<compile_context>
chip_gen: v5e
topology: v5e:2x2
jax: 0.10.0
libtpu: 0.0.40
codegen_flags: <defaults>
</compile_context>

<pallas_src>
import functools

import jax
import jax.numpy as jnp
from jax import lax
from jax.experimental import pallas as pl
from jax.experimental.pallas import tpu as pltpu

N_LAYERS = 3                         # "self.N" scaled down from 10 for the small synthetic setup
ID_DIM = 32
ENC_CHANNELS = [3, 8, 16, 32, 32]    # produces N_LAYERS + 1 = 4 readout features
R_CAT = sum(ENC_CHANNELS[1:N_LAYERS + 1])   # 56: concat of the N IBA-gated feature maps
F_CAT = sum(ENC_CHANNELS[1:])               # 88: concat of all N+1 readout feature maps
POOL_ROWS = 2 * R_CAT + 2 * F_CAT           # 288: [pz_s, pz_t, pf_s, pf_t]


def _round_up(x, m):
    return ((x + m - 1) // m) * m


# ---------------------------- Pallas kernels ----------------------------

def _fused_main_kernel(xs_ref, xt_ref, noise_ref,
                       a1_ref, c1_ref, a2_ref, c2_ref, a3_ref, c3_ref, a4_ref, c4_ref,
                       m_all_ref, s_all_ref, m_iba_ref, s_iba_ref, act_ref,
                       w_iib_ref, b_iib_ref,
                       w_ai_ref, w_af_ref, b_a_ref, w_l_ref, b_l_ref,
                       attr_ref, gate_ref, pool_ref, *, tm, m_valid):
    # column validity mask for the padded remainder tile
    col = pl.program_id(0) * tm + lax.broadcasted_iota(jnp.int32, (1, tm), 1)
    valid = jnp.where(col < m_valid, 1.0, 0.0)                      # (1, tm)

    def affine(w_ref, x, b_ref, relu=False):
        y = jnp.dot(w_ref[...], x, preferred_element_type=jnp.float32,
                    precision=lax.Precision.HIGHEST) + b_ref[...]
        return jnp.maximum(y, 0.0) if relu else y

    def encode(x):
        # slab ("cat-space") encoder: identity-carry blocks were folded into A/c in the wrapper,
        # so each step just extends the feature slab; relu is idempotent on the carried part.
        g1 = affine(a1_ref, x, c1_ref, relu=True)     # (8,  tm)
        g2 = affine(a2_ref, g1, c2_ref, relu=True)    # (24, tm) = [h1, h2]
        g3 = affine(a3_ref, g2, c3_ref, relu=True)    # (56, tm) = [h1, h2, h3] = R_cat
        g4 = affine(a4_ref, g3, c4_ref, relu=True)    # (88, tm) = [h1, h2, h3, h4]
        return g3, g4

    inv_std = 1.0 / jnp.maximum(s_all_ref[...], 0.01)   # (88, 1)
    act = act_ref[...]                                  # (56, 1)
    m_r = m_iba_ref[...]
    s_r = s_iba_ref[...]

    def branch(x, eps_raw):
        # One image through encoder -> readout norm -> IIB -> IBA; pools are reduced immediately
        # so only R (56, tm) and lambda (56, tm) stay live outside this function.
        r, f = encode(x)
        pool_f = jnp.sum(f * valid, axis=1, keepdims=True)              # (88, 1)
        ro = (f - m_all_ref[...]) * inv_std                             # readout normalisation
        lam = jax.nn.sigmoid(affine(w_iib_ref, ro, b_iib_ref))          # IIB: (88 -> 56) fused
        eps = eps_raw * s_r + m_r                                       # eps ~ N(m_r, std_r)
        z = act * (lam * r + (1.0 - lam) * eps) + (1.0 - act) * r       # IBA
        pool_z = jnp.sum(z * valid, axis=1, keepdims=True)              # (56, 1)
        return r, lam, pool_z, pool_f

    xs = xs_ref[...]
    xt = xt_ref[...]
    rs, _lam_s, pz_s, pf_s = branch(xs, noise_ref[0:R_CAT, :])
    rt, lam_t, pz_t, pf_t = branch(xt, noise_ref[R_CAT:2 * R_CAT, :])

    # --- source->target blend; m_s = std_s = Rs (batch-of-1 mean, reproducing the reference) ---
    eps_b = noise_ref[2 * R_CAT:3 * R_CAT, :]
    feat_t = rt * (1.0 - lam_t) + lam_t * (eps_b * rs + rs)

    # --- decoder/G surrogate heads: attr + sigmoid gate (layer-0 feature slot is the Xt image) ---
    attr_ref[...] = (jnp.dot(w_ai_ref[...], xt, preferred_element_type=jnp.float32,
                             precision=lax.Precision.HIGHEST)
                     + jnp.dot(w_af_ref[...], feat_t, preferred_element_type=jnp.float32,
                               precision=lax.Precision.HIGHEST)
                     + b_a_ref[...])
    gate_ref[...] = jax.nn.sigmoid(affine(w_l_ref, lam_t, b_l_ref))

    # --- per-tile pooled partial sums, written as aligned column stores ---
    pool_ref[0, 0:R_CAT, :] = pz_s
    pool_ref[0, R_CAT:2 * R_CAT, :] = pz_t
    pool_ref[0, 2 * R_CAT:2 * R_CAT + F_CAT, :] = pf_s
    pool_ref[0, 2 * R_CAT + F_CAT:POOL_ROWS, :] = pf_t


def _final_blend_kernel(attr_ref, gate_ref, idm_ref, y_ref):
    gate = gate_ref[...]
    y_ref[...] = jnp.tanh(attr_ref[...] * (1.0 - gate) + gate * idm_ref[...])


# ---------------------------- parameters ----------------------------

def init_params(key):
    params = {}
    keys = iter(jax.random.split(key, 64))

    def dense(cin, cout, scale=0.1):
        w = scale * jax.random.normal(next(keys), (cin, cout), jnp.float32)
        b = jnp.zeros((cout,), jnp.float32)
        return w, b

    # synthetic Backbone128 (encoder) + identity head
    params["enc"] = [dense(ENC_CHANNELS[i], ENC_CHANNELS[i + 1])
                     for i in range(N_LAYERS + 1)]
    params["id_head"] = dense(ENC_CHANNELS[-1], ID_DIM)

    # surrogate for readout_layer{i}.pth running stats (m, std, active_neurons)
    params["stats"] = []
    for i in range(N_LAYERS + 1):
        c = ENC_CHANNELS[i + 1]
        m = 0.05 * jax.random.normal(next(keys), (c,), jnp.float32)
        s = 0.5 + jax.nn.softplus(jax.random.normal(next(keys), (c,), jnp.float32))
        active = (jax.random.uniform(next(keys), (c,)) > 0.1).astype(jnp.float32)
        params["stats"].append((m, s, active))

    in_c = sum(ENC_CHANNELS[1:])            # concat of all N+1 readout features
    params["iib"] = [dense(in_c, ENC_CHANNELS[i + 1]) for i in range(N_LAYERS)]
    params["restrict"] = [dense(ENC_CHANNELS[i + 1], ID_DIM) for i in range(N_LAYERS)]

    attr_in = 3 + sum(ENC_CHANNELS[2:N_LAYERS + 1])   # Xt image replaces feature 0
    lamb_in = sum(ENC_CHANNELS[1:N_LAYERS + 1])
    params["dec_attr"] = dense(attr_in, 3)
    params["dec_lamb"] = dense(lamb_in, 3)
    params["g_id"] = dense(ID_DIM, 3)
    return params


# ---------------------------- forward pass ----------------------------

def infoswap_forward(source, target, params, key):
    """source/target: (1, 3, H, W) in [-1, 1]. Returns (1, 3, H, W) in [-1, 1]."""
    # TODO(synk): MTCNN alignment / 512-resize / warpAffine / laplacian blending omitted.
    B = source.shape[0]
    assert B == 1
    _, _, H, W = source.shape
    Mt = H * W

    # NCHW is already channel-major: (3, M) slabs, no transpose needed.
    xs2d = source.reshape(3, Mt).astype(jnp.float32)
    xt2d = target.reshape(3, Mt).astype(jnp.float32)

    # column tiling: lane-dense tiles, padded + in-kernel masked remainder
    TM = 256 if Mt > 512 else 128
    Mp = _round_up(Mt, TM)
    ntiles = Mp // TM
    if Mp != Mt:
        xs2d = jnp.pad(xs2d, ((0, 0), (0, Mp - Mt)))
        xt2d = jnp.pad(xt2d, ((0, 0), (0, Mp - Mt)))

    # Gaussian noise (exact torch.randn semantics), generated once in XLA and streamed lane-dense:
    #   rows [0:56) IBA eps (source), [56:112) IBA eps (target), [112:168) blend eps.
    noise = jax.random.normal(key, (3 * R_CAT, Mp), jnp.float32)

    # --- fold per-layer weights/stats into channel-major "cat-space" operators (XLA, one time) ---
    A_list, c_list = [], []
    prev = 0
    for (w, b) in params["enc"]:
        cin, cout = w.shape
        if prev == 0:
            A, c = w, b
        else:
            right = jnp.concatenate(
                [jnp.zeros((prev - cin, cout), jnp.float32), w], axis=0)
            A = jnp.concatenate([jnp.eye(prev, dtype=jnp.float32), right], axis=1)
            c = jnp.concatenate([jnp.zeros((prev,), jnp.float32), b])
        A_list.append(A)
        c_list.append(c)
        prev = (prev + cout) if prev else cout
    a1t, a2t, a3t, a4t = [A.T for A in A_list]                 # (Cout_slab, Cin_slab)
    c1, c2, c3, c4 = [c.reshape(-1, 1) for c in c_list]        # (Cout_slab, 1)

    m_all = jnp.concatenate([params["stats"][i][0] for i in range(N_LAYERS + 1)]).reshape(F_CAT, 1)
    s_all = jnp.concatenate([params["stats"][i][1] for i in range(N_LAYERS + 1)]).reshape(F_CAT, 1)
    m_iba = m_all[:R_CAT]
    s_iba = s_all[:R_CAT]
    act56 = jnp.concatenate([params["stats"][i][2] for i in range(N_LAYERS)]).reshape(R_CAT, 1)

    w_iib_t = jnp.concatenate([params["iib"][i][0] for i in range(N_LAYERS)], axis=1).T  # (56, 88)
    b_iib = jnp.concatenate([params["iib"][i][1] for i in range(N_LAYERS)]).reshape(R_CAT, 1)

    w_a51, b_a = params["dec_attr"]            # (51, 3): [Xt img (3), feat1 (16), feat2 (32)]
    w_ai_t = w_a51[:3].T                       # (3, 3)  image part
    w_af_t = jnp.concatenate(                  # feature part, layer-0 slot zeroed (replaced by Xt)
        [jnp.zeros((ENC_CHANNELS[1], 3), jnp.float32), w_a51[3:]], axis=0).T             # (3, 56)
    w_l, b_l = params["dec_lamb"]
    w_l_t = w_l.T                              # (3, 56)
    b_a = b_a.reshape(3, 1)
    b_l = b_l.reshape(3, 1)

    resident = [a1t, c1, a2t, c2, a3t, c3, a4t, c4,
                m_all, s_all, m_iba, s_iba, act56,
                w_iib_t, b_iib, w_ai_t, w_af_t, b_a, w_l_t, b_l]

    def _const_spec(arr):
        nd = arr.ndim
        return pl.BlockSpec(arr.shape, lambda i, nd=nd: (0,) * nd)

    col3_spec = pl.BlockSpec((3, TM), lambda i: (0, i))
    noise_spec = pl.BlockSpec((3 * R_CAT, TM), lambda i: (0, i))

    attr_p, gate_p, pools_p = pl.pallas_call(
        functools.partial(_fused_main_kernel, tm=TM, m_valid=Mt),
        out_shape=(jax.ShapeDtypeStruct((3, Mp), jnp.float32),
                   jax.ShapeDtypeStruct((3, Mp), jnp.float32),
                   jax.ShapeDtypeStruct((ntiles, POOL_ROWS, 1), jnp.float32)),
        grid=(ntiles,),
        in_specs=[col3_spec, col3_spec, noise_spec] + [_const_spec(a) for a in resident],
        out_specs=(col3_spec, col3_spec,
                   pl.BlockSpec((1, POOL_ROWS, 1), lambda i: (i, 0, 0))),
        compiler_params=pltpu.CompilerParams(dimension_semantics=("parallel",)),
    )(xs2d, xt2d, noise, *resident)

    # --- tiny global reductions + id-space matmuls (XLA; a grid=(1,) kernel is pure overhead) ---
    psum = jnp.sum(pools_p, axis=0)[:, 0] / float(Mt)             # (288,)
    pool_z = jnp.stack([psum[0:R_CAT], psum[R_CAT:2 * R_CAT]], axis=0)               # (2, 56)
    pool_f = jnp.stack([psum[2 * R_CAT:2 * R_CAT + F_CAT],
                        psum[2 * R_CAT + F_CAT:POOL_ROWS]], axis=0)                  # (2, 88)

    w_id, b_id = params["id_head"]
    X_id = pool_f[:, R_CAT:] @ w_id + b_id             # (2, ID_DIM); only its shape is consumed
    w_r_cat = jnp.concatenate([params["restrict"][i][0] for i in range(N_LAYERS)], axis=0)
    b_r_sum = sum(params["restrict"][i][1] for i in range(N_LAYERS))
    X_id_restrict = (jnp.zeros_like(X_id) + (pool_z @ w_r_cat + b_r_sum)) / float(N_LAYERS)
    Xs_id = X_id_restrict[:B]                          # (1, ID_DIM)
    w_g, b_g = params["g_id"]
    id_mod = (Xs_id @ w_g + b_g).reshape(3, 1)

    # --- final lambda-gated tanh blend (needs the global Xs_id, hence a second tiny pass) ---
    y2d = pl.pallas_call(
        _final_blend_kernel,
        out_shape=jax.ShapeDtypeStruct((3, Mp), jnp.float32),
        grid=(ntiles,),
        in_specs=[col3_spec, col3_spec, pl.BlockSpec((3, 1), lambda i: (0, 0))],
        out_specs=col3_spec,
        compiler_params=pltpu.CompilerParams(dimension_semantics=("parallel",)),
    )(attr_p, gate_p, id_mod)

    return y2d[:, :Mt].reshape(B, 3, H, W)             # NCHW, [-1, 1]


# ---------------------------- main ----------------------------

if __name__ == "__main__":
    key = jax.random.PRNGKey(0)
    k_param, k_src, k_tgt, k_noise = jax.random.split(key, 4)
    params = init_params(k_param)

    source = jax.random.uniform(k_src, (1, 3, 16, 16), jnp.float32, -1.0, 1.0)
    target = jax.random.uniform(k_tgt, (1, 3, 16, 16), jnp.float32, -1.0, 1.0)

    out = infoswap_forward(source, target, params, k_noise)
    out = jax.block_until_ready(out)
    assert out.shape == (1, 3, 16, 16), out.shape
    assert bool(jnp.all(jnp.isfinite(out)))
    print("KERNEL_OK")
</pallas_src>

<mosaic_0001>
module attributes {stable_mosaic.version = 11 : i64} {
  func.func @_fused_main_kernel(%arg0: i32, %arg1: memref<3x128xf32, #tpu.memory_space<vmem>>, %arg2: memref<3x128xf32, #tpu.memory_space<vmem>>, %arg3: memref<168x128xf32, #tpu.memory_space<vmem>>, %arg4: memref<8x3xf32, #tpu.memory_space<vmem>>, %arg5: memref<8x1xf32, #tpu.memory_space<vmem>>, %arg6: memref<24x8xf32, #tpu.memory_space<vmem>>, %arg7: memref<24x1xf32, #tpu.memory_space<vmem>>, %arg8: memref<56x24xf32, #tpu.memory_space<vmem>>, %arg9: memref<56x1xf32, #tpu.memory_space<vmem>>, %arg10: memref<88x56xf32, #tpu.memory_space<vmem>>, %arg11: memref<88x1xf32, #tpu.memory_space<vmem>>, %arg12: memref<88x1xf32, #tpu.memory_space<vmem>>, %arg13: memref<88x1xf32, #tpu.memory_space<vmem>>, %arg14: memref<56x1xf32, #tpu.memory_space<vmem>>, %arg15: memref<56x1xf32, #tpu.memory_space<vmem>>, %arg16: memref<56x1xf32, #tpu.memory_space<vmem>>, %arg17: memref<56x88xf32, #tpu.memory_space<vmem>>, %arg18: memref<56x1xf32, #tpu.memory_space<vmem>>, %arg19: memref<3x3xf32, #tpu.memory_space<vmem>>, %arg20: memref<3x56xf32, #tpu.memory_space<vmem>>, %arg21: memref<3x1xf32, #tpu.memory_space<vmem>>, %arg22: memref<3x56xf32, #tpu.memory_space<vmem>>, %arg23: memref<3x1xf32, #tpu.memory_space<vmem>>, %arg24: memref<3x128xf32, #tpu.memory_space<vmem>>, %arg25: memref<3x128xf32, #tpu.memory_space<vmem>>, %arg26: memref<1x288x1xf32, #tpu.memory_space<vmem>>) attributes {dimension_semantics = [#tpu.dimension_semantics<parallel>], iteration_bounds = array<i64: 2>, scalar_prefetch = 0 : i64, scratch_operands = 0 : i64, tpu.core_type = #tpu.core_type<tc>, window_params = [{transform_indices = @transform_0, window_bounds = array<i64: 3, 128>}, {transform_indices = @transform_1, window_bounds = array<i64: 3, 128>}, {transform_indices = @transform_2, window_bounds = array<i64: 168, 128>}, {pipeline_mode = #tpu.pipeline_mode<synchronous>, transform_indices = @transform_3, window_bounds = array<i64: 8, 3>}, {pipeline_mode = #tpu.pipeline_mode<synchronous>, transform_indices = @transform_4, window_bounds = array<i64: 8, 1>}, {pipeline_mode = #tpu.pipeline_mode<synchronous>, transform_indices = @transform_5, window_bounds = array<i64: 24, 8>}, {pipeline_mode = #tpu.pipeline_mode<synchronous>, transform_indices = @transform_6, window_bounds = array<i64: 24, 1>}, {pipeline_mode = #tpu.pipeline_mode<synchronous>, transform_indices = @transform_7, window_bounds = array<i64: 56, 24>}, {pipeline_mode = #tpu.pipeline_mode<synchronous>, transform_indices = @transform_8, window_bounds = array<i64: 56, 1>}, {pipeline_mode = #tpu.pipeline_mode<synchronous>, transform_indices = @transform_9, window_bounds = array<i64: 88, 56>}, {pipeline_mode = #tpu.pipeline_mode<synchronous>, transform_indices = @transform_10, window_bounds = array<i64: 88, 1>}, {pipeline_mode = #tpu.pipeline_mode<synchronous>, transform_indices = @transform_11, window_bounds = array<i64: 88, 1>}, {pipeline_mode = #tpu.pipeline_mode<synchronous>, transform_indices = @transform_12, window_bounds = array<i64: 88, 1>}, {pipeline_mode = #tpu.pipeline_mode<synchronous>, transform_indices = @transform_13, window_bounds = array<i64: 56, 1>}, {pipeline_mode = #tpu.pipeline_mode<synchronous>, transform_indices = @transform_14, window_bounds = array<i64: 56, 1>}, {pipeline_mode = #tpu.pipeline_mode<synchronous>, transform_indices = @transform_15, window_bounds = array<i64: 56, 1>}, {pipeline_mode = #tpu.pipeline_mode<synchronous>, transform_indices = @transform_16, window_bounds = array<i64: 56, 88>}, {pipeline_mode = #tpu.pipeline_mode<synchronous>, transform_indices = @transform_17, window_bounds = array<i64: 56, 1>}, {pipeline_mode = #tpu.pipeline_mode<synchronous>, transform_indices = @transform_18, window_bounds = array<i64: 3, 3>}, {pipeline_mode = #tpu.pipeline_mode<synchronous>, transform_indices = @transform_19, window_bounds = array<i64: 3, 56>}, {pipeline_mode = #tpu.pipeline_mode<synchronous>, transform_indices = @transform_20, window_bounds = array<i64: 3, 1>}, {pipeline_mode = #tpu.pipeline_mode<synchronous>, transform_indices = @transform_21, window_bounds = array<i64: 3, 56>}, {pipeline_mode = #tpu.pipeline_mode<synchronous>, transform_indices = @transform_22, window_bounds = array<i64: 3, 1>}, {transform_indices = @transform_23, window_bounds = array<i64: 3, 128>}, {transform_indices = @transform_24, window_bounds = array<i64: 3, 128>}, {transform_indices = @transform_25, window_bounds = array<i64: 1, 288, 1>}]} {
    %c128_i32 = arith.constant 128 : i32
    %0 = arith.muli %arg0, %c128_i32 : i32
    %1 = tpu.iota {dimensions = array<i32: 1>} : vector<1x128xi32>
    %2 = vector.broadcast %0 : i32 to vector<1x128xi32>
    %3 = arith.addi %2, %1 : vector<1x128xi32>
    %c256_i32 = arith.constant 256 : i32
    %4 = vector.broadcast %c256_i32 : i32 to vector<1x128xi32>
    %5 = arith.cmpi slt, %3, %4 : vector<1x128xi32>
    %cst = arith.constant 1.000000e+00 : f32
    %cst_0 = arith.constant 0.000000e+00 : f32
    %6 = vector.broadcast %cst : f32 to vector<1x128xf32>
    %7 = vector.broadcast %cst_0 : f32 to vector<1x128xf32>
    %8 = arith.select %5, %6, %7 : vector<1x128xi1>, vector<1x128xf32>
    %c0 = arith.constant 0 : index
    %c0_1 = arith.constant 0 : index
    %9 = vector.load %arg13[%c0, %c0_1] : memref<88x1xf32, #tpu.memory_space<vmem>>, vector<88x1xf32>
    %cst_2 = arith.constant 0.00999999977 : f32
    %10 = vector.broadcast %cst_2 : f32 to vector<88x1xf32>
    %11 = arith.maximumf %9, %10 : vector<88x1xf32>
    %cst_3 = arith.constant 1.000000e+00 : f32
    %12 = vector.broadcast %cst_3 : f32 to vector<88x1xf32>
    %13 = arith.divf %12, %11 : vector<88x1xf32>
    %c0_4 = arith.constant 0 : index
    %c0_5 = arith.constant 0 : index
    %14 = vector.load %arg16[%c0_4, %c0_5] : memref<56x1xf32, #tpu.memory_space<vmem>>, vector<56x1xf32>
    %c0_6 = arith.constant 0 : index
    %c0_7 = arith.constant 0 : index
    %15 = vector.load %arg14[%c0_6, %c0_7] : memref<56x1xf32, #tpu.memory_space<vmem>>, vector<56x1xf32>
    %c0_8 = arith.constant 0 : index
    %c0_9 = arith.constant 0 : index
    %16 = vector.load %arg15[%c0_8, %c0_9] : memref<56x1xf32, #tpu.memory_space<vmem>>, vector<56x1xf32>
    %c0_10 = arith.constant 0 : index
    %c0_11 = arith.constant 0 : index
    %17 = vector.load %arg1[%c0_10, %c0_11] : memref<3x128xf32, #tpu.memory_space<vmem>>, vector<3x128xf32>
    %c0_12 = arith.constant 0 : index
    %c0_13 = arith.constant 0 : index
    %18 = vector.load %arg2[%c0_12, %c0_13] : memref<3x128xf32, #tpu.memory_space<vmem>>, vector<3x128xf32>
    %c0_14 = arith.constant 0 : index
    %c0_15 = arith.constant 0 : index
    %19 = vector.load %arg3[%c0_14, %c0_15] : memref<168x128xf32, #tpu.memory_space<vmem>>, vector<56x128xf32>
    %c0_16 = arith.constant 0 : index
    %c0_17 = arith.constant 0 : index
    %20 = vector.load %arg4[%c0_16, %c0_17] : memref<8x3xf32, #tpu.memory_space<vmem>>, vector<8x3xf32>
    %cst_18 = arith.constant dense<0.000000e+00> : vector<8x128xf32>
    %21 = tpu.matmul %20, %17, %cst_18 {dimension_numbers = #tpu.dot_dimension_numbers<[1], [0], [0], [1], [0, 0, 1, 1], [], []>, precision = #tpu.contract_precision<fp32>} : vector<8x3xf32>, vector<3x128xf32>, vector<8x128xf32> -> vector<8x128xf32>
    %c0_19 = arith.constant 0 : index
    %c0_20 = arith.constant 0 : index
    %22 = vector.load %arg5[%c0_19, %c0_20] : memref<8x1xf32, #tpu.memory_space<vmem>>, vector<8x1xf32>
    %23 = vector.broadcast %22 : vector<8x1xf32> to vector<8x128xf32>
    %24 = arith.addf %21, %23 : vector<8x128xf32>
    %cst_21 = arith.constant 0.000000e+00 : f32
    %25 = vector.broadcast %cst_21 : f32 to vector<8x128xf32>
    %26 = arith.maximumf %24, %25 : vector<8x128xf32>
    %c0_22 = arith.constant 0 : index
    %c0_23 = arith.constant 0 : index
    %27 = vector.load %arg6[%c0_22, %c0_23] : memref<24x8xf32, #tpu.memory_space<vmem>>, vector<24x8xf32>
    %cst_24 = arith.constant dense<0.000000e+00> : vector<24x128xf32>
    %28 = tpu.matmul %27, %26, %cst_24 {dimension_numbers = #tpu.dot_dimension_numbers<[1], [0], [0], [1], [0, 0, 1, 1], [], []>, precision = #tpu.contract_precision<fp32>} : vector<24x8xf32>, vector<8x128xf32>, vector<24x128xf32> -> vector<24x128xf32>
    %c0_25 = arith.constant 0 : index
    %c0_26 = arith.constant 0 : index
    %29 = vector.load %arg7[%c0_25, %c0_26] : memref<24x1xf32, #tpu.memory_space<vmem>>, vector<24x1xf32>
    %30 = vector.broadcast %29 : vector<24x1xf32> to vector<24x128xf32>
    %31 = arith.addf %28, %30 : vector<24x128xf32>
    %cst_27 = arith.constant 0.000000e+00 : f32
    %32 = vector.broadcast %cst_27 : f32 to vector<24x128xf32>
    %33 = arith.maximumf %31, %32 : vector<24x128xf32>
    %c0_28 = arith.constant 0 : index
    %c0_29 = arith.constant 0 : index
    %34 = vector.load %arg8[%c0_28, %c0_29] : memref<56x24xf32, #tpu.memory_space<vmem>>, vector<56x24xf32>
    %cst_30 = arith.constant dense<0.000000e+00> : vector<56x128xf32>
    %35 = tpu.matmul %34, %33, %cst_30 {dimension_numbers = #tpu.dot_dimension_numbers<[1], [0], [0], [1], [0, 0, 1, 1], [], []>, precision = #tpu.contract_precision<fp32>} : vector<56x24xf32>, vector<24x128xf32>, vector<56x128xf32> -> vector<56x128xf32>
    %c0_31 = arith.constant 0 : index
    %c0_32 = arith.constant 0 : index
    %36 = vector.load %arg9[%c0_31, %c0_32] : memref<56x1xf32, #tpu.memory_space<vmem>>, vector<56x1xf32>
    %37 = vector.broadcast %36 : vector<56x1xf32> to vector<56x128xf32>
    %38 = arith.addf %35, %37 : vector<56x128xf32>
    %cst_33 = arith.constant 0.000000e+00 : f32
    %39 = vector.broadcast %cst_33 : f32 to vector<56x128xf32>
    %40 = arith.maximumf %38, %39 : vector<56x128xf32>
    %c0_34 = arith.constant 0 : index
    %c0_35 = arith.constant 0 : index
    %41 = vector.load %arg10[%c0_34, %c0_35] : memref<88x56xf32, #tpu.memory_space<vmem>>, vector<88x56xf32>
    %cst_36 = arith.constant dense<0.000000e+00> : vector<88x128xf32>
    %42 = tpu.matmul %41, %40, %cst_36 {dimension_numbers = #tpu.dot_dimension_numbers<[1], [0], [0], [1], [0, 0, 1, 1], [], []>, precision = #tpu.contract_precision<fp32>} : vector<88x56xf32>, vector<56x128xf32>, vector<88x128xf32> -> vector<88x128xf32>
    %c0_37 = arith.constant 0 : index
    %c0_38 = arith.constant 0 : index
    %43 = vector.load %arg11[%c0_37, %c0_38] : memref<88x1xf32, #tpu.memory_space<vmem>>, vector<88x1xf32>
    %44 = vector.broadcast %43 : vector<88x1xf32> to vector<88x128xf32>
    %45 = arith.addf %42, %44 : vector<88x128xf32>
    %cst_39 = arith.constant 0.000000e+00 : f32
    %46 = vector.broadcast %cst_39 : f32 to vector<88x128xf32>
    %47 = arith.maximumf %45, %46 : vector<88x128xf32>
    %48 = vector.broadcast %8 : vector<1x128xf32> to vector<88x128xf32>
    %49 = arith.mulf %47, %48 : vector<88x128xf32>
    %cst_40 = arith.constant dense<0.000000e+00> : vector<88xf32>
    %50 = vector.multi_reduction <add>, %49, %cst_40 [1] : vector<88x128xf32> to vector<88xf32>
    %51 = vector.shape_cast %50 : vector<88xf32> to vector<88x1xf32>
    %c0_41 = arith.constant 0 : index
    %c0_42 = arith.constant 0 : index
    %52 = vector.load %arg12[%c0_41, %c0_42] : memref<88x1xf32, #tpu.memory_space<vmem>>, vector<88x1xf32>
    %53 = vector.broadcast %52 : vector<88x1xf32> to vector<88x128xf32>
    %54 = arith.subf %47, %53 : vector<88x128xf32>
    %55 = vector.broadcast %13 : vector<88x1xf32> to vector<88x128xf32>
    %56 = arith.mulf %54, %55 : vector<88x128xf32>
    %c0_43 = arith.constant 0 : index
    %c0_44 = arith.constant 0 : index
    %57 = vector.load %arg17[%c0_43, %c0_44] : memref<56x88xf32, #tpu.memory_space<vmem>>, vector<56x88xf32>
    %cst_45 = arith.constant dense<0.000000e+00> : vector<56x128xf32>
    %58 = tpu.matmul %57, %56, %cst_45 {dimension_numbers = #tpu.dot_dimension_numbers<[1], [0], [0], [1], [0, 0, 1, 1], [], []>, precision = #tpu.contract_precision<fp32>} : vector<56x88xf32>, vector<88x128xf32>, vector<56x128xf32> -> vector<56x128xf32>
    %c0_46 = arith.constant 0 : index
    %c0_47 = arith.constant 0 : index
    %59 = vector.load %arg18[%c0_46, %c0_47] : memref<56x1xf32, #tpu.memory_space<vmem>>, vector<56x1xf32>
    %60 = vector.broadcast %59 : vector<56x1xf32> to vector<56x128xf32>
    %61 = arith.addf %58, %60 : vector<56x128xf32>
    %62 = arith.negf %61 : vector<56x128xf32>
    %63 = math.exp %62 : vector<56x128xf32>
    %cst_48 = arith.constant 1.000000e+00 : f32
    %64 = vector.broadcast %cst_48 : f32 to vector<56x128xf32>
    %65 = arith.addf %64, %63 : vector<56x128xf32>
    %66 = arith.divf %64, %65 : vector<56x128xf32>
    %67 = vector.broadcast %16 : vector<56x1xf32> to vector<56x128xf32>
    %68 = arith.mulf %19, %67 : vector<56x128xf32>
    %69 = vector.broadcast %15 : vector<56x1xf32> to vector<56x128xf32>
    %70 = arith.addf %68, %69 : vector<56x128xf32>
    %71 = arith.mulf %66, %40 : vector<56x128xf32>
    %cst_49 = arith.constant 1.000000e+00 : f32
    %72 = vector.broadcast %cst_49 : f32 to vector<56x128xf32>
    %73 = arith.subf %72, %66 : vector<56x128xf32>
    %74 = arith.mulf %73, %70 : vector<56x128xf32>
    %75 = arith.addf %71, %74 : vector<56x128xf32>
    %76 = vector.broadcast %14 : vector<56x1xf32> to vector<56x128xf32>
    %77 = arith.mulf %76, %75 : vector<56x128xf32>
    %cst_50 = arith.constant 1.000000e+00 : f32
    %78 = vector.broadcast %cst_50 : f32 to vector<56x1xf32>
    %79 = arith.subf %78, %14 : vector<56x1xf32>
    %80 = vector.broadcast %79 : vector<56x1xf32> to vector<56x128xf32>
    %81 = arith.mulf %80, %40 : vector<56x128xf32>
    %82 = arith.addf %77, %81 : vector<56x128xf32>
    %83 = vector.broadcast %8 : vector<1x128xf32> to vector<56x128xf32>
    %84 = arith.mulf %82, %83 : vector<56x128xf32>
    %cst_51 = arith.constant dense<0.000000e+00> : vector<56xf32>
    %85 = vector.multi_reduction <add>, %84, %cst_51 [1] : vector<56x128xf32> to vector<56xf32>
    %86 = vector.shape_cast %85 : vector<56xf32> to vector<56x1xf32>
    %c56 = arith.constant 56 : index
    %c0_52 = arith.constant 0 : index
    %87 = vector.load %arg3[%c56, %c0_52] : memref<168x128xf32, #tpu.memory_space<vmem>>, vector<56x128xf32>
    %c0_53 = arith.constant 0 : index
    %c0_54 = arith.constant 0 : index
    %88 = vector.load %arg4[%c0_53, %c0_54] : memref<8x3xf32, #tpu.memory_space<vmem>>, vector<8x3xf32>
    %cst_55 = arith.constant dense<0.000000e+00> : vector<8x128xf32>
    %89 = tpu.matmul %88, %18, %cst_55 {dimension_numbers = #tpu.dot_dimension_numbers<[1], [0], [0], [1], [0, 0, 1, 1], [], []>, precision = #tpu.contract_precision<fp32>} : vector<8x3xf32>, vector<3x128xf32>, vector<8x128xf32> -> vector<8x128xf32>
    %c0_56 = arith.constant 0 : index
    %c0_57 = arith.constant 0 : index
    %90 = vector.load %arg5[%c0_56, %c0_57] : memref<8x1xf32, #tpu.memory_space<vmem>>, vector<8x1xf32>
    %91 = vector.broadcast %90 : vector<8x1xf32> to vector<8x128xf32>
    %92 = arith.addf %89, %91 : vector<8x128xf32>
    %cst_58 = arith.constant 0.000000e+00 : f32
    %93 = vector.broadcast %cst_58 : f32 to vector<8x128xf32>
    %94 = arith.maximumf %92, %93 : vector<8x128xf32>
    %c0_59 = arith.constant 0 : index
    %c0_60 = arith.constant 0 : index
    %95 = vector.load %arg6[%c0_59, %c0_60] : memref<24x8xf32, #tpu.memory_space<vmem>>, vector<24x8xf32>
    %cst_61 = arith.constant dense<0.000000e+00> : vector<24x128xf32>
    %96 = tpu.matmul %95, %94, %cst_61 {dimension_numbers = #tpu.dot_dimension_numbers<[1], [0], [0], [1], [0, 0, 1, 1], [], []>, precision = #tpu.contract_precision<fp32>} : vector<24x8xf32>, vector<8x128xf32>, vector<24x128xf32> -> vector<24x128xf32>
    %c0_62 = arith.constant 0 : index
    %c0_63 = arith.constant 0 : index
    %97 = vector.load %arg7[%c0_62, %c0_63] : memref<24x1xf32, #tpu.memory_space<vmem>>, vector<24x1xf32>
    %98 = vector.broadcast %97 : vector<24x1xf32> to vector<24x128xf32>
    %99 = arith.addf %96, %98 : vector<24x128xf32>
    %cst_64 = arith.constant 0.000000e+00 : f32
    %100 = vector.broadcast %cst_64 : f32 to vector<24x128xf32>
    %101 = arith.maximumf %99, %100 : vector<24x128xf32>
    %c0_65 = arith.constant 0 : index
    %c0_66 = arith.constant 0 : index
    %102 = vector.load %arg8[%c0_65, %c0_66] : memref<56x24xf32, #tpu.memory_space<vmem>>, vector<56x24xf32>
    %cst_67 = arith.constant dense<0.000000e+00> : vector<56x128xf32>
    %103 = tpu.matmul %102, %101, %cst_67 {dimension_numbers = #tpu.dot_dimension_numbers<[1], [0], [0], [1], [0, 0, 1, 1], [], []>, precision = #tpu.contract_precision<fp32>} : vector<56x24xf32>, vector<24x128xf32>, vector<56x128xf32> -> vector<56x128xf32>
    %c0_68 = arith.constant 0 : index
    %c0_69 = arith.constant 0 : index
    %104 = vector.load %arg9[%c0_68, %c0_69] : memref<56x1xf32, #tpu.memory_space<vmem>>, vector<56x1xf32>
    %105 = vector.broadcast %104 : vector<56x1xf32> to vector<56x128xf32>
    %106 = arith.addf %103, %105 : vector<56x128xf32>
    %cst_70 = arith.constant 0.000000e+00 : f32
    %107 = vector.broadcast %cst_70 : f32 to vector<56x128xf32>
    %108 = arith.maximumf %106, %107 : vector<56x128xf32>
    %c0_71 = arith.constant 0 : index
    %c0_72 = arith.constant 0 : index
    %109 = vector.load %arg10[%c0_71, %c0_72] : memref<88x56xf32, #tpu.memory_space<vmem>>, vector<88x56xf32>
    %cst_73 = arith.constant dense<0.000000e+00> : vector<88x128xf32>
    %110 = tpu.matmul %109, %108, %cst_73 {dimension_numbers = #tpu.dot_dimension_numbers<[1], [0], [0], [1], [0, 0, 1, 1], [], []>, precision = #tpu.contract_precision<fp32>} : vector<88x56xf32>, vector<56x128xf32>, vector<88x128xf32> -> vector<88x128xf32>
    %c0_74 = arith.constant 0 : index
    %c0_75 = arith.constant 0 : index
    %111 = vector.load %arg11[%c0_74, %c0_75] : memref<88x1xf32, #tpu.memory_space<vmem>>, vector<88x1xf32>
    %112 = vector.broadcast %111 : vector<88x1xf32> to vector<88x128xf32>
    %113 = arith.addf %110, %112 : vector<88x128xf32>
    %cst_76 = arith.constant 0.000000e+00 : f32
    %114 = vector.broadcast %cst_76 : f32 to vector<88x128xf32>
    %115 = arith.maximumf %113, %114 : vector<88x128xf32>
    %116 = vector.broadcast %8 : vector<1x128xf32> to vector<88x128xf32>
    %117 = arith.mulf %115, %116 : vector<88x128xf32>
    %cst_77 = arith.constant dense<0.000000e+00> : vector<88xf32>
    %118 = vector.multi_reduction <add>, %117, %cst_77 [1] : vector<88x128xf32> to vector<88xf32>
    %119 = vector.shape_cast %118 : vector<88xf32> to vector<88x1xf32>
    %c0_78 = arith.constant 0 : index
    %c0_79 = arith.constant 0 : index
    %120 = vector.load %arg12[%c0_78, %c0_79] : memref<88x1xf32, #tpu.memory_space<vmem>>, vector<88x1xf32>
    %121 = vector.broadcast %120 : vector<88x1xf32> to vector<88x128xf32>
    %122 = arith.subf %115, %121 : vector<88x128xf32>
    %123 = vector.broadcast %13 : vector<88x1xf32> to vector<88x128xf32>
    %124 = arith.mulf %122, %123 : vector<88x128xf32>
    %c0_80 = arith.constant 0 : index
    %c0_81 = arith.constant 0 : index
    %125 = vector.load %arg17[%c0_80, %c0_81] : memref<56x88xf32, #tpu.memory_space<vmem>>, vector<56x88xf32>
    %cst_82 = arith.constant dense<0.000000e+00> : vector<56x128xf32>
    %126 = tpu.matmul %125, %124, %cst_82 {dimension_numbers = #tpu.dot_dimension_numbers<[1], [0], [0], [1], [0, 0, 1, 1], [], []>, precision = #tpu.contract_precision<fp32>} : vector<56x88xf32>, vector<88x128xf32>, vector<56x128xf32> -> vector<56x128xf32>
    %c0_83 = arith.constant 0 : index
    %c0_84 = arith.constant 0 : index
    %127 = vector.load %arg18[%c0_83, %c0_84] : memref<56x1xf32, #tpu.memory_space<vmem>>, vector<56x1xf32>
    %128 = vector.broadcast %127 : vector<56x1xf32> to vector<56x128xf32>
    %129 = arith.addf %126, %128 : vector<56x128xf32>
    %130 = arith.negf %129 : vector<56x128xf32>
    %131 = math.exp %130 : vector<56x128xf32>
    %cst_85 = arith.constant 1.000000e+00 : f32
    %132 = vector.broadcast %cst_85 : f32 to vector<56x128xf32>
    %133 = arith.addf %132, %131 : vector<56x128xf32>
    %134 = arith.divf %132, %133 : vector<56x128xf32>
    %135 = vector.broadcast %16 : vector<56x1xf32> to vector<56x128xf32>
    %136 = arith.mulf %87, %135 : vector<56x128xf32>
    %137 = vector.broadcast %15 : vector<56x1xf32> to vector<56x128xf32>
    %138 = arith.addf %136, %137 : vector<56x128xf32>
    %139 = arith.mulf %134, %108 : vector<56x128xf32>
    %cst_86 = arith.constant 1.000000e+00 : f32
    %140 = vector.broadcast %cst_86 : f32 to vector<56x128xf32>
    %141 = arith.subf %140, %134 : vector<56x128xf32>
    %142 = arith.mulf %141, %138 : vector<56x128xf32>
    %143 = arith.addf %139, %142 : vector<56x128xf32>
    %144 = vector.broadcast %14 : vector<56x1xf32> to vector<56x128xf32>
    %145 = arith.mulf %144, %143 : vector<56x128xf32>
    %cst_87 = arith.constant 1.000000e+00 : f32
    %146 = vector.broadcast %cst_87 : f32 to vector<56x1xf32>
    %147 = arith.subf %146, %14 : vector<56x1xf32>
    %148 = vector.broadcast %147 : vector<56x1xf32> to vector<56x128xf32>
    %149 = arith.mulf %148, %108 : vector<56x128xf32>
    %150 = arith.addf %145, %149 : vector<56x128xf32>
    %151 = vector.broadcast %8 : vector<1x128xf32> to vector<56x128xf32>
    %152 = arith.mulf %150, %151 : vector<56x128xf32>
    %cst_88 = arith.constant dense<0.000000e+00> : vector<56xf32>
    %153 = vector.multi_reduction <add>, %152, %cst_88 [1] : vector<56x128xf32> to vector<56xf32>
    %154 = vector.shape_cast %153 : vector<56xf32> to vector<56x1xf32>
    %c112 = arith.constant 112 : index
    %c0_89 = arith.constant 0 : index
    %155 = vector.load %arg3[%c112, %c0_89] : memref<168x128xf32, #tpu.memory_space<vmem>>, vector<56x128xf32>
    %cst_90 = arith.constant 1.000000e+00 : f32
    %156 = vector.broadcast %cst_90 : f32 to vector<56x128xf32>
    %157 = arith.subf %156, %134 : vector<56x128xf32>
    %158 = arith.mulf %108, %157 : vector<56x128xf32>
    %159 = arith.mulf %155, %40 : vector<56x128xf32>
    %160 = arith.addf %159, %40 : vector<56x128xf32>
    %161 = arith.mulf %134, %160 : vector<56x128xf32>
    %162 = arith.addf %158, %161 : vector<56x128xf32>
    %c0_91 = arith.constant 0 : index
    %c0_92 = arith.constant 0 : index
    %163 = vector.load %arg19[%c0_91, %c0_92] : memref<3x3xf32, #tpu.memory_space<vmem>>, vector<3x3xf32>
    %cst_93 = arith.constant dense<0.000000e+00> : vector<3x128xf32>
    %164 = tpu.matmul %163, %18, %cst_93 {dimension_numbers = #tpu.dot_dimension_numbers<[1], [0], [0], [1], [0, 0, 1, 1], [], []>, precision = #tpu.contract_precision<fp32>} : vector<3x3xf32>, vector<3x128xf32>, vector<3x128xf32> -> vector<3x128xf32>
    %c0_94 = arith.constant 0 : index
    %c0_95 = arith.constant 0 : index
    %165 = vector.load %arg20[%c0_94, %c0_95] : memref<3x56xf32, #tpu.memory_space<vmem>>, vector<3x56xf32>
    %cst_96 = arith.constant dense<0.000000e+00> : vector<3x128xf32>
    %166 = tpu.matmul %165, %162, %cst_96 {dimension_numbers = #tpu.dot_dimension_numbers<[1], [0], [0], [1], [0, 0, 1, 1], [], []>, precision = #tpu.contract_precision<fp32>} : vector<3x56xf32>, vector<56x128xf32>, vector<3x128xf32> -> vector<3x128xf32>
    %167 = arith.addf %164, %166 : vector<3x128xf32>
    %c0_97 = arith.constant 0 : index
    %c0_98 = arith.constant 0 : index
    %168 = vector.load %arg21[%c0_97, %c0_98] : memref<3x1xf32, #tpu.memory_space<vmem>>, vector<3x1xf32>
    %169 = vector.broadcast %168 : vector<3x1xf32> to vector<3x128xf32>
    %170 = arith.addf %167, %169 : vector<3x128xf32>
    %c0_99 = arith.constant 0 : index
    %c0_100 = arith.constant 0 : index
    %171 = vector.load %arg24[%c0_99, %c0_100] : memref<3x128xf32, #tpu.memory_space<vmem>>, vector<3x128xf32>
    tpu.vector_store %arg24[%c0_99, %c0_100], %170 {strides = array<i32>} : memref<3x128xf32, #tpu.memory_space<vmem>>, vector<3x128xf32>,
    %c0_101 = arith.constant 0 : index
    %c0_102 = arith.constant 0 : index
    %172 = vector.load %arg22[%c0_101, %c0_102] : memref<3x56xf32, #tpu.memory_space<vmem>>, vector<3x56xf32>
    %cst_103 = arith.constant dense<0.000000e+00> : vector<3x128xf32>
    %173 = tpu.matmul %172, %134, %cst_103 {dimension_numbers = #tpu.dot_dimension_numbers<[1], [0], [0], [1], [0, 0, 1, 1], [], []>, precision = #tpu.contract_precision<fp32>} : vector<3x56xf32>, vector<56x128xf32>, vector<3x128xf32> -> vector<3x128xf32>
    %c0_104 = arith.constant 0 : index
    %c0_105 = arith.constant 0 : index
    %174 = vector.load %arg23[%c0_104, %c0_105] : memref<3x1xf32, #tpu.memory_space<vmem>>, vector<3x1xf32>
    %175 = vector.broadcast %174 : vector<3x1xf32> to vector<3x128xf32>
    %176 = arith.addf %173, %175 : vector<3x128xf32>
    %177 = arith.negf %176 : vector<3x128xf32>
    %178 = math.exp %177 : vector<3x128xf32>
    %cst_106 = arith.constant 1.000000e+00 : f32
    %179 = vector.broadcast %cst_106 : f32 to vector<3x128xf32>
    %180 = arith.addf %179, %178 : vector<3x128xf32>
    %181 = arith.divf %179, %180 : vector<3x128xf32>
    %c0_107 = arith.constant 0 : index
    %c0_108 = arith.constant 0 : index
    %182 = vector.load %arg25[%c0_107, %c0_108] : memref<3x128xf32, #tpu.memory_space<vmem>>, vector<3x128xf32>
    tpu.vector_store %arg25[%c0_107, %c0_108], %181 {strides = array<i32>} : memref<3x128xf32, #tpu.memory_space<vmem>>, vector<3x128xf32>,
    %c0_109 = arith.constant 0 : index
    %c0_110 = arith.constant 0 : index
    %c0_111 = arith.constant 0 : index
    %183 = vector.load %arg26[%c0_109, %c0_110, %c0_111] : memref<1x288x1xf32, #tpu.memory_space<vmem>>, vector<1x56x1xf32>
    %184 = vector.shape_cast %183 : vector<1x56x1xf32> to vector<56x1xf32>
    %185 = vector.shape_cast %86 : vector<56x1xf32> to vector<1x56x1xf32>
    tpu.vector_store %arg26[%c0_109, %c0_110, %c0_111], %185 {strides = array<i32>} : memref<1x288x1xf32, #tpu.memory_space<vmem>>, vector<1x56x1xf32>,
    %c0_112 = arith.constant 0 : index
    %c56_113 = arith.constant 56 : index
    %c0_114 = arith.constant 0 : index
    %186 = vector.load %arg26[%c0_112, %c56_113, %c0_114] : memref<1x288x1xf32, #tpu.memory_space<vmem>>, vector<1x56x1xf32>
    %187 = vector.shape_cast %186 : vector<1x56x1xf32> to vector<56x1xf32>
    %188 = vector.shape_cast %154 : vector<56x1xf32> to vector<1x56x1xf32>
    tpu.vector_store %arg26[%c0_112, %c56_113, %c0_114], %188 {strides = array<i32>} : memref<1x288x1xf32, #tpu.memory_space<vmem>>, vector<1x56x1xf32>,
    %c0_115 = arith.constant 0 : index
    %c112_116 = arith.constant 112 : index
    %c0_117 = arith.constant 0 : index
    %189 = vector.load %arg26[%c0_115, %c112_116, %c0_117] : memref<1x288x1xf32, #tpu.memory_space<vmem>>, vector<1x88x1xf32>
    %190 = vector.shape_cast %189 : vector<1x88x1xf32> to vector<88x1xf32>
    %191 = vector.shape_cast %51 : vector<88x1xf32> to vector<1x88x1xf32>
    tpu.vector_store %arg26[%c0_115, %c112_116, %c0_117], %191 {strides = array<i32>} : memref<1x288x1xf32, #tpu.memory_space<vmem>>, vector<1x88x1xf32>,
    %c0_118 = arith.constant 0 : index
    %c200 = arith.constant 200 : index
    %c0_119 = arith.constant 0 : index
    %192 = vector.load %arg26[%c0_118, %c200, %c0_119] : memref<1x288x1xf32, #tpu.memory_space<vmem>>, vector<1x88x1xf32>
    %193 = vector.shape_cast %192 : vector<1x88x1xf32> to vector<88x1xf32>
    %194 = vector.shape_cast %119 : vector<88x1xf32> to vector<1x88x1xf32>
    tpu.vector_store %arg26[%c0_118, %c200, %c0_119], %194 {strides = array<i32>} : memref<1x288x1xf32, #tpu.memory_space<vmem>>, vector<1x88x1xf32>,
    return
  }
  func.func @transform_0(%arg0: i32) -> (i32, i32) {
    %c0_i32 = arith.constant 0 : i32
    %c0_i32_0 = arith.constant 0 : i32
    return %c0_i32, %arg0 : i32, i32
  }
  func.func @transform_1(%arg0: i32) -> (i32, i32) {
    %c0_i32 = arith.constant 0 : i32
    %c0_i32_0 = arith.constant 0 : i32
    return %c0_i32, %arg0 : i32, i32
  }
  func.func @transform_2(%arg0: i32) -> (i32, i32) {
    %c0_i32 = arith.constant 0 : i32
    %c0_i32_0 = arith.constant 0 : i32
    return %c0_i32, %arg0 : i32, i32
  }
  func.func @transform_3(%arg0: i32) -> (i32, i32) {
    %c0_i32 = arith.constant 0 : i32
    %c0_i32_0 = arith.constant 0 : i32
    %c0_i32_1 = arith.constant 0 : i32
    return %c0_i32, %c0_i32_0 : i32, i32
  }
  func.func @transform_4(%arg0: i32) -> (i32, i32) {
    %c0_i32 = arith.constant 0 : i32
    %c0_i32_0 = arith.constant 0 : i32
    %c0_i32_1 = arith.constant 0 : i32
    return %c0_i32, %c0_i32_0 : i32, i32
  }
  func.func @transform_5(%arg0: i32) -> (i32, i32) {
    %c0_i32 = arith.constant 0 : i32
    %c0_i32_0 = arith.constant 0 : i32
    %c0_i32_1 = arith.constant 0 : i32
    return %c0_i32, %c0_i32_0 : i32, i32
  }
  func.func @transform_6(%arg0: i32) -> (i32, i32) {
    %c0_i32 = arith.constant 0 : i32
    %c0_i32_0 = arith.constant 0 : i32
    %c0_i32_1 = arith.constant 0 : i32
    return %c0_i32, %c0_i32_0 : i32, i32
  }
  func.func @transform_7(%arg0: i32) -> (i32, i32) {
    %c0_i32 = arith.constant 0 : i32
    %c0_i32_0 = arith.constant 0 : i32
    %c0_i32_1 = arith.constant 0 : i32
    return %c0_i32, %c0_i32_0 : i32, i32
  }
  func.func @transform_8(%arg0: i32) -> (i32, i32) {
    %c0_i32 = arith.constant 0 : i32
    %c0_i32_0 = arith.constant 0 : i32
    %c0_i32_1 = arith.constant 0 : i32
    return %c0_i32, %c0_i32_0 : i32, i32
  }
  func.func @transform_9(%arg0: i32) -> (i32, i32) {
    %c0_i32 = arith.constant 0 : i32
    %c0_i32_0 = arith.constant 0 : i32
    %c0_i32_1 = arith.constant 0 : i32
    return %c0_i32, %c0_i32_0 : i32, i32
  }
  func.func @transform_10(%arg0: i32) -> (i32, i32) {
    %c0_i32 = arith.constant 0 : i32
    %c0_i32_0 = arith.constant 0 : i32
    %c0_i32_1 = arith.constant 0 : i32
    return %c0_i32, %c0_i32_0 : i32, i32
  }
  func.func @transform_11(%arg0: i32) -> (i32, i32) {
    %c0_i32 = arith.constant 0 : i32
    %c0_i32_0 = arith.constant 0 : i32
    %c0_i32_1 = arith.constant 0 : i32
    return %c0_i32, %c0_i32_0 : i32, i32
  }
  func.func @transform_12(%arg0: i32) -> (i32, i32) {
    %c0_i32 = arith.constant 0 : i32
    %c0_i32_0 = arith.constant 0 : i32
    %c0_i32_1 = arith.constant 0 : i32
    return %c0_i32, %c0_i32_0 : i32, i32
  }
  func.func @transform_13(%arg0: i32) -> (i32, i32) {
    %c0_i32 = arith.constant 0 : i32
    %c0_i32_0 = arith.constant 0 : i32
    %c0_i32_1 = arith.constant 0 : i32
    return %c0_i32, %c0_i32_0 : i32, i32
  }
  func.func @transform_14(%arg0: i32) -> (i32, i32) {
    %c0_i32 = arith.constant 0 : i32
    %c0_i32_0 = arith.constant 0 : i32
    %c0_i32_1 = arith.constant 0 : i32
    return %c0_i32, %c0_i32_0 : i32, i32
  }
  func.func @transform_15(%arg0: i32) -> (i32, i32) {
    %c0_i32 = arith.constant 0 : i32
    %c0_i32_0 = arith.constant 0 : i32
    %c0_i32_1 = arith.constant 0 : i32
    return %c0_i32, %c0_i32_0 : i32, i32
  }
  func.func @transform_16(%arg0: i32) -> (i32, i32) {
    %c0_i32 = arith.constant 0 : i32
    %c0_i32_0 = arith.constant 0 : i32
    %c0_i32_1 = arith.constant 0 : i32
    return %c0_i32, %c0_i32_0 : i32, i32
  }
  func.func @transform_17(%arg0: i32) -> (i32, i32) {
    %c0_i32 = arith.constant 0 : i32
    %c0_i32_0 = arith.constant 0 : i32
    %c0_i32_1 = arith.constant 0 : i32
    return %c0_i32, %c0_i32_0 : i32, i32
  }
  func.func @transform_18(%arg0: i32) -> (i32, i32) {
    %c0_i32 = arith.constant 0 : i32
    %c0_i32_0 = arith.constant 0 : i32
    %c0_i32_1 = arith.constant 0 : i32
    return %c0_i32, %c0_i32_0 : i32, i32
  }
  func.func @transform_19(%arg0: i32) -> (i32, i32) {
    %c0_i32 = arith.constant 0 : i32
    %c0_i32_0 = arith.constant 0 : i32
    %c0_i32_1 = arith.constant 0 : i32
    return %c0_i32, %c0_i32_0 : i32, i32
  }
  func.func @transform_20(%arg0: i32) -> (i32, i32) {
    %c0_i32 = arith.constant 0 : i32
    %c0_i32_0 = arith.constant 0 : i32
    %c0_i32_1 = arith.constant 0 : i32
    return %c0_i32, %c0_i32_0 : i32, i32
  }
  func.func @transform_21(%arg0: i32) -> (i32, i32) {
    %c0_i32 = arith.constant 0 : i32
    %c0_i32_0 = arith.constant 0 : i32
    %c0_i32_1 = arith.constant 0 : i32
    return %c0_i32, %c0_i32_0 : i32, i32
  }
  func.func @transform_22(%arg0: i32) -> (i32, i32) {
    %c0_i32 = arith.constant 0 : i32
    %c0_i32_0 = arith.constant 0 : i32
    %c0_i32_1 = arith.constant 0 : i32
    return %c0_i32, %c0_i32_0 : i32, i32
  }
  func.func @transform_23(%arg0: i32) -> (i32, i32) {
    %c0_i32 = arith.constant 0 : i32
    %c0_i32_0 = arith.constant 0 : i32
    return %c0_i32, %arg0 : i32, i32
  }
  func.func @transform_24(%arg0: i32) -> (i32, i32) {
    %c0_i32 = arith.constant 0 : i32
    %c0_i32_0 = arith.constant 0 : i32
    return %c0_i32, %arg0 : i32, i32
  }
  func.func @transform_25(%arg0: i32) -> (i32, i32, i32) {
    %c0_i32 = arith.constant 0 : i32
    %c0_i32_0 = arith.constant 0 : i32
    %c0_i32_1 = arith.constant 0 : i32
    return %arg0, %c0_i32, %c0_i32_0 : i32, i32, i32
  }
}

</mosaic_0001>

<llo_original>
// kernel: tpu_custom_call.1
$region0: #{tpu_custom_call.1}
  #allocation0 [shape = 'u32[]', space=smem, size = 0x4, offset = 0x4, fixed_abs, tag = 'smem constant byte address 0x4 - core index']
  #allocation1 [shape = 'u32[72,128]{1,0:T(1,128)}', space=vmem, size = 0x9000, scoped, tag = 'internal scratch']
  %s0 = inlined_call_operand.vmem [shape: f32[3,256], index: 0, kind: input, shape index: {}]
  %s1 = inlined_call_operand.vmem [shape: f32[3,256], index: 1, kind: input, shape index: {}]
  %s2 = inlined_call_operand.hbm [shape: f32[168,256], index: 2, kind: input, shape index: {}]
  %s3 = inlined_call_operand.vmem [shape: f32[8,3], index: 3, kind: input, shape index: {}]
  %s4 = inlined_call_operand.vmem [shape: f32[8,1], index: 4, kind: input, shape index: {}]
  %s5 = inlined_call_operand.vmem [shape: f32[24,8], index: 5, kind: input, shape index: {}]
  %s6 = inlined_call_operand.vmem [shape: f32[24,1], index: 6, kind: input, shape index: {}]
  %s7 = inlined_call_operand.vmem [shape: f32[56,24], index: 7, kind: input, shape index: {}]
  %s8 = inlined_call_operand.vmem [shape: f32[56,1], index: 8, kind: input, shape index: {}]
  %s9 = inlined_call_operand.vmem [shape: f32[88,56], index: 9, kind: input, shape index: {}]
  %s10 = inlined_call_operand.vmem [shape: f32[88,1], index: 10, kind: input, shape index: {}]
  %s11 = inlined_call_operand.vmem [shape: f32[88,1], index: 11, kind: input, shape index: {}]
  %s12 = inlined_call_operand.vmem [shape: f32[88,1], index: 12, kind: input, shape index: {}]
  %s13 = inlined_call_operand.vmem [shape: f32[56,1], index: 13, kind: input, shape index: {}]
  %s14 = inlined_call_operand.vmem [shape: f32[56,1], index: 14, kind: input, shape index: {}]
  %s15 = inlined_call_operand.vmem [shape: f32[56,1], index: 15, kind: input, shape index: {}]
  %s16 = inlined_call_operand.vmem [shape: f32[56,88], index: 16, kind: input, shape index: {}]
  %s17 = inlined_call_operand.vmem [shape: f32[56,1], index: 17, kind: input, shape index: {}]
  %s18 = inlined_call_operand.vmem [shape: f32[3,3], index: 18, kind: input, shape index: {}]
  %s19 = inlined_call_operand.vmem [shape: f32[3,56], index: 19, kind: input, shape index: {}]
  %s20 = inlined_call_operand.vmem [shape: f32[3,1], index: 20, kind: input, shape index: {}]
  %s21 = inlined_call_operand.vmem [shape: f32[3,56], index: 21, kind: input, shape index: {}]
  %s22 = inlined_call_operand.vmem [shape: f32[3,1], index: 22, kind: input, shape index: {}]
  %s23 = inlined_call_operand.hbm [shape: f32[3,256], index: 23, kind: output, shape index: {0}]
  %s24 = inlined_call_operand.hbm [shape: f32[3,256], index: 24, kind: output, shape index: {1}]
  %s25 = inlined_call_operand.vmem [shape: f32[2,288,1], index: 25, kind: output, shape index: {2}]
  %26 = xla_tuple %s23, %s24, %s25
  %s27 = sld [smem:[#allocation0]]
  $region145: #{tpu_custom_call.1} parent=0
    _
  %s29 = ssub.s32 1, %s27
  %s30 = scalar_select 0, %s29, %s27
  $region1: #{tpu_custom_call.1} parent=0
    #allocation2 [shape = 'u8[172032]{0}', space=vmem, size = 0x2a000, scoped, tag = 'input window, operand 2']
    #allocation3 [shape = 's32[2]{0}', space=sflag, size = 0x8, scoped, tag = 'scoped memory for tpu_custom_call.1']
    #allocation4 [shape = 's32[2]{0}', space=sflag, size = 0x8, scoped, tag = 'scoped memory for tpu_custom_call.1']
    #allocation5 [shape = 'u8[4096]{0}', space=vmem, size = 0x1000, scoped, tag = 'output window, operand 0']
    #allocation6 [shape = 'u8[4096]{0}', space=vmem, size = 0x1000, scoped, tag = 'output window, operand 1']
    #allocation7 [shape = 's32[2]{0}', space=sflag, size = 0x8, scoped, tag = 'scoped memory for tpu_custom_call.1']
    %31 = vsyncpa [#allocation3], 0
    %s32 = scalar_lea.sflag [#allocation3], 1
    %33 = vsyncpa %s32, 0
    %34 = vsyncpa [#allocation4], 0
    %s35 = scalar_lea.sflag [#allocation4], 1
    %36 = vsyncpa %s35, 0
    %37 = vsyncpa [#allocation7], 0
    %s38 = scalar_lea.sflag [#allocation7], 1
    %39 = vsyncpa %s38, 0
    loop: start=0, step=1, limit=4
    $region2: #{tpu_custom_call.1} parent=1 // loop_pre_header
      _
    $region3: #{tpu_custom_call.1} parent=1 // loop_header
      %s41 = sphi 0, %s45
      %p42 = scmp.ge.s32.totalorder %s41, 4
      %s51 = sphi 0, %s53
      %s54 = sphi 0, %s51
      %s55 = sphi 0, %s54
      %s71 = sphi 0, %s55
      %s77 = sphi 0, %s79
      %s80 = sphi 0, %s77
      %s81 = sphi 0, %s80
      %s97 = sphi 0, %s81
      %s103 = sphi 0, %s105
      %s106 = sphi 0, %s103
      %s107 = sphi 0, %s106
      %s123 = sphi 0, %s107
      %s127 = sphi 0, %s127
      %s129 = sphi 0, %s127
      %s130 = sphi 0, %s129
      %s144 = sphi 0, %s130
      %s148 = sphi 0, %s148
      %s150 = sphi 0, %s148
      %s151 = sphi 0, %s150
      %s165 = sphi 0, %s151
      %s169 = sphi 0, %s169
      %s171 = sphi 0, %s169
      %s172 = sphi 0, %s171
      %s186 = sphi 0, %s172
      %s190 = sphi 0, %s190
      %s192 = sphi 0, %s190
      %s193 = sphi 0, %s192
      %s207 = sphi 0, %s193
      %s211 = sphi 0, %s211
      %s213 = sphi 0, %s211
      %s214 = sphi 0, %s213
      %s228 = sphi 0, %s214
      %s232 = sphi 0, %s232
      %s234 = sphi 0, %s232
      %s235 = sphi 0, %s234
      %s249 = sphi 0, %s235
      %s253 = sphi 0, %s253
      %s255 = sphi 0, %s253
      %s256 = sphi 0, %s255
      %s270 = sphi 0, %s256
      %s274 = sphi 0, %s274
      %s276 = sphi 0, %s274
      %s277 = sphi 0, %s276
      %s291 = sphi 0, %s277
      %s295 = sphi 0, %s295
      %s297 = sphi 0, %s295
      %s298 = sphi 0, %s297
      %s312 = sphi 0, %s298
      %s316 = sphi 0, %s316
      %s318 = sphi 0, %s316
      %s319 = sphi 0, %s318
      %s333 = sphi 0, %s319
      %s337 = sphi 0, %s337
      %s339 = sphi 0, %s337
      %s340 = sphi 0, %s339
      %s354 = sphi 0, %s340
      %s358 = sphi 0, %s358
      %s360 = sphi 0, %s358
      %s361 = sphi 0, %s360
      %s375 = sphi 0, %s361
      %s379 = sphi 0, %s379
      %s381 = sphi 0, %s379
      %s382 = sphi 0, %s381
      %s396 = sphi 0, %s382
      %s400 = sphi 0, %s400
      %s402 = sphi 0, %s400
      %s403 = sphi 0, %s402
      %s417 = sphi 0, %s403
      %s421 = sphi 0, %s421
      %s423 = sphi 0, %s421
      %s424 = sphi 0, %s423
      %s438 = sphi 0, %s424
      %s442 = sphi 0, %s442
      %s444 = sphi 0, %s442
      %s445 = sphi 0, %s444
      %s459 = sphi 0, %s445
      %s463 = sphi 0, %s463
      %s465 = sphi 0, %s463
      %s466 = sphi 0, %s465
      %s480 = sphi 0, %s466
      %s484 = sphi 0, %s484
      %s486 = sphi 0, %s484
      %s487 = sphi 0, %s486
      %s501 = sphi 0, %s487
      %s505 = sphi 0, %s505
      %s507 = sphi 0, %s505
      %s508 = sphi 0, %s507
      %s522 = sphi 0, %s508
      %s526 = sphi 0, %s526
      %s528 = sphi 0, %s526
      %s529 = sphi 0, %s528
      %s543 = sphi 0, %s529
      %s549 = sphi 0, %s551
      %s552 = sphi 0, %s549
      %s553 = sphi 0, %s552
      %s569 = sphi 0, %s553
      %s575 = sphi 0, %s577
      %s578 = sphi 0, %s575
      %s579 = sphi 0, %s578
      %s595 = sphi 0, %s579
      %s601 = sphi 0, %s603
      %s604 = sphi 0, %s601
      %s605 = sphi 0, %s604
      %s621 = sphi 0, %s605
    $region4: #{tpu_custom_call.1} parent=1 // loop_header_branch
      %44 = sbr.rel (%p42) target = $region8
    $region5: #{tpu_custom_call.1} parent=1 // loop_body
      %s46 = ssub.s32 %s41, 1
      %s47 = ssub.s32 %s41, 2
      %s48 = sadd.s32 %s41, 1
      %s49 = ssub.s32 %s41, %s48
      %p50 = scmp.eq.s32.totalorder %s49, 0
      %s52 = sadd.s32 %s51, 1
      %s53 = scalar_select %p50, %s51, %s52
      %p56 = pneg %p50
      %p57 = scmp.eq.s32.totalorder %s41, 1
      %p58 = por %p56, %p57
      %p59 = scmp.ne.s32.totalorder %s51, %s54
      %p60 = scmp.eq.s32.totalorder %s41, 0
      %p61 = por %p59, %p60
      %p62 = scmp.ne.s32.totalorder %s51, %s54
      %p63 = scmp.eq.s32.totalorder %s46, 1
      %p64 = por %p62, %p63
      %p65 = scmp.ne.s32.totalorder %s54, %s55
      %p66 = scmp.eq.s32.totalorder %s46, 0
      %p67 = por %p65, %p66
      %p68 = scmp.ne.s32.totalorder %s54, %s55
      %p69 = scmp.eq.s32.totalorder %s47, 1
      %p70 = por %p68, %p69
      %p72 = scmp.ne.s32.totalorder %s55, %s71
      %p73 = scmp.eq.s32.totalorder %s47, 0
      %p74 = por %p72, %p73
      %s75 = ssub.s32 %s41, %s48
      %p76 = scmp.eq.s32.totalorder %s75, 0
      %s78 = sadd.s32 %s77, 1
      %s79 = scalar_select %p76, %s77, %s78
      %p82 = pneg %p76
      %p83 = scmp.eq.s32.totalorder %s41, 1
      %p84 = por %p82, %p83
      %p85 = scmp.ne.s32.totalorder %s77, %s80
      %p86 = scmp.eq.s32.totalorder %s41, 0
      %p87 = por %p85, %p86
      %p88 = scmp.ne.s32.totalorder %s77, %s80
      %p89 = scmp.eq.s32.totalorder %s46, 1
      %p90 = por %p88, %p89
      %p91 = scmp.ne.s32.totalorder %s80, %s81
      %p92 = scmp.eq.s32.totalorder %s46, 0
      %p93 = por %p91, %p92
      %p94 = scmp.ne.s32.totalorder %s80, %s81
      %p95 = scmp.eq.s32.totalorder %s47, 1
      %p96 = por %p94, %p95
      %p98 = scmp.ne.s32.totalorder %s81, %s97
      %p99 = scmp.eq.s32.totalorder %s47, 0
      %p100 = por %p98, %p99
      %s101 = ssub.s32 %s41, %s48
      %p102 = scmp.eq.s32.totalorder %s101, 0
      %s104 = sadd.s32 %s103, 1
      %s105 = scalar_select %p102, %s103, %s104
      %p108 = pneg %p102
      %p109 = scmp.eq.s32.totalorder %s41, 1
      %p110 = por %p108, %p109
      %p111 = scmp.ne.s32.totalorder %s103, %s106
      %p112 = scmp.eq.s32.totalorder %s41, 0
      %p113 = por %p111, %p112
      %p114 = scmp.ne.s32.totalorder %s103, %s106
      %p115 = scmp.eq.s32.totalorder %s46, 1
      %p116 = por %p114, %p115
      %p117 = scmp.ne.s32.totalorder %s106, %s107
      %p118 = scmp.eq.s32.totalorder %s46, 0
      %p119 = por %p117, %p118
      %p120 = scmp.ne.s32.totalorder %s106, %s107
      %p121 = scmp.eq.s32.totalorder %s47, 1
      %p122 = por %p120, %p121
      %p124 = scmp.ne.s32.totalorder %s107, %s123
      %p125 = scmp.eq.s32.totalorder %s47, 0
      %p126 = por %p124, %p125
      %s128 = sadd.s32 %s127, 1
      %p131 = scmp.eq.s32.totalorder %s41, 1
      %p132 = scmp.ne.s32.totalorder %s127, %s129
      %p133 = scmp.eq.s32.totalorder %s41, 0
      %p134 = por %p132, %p133
      %p135 = scmp.ne.s32.totalorder %s127, %s129
      %p136 = scmp.eq.s32.totalorder %s46, 1
      %p137 = por %p135, %p136
      %p138 = scmp.ne.s32.totalorder %s129, %s130
      %p139 = scmp.eq.s32.totalorder %s46, 0
      %p140 = por %p138, %p139
      %p141 = scmp.ne.s32.totalorder %s129, %s130
      %p142 = scmp.eq.s32.totalorder %s47, 1
      %p143 = por %p141, %p142
      %p145 = scmp.ne.s32.totalorder %s130, %s144
      %p146 = scmp.eq.s32.totalorder %s47, 0
      %p147 = por %p145, %p146
      %s149 = sadd.s32 %s148, 1
      %p152 = scmp.eq.s32.totalorder %s41, 1
      %p153 = scmp.ne.s32.totalorder %s148, %s150
      %p154 = scmp.eq.s32.totalorder %s41, 0
      %p155 = por %p153, %p154
      %p156 = scmp.ne.s32.totalorder %s148, %s150
      %p157 = scmp.eq.s32.totalorder %s46, 1
      %p158 = por %p156, %p157
      %p159 = scmp.ne.s32.totalorder %s150, %s151
      %p160 = scmp.eq.s32.totalorder %s46, 0
      %p161 = por %p159, %p160
      %p162 = scmp.ne.s32.totalorder %s150, %s151
      %p163 = scmp.eq.s32.totalorder %s47, 1
      %p164 = por %p162, %p163
      %p166 = scmp.ne.s32.totalorder %s151, %s165
      %p167 = scmp.eq.s32.totalorder %s47, 0
      %p168 = por %p166, %p167
      %s170 = sadd.s32 %s169, 1
      %p173 = scmp.eq.s32.totalorder %s41, 1
      %p174 = scmp.ne.s32.totalorder %s169, %s171
      %p175 = scmp.eq.s32.totalorder %s41, 0
      %p176 = por %p174, %p175
      %p177 = scmp.ne.s32.totalorder %s169, %s171
      %p178 = scmp.eq.s32.totalorder %s46, 1
      %p179 = por %p177, %p178
      %p180 = scmp.ne.s32.totalorder %s171, %s172
      %p181 = scmp.eq.s32.totalorder %s46, 0
      %p182 = por %p180, %p181
      %p183 = scmp.ne.s32.totalorder %s171, %s172
      %p184 = scmp.eq.s32.totalorder %s47, 1
      %p185 = por %p183, %p184
      %p187 = scmp.ne.s32.totalorder %s172, %s186
      %p188 = scmp.eq.s32.totalorder %s47, 0
      %p189 = por %p187, %p188
      %s191 = sadd.s32 %s190, 1
      %p194 = scmp.eq.s32.totalorder %s41, 1
      %p195 = scmp.ne.s32.totalorder %s190, %s192
      %p196 = scmp.eq.s32.totalorder %s41, 0
      %p197 = por %p195, %p196
      %p198 = scmp.ne.s32.totalorder %s190, %s192
      %p199 = scmp.eq.s32.totalorder %s46, 1
      %p200 = por %p198, %p199
      %p201 = scmp.ne.s32.totalorder %s192, %s193
      %p202 = scmp.eq.s32.totalorder %s46, 0
      %p203 = por %p201, %p202
      %p204 = scmp.ne.s32.totalorder %s192, %s193
      %p205 = scmp.eq.s32.totalorder %s47, 1
      %p206 = por %p204, %p205
      %p208 = scmp.ne.s32.totalorder %s193, %s207
      %p209 = scmp.eq.s32.totalorder %s47, 0
      %p210 = por %p208, %p209
      %s212 = sadd.s32 %s211, 1
      %p215 = scmp.eq.s32.totalorder %s41, 1
      %p216 = scmp.ne.s32.totalorder %s211, %s213
      %p217 = scmp.eq.s32.totalorder %s41, 0
      %p218 = por %p216, %p217
      %p219 = scmp.ne.s32.totalorder %s211, %s213
      %p220 = scmp.eq.s32.totalorder %s46, 1
      %p221 = por %p219, %p220
      %p222 = scmp.ne.s32.totalorder %s213, %s214
      %p223 = scmp.eq.s32.totalorder %s46, 0
      %p224 = por %p222, %p223
      %p225 = scmp.ne.s32.totalorder %s213, %s214
      %p226 = scmp.eq.s32.totalorder %s47, 1
      %p227 = por %p225, %p226
      %p229 = scmp.ne.s32.totalorder %s214, %s228
      %p230 = scmp.eq.s32.totalorder %s47, 0
      %p231 = por %p229, %p230
      %s233 = sadd.s32 %s232, 1
      %p236 = scmp.eq.s32.totalorder %s41, 1
      %p237 = scmp.ne.s32.totalorder %s232, %s234
      %p238 = scmp.eq.s32.totalorder %s41, 0
      %p239 = por %p237, %p238
      %p240 = scmp.ne.s32.totalorder %s232, %s234
      %p241 = scmp.eq.s32.totalorder %s46, 1
      %p242 = por %p240, %p241
      %p243 = scmp.ne.s32.totalorder %s234, %s235
      %p244 = scmp.eq.s32.totalorder %s46, 0
      %p245 = por %p243, %p244
      %p246 = scmp.ne.s32.totalorder %s234, %s235
      %p247 = scmp.eq.s32.totalorder %s47, 1
      %p248 = por %p246, %p247
      %p250 = scmp.ne.s32.totalorder %s235, %s249
      %p251 = scmp.eq.s32.totalorder %s47, 0
      %p252 = por %p250, %p251
      %s254 = sadd.s32 %s253, 1
      %p257 = scmp.eq.s32.totalorder %s41, 1
      %p258 = scmp.ne.s32.totalorder %s253, %s255
      %p259 = scmp.eq.s32.totalorder %s41, 0
      %p260 = por %p258, %p259
      %p261 = scmp.ne.s32.totalorder %s253, %s255
      %p262 = scmp.eq.s32.totalorder %s46, 1
      %p263 = por %p261, %p262
      %p264 = scmp.ne.s32.totalorder %s255, %s256
      %p265 = scmp.eq.s32.totalorder %s46, 0
      %p266 = por %p264, %p265
      %p267 = scmp.ne.s32.totalorder %s255, %s256
      %p268 = scmp.eq.s32.totalorder %s47, 1
      %p269 = por %p267, %p268
      %p271 = scmp.ne.s32.totalorder %s256, %s270
      %p272 = scmp.eq.s32.totalorder %s47, 0
      %p273 = por %p271, %p272
      %s275 = sadd.s32 %s274, 1
      %p278 = scmp.eq.s32.totalorder %s41, 1
      %p279 = scmp.ne.s32.totalorder %s274, %s276
      %p280 = scmp.eq.s32.totalorder %s41, 0
      %p281 = por %p279, %p280
      %p282 = scmp.ne.s32.totalorder %s274, %s276
      %p283 = scmp.eq.s32.totalorder %s46, 1
      %p284 = por %p282, %p283
      %p285 = scmp.ne.s32.totalorder %s276, %s277
      %p286 = scmp.eq.s32.totalorder %s46, 0
      %p287 = por %p285, %p286
      %p288 = scmp.ne.s32.totalorder %s276, %s277
      %p289 = scmp.eq.s32.totalorder %s47, 1
      %p290 = por %p288, %p289
      %p292 = scmp.ne.s32.totalorder %s277, %s291
      %p293 = scmp.eq.s32.totalorder %s47, 0
      %p294 = por %p292, %p293
      %s296 = sadd.s32 %s295, 1
      %p299 = scmp.eq.s32.totalorder %s41, 1
      %p300 = scmp.ne.s32.totalorder %s295, %s297
      %p301 = scmp.eq.s32.totalorder %s41, 0
      %p302 = por %p300, %p301
      %p303 = scmp.ne.s32.totalorder %s295, %s297
      %p304 = scmp.eq.s32.totalorder %s46, 1
      %p305 = por %p303, %p304
      %p306 = scmp.ne.s32.totalorder %s297, %s298
      %p307 = scmp.eq.s32.totalorder %s46, 0
      %p308 = por %p306, %p307
      %p309 = scmp.ne.s32.totalorder %s297, %s298
      %p310 = scmp.eq.s32.totalorder %s47, 1
      %p311 = por %p309, %p310
      %p313 = scmp.ne.s32.totalorder %s298, %s312
      %p314 = scmp.eq.s32.totalorder %s47, 0
      %p315 = por %p313, %p314
      %s317 = sadd.s32 %s316, 1
      %p320 = scmp.eq.s32.totalorder %s41, 1
      %p321 = scmp.ne.s32.totalorder %s316, %s318
      %p322 = scmp.eq.s32.totalorder %s41, 0
      %p323 = por %p321, %p322
      %p324 = scmp.ne.s32.totalorder %s316, %s318
      %p325 = scmp.eq.s32.totalorder %s46, 1
      %p326 = por %p324, %p325
      %p327 = scmp.ne.s32.totalorder %s318, %s319
      %p328 = scmp.eq.s32.totalorder %s46, 0
      %p329 = por %p327, %p328
      %p330 = scmp.ne.s32.totalorder %s318, %s319
      %p331 = scmp.eq.s32.totalorder %s47, 1
      %p332 = por %p330, %p331
      %p334 = scmp.ne.s32.totalorder %s319, %s333
      %p335 = scmp.eq.s32.totalorder %s47, 0
      %p336 = por %p334, %p335
      %s338 = sadd.s32 %s337, 1
      %p341 = scmp.eq.s32.totalorder %s41, 1
      %p342 = scmp.ne.s32.totalorder %s337, %s339
      %p343 = scmp.eq.s32.totalorder %s41, 0
      %p344 = por %p342, %p343
      %p345 = scmp.ne.s32.totalorder %s337, %s339
      %p346 = scmp.eq.s32.totalorder %s46, 1
      %p347 = por %p345, %p346
      %p348 = scmp.ne.s32.totalorder %s339, %s340
      %p349 = scmp.eq.s32.totalorder %s46, 0
      %p350 = por %p348, %p349
      %p351 = scmp.ne.s32.totalorder %s339, %s340
      %p352 = scmp.eq.s32.totalorder %s47, 1
      %p353 = por %p351, %p352
      %p355 = scmp.ne.s32.totalorder %s340, %s354
      %p356 = scmp.eq.s32.totalorder %s47, 0
      %p357 = por %p355, %p356
      %s359 = sadd.s32 %s358, 1
      %p362 = scmp.eq.s32.totalorder %s41, 1
      %p363 = scmp.ne.s32.totalorder %s358, %s360
      %p364 = scmp.eq.s32.totalorder %s41, 0
      %p365 = por %p363, %p364
      %p366 = scmp.ne.s32.totalorder %s358, %s360
      %p367 = scmp.eq.s32.totalorder %s46, 1
      %p368 = por %p366, %p367
      %p369 = scmp.ne.s32.totalorder %s360, %s361
      %p370 = scmp.eq.s32.totalorder %s46, 0
      %p371 = por %p369, %p370
      %p372 = scmp.ne.s32.totalorder %s360, %s361
      %p373 = scmp.eq.s32.totalorder %s47, 1
      %p374 = por %p372, %p373
      %p376 = scmp.ne.s32.totalorder %s361, %s375
      %p377 = scmp.eq.s32.totalorder %s47, 0
      %p378 = por %p376, %p377
      %s380 = sadd.s32 %s379, 1
      %p383 = scmp.eq.s32.totalorder %s41, 1
      %p384 = scmp.ne.s32.totalorder %s379, %s381
      %p385 = scmp.eq.s32.totalorder %s41, 0
      %p386 = por %p384, %p385
      %p387 = scmp.ne.s32.totalorder %s379, %s381
      %p388 = scmp.eq.s32.totalorder %s46, 1
      %p389 = por %p387, %p388
      %p390 = scmp.ne.s32.totalorder %s381, %s382
      %p391 = scmp.eq.s32.totalorder %s46, 0
      %p392 = por %p390, %p391
      %p393 = scmp.ne.s32.totalorder %s381, %s382
      %p394 = scmp.eq.s32.totalorder %s47, 1
      %p395 = por %p393, %p394
      %p397 = scmp.ne.s32.totalorder %s382, %s396
      %p398 = scmp.eq.s32.totalorder %s47, 0
      %p399 = por %p397, %p398
      %s401 = sadd.s32 %s400, 1
      %p404 = scmp.eq.s32.totalorder %s41, 1
      %p405 = scmp.ne.s32.totalorder %s400, %s402
      %p406 = scmp.eq.s32.totalorder %s41, 0
      %p407 = por %p405, %p406
      %p408 = scmp.ne.s32.totalorder %s400, %s402
      %p409 = scmp.eq.s32.totalorder %s46, 1
      %p410 = por %p408, %p409
      %p411 = scmp.ne.s32.totalorder %s402, %s403
      %p412 = scmp.eq.s32.totalorder %s46, 0
      %p413 = por %p411, %p412
      %p414 = scmp.ne.s32.totalorder %s402, %s403
      %p415 = scmp.eq.s32.totalorder %s47, 1
      %p416 = por %p414, %p415
      %p418 = scmp.ne.s32.totalorder %s403, %s417
      %p419 = scmp.eq.s32.totalorder %s47, 0
      %p420 = por %p418, %p419
      %s422 = sadd.s32 %s421, 1
      %p425 = scmp.eq.s32.totalorder %s41, 1
      %p426 = scmp.ne.s32.totalorder %s421, %s423
      %p427 = scmp.eq.s32.totalorder %s41, 0
      %p428 = por %p426, %p427
      %p429 = scmp.ne.s32.totalorder %s421, %s423
      %p430 = scmp.eq.s32.totalorder %s46, 1
      %p431 = por %p429, %p430
      %p432 = scmp.ne.s32.totalorder %s423, %s424
      %p433 = scmp.eq.s32.totalorder %s46, 0
      %p434 = por %p432, %p433
      %p435 = scmp.ne.s32.totalorder %s423, %s424
      %p436 = scmp.eq.s32.totalorder %s47, 1
      %p437 = por %p435, %p436
      %p439 = scmp.ne.s32.totalorder %s424, %s438
      %p440 = scmp.eq.s32.totalorder %s47, 0
      %p441 = por %p439, %p440
      %s443 = sadd.s32 %s442, 1
      %p446 = scmp.eq.s32.totalorder %s41, 1
      %p447 = scmp.ne.s32.totalorder %s442, %s444
      %p448 = scmp.eq.s32.totalorder %s41, 0
      %p449 = por %p447, %p448
      %p450 = scmp.ne.s32.totalorder %s442, %s444
      %p451 = scmp.eq.s32.totalorder %s46, 1
      %p452 = por %p450, %p451
      %p453 = scmp.ne.s32.totalorder %s444, %s445
      %p454 = scmp.eq.s32.totalorder %s46, 0
      %p455 = por %p453, %p454
      %p456 = scmp.ne.s32.totalorder %s444, %s445
      %p457 = scmp.eq.s32.totalorder %s47, 1
      %p458 = por %p456, %p457
      %p460 = scmp.ne.s32.totalorder %s445, %s459
      %p461 = scmp.eq.s32.totalorder %s47, 0
      %p462 = por %p460, %p461
      %s464 = sadd.s32 %s463, 1
      %p467 = scmp.eq.s32.totalorder %s41, 1
      %p468 = scmp.ne.s32.totalorder %s463, %s465
      %p469 = scmp.eq.s32.totalorder %s41, 0
      %p470 = por %p468, %p469
      %p471 = scmp.ne.s32.totalorder %s463, %s465
      %p472 = scmp.eq.s32.totalorder %s46, 1
      %p473 = por %p471, %p472
      %p474 = scmp.ne.s32.totalorder %s465, %s466
      %p475 = scmp.eq.s32.totalorder %s46, 0
      %p476 = por %p474, %p475
      %p477 = scmp.ne.s32.totalorder %s465, %s466
      %p478 = scmp.eq.s32.totalorder %s47, 1
      %p479 = por %p477, %p478
      %p481 = scmp.ne.s32.totalorder %s466, %s480
      %p482 = scmp.eq.s32.totalorder %s47, 0
      %p483 = por %p481, %p482
      %s485 = sadd.s32 %s484, 1
      %p488 = scmp.eq.s32.totalorder %s41, 1
      %p489 = scmp.ne.s32.totalorder %s484, %s486
      %p490 = scmp.eq.s32.totalorder %s41, 0
      %p491 = por %p489, %p490
      %p492 = scmp.ne.s32.totalorder %s484, %s486
      %p493 = scmp.eq.s32.totalorder %s46, 1
      %p494 = por %p492, %p493
      %p495 = scmp.ne.s32.totalorder %s486, %s487
      %p496 = scmp.eq.s32.totalorder %s46, 0
      %p497 = por %p495, %p496
      %p498 = scmp.ne.s32.totalorder %s486, %s487
      %p499 = scmp.eq.s32.totalorder %s47, 1
      %p500 = por %p498, %p499
      %p502 = scmp.ne.s32.totalorder %s487, %s501
      %p503 = scmp.eq.s32.totalorder %s47, 0
      %p504 = por %p502, %p503
      %s506 = sadd.s32 %s505, 1
      %p509 = scmp.eq.s32.totalorder %s41, 1
      %p510 = scmp.ne.s32.totalorder %s505, %s507
      %p511 = scmp.eq.s32.totalorder %s41, 0
      %p512 = por %p510, %p511
      %p513 = scmp.ne.s32.totalorder %s505, %s507
      %p514 = scmp.eq.s32.totalorder %s46, 1
      %p515 = por %p513, %p514
      %p516 = scmp.ne.s32.totalorder %s507, %s508
      %p517 = scmp.eq.s32.totalorder %s46, 0
      %p518 = por %p516, %p517
      %p519 = scmp.ne.s32.totalorder %s507, %s508
      %p520 = scmp.eq.s32.totalorder %s47, 1
      %p521 = por %p519, %p520
      %p523 = scmp.ne.s32.totalorder %s508, %s522
      %p524 = scmp.eq.s32.totalorder %s47, 0
      %p525 = por %p523, %p524
      %s527 = sadd.s32 %s526, 1
      %p530 = scmp.eq.s32.totalorder %s41, 1
      %p531 = scmp.ne.s32.totalorder %s526, %s528
      %p532 = scmp.eq.s32.totalorder %s41, 0
      %p533 = por %p531, %p532
      %p534 = scmp.ne.s32.totalorder %s526, %s528
      %p535 = scmp.eq.s32.totalorder %s46, 1
      %p536 = por %p534, %p535
      %p537 = scmp.ne.s32.totalorder %s528, %s529
      %p538 = scmp.eq.s32.totalorder %s46, 0
      %p539 = por %p537, %p538
      %p540 = scmp.ne.s32.totalorder %s528, %s529
      %p541 = scmp.eq.s32.totalorder %s47, 1
      %p542 = por %p540, %p541
      %p544 = scmp.ne.s32.totalorder %s529, %s543
      %p545 = scmp.eq.s32.totalorder %s47, 0
      %p546 = por %p544, %p545
      %s547 = ssub.s32 %s41, %s48
      %p548 = scmp.eq.s32.totalorder %s547, 0
      %s550 = sadd.s32 %s549, 1
      %s551 = scalar_select %p548, %s549, %s550
      %p554 = pneg %p548
      %p555 = scmp.eq.s32.totalorder %s41, 1
      %p556 = por %p554, %p555
      %p557 = scmp.ne.s32.totalorder %s549, %s552
      %p558 = scmp.eq.s32.totalorder %s41, 0
      %p559 = por %p557, %p558
      %p560 = scmp.ne.s32.totalorder %s549, %s552
      %p561 = scmp.eq.s32.totalorder %s46, 1
      %p562 = por %p560, %p561
      %p563 = scmp.ne.s32.totalorder %s552, %s553
      %p564 = scmp.eq.s32.totalorder %s46, 0
      %p565 = por %p563, %p564
      %p566 = scmp.ne.s32.totalorder %s552, %s553
      %p567 = scmp.eq.s32.totalorder %s47, 1
      %p568 = por %p566, %p567
      %p570 = scmp.ne.s32.totalorder %s553, %s569
      %p571 = scmp.eq.s32.totalorder %s47, 0
      %p572 = por %p570, %p571
      %s573 = ssub.s32 %s41, %s48
      %p574 = scmp.eq.s32.totalorder %s573, 0
      %s576 = sadd.s32 %s575, 1
      %s577 = scalar_select %p574, %s575, %s576
      %p580 = pneg %p574
      %p581 = scmp.eq.s32.totalorder %s41, 1
      %p582 = por %p580, %p581
      %p583 = scmp.ne.s32.totalorder %s575, %s578
      %p584 = scmp.eq.s32.totalorder %s41, 0
      %p585 = por %p583, %p584
      %p586 = scmp.ne.s32.totalorder %s575, %s578
      %p587 = scmp.eq.s32.totalorder %s46, 1
      %p588 = por %p586, %p587
      %p589 = scmp.ne.s32.totalorder %s578, %s579
      %p590 = scmp.eq.s32.totalorder %s46, 0
      %p591 = por %p589, %p590
      %p592 = scmp.ne.s32.totalorder %s578, %s579
      %p593 = scmp.eq.s32.totalorder %s47, 1
      %p594 = por %p592, %p593
      %p596 = scmp.ne.s32.totalorder %s579, %s595
      %p597 = scmp.eq.s32.totalorder %s47, 0
      %p598 = por %p596, %p597
      %s599 = ssub.s32 %s41, %s48
      %p600 = scmp.eq.s32.totalorder %s599, 0
      %s602 = sadd.s32 %s601, 1
      %s603 = scalar_select %p600, %s601, %s602
      %p606 = pneg %p600
      %p607 = scmp.eq.s32.totalorder %s41, 1
      %p608 = por %p606, %p607
      %p609 = scmp.ne.s32.totalorder %s601, %s604
      %p610 = scmp.eq.s32.totalorder %s41, 0
      %p611 = por %p609, %p610
      %p612 = scmp.ne.s32.totalorder %s601, %s604
      %p613 = scmp.eq.s32.totalorder %s46, 1
      %p614 = por %p612, %p613
      %p615 = scmp.ne.s32.totalorder %s604, %s605
      %p616 = scmp.eq.s32.totalorder %s46, 0
      %p617 = por %p615, %p616
      %p618 = scmp.ne.s32.totalorder %s604, %s605
      %p619 = scmp.eq.s32.totalorder %s47, 1
      %p620 = por %p618, %p619
      %p622 = scmp.ne.s32.totalorder %s605, %s621
      %p623 = scmp.eq.s32.totalorder %s47, 0
      %p624 = por %p622, %p623
      %p625 = scmp.le.s32.totalorder 1, %s41
      %p626 = scmp.lt.s32.totalorder %s41, 3
      %p627 = pnand %p625, %p626
      %p628 = pneg %p627
      // Predicated region
      $region9: #{tpu_custom_call.1} parent=5 // pred_check
        _
      $region10: #{tpu_custom_call.1} parent=5 // pred_check_branch
        %630 = sbr.rel (%p627) target = $region12
      $region11: #{tpu_custom_call.1} parent=5 // pred_region
        %s631 = ssub.s32 %s41, 1
        // Predicated region
        $region13: #{tpu_custom_call.1} parent=11 // pred_check
          %p632 = pneg %p140
        $region14: #{tpu_custom_call.1} parent=11 // pred_check_branch
          %634 = sbr.rel (%p632) target = $region16
        $region15: #{tpu_custom_call.1} parent=11 // pred_region
          _
        $region16: #{tpu_custom_call.1} parent=11 // pred_fallthru
          _
        // Predicated region
        $region17: #{tpu_custom_call.1} parent=11 // pred_check
          %p635 = pneg %p161
        $region18: #{tpu_custom_call.1} parent=11 // pred_check_branch
          %637 = sbr.rel (%p635) target = $region20
        $region19: #{tpu_custom_call.1} parent=11 // pred_region
          _
        $region20: #{tpu_custom_call.1} parent=11 // pred_fallthru
          _
        // Predicated region
        $region21: #{tpu_custom_call.1} parent=11 // pred_check
          %p638 = pneg %p182
        $region22: #{tpu_custom_call.1} parent=11 // pred_check_branch
          %640 = sbr.rel (%p638) target = $region24
        $region23: #{tpu_custom_call.1} parent=11 // pred_region
          _
        $region24: #{tpu_custom_call.1} parent=11 // pred_fallthru
          _
        // Predicated region
        $region25: #{tpu_custom_call.1} parent=11 // pred_check
          %p641 = pneg %p203
        $region26: #{tpu_custom_call.1} parent=11 // pred_check_branch
          %643 = sbr.rel (%p641) target = $region28
        $region27: #{tpu_custom_call.1} parent=11 // pred_region
          _
        $region28: #{tpu_custom_call.1} parent=11 // pred_fallthru
          _
        // Predicated region
        $region29: #{tpu_custom_call.1} parent=11 // pred_check
          %p644 = pneg %p224
        $region30: #{tpu_custom_call.1} parent=11 // pred_check_branch
          %646 = sbr.rel (%p644) target = $region32
        $region31: #{tpu_custom_call.1} parent=11 // pred_region
          _
        $region32: #{tpu_custom_call.1} parent=11 // pred_fallthru
          _
        // Predicated region
        $region33: #{tpu_custom_call.1} parent=11 // pred_check
          %p647 = pneg %p245
        $region34: #{tpu_custom_call.1} parent=11 // pred_check_branch
          %649 = sbr.rel (%p647) target = $region36
        $region35: #{tpu_custom_call.1} parent=11 // pred_region
          _
        $region36: #{tpu_custom_call.1} parent=11 // pred_fallthru
          _
        // Predicated region
        $region37: #{tpu_custom_call.1} parent=11 // pred_check
          %p650 = pneg %p266
        $region38: #{tpu_custom_call.1} parent=11 // pred_check_branch
          %652 = sbr.rel (%p650) target = $region40
        $region39: #{tpu_custom_call.1} parent=11 // pred_region
          _
        $region40: #{tpu_custom_call.1} parent=11 // pred_fallthru
          _
        // Predicated region
        $region41: #{tpu_custom_call.1} parent=11 // pred_check
          %p653 = pneg %p287
        $region42: #{tpu_custom_call.1} parent=11 // pred_check_branch
          %655 = sbr.rel (%p653) target = $region44
        $region43: #{tpu_custom_call.1} parent=11 // pred_region
          _
        $region44: #{tpu_custom_call.1} parent=11 // pred_fallthru
          _
        // Predicated region
        $region45: #{tpu_custom_call.1} parent=11 // pred_check
          %p656 = pneg %p308
        $region46: #{tpu_custom_call.1} parent=11 // pred_check_branch
          %658 = sbr.rel (%p656) target = $region48
        $region47: #{tpu_custom_call.1} parent=11 // pred_region
          _
        $region48: #{tpu_custom_call.1} parent=11 // pred_fallthru
          _
        // Predicated region
        $region49: #{tpu_custom_call.1} parent=11 // pred_check
          %p659 = pneg %p329
        $region50: #{tpu_custom_call.1} parent=11 // pred_check_branch
          %661 = sbr.rel (%p659) target = $region52
        $region51: #{tpu_custom_call.1} parent=11 // pred_region
          _
        $region52: #{tpu_custom_call.1} parent=11 // pred_fallthru
          _
        // Predicated region
        $region53: #{tpu_custom_call.1} parent=11 // pred_check
          %p662 = pneg %p350
        $region54: #{tpu_custom_call.1} parent=11 // pred_check_branch
          %664 = sbr.rel (%p662) target = $region56
        $region55: #{tpu_custom_call.1} parent=11 // pred_region
          _
        $region56: #{tpu_custom_call.1} parent=11 // pred_fallthru
          _
        // Predicated region
        $region57: #{tpu_custom_call.1} parent=11 // pred_check
          %p665 = pneg %p371
        $region58: #{tpu_custom_call.1} parent=11 // pred_check_branch
          %667 = sbr.rel (%p665) target = $region60
        $region59: #{tpu_custom_call.1} parent=11 // pred_region
          _
        $region60: #{tpu_custom_call.1} parent=11 // pred_fallthru
          _
        // Predicated region
        $region61: #{tpu_custom_call.1} parent=11 // pred_check
          %p668 = pneg %p392
        $region62: #{tpu_custom_call.1} parent=11 // pred_check_branch
          %670 = sbr.rel (%p668) target = $region64
        $region63: #{tpu_custom_call.1} parent=11 // pred_region
          _
        $region64: #{tpu_custom_call.1} parent=11 // pred_fallthru
          _
        // Predicated region
        $region65: #{tpu_custom_call.1} parent=11 // pred_check
          %p671 = pneg %p413
        $region66: #{tpu_custom_call.1} parent=11 // pred_check_branch
          %673 = sbr.rel (%p671) target = $region68
        $region67: #{tpu_custom_call.1} parent=11 // pred_region
          _
        $region68: #{tpu_custom_call.1} parent=11 // pred_fallthru
          _
        // Predicated region
        $region69: #{tpu_custom_call.1} parent=11 // pred_check
          %p674 = pneg %p434
        $region70: #{tpu_custom_call.1} parent=11 // pred_check_branch
          %676 = sbr.rel (%p674) target = $region72
        $region71: #{tpu_custom_call.1} parent=11 // pred_region
          _
        $region72: #{tpu_custom_call.1} parent=11 // pred_fallthru
          _
        // Predicated region
        $region73: #{tpu_custom_call.1} parent=11 // pred_check
          %p677 = pneg %p455
        $region74: #{tpu_custom_call.1} parent=11 // pred_check_branch
          %679 = sbr.rel (%p677) target = $region76
        $region75: #{tpu_custom_call.1} parent=11 // pred_region
          _
        $region76: #{tpu_custom_call.1} parent=11 // pred_fallthru
          _
        // Predicated region
        $region77: #{tpu_custom_call.1} parent=11 // pred_check
          %p680 = pneg %p476
        $region78: #{tpu_custom_call.1} parent=11 // pred_check_branch
          %682 = sbr.rel (%p680) target = $region80
        $region79: #{tpu_custom_call.1} parent=11 // pred_region
          _
        $region80: #{tpu_custom_call.1} parent=11 // pred_fallthru
          _
        // Predicated region
        $region81: #{tpu_custom_call.1} parent=11 // pred_check
          %p683 = pneg %p497
        $region82: #{tpu_custom_call.1} parent=11 // pred_check_branch
          %685 = sbr.rel (%p683) target = $region84
        $region83: #{tpu_custom_call.1} parent=11 // pred_region
          _
        $region84: #{tpu_custom_call.1} parent=11 // pred_fallthru
          _
        // Predicated region
        $region85: #{tpu_custom_call.1} parent=11 // pred_check
          %p686 = pneg %p518
        $region86: #{tpu_custom_call.1} parent=11 // pred_check_branch
          %688 = sbr.rel (%p686) target = $region88
        $region87: #{tpu_custom_call.1} parent=11 // pred_region
          _
        $region88: #{tpu_custom_call.1} parent=11 // pred_fallthru
          _
        // Predicated region
        $region89: #{tpu_custom_call.1} parent=11 // pred_check
          %p689 = pneg %p539
        $region90: #{tpu_custom_call.1} parent=11 // pred_check_branch
          %691 = sbr.rel (%p689) target = $region92
        $region91: #{tpu_custom_call.1} parent=11 // pred_region
          _
        $region92: #{tpu_custom_call.1} parent=11 // pred_fallthru
          _
      $region12: #{tpu_custom_call.1} parent=5 // pred_fallthru
        _
      %p692 = scmp.lt.s32.totalorder %s41, 2
      // Predicated region
      $region93: #{tpu_custom_call.1} parent=5 // pred_check
        %p693 = pneg %p692
      $region94: #{tpu_custom_call.1} parent=5 // pred_check_branch
        %695 = sbr.rel (%p693) target = $region96
      $region95: #{tpu_custom_call.1} parent=5 // pred_region
        // Predicated region
        $region97: #{tpu_custom_call.1} parent=95 // pred_check
          %p696 = pneg %p61
        $region98: #{tpu_custom_call.1} parent=95 // pred_check_branch
          %698 = sbr.rel (%p696) target = $region100
        $region99: #{tpu_custom_call.1} parent=95 // pred_region
          %p699 = scmp.lt.s32.totalorder %s41, 1
          %s700 = scalar_select %p699, %s41, 1
          %s701 = smul.addr %s700, 4
          %s702 = scalar_lea.vmem %s0, %s701
        $region100: #{tpu_custom_call.1} parent=95 // pred_fallthru
          _
        // Predicated region
        $region101: #{tpu_custom_call.1} parent=95 // pred_check
          %p703 = pneg %p87
        $region102: #{tpu_custom_call.1} parent=95 // pred_check_branch
          %705 = sbr.rel (%p703) target = $region104
        $region103: #{tpu_custom_call.1} parent=95 // pred_region
          %p706 = scmp.lt.s32.totalorder %s41, 1
          %s707 = scalar_select %p706, %s41, 1
          %s708 = smul.addr %s707, 4
          %s709 = scalar_lea.vmem %s1, %s708
        $region104: #{tpu_custom_call.1} parent=95 // pred_fallthru
          _
        // Predicated region
        $region105: #{tpu_custom_call.1} parent=95 // pred_check
          %p710 = pneg %p113
        $region106: #{tpu_custom_call.1} parent=95 // pred_check_branch
          %712 = sbr.rel (%p710) target = $region108
        $region107: #{tpu_custom_call.1} parent=95 // pred_region
          %s713 = sand.u32 %s103, 1
          %s714 = scalar_lea.sflag [#allocation3], %s713
          %s715 = sand.u32 %s103, 1
          %s716 = smul.addr %s715, 168
          %s717 = scalar_lea.vmem [#allocation2], %s716
          %719 = vsyncadd %s714, 0
          %s720 = smul.addr %s41, 8
          %s721 = scalar_lea.hbm %s2, %s720
          %s722 = sshll.u32 %s721, 4
          %s723 = int_to_ptr.hbm [resolvable:$true] %s722
          %s724 = sshll.u32 %s717, 4
          %s725 = int_to_ptr.vmem [resolvable:$true] %s724
          %730 = dma.hbm_to_vmem [thread:$0]  %s723, 2688, %s725, %s714, 256, 128, 8
        $region108: #{tpu_custom_call.1} parent=95 // pred_fallthru
          _
      $region96: #{tpu_custom_call.1} parent=5 // pred_fallthru
        _
      %p731 = scmp.le.s32.totalorder 1, %s41
      %p732 = scmp.lt.s32.totalorder %s41, 3
      %p733 = pnand %p731, %p732
      %p734 = pneg %p733
      // Predicated region
      $region109: #{tpu_custom_call.1} parent=5 // pred_check
        _
      $region110: #{tpu_custom_call.1} parent=5 // pred_check_branch
        %736 = sbr.rel (%p733) target = $region112
      $region111: #{tpu_custom_call.1} parent=5 // pred_region
        %s737 = ssub.s32 %s41, 1
        %s738 = sand.u32 %s106, 1
        %s739 = scalar_lea.sflag [#allocation3], %s738
        %s740 = sand.u32 %s106, 1
        %s741 = smul.addr %s740, 168
        %s742 = scalar_lea.vmem [#allocation2], %s741
        // Predicated region
        $region113: #{tpu_custom_call.1} parent=111 // pred_check
          %p743 = pneg %p119
        $region114: #{tpu_custom_call.1} parent=111 // pred_check_branch
          %745 = sbr.rel (%p743) target = $region116
        $region115: #{tpu_custom_call.1} parent=111 // pred_region
          %747 = dma.done %s739, 2688
        $region116: #{tpu_custom_call.1} parent=111 // pred_fallthru
          _
        %p748 = scmp.lt.s32.totalorder %s46, 1
        %s749 = scalar_select %p748, %s46, 1
        %s750 = smul.addr %s749, 4
        %s751 = scalar_lea.vmem %s0, %s750
        %p752 = pneg %p67
        %p753 = pneg %p64
        %p754 = scmp.lt.s32.totalorder %s46, 1
        %s755 = scalar_select %p754, %s46, 1
        %s756 = smul.addr %s755, 4
        %s757 = scalar_lea.vmem %s1, %s756
        %p758 = pneg %p93
        %p759 = pneg %p90
        %s760 = sand.u32 %s106, 1
        %s761 = scalar_lea.sflag [#allocation3], %s760
        %s762 = sand.u32 %s106, 1
        %s763 = smul.addr %s762, 168
        %s764 = scalar_lea.vmem [#allocation2], %s763
        %p765 = pneg %p119
        %p766 = pneg %p116
        %p767 = pneg %p140
        %p768 = pneg %p137
        %p769 = pneg %p161
        %p770 = pneg %p158
        %p771 = pneg %p182
        %p772 = pneg %p179
        %p773 = pneg %p203
        %p774 = pneg %p200
        %p775 = pneg %p224
        %p776 = pneg %p221
        %p777 = pneg %p245
        %p778 = pneg %p242
        %p779 = pneg %p266
        %p780 = pneg %p263
        %p781 = pneg %p287
        %p782 = pneg %p284
        %p783 = pneg %p308
        %p784 = pneg %p305
        %p785 = pneg %p329
        %p786 = pneg %p326
        %p787 = pneg %p350
        %p788 = pneg %p347
        %p789 = pneg %p371
        %p790 = pneg %p368
        %p791 = pneg %p392
        %p792 = pneg %p389
        %p793 = pneg %p413
        %p794 = pneg %p410
        %p795 = pneg %p434
        %p796 = pneg %p431
        %p797 = pneg %p455
        %p798 = pneg %p452
        %p799 = pneg %p476
        %p800 = pneg %p473
        %p801 = pneg %p497
        %p802 = pneg %p494
        %p803 = pneg %p518
        %p804 = pneg %p515
        %p805 = pneg %p539
        %p806 = pneg %p536
        %p807 = pneg %p565
        %p808 = pneg %p562
        %s809 = sand.u32 %s552, 1
        %s810 = scalar_lea.sflag [#allocation4], %s809
        %s811 = sand.u32 %s552, 1
        %s812 = smul.addr %s811, 4
        %s813 = scalar_lea.vmem [#allocation5], %s812
        %p814 = pneg %p591
        %p815 = pneg %p588
        %s816 = sand.u32 %s578, 1
        %s817 = scalar_lea.sflag [#allocation7], %s816
        %s818 = sand.u32 %s578, 1
        %s819 = smul.addr %s818, 4
        %s820 = scalar_lea.vmem [#allocation6], %s819
        %p821 = pneg %p617
        %p822 = pneg %p614
        %p823 = scmp.lt.s32.totalorder %s46, 1
        %s824 = scalar_select %p823, %s46, 1
        %s825 = smul.addr %s824, 36
        %s826 = smul.addr %s825, 8
        %s827 = scalar_lea.vmem %s25, %s826
        %p828 = scmp.lt.s32.totalorder %s46, 1
        %s829 = scalar_select %p828, %s46, 1
        %s830 = smul.addr %s829, 4
        %s831 = scalar_lea.vmem %s0, %s830
        %p832 = scmp.lt.s32.totalorder %s46, 1
        %s833 = scalar_select %p832, %s46, 1
        %s834 = smul.addr %s833, 4
        %s835 = scalar_lea.vmem %s1, %s834
        %p836 = scmp.lt.s32.totalorder %s46, 1
        %s837 = scalar_select %p836, %s46, 1
        %s838 = smul.addr %s837, 36
        %s839 = smul.addr %s838, 8
        %s840 = scalar_lea.vmem %s25, %s839
        %s841 = smul.u32 %s46, 128
        %v842 = vlaneseq
        %v843 = vand.u32 %v842, 127
        %v844 = vstv %s841
        %v845 = vadd.s32 %v844, %v843
        %vm846 = vcmp.lt.s32.totalorder %v845, 256
        %v847 = vsel %vm846, 1.0, 0.0
        %v848 = vld [vmem:[%s12] sm:$0xff]
        %v849 = vld [vmem:[%s12 + $0x8] sm:$0xff]
        %v850 = vld [vmem:[%s12 + $0x10] sm:$0xff]
        %v851 = vld [vmem:[%s12 + $0x18] sm:$0xff]
        %v852 = vld [vmem:[%s12 + $0x20] sm:$0xff]
        %v853 = vld [vmem:[%s12 + $0x28] sm:$0xff]
        %v854 = vld [vmem:[%s12 + $0x30] sm:$0xff]
        %v855 = vld [vmem:[%s12 + $0x38] sm:$0xff]
        %v856 = vld [vmem:[%s12 + $0x40] sm:$0xff]
        %v857 = vld [vmem:[%s12 + $0x48] sm:$0xff]
        %v858 = vld [vmem:[%s12 + $0x50] sm:$0xff]
        %v859 = vmax.f32 %v848, 0.01
        %v860 = vmax.f32 %v849, 0.01
        %v861 = vmax.f32 %v850, 0.01
        %v862 = vmax.f32 %v851, 0.01
        %v863 = vmax.f32 %v852, 0.01
        %v864 = vmax.f32 %v853, 0.01
        %v865 = vmax.f32 %v854, 0.01
        %v866 = vmax.f32 %v855, 0.01
        %v867 = vmax.f32 %v856, 0.01
        %v868 = vmax.f32 %v857, 0.01
        %v869 = vmax.f32 %v858, 0.01
        %v870 = vrcp.pop %v859
        %v871 = vmul.f32 %v859, %v870
        %v872 = vsub.f32 1.0, %v871
        %v873 = vmul.f32 %v870, %v872
        %v874 = vadd.f32 %v870, %v873
        %vm875 = vweird.f32 %v859
        %vm876 = vweird.f32 %v870
        %vm877 = vmor %vm875, %vm876
        %v878 = vsel %vm877, %v870, %v874
        %v879 = vand.u32 2147483647, %v859
        %vm880 = vcmp.eq.f32.partialorder %v879, 8.507059e+37
        %v881 = vand.u32 %v859, 2147483648
        %v882 = vor.u32 1.1754944e-38, %v881
        %v883 = vsel %vm880, %v882, %v878
        %v884 = vmul.f32 1.0, %v883
        %v885 = vrcp.pop %v860
        %v886 = vmul.f32 %v860, %v885
        %v887 = vsub.f32 1.0, %v886
        %v888 = vmul.f32 %v885, %v887
        %v889 = vadd.f32 %v885, %v888
        %vm890 = vweird.f32 %v860
        %vm891 = vweird.f32 %v885
        %vm892 = vmor %vm890, %vm891
        %v893 = vsel %vm892, %v885, %v889
        %v894 = vand.u32 2147483647, %v860
        %vm895 = vcmp.eq.f32.partialorder %v894, 8.507059e+37
        %v896 = vand.u32 %v860, 2147483648
        %v897 = vor.u32 1.1754944e-38, %v896
        %v898 = vsel %vm895, %v897, %v893
        %v899 = vmul.f32 1.0, %v898
        %v900 = vrcp.pop %v861
        %v901 = vmul.f32 %v861, %v900
        %v902 = vsub.f32 1.0, %v901
        %v903 = vmul.f32 %v900, %v902
        %v904 = vadd.f32 %v900, %v903
        %vm905 = vweird.f32 %v861
        %vm906 = vweird.f32 %v900
        %vm907 = vmor %vm905, %vm906
        %v908 = vsel %vm907, %v900, %v904
        %v909 = vand.u32 2147483647, %v861
        %vm910 = vcmp.eq.f32.partialorder %v909, 8.507059e+37
        %v911 = vand.u32 %v861, 2147483648
        %v912 = vor.u32 1.1754944e-38, %v911
        %v913 = vsel %vm910, %v912, %v908
        %v914 = vmul.f32 1.0, %v913
        %v915 = vrcp.pop %v862
        %v916 = vmul.f32 %v862, %v915
        %v917 = vsub.f32 1.0, %v916
        %v918 = vmul.f32 %v915, %v917
        %v919 = vadd.f32 %v915, %v918
        %vm920 = vweird.f32 %v862
        %vm921 = vweird.f32 %v915
        %vm922 = vmor %vm920, %vm921
        %v923 = vsel %vm922, %v915, %v919
        %v924 = vand.u32 2147483647, %v862
        %vm925 = vcmp.eq.f32.partialorder %v924, 8.507059e+37
        %v926 = vand.u32 %v862, 2147483648
        %v927 = vor.u32 1.1754944e-38, %v926
        %v928 = vsel %vm925, %v927, %v923
        %v929 = vmul.f32 1.0, %v928
        %v930 = vrcp.pop %v863
        %v931 = vmul.f32 %v863, %v930
        %v932 = vsub.f32 1.0, %v931
        %v933 = vmul.f32 %v930, %v932
        %v934 = vadd.f32 %v930, %v933
        %vm935 = vweird.f32 %v863
        %vm936 = vweird.f32 %v930
        %vm937 = vmor %vm935, %vm936
        %v938 = vsel %vm937, %v930, %v934
        %v939 = vand.u32 2147483647, %v863
        %vm940 = vcmp.eq.f32.partialorder %v939, 8.507059e+37
        %v941 = vand.u32 %v863, 2147483648
        %v942 = vor.u32 1.1754944e-38, %v941
        %v943 = vsel %vm940, %v942, %v938
        %v944 = vmul.f32 1.0, %v943
        %v945 = vrcp.pop %v864
        %v946 = vmul.f32 %v864, %v945
        %v947 = vsub.f32 1.0, %v946
        %v948 = vmul.f32 %v945, %v947
        %v949 = vadd.f32 %v945, %v948
        %vm950 = vweird.f32 %v864
        %vm951 = vweird.f32 %v945
        %vm952 = vmor %vm950, %vm951
        %v953 = vsel %vm952, %v945, %v949
        %v954 = vand.u32 2147483647, %v864
        %vm955 = vcmp.eq.f32.partialorder %v954, 8.507059e+37
        %v956 = vand.u32 %v864, 2147483648
        %v957 = vor.u32 1.1754944e-38, %v956
        %v958 = vsel %vm955, %v957, %v953
        %v959 = vmul.f32 1.0, %v958
        %v960 = vrcp.pop %v865
        %v961 = vmul.f32 %v865, %v960
        %v962 = vsub.f32 1.0, %v961
        %v963 = vmul.f32 %v960, %v962
        %v964 = vadd.f32 %v960, %v963
        %vm965 = vweird.f32 %v865
        %vm966 = vweird.f32 %v960
        %vm967 = vmor %vm965, %vm966
        %v968 = vsel %vm967, %v960, %v964
        %v969 = vand.u32 2147483647, %v865
        %vm970 = vcmp.eq.f32.partialorder %v969, 8.507059e+37
        %v971 = vand.u32 %v865, 2147483648
        %v972 = vor.u32 1.1754944e-38, %v971
        %v973 = vsel %vm970, %v972, %v968
        %v974 = vmul.f32 1.0, %v973
        %v975 = vrcp.pop %v866
        %v976 = vmul.f32 %v866, %v975
        %v977 = vsub.f32 1.0, %v976
        %v978 = vmul.f32 %v975, %v977
        %v979 = vadd.f32 %v975, %v978
        %vm980 = vweird.f32 %v866
        %vm981 = vweird.f32 %v975
        %vm982 = vmor %vm980, %vm981
        %v983 = vsel %vm982, %v975, %v979
        %v984 = vand.u32 2147483647, %v866
        %vm985 = vcmp.eq.f32.partialorder %v984, 8.507059e+37
        %v986 = vand.u32 %v866, 2147483648
        %v987 = vor.u32 1.1754944e-38, %v986
        %v988 = vsel %vm985, %v987, %v983
        %v989 = vmul.f32 1.0, %v988
        %v990 = vrcp.pop %v867
        %v991 = vmul.f32 %v867, %v990
        %v992 = vsub.f32 1.0, %v991
        %v993 = vmul.f32 %v990, %v992
        %v994 = vadd.f32 %v990, %v993
        %vm995 = vweird.f32 %v867
        %vm996 = vweird.f32 %v990
        %vm997 = vmor %vm995, %vm996
        %v998 = vsel %vm997, %v990, %v994
        %v999 = vand.u32 2147483647, %v867
        %vm1000 = vcmp.eq.f32.partialorder %v999, 8.507059e+37
        %v1001 = vand.u32 %v867, 2147483648
        %v1002 = vor.u32 1.1754944e-38, %v1001
        %v1003 = vsel %vm1000, %v1002, %v998
        %v1004 = vmul.f32 1.0, %v1003
        %v1005 = vrcp.pop %v868
        %v1006 = vmul.f32 %v868, %v1005
        %v1007 = vsub.f32 1.0, %v1006
        %v1008 = vmul.f32 %v1005, %v1007
        %v1009 = vadd.f32 %v1005, %v1008
        %vm1010 = vweird.f32 %v868
        %vm1011 = vweird.f32 %v1005
        %vm1012 = vmor %vm1010, %vm1011
        %v1013 = vsel %vm1012, %v1005, %v1009
        %v1014 = vand.u32 2147483647, %v868
        %vm1015 = vcmp.eq.f32.partialorder %v1014, 8.507059e+37
        %v1016 = vand.u32 %v868, 2147483648
        %v1017 = vor.u32 1.1754944e-38, %v1016
        %v1018 = vsel %vm1015, %v1017, %v1013
        %v1019 = vmul.f32 1.0, %v1018
        %v1020 = vrcp.pop %v869
        %v1021 = vmul.f32 %v869, %v1020
        %v1022 = vsub.f32 1.0, %v1021
        %v1023 = vmul.f32 %v1020, %v1022
        %v1024 = vadd.f32 %v1020, %v1023
        %vm1025 = vweird.f32 %v869
        %vm1026 = vweird.f32 %v1020
        %vm1027 = vmor %vm1025, %vm1026
        %v1028 = vsel %vm1027, %v1020, %v1024
        %v1029 = vand.u32 2147483647, %v869
        %vm1030 = vcmp.eq.f32.partialorder %v1029, 8.507059e+37
        %v1031 = vand.u32 %v869, 2147483648
        %v1032 = vor.u32 1.1754944e-38, %v1031
        %v1033 = vsel %vm1030, %v1032, %v1028
        %v1034 = vmul.f32 1.0, %v1033
        %v1035 = vld [vmem:[%s15] sm:$0xff]
        %v1036 = vld [vmem:[%s15 + $0x8] sm:$0xff]
        %v1037 = vld [vmem:[%s15 + $0x10] sm:$0xff]
        %v1038 = vld [vmem:[%s15 + $0x18] sm:$0xff]
        %v1039 = vld [vmem:[%s15 + $0x20] sm:$0xff]
        %v1040 = vld [vmem:[%s15 + $0x28] sm:$0xff]
        %v1041 = vld [vmem:[%s15 + $0x30] sm:$0xff]
        %v1042 = vld [vmem:[%s13] sm:$0xff]
        %v1043 = vld [vmem:[%s13 + $0x8] sm:$0xff]
        %v1044 = vld [vmem:[%s13 + $0x10] sm:$0xff]
        %v1045 = vld [vmem:[%s13 + $0x18] sm:$0xff]
        %v1046 = vld [vmem:[%s13 + $0x20] sm:$0xff]
        %v1047 = vld [vmem:[%s13 + $0x28] sm:$0xff]
        %v1048 = vld [vmem:[%s13 + $0x30] sm:$0xff]
        %v1049 = vld [vmem:[%s14] sm:$0xff]
        %v1050 = vld [vmem:[%s14 + $0x8] sm:$0xff]
        %v1051 = vld [vmem:[%s14 + $0x10] sm:$0xff]
        %v1052 = vld [vmem:[%s14 + $0x18] sm:$0xff]
        %v1053 = vld [vmem:[%s14 + $0x20] sm:$0xff]
        %v1054 = vld [vmem:[%s14 + $0x28] sm:$0xff]
        %v1055 = vld [vmem:[%s14 + $0x30] sm:$0xff]
        %v1056 = vld [vmem:[%s831] sm:$0x7]
        %v1057 = vld [vmem:[%s835] sm:$0x7]
        %v1058 = vld [vmem:[%s742] sm:$0xff]
        %v1059 = vld [vmem:[%s742 + $0x8] sm:$0xff]
        %v1060 = vld [vmem:[%s742 + $0x10] sm:$0xff]
        %v1061 = vld [vmem:[%s742 + $0x18] sm:$0xff]
        %v1062 = vld [vmem:[%s742 + $0x20] sm:$0xff]
        %v1063 = vld [vmem:[%s742 + $0x28] sm:$0xff]
        %v1064 = vld [vmem:[%s742 + $0x30] sm:$0xff]
        %v1065 = vld [vmem:[%s3] sm:$0xff]
        %v1066 = vld [vmem:[%s4] sm:$0xff]
        %1068 = vset.pattern.permute.xlu0 0
        %1069 = vperm.xlu0 %1068, %v1066
        %v1070 = vpop.permute.xlu0 %1069
        %vm1072 = vcmask 23552
        %v1074 = vsel %vm1072, %v1065, 0
        %vm1076 = vcmask 1042432
        %v1078 = vsel %vm1076, %v1056, 0
        %1080 = vmatpush.msra.mxu0 0.0
        %1081 = vmatpush.msra.mxu0 0.0
        %1082 = vmatpush.msra.mxu0 0.0
        %1083 = vmatpush.msra.mxu0 0.0
        %1084 = vmatpush.msra.mxu0 0.0
        %1085 = vmatpush.msra.mxu0 0.0
        %1086 = vmatpush.msra.mxu0 0.0
        %1087 = vmatpush.msra.mxu0 0.0
        %1088 = vmatpush.msra.mxu0 0.0
        %1089 = vmatpush.msra.mxu0 0.0
        %1090 = vmatpush.msra.mxu0 0.0
        %1091 = vmatpush.msra.mxu0 0.0
        %1092 = vmatpush.msra.mxu0 0.0
        %1093 = vmatpush.msra.mxu0 0.0
        %1094 = vmatpush.msra.mxu0 0.0
        %v1095 = vand.u32 %v1078, 4294901760
        %1096 = vmatpush.msra.mxu0 %v1095
        %v1097 = vand.u32 %v1074, 4294901760
        %v1098 = vsub.f32 %v1074, %v1097
        %v1099 = vand.u32 %v1098, 4294901760
        %v1100 = vsub.f32 %v1098, %v1099
        %v1101 = vand.u32 %v1100, 4294901760
        %1102 = vmatmul.f32.gmra.mxu0 %v1101
        %v1103 = vpop.f32.mrf.mxu0
        %v1104 = vadd.f32 %v1070, %v1103
        %1105 = vdwg.mxu0
        %1106 = vmatpush.msra.mxu0 0.0
        %1107 = vmatpush.msra.mxu0 0.0
        %1108 = vmatpush.msra.mxu0 0.0
        %1109 = vmatpush.msra.mxu0 0.0
        %1110 = vmatpush.msra.mxu0 0.0
        %1111 = vmatpush.msra.mxu0 0.0
        %1112 = vmatpush.msra.mxu0 0.0
        %1113 = vmatpush.msra.mxu0 0.0
        %1114 = vmatpush.msra.mxu0 0.0
        %1115 = vmatpush.msra.mxu0 0.0
        %1116 = vmatpush.msra.mxu0 0.0
        %1117 = vmatpush.msra.mxu0 0.0
        %1118 = vmatpush.msra.mxu0 0.0
        %1119 = vmatpush.msra.mxu0 0.0
        %1120 = vmatpush.msra.mxu0 0.0
        %v1121 = vand.u32 %v1078, 4294901760
        %v1122 = vsub.f32 %v1078, %v1121
        %v1123 = vand.u32 %v1122, 4294901760
        %v1124 = vsub.f32 %v1122, %v1123
        %v1125 = vand.u32 %v1124, 4294901760
        %1126 = vmatpush.msra.mxu0 %v1125
        %v1127 = vand.u32 %v1074, 4294901760
        %1128 = vmatmul.f32.gmra.mxu0 %v1127
        %v1129 = vpop.f32.mrf.mxu0
        %v1130 = vadd.f32 %v1104, %v1129
        %1131 = vdwg.mxu0
        %1132 = vmatpush.msra.mxu0 0.0
        %1133 = vmatpush.msra.mxu0 0.0
        %1134 = vmatpush.msra.mxu0 0.0
        %1135 = vmatpush.msra.mxu0 0.0
        %1136 = vmatpush.msra.mxu0 0.0
        %1137 = vmatpush.msra.mxu0 0.0
        %1138 = vmatpush.msra.mxu0 0.0
        %1139 = vmatpush.msra.mxu0 0.0
        %1140 = vmatpush.msra.mxu0 0.0
        %1141 = vmatpush.msra.mxu0 0.0
        %1142 = vmatpush.msra.mxu0 0.0
        %1143 = vmatpush.msra.mxu0 0.0
        %1144 = vmatpush.msra.mxu0 0.0
        %1145 = vmatpush.msra.mxu0 0.0
        %1146 = vmatpush.msra.mxu0 0.0
        %v1147 = vand.u32 %v1078, 4294901760
        %v1148 = vsub.f32 %v1078, %v1147
        %1149 = vmatpush.msra.mxu0 %v1148
        %v1150 = vand.u32 %v1074, 4294901760
        %v1151 = vsub.f32 %v1074, %v1150
        %1152 = vmatmul.f32.gmra.mxu0 %v1151
        %v1153 = vpop.f32.mrf.mxu0
        %v1154 = vadd.f32 %v1130, %v1153
        %1155 = vdwg.mxu0
        %1156 = vmatpush.msra.mxu0 0.0
        %1157 = vmatpush.msra.mxu0 0.0
        %1158 = vmatpush.msra.mxu0 0.0
        %1159 = vmatpush.msra.mxu0 0.0
        %1160 = vmatpush.msra.mxu0 0.0
        %1161 = vmatpush.msra.mxu0 0.0
        %1162 = vmatpush.msra.mxu0 0.0
        %1163 = vmatpush.msra.mxu0 0.0
        %1164 = vmatpush.msra.mxu0 0.0
        %1165 = vmatpush.msra.mxu0 0.0
        %1166 = vmatpush.msra.mxu0 0.0
        %1167 = vmatpush.msra.mxu0 0.0
        %1168 = vmatpush.msra.mxu0 0.0
        %1169 = vmatpush.msra.mxu0 0.0
        %1170 = vmatpush.msra.mxu0 0.0
        %v1171 = vand.u32 %v1078, 4294901760
        %1172 = vmatpush.msra.mxu0 %v1171
        %v1173 = vand.u32 %v1074, 4294901760
        %v1174 = vsub.f32 %v1074, %v1173
        %v1175 = vand.u32 %v1174, 4294901760
        %1176 = vmatmul.f32.gmra.mxu0 %v1175
        %v1177 = vpop.f32.mrf.mxu0
        %v1178 = vadd.f32 %v1154, %v1177
        %1179 = vdwg.mxu0
        %1180 = vmatpush.msra.mxu0 0.0
        %1181 = vmatpush.msra.mxu0 0.0
        %1182 = vmatpush.msra.mxu0 0.0
        %1183 = vmatpush.msra.mxu0 0.0
        %1184 = vmatpush.msra.mxu0 0.0
        %1185 = vmatpush.msra.mxu0 0.0
        %1186 = vmatpush.msra.mxu0 0.0
        %1187 = vmatpush.msra.mxu0 0.0
        %1188 = vmatpush.msra.mxu0 0.0
        %1189 = vmatpush.msra.mxu0 0.0
        %1190 = vmatpush.msra.mxu0 0.0
        %1191 = vmatpush.msra.mxu0 0.0
        %1192 = vmatpush.msra.mxu0 0.0
        %1193 = vmatpush.msra.mxu0 0.0
        %1194 = vmatpush.msra.mxu0 0.0
        %v1195 = vand.u32 %v1078, 4294901760
        %v1196 = vsub.f32 %v1078, %v1195
        %v1197 = vand.u32 %v1196, 4294901760
        %1198 = vmatpush.msra.mxu0 %v1197
        %v1199 = vand.u32 %v1074, 4294901760
        %1200 = vmatmul.f32.gmra.mxu0 %v1199
        %v1201 = vpop.f32.mrf.mxu0
        %v1202 = vadd.f32 %v1178, %v1201
        %1203 = vdwg.mxu0
        %1204 = vmatpush.msra.mxu0 0.0
        %1205 = vmatpush.msra.mxu0 0.0
        %1206 = vmatpush.msra.mxu0 0.0
        %1207 = vmatpush.msra.mxu0 0.0
        %1208 = vmatpush.msra.mxu0 0.0
        %1209 = vmatpush.msra.mxu0 0.0
        %1210 = vmatpush.msra.mxu0 0.0
        %1211 = vmatpush.msra.mxu0 0.0
        %1212 = vmatpush.msra.mxu0 0.0
        %1213 = vmatpush.msra.mxu0 0.0
        %1214 = vmatpush.msra.mxu0 0.0
        %1215 = vmatpush.msra.mxu0 0.0
        %1216 = vmatpush.msra.mxu0 0.0
        %1217 = vmatpush.msra.mxu0 0.0
        %1218 = vmatpush.msra.mxu0 0.0
        %v1219 = vand.u32 %v1078, 4294901760
        %1220 = vmatpush.msra.mxu0 %v1219
        %v1221 = vand.u32 %v1074, 4294901760
        %1222 = vmatmul.f32.gmra.mxu0 %v1221
        %v1223 = vpop.f32.mrf.mxu0
        %v1224 = vadd.f32 %v1202, %v1223
        %1225 = vdwg.mxu0
        %v1226 = vmax.f32 %v1224, 0.0
        %v1227 = vld [vmem:[%s5] sm:$0xff]
        %v1228 = vld [vmem:[%s5 + $0x8] sm:$0xff]
        %v1229 = vld [vmem:[%s5 + $0x10] sm:$0xff]
        %v1230 = vld [vmem:[%s6] sm:$0xff]
        %v1231 = vld [vmem:[%s6 + $0x8] sm:$0xff]
        %v1232 = vld [vmem:[%s6 + $0x10] sm:$0xff]
        %1234 = vset.pattern.permute.xlu0 0
        %1235 = vperm.xlu0 %1234, %v1230
        %v1236 = vpop.permute.xlu0 %1235
        %1239 = vset.pattern.permute.xlu0 0
        %1240 = vperm.xlu0 %1239, %v1231
        %v1241 = vpop.permute.xlu0 %1240
        %1244 = vset.pattern.permute.xlu0 0
        %1245 = vperm.xlu0 %1244, %v1232
        %v1246 = vpop.permute.xlu0 %1245
        %vm1248 = vcmask 64512
        %v1250 = vsel %vm1248, %v1227, 0
        %v1253 = vsel %vm1248, %v1228, 0
        %v1256 = vsel %vm1248, %v1229, 0
        %1258 = vmatpush.msra.mxu0 0.0
        %1259 = vmatpush.msra.mxu0 0.0
        %1260 = vmatpush.msra.mxu0 0.0
        %1261 = vmatpush.msra.mxu0 0.0
        %1262 = vmatpush.msra.mxu0 0.0
        %1263 = vmatpush.msra.mxu0 0.0
        %1264 = vmatpush.msra.mxu0 0.0
        %1265 = vmatpush.msra.mxu0 0.0
        %1266 = vmatpush.msra.mxu0 0.0
        %1267 = vmatpush.msra.mxu0 0.0
        %1268 = vmatpush.msra.mxu0 0.0
        %1269 = vmatpush.msra.mxu0 0.0
        %1270 = vmatpush.msra.mxu0 0.0
        %1271 = vmatpush.msra.mxu0 0.0
        %1272 = vmatpush.msra.mxu0 0.0
        %v1273 = vand.u32 %v1226, 4294901760
        %1274 = vmatpush.msra.mxu0 %v1273
        %v1275 = vand.u32 %v1250, 4294901760
        %v1276 = vsub.f32 %v1250, %v1275
        %v1277 = vand.u32 %v1276, 4294901760
        %v1278 = vsub.f32 %v1276, %v1277
        %v1279 = vand.u32 %v1278, 4294901760
        %1280 = vmatmul.f32.gmra.mxu0 %v1279
        %v1281 = vpop.f32.mrf.mxu0
        %v1282 = vadd.f32 %v1236, %v1281
        %v1283 = vand.u32 %v1253, 4294901760
        %v1284 = vsub.f32 %v1253, %v1283
        %v1285 = vand.u32 %v1284, 4294901760
        %v1286 = vsub.f32 %v1284, %v1285
        %v1287 = vand.u32 %v1286, 4294901760
        %1288 = vmatmul.f32.gmra.mxu0 %v1287
        %v1289 = vpop.f32.mrf.mxu0
        %v1290 = vadd.f32 %v1241, %v1289
        %v1291 = vand.u32 %v1256, 4294901760
        %v1292 = vsub.f32 %v1256, %v1291
        %v1293 = vand.u32 %v1292, 4294901760
        %v1294 = vsub.f32 %v1292, %v1293
        %v1295 = vand.u32 %v1294, 4294901760
        %1296 = vmatmul.f32.gmra.mxu0 %v1295
        %v1297 = vpop.f32.mrf.mxu0
        %v1298 = vadd.f32 %v1246, %v1297
        %1299 = vdwg.mxu0
        %1300 = vmatpush.msra.mxu0 0.0
        %1301 = vmatpush.msra.mxu0 0.0
        %1302 = vmatpush.msra.mxu0 0.0
        %1303 = vmatpush.msra.mxu0 0.0
        %1304 = vmatpush.msra.mxu0 0.0
        %1305 = vmatpush.msra.mxu0 0.0
        %1306 = vmatpush.msra.mxu0 0.0
        %1307 = vmatpush.msra.mxu0 0.0
        %1308 = vmatpush.msra.mxu0 0.0
        %1309 = vmatpush.msra.mxu0 0.0
        %1310 = vmatpush.msra.mxu0 0.0
        %1311 = vmatpush.msra.mxu0 0.0
        %1312 = vmatpush.msra.mxu0 0.0
        %1313 = vmatpush.msra.mxu0 0.0
        %1314 = vmatpush.msra.mxu0 0.0
        %v1315 = vand.u32 %v1226, 4294901760
        %v1316 = vsub.f32 %v1226, %v1315
        %v1317 = vand.u32 %v1316, 4294901760
        %v1318 = vsub.f32 %v1316, %v1317
        %v1319 = vand.u32 %v1318, 4294901760
        %1320 = vmatpush.msra.mxu0 %v1319
        %v1321 = vand.u32 %v1250, 4294901760
        %1322 = vmatmul.f32.gmra.mxu0 %v1321
        %v1323 = vpop.f32.mrf.mxu0
        %v1324 = vadd.f32 %v1282, %v1323
        %v1325 = vand.u32 %v1253, 4294901760
        %1326 = vmatmul.f32.gmra.mxu0 %v1325
        %v1327 = vpop.f32.mrf.mxu0
        %v1328 = vadd.f32 %v1290, %v1327
        %v1329 = vand.u32 %v1256, 4294901760
        %1330 = vmatmul.f32.gmra.mxu0 %v1329
        %v1331 = vpop.f32.mrf.mxu0
        %v1332 = vadd.f32 %v1298, %v1331
        %1333 = vdwg.mxu0
        %1334 = vmatpush.msra.mxu0 0.0
        %1335 = vmatpush.msra.mxu0 0.0
        %1336 = vmatpush.msra.mxu0 0.0
        %1337 = vmatpush.msra.mxu0 0.0
        %1338 = vmatpush.msra.mxu0 0.0
        %1339 = vmatpush.msra.mxu0 0.0
        %1340 = vmatpush.msra.mxu0 0.0
        %1341 = vmatpush.msra.mxu0 0.0
        %1342 = vmatpush.msra.mxu0 0.0
        %1343 = vmatpush.msra.mxu0 0.0
        %1344 = vmatpush.msra.mxu0 0.0
        %1345 = vmatpush.msra.mxu0 0.0
        %1346 = vmatpush.msra.mxu0 0.0
        %1347 = vmatpush.msra.mxu0 0.0
        %1348 = vmatpush.msra.mxu0 0.0
        %v1349 = vand.u32 %v1226, 4294901760
        %v1350 = vsub.f32 %v1226, %v1349
        %1351 = vmatpush.msra.mxu0 %v1350
        %v1352 = vand.u32 %v1250, 4294901760
        %v1353 = vsub.f32 %v1250, %v1352
        %1354 = vmatmul.f32.gmra.mxu0 %v1353
        %v1355 = vpop.f32.mrf.mxu0
        %v1356 = vadd.f32 %v1324, %v1355
        %v1357 = vand.u32 %v1253, 4294901760
        %v1358 = vsub.f32 %v1253, %v1357
        %1359 = vmatmul.f32.gmra.mxu0 %v1358
        %v1360 = vpop.f32.mrf.mxu0
        %v1361 = vadd.f32 %v1328, %v1360
        %v1362 = vand.u32 %v1256, 4294901760
        %v1363 = vsub.f32 %v1256, %v1362
        %1364 = vmatmul.f32.gmra.mxu0 %v1363
        %v1365 = vpop.f32.mrf.mxu0
        %v1366 = vadd.f32 %v1332, %v1365
        %1367 = vdwg.mxu0
        %1368 = vmatpush.msra.mxu0 0.0
        %1369 = vmatpush.msra.mxu0 0.0
        %1370 = vmatpush.msra.mxu0 0.0
        %1371 = vmatpush.msra.mxu0 0.0
        %1372 = vmatpush.msra.mxu0 0.0
        %1373 = vmatpush.msra.mxu0 0.0
        %1374 = vmatpush.msra.mxu0 0.0
        %1375 = vmatpush.msra.mxu0 0.0
        %1376 = vmatpush.msra.mxu0 0.0
        %1377 = vmatpush.msra.mxu0 0.0
        %1378 = vmatpush.msra.mxu0 0.0
        %1379 = vmatpush.msra.mxu0 0.0
        %1380 = vmatpush.msra.mxu0 0.0
        %1381 = vmatpush.msra.mxu0 0.0
        %1382 = vmatpush.msra.mxu0 0.0
        %v1383 = vand.u32 %v1226, 4294901760
        %1384 = vmatpush.msra.mxu0 %v1383
        %v1385 = vand.u32 %v1250, 4294901760
        %v1386 = vsub.f32 %v1250, %v1385
        %v1387 = vand.u32 %v1386, 4294901760
        %1388 = vmatmul.f32.gmra.mxu0 %v1387
        %v1389 = vpop.f32.mrf.mxu0
        %v1390 = vadd.f32 %v1356, %v1389
        %v1391 = vand.u32 %v1253, 4294901760
        %v1392 = vsub.f32 %v1253, %v1391
        %v1393 = vand.u32 %v1392, 4294901760
        %1394 = vmatmul.f32.gmra.mxu0 %v1393
        %v1395 = vpop.f32.mrf.mxu0
        %v1396 = vadd.f32 %v1361, %v1395
        %v1397 = vand.u32 %v1256, 4294901760
        %v1398 = vsub.f32 %v1256, %v1397
        %v1399 = vand.u32 %v1398, 4294901760
        %1400 = vmatmul.f32.gmra.mxu0 %v1399
        %v1401 = vpop.f32.mrf.mxu0
        %v1402 = vadd.f32 %v1366, %v1401
        %1403 = vdwg.mxu0
        %1404 = vmatpush.msra.mxu0 0.0
        %1405 = vmatpush.msra.mxu0 0.0
        %1406 = vmatpush.msra.mxu0 0.0
        %1407 = vmatpush.msra.mxu0 0.0
        %1408 = vmatpush.msra.mxu0 0.0
        %1409 = vmatpush.msra.mxu0 0.0
        %1410 = vmatpush.msra.mxu0 0.0
        %1411 = vmatpush.msra.mxu0 0.0
        %1412 = vmatpush.msra.mxu0 0.0
        %1413 = vmatpush.msra.mxu0 0.0
        %1414 = vmatpush.msra.mxu0 0.0
        %1415 = vmatpush.msra.mxu0 0.0
        %1416 = vmatpush.msra.mxu0 0.0
        %1417 = vmatpush.msra.mxu0 0.0
        %1418 = vmatpush.msra.mxu0 0.0
        %v1419 = vand.u32 %v1226, 4294901760
        %v1420 = vsub.f32 %v1226, %v1419
        %v1421 = vand.u32 %v1420, 4294901760
        %1422 = vmatpush.msra.mxu0 %v1421
        %v1423 = vand.u32 %v1250, 4294901760
        %1424 = vmatmul.f32.gmra.mxu0 %v1423
        %v1425 = vpop.f32.mrf.mxu0
        %v1426 = vadd.f32 %v1390, %v1425
        %v1427 = vand.u32 %v1253, 4294901760
        %1428 = vmatmul.f32.gmra.mxu0 %v1427
        %v1429 = vpop.f32.mrf.mxu0
        %v1430 = vadd.f32 %v1396, %v1429
        %v1431 = vand.u32 %v1256, 4294901760
        %1432 = vmatmul.f32.gmra.mxu0 %v1431
        %v1433 = vpop.f32.mrf.mxu0
        %v1434 = vadd.f32 %v1402, %v1433
        %1435 = vdwg.mxu0
        %1436 = vmatpush.msra.mxu0 0.0
        %1437 = vmatpush.msra.mxu0 0.0
        %1438 = vmatpush.msra.mxu0 0.0
        %1439 = vmatpush.msra.mxu0 0.0
        %1440 = vmatpush.msra.mxu0 0.0
        %1441 = vmatpush.msra.mxu0 0.0
        %1442 = vmatpush.msra.mxu0 0.0
        %1443 = vmatpush.msra.mxu0 0.0
        %1444 = vmatpush.msra.mxu0 0.0
        %1445 = vmatpush.msra.mxu0 0.0
        %1446 = vmatpush.msra.mxu0 0.0
        %1447 = vmatpush.msra.mxu0 0.0
        %1448 = vmatpush.msra.mxu0 0.0
        %1449 = vmatpush.msra.mxu0 0.0
        %1450 = vmatpush.msra.mxu0 0.0
        %v1451 = vand.u32 %v1226, 4294901760
        %1452 = vmatpush.msra.mxu0 %v1451
        %v1453 = vand.u32 %v1250, 4294901760
        %1454 = vmatmul.f32.gmra.mxu0 %v1453
        %v1455 = vpop.f32.mrf.mxu0
        %v1456 = vadd.f32 %v1426, %v1455
        %v1457 = vand.u32 %v1253, 4294901760
        %1458 = vmatmul.f32.gmra.mxu0 %v1457
        %v1459 = vpop.f32.mrf.mxu0
        %v1460 = vadd.f32 %v1430, %v1459
        %v1461 = vand.u32 %v1256, 4294901760
        %1462 = vmatmul.f32.gmra.mxu0 %v1461
        %v1463 = vpop.f32.mrf.mxu0
        %v1464 = vadd.f32 %v1434, %v1463
        %1465 = vdwg.mxu0
        %v1466 = vmax.f32 %v1456, 0.0
        %v1467 = vmax.f32 %v1460, 0.0
        %v1468 = vmax.f32 %v1464, 0.0
        %v1469 = vld [vmem:[%s7] sm:$0xff]
        %v1470 = vld [vmem:[%s7 + $0x8] sm:$0xff]
        %v1471 = vld [vmem:[%s7 + $0x10] sm:$0xff]
        %v1472 = vld [vmem:[%s7 + $0x18] sm:$0xff]
        %v1473 = vld [vmem:[%s7 + $0x20] sm:$0xff]
        %v1474 = vld [vmem:[%s7 + $0x28] sm:$0xff]
        %v1475 = vld [vmem:[%s7 + $0x30] sm:$0xff]
        %v1476 = vld [vmem:[%s8] sm:$0xff]
        %v1477 = vld [vmem:[%s8 + $0x8] sm:$0xff]
        %v1478 = vld [vmem:[%s8 + $0x10] sm:$0xff]
        %v1479 = vld [vmem:[%s8 + $0x18] sm:$0xff]
        %v1480 = vld [vmem:[%s8 + $0x20] sm:$0xff]
        %v1481 = vld [vmem:[%s8 + $0x28] sm:$0xff]
        %v1482 = vld [vmem:[%s8 + $0x30] sm:$0xff]
        %1484 = vset.pattern.permute.xlu0 0
        %1485 = vperm.xlu0 %1484, %v1476
        %v1486 = vpop.permute.xlu0 %1485
        %1489 = vset.pattern.permute.xlu0 0
        %1490 = vperm.xlu0 %1489, %v1477
        %v1491 = vpop.permute.xlu0 %1490
        %1494 = vset.pattern.permute.xlu0 0
        %1495 = vperm.xlu0 %1494, %v1478
        %v1496 = vpop.permute.xlu0 %1495
        %1499 = vset.pattern.permute.xlu0 0
        %1500 = vperm.xlu0 %1499, %v1479
        %v1501 = vpop.permute.xlu0 %1500
        %1504 = vset.pattern.permute.xlu0 0
        %1505 = vperm.xlu0 %1504, %v1480
        %v1506 = vpop.permute.xlu0 %1505
        %1509 = vset.pattern.permute.xlu0 0
        %1510 = vperm.xlu0 %1509, %v1481
        %v1511 = vpop.permute.xlu0 %1510
        %1514 = vset.pattern.permute.xlu0 0
        %1515 = vperm.xlu0 %1514, %v1482
        %v1516 = vpop.permute.xlu0 %1515
        %vm1518 = vcmask 195584
        %v1520 = vsel %vm1518, %v1469, 0
        %v1523 = vsel %vm1518, %v1470, 0
        %v1526 = vsel %vm1518, %v1471, 0
        %v1529 = vsel %vm1518, %v1472, 0
        %v1532 = vsel %vm1518, %v1473, 0
        %v1535 = vsel %vm1518, %v1474, 0
        %v1538 = vsel %vm1518, %v1475, 0
        %1540 = vmatpush.msra.mxu0 0.0
        %1541 = vmatpush.msra.mxu0 0.0
        %1542 = vmatpush.msra.mxu0 0.0
        %1543 = vmatpush.msra.mxu0 0.0
        %1544 = vmatpush.msra.mxu0 0.0
        %1545 = vmatpush.msra.mxu0 0.0
        %1546 = vmatpush.msra.mxu0 0.0
        %1547 = vmatpush.msra.mxu0 0.0
        %1548 = vmatpush.msra.mxu0 0.0
        %1549 = vmatpush.msra.mxu0 0.0
        %1550 = vmatpush.msra.mxu0 0.0
        %1551 = vmatpush.msra.mxu0 0.0
        %1552 = vmatpush.msra.mxu0 0.0
        %v1553 = vand.u32 %v1468, 4294901760
        %1554 = vmatpush.msra.mxu0 %v1553
        %v1555 = vand.u32 %v1467, 4294901760
        %1556 = vmatpush.msra.mxu0 %v1555
        %v1557 = vand.u32 %v1466, 4294901760
        %1558 = vmatpush.msra.mxu0 %v1557
        %v1559 = vand.u32 %v1520, 4294901760
        %v1560 = vsub.f32 %v1520, %v1559
        %v1561 = vand.u32 %v1560, 4294901760
        %v1562 = vsub.f32 %v1560, %v1561
        %v1563 = vand.u32 %v1562, 4294901760
        %1564 = vmatmul.f32.gmra.mxu0 %v1563
        %v1565 = vpop.f32.mrf.mxu0
        %v1566 = vadd.f32 %v1486, %v1565
        %v1567 = vand.u32 %v1523, 4294901760
        %v1568 = vsub.f32 %v1523, %v1567
        %v1569 = vand.u32 %v1568, 4294901760
        %v1570 = vsub.f32 %v1568, %v1569
        %v1571 = vand.u32 %v1570, 4294901760
        %1572 = vmatmul.f32.gmra.mxu0 %v1571
        %v1573 = vpop.f32.mrf.mxu0
        %v1574 = vadd.f32 %v1491, %v1573
        %v1575 = vand.u32 %v1526, 4294901760
        %v1576 = vsub.f32 %v1526, %v1575
        %v1577 = vand.u32 %v1576, 4294901760
        %v1578 = vsub.f32 %v1576, %v1577
        %v1579 = vand.u32 %v1578, 4294901760
        %1580 = vmatmul.f32.gmra.mxu0 %v1579
        %v1581 = vpop.f32.mrf.mxu0
        %v1582 = vadd.f32 %v1496, %v1581
        %v1583 = vand.u32 %v1529, 4294901760
        %v1584 = vsub.f32 %v1529, %v1583
        %v1585 = vand.u32 %v1584, 4294901760
        %v1586 = vsub.f32 %v1584, %v1585
        %v1587 = vand.u32 %v1586, 4294901760
        %1588 = vmatmul.f32.gmra.mxu0 %v1587
        %v1589 = vpop.f32.mrf.mxu0
        %v1590 = vadd.f32 %v1501, %v1589
        %v1591 = vand.u32 %v1532, 4294901760
        %v1592 = vsub.f32 %v1532, %v1591
        %v1593 = vand.u32 %v1592, 4294901760
        %v1594 = vsub.f32 %v1592, %v1593
        %v1595 = vand.u32 %v1594, 4294901760
        %1596 = vmatmul.f32.gmra.mxu0 %v1595
        %v1597 = vpop.f32.mrf.mxu0
        %v1598 = vadd.f32 %v1506, %v1597
        %v1599 = vand.u32 %v1535, 4294901760
        %v1600 = vsub.f32 %v1535, %v1599
        %v1601 = vand.u32 %v1600, 4294901760
        %v1602 = vsub.f32 %v1600, %v1601
        %v1603 = vand.u32 %v1602, 4294901760
        %1604 = vmatmul.f32.gmra.mxu0 %v1603
        %v1605 = vpop.f32.mrf.mxu0
        %v1606 = vadd.f32 %v1511, %v1605
        %v1607 = vand.u32 %v1538, 4294901760
        %v1608 = vsub.f32 %v1538, %v1607
        %v1609 = vand.u32 %v1608, 4294901760
        %v1610 = vsub.f32 %v1608, %v1609
        %v1611 = vand.u32 %v1610, 4294901760
        %1612 = vmatmul.f32.gmra.mxu0 %v1611
        %v1613 = vpop.f32.mrf.mxu0
        %v1614 = vadd.f32 %v1516, %v1613
        %1615 = vdwg.mxu0
        %1616 = vmatpush.msra.mxu0 0.0
        %1617 = vmatpush.msra.mxu0 0.0
        %1618 = vmatpush.msra.mxu0 0.0
        %1619 = vmatpush.msra.mxu0 0.0
        %1620 = vmatpush.msra.mxu0 0.0
        %1621 = vmatpush.msra.mxu0 0.0
        %1622 = vmatpush.msra.mxu0 0.0
        %1623 = vmatpush.msra.mxu0 0.0
        %1624 = vmatpush.msra.mxu0 0.0
        %1625 = vmatpush.msra.mxu0 0.0
        %1626 = vmatpush.msra.mxu0 0.0
        %1627 = vmatpush.msra.mxu0 0.0
        %1628 = vmatpush.msra.mxu0 0.0
        %v1629 = vand.u32 %v1468, 4294901760
        %v1630 = vsub.f32 %v1468, %v1629
        %v1631 = vand.u32 %v1630, 4294901760
        %v1632 = vsub.f32 %v1630, %v1631
        %v1633 = vand.u32 %v1632, 4294901760
        %1634 = vmatpush.msra.mxu0 %v1633
        %v1635 = vand.u32 %v1467, 4294901760
        %v1636 = vsub.f32 %v1467, %v1635
        %v1637 = vand.u32 %v1636, 4294901760
        %v1638 = vsub.f32 %v1636, %v1637
        %v1639 = vand.u32 %v1638, 4294901760
        %1640 = vmatpush.msra.mxu0 %v1639
        %v1641 = vand.u32 %v1466, 4294901760
        %v1642 = vsub.f32 %v1466, %v1641
        %v1643 = vand.u32 %v1642, 4294901760
        %v1644 = vsub.f32 %v1642, %v1643
        %v1645 = vand.u32 %v1644, 4294901760
        %1646 = vmatpush.msra.mxu0 %v1645
        %v1647 = vand.u32 %v1520, 4294901760
        %1648 = vmatmul.f32.gmra.mxu0 %v1647
        %v1649 = vpop.f32.mrf.mxu0
        %v1650 = vadd.f32 %v1566, %v1649
        %v1651 = vand.u32 %v1523, 4294901760
        %1652 = vmatmul.f32.gmra.mxu0 %v1651
        %v1653 = vpop.f32.mrf.mxu0
        %v1654 = vadd.f32 %v1574, %v1653
        %v1655 = vand.u32 %v1526, 4294901760
        %1656 = vmatmul.f32.gmra.mxu0 %v1655
        %v1657 = vpop.f32.mrf.mxu0
        %v1658 = vadd.f32 %v1582, %v1657
        %v1659 = vand.u32 %v1529, 4294901760
        %1660 = vmatmul.f32.gmra.mxu0 %v1659
        %v1661 = vpop.f32.mrf.mxu0
        %v1662 = vadd.f32 %v1590, %v1661
        %v1663 = vand.u32 %v1532, 4294901760
        %1664 = vmatmul.f32.gmra.mxu0 %v1663
        %v1665 = vpop.f32.mrf.mxu0
        %v1666 = vadd.f32 %v1598, %v1665
        %v1667 = vand.u32 %v1535, 4294901760
        %1668 = vmatmul.f32.gmra.mxu0 %v1667
        %v1669 = vpop.f32.mrf.mxu0
        %v1670 = vadd.f32 %v1606, %v1669
        %v1671 = vand.u32 %v1538, 4294901760
        %1672 = vmatmul.f32.gmra.mxu0 %v1671
        %v1673 = vpop.f32.mrf.mxu0
        %v1674 = vadd.f32 %v1614, %v1673
        %1675 = vdwg.mxu0
        %1676 = vmatpush.msra.mxu0 0.0
        %1677 = vmatpush.msra.mxu0 0.0
        %1678 = vmatpush.msra.mxu0 0.0
        %1679 = vmatpush.msra.mxu0 0.0
        %1680 = vmatpush.msra.mxu0 0.0
        %1681 = vmatpush.msra.mxu0 0.0
        %1682 = vmatpush.msra.mxu0 0.0
        %1683 = vmatpush.msra.mxu0 0.0
        %1684 = vmatpush.msra.mxu0 0.0
        %1685 = vmatpush.msra.mxu0 0.0
        %1686 = vmatpush.msra.mxu0 0.0
        %1687 = vmatpush.msra.mxu0 0.0
        %1688 = vmatpush.msra.mxu0 0.0
        %v1689 = vand.u32 %v1468, 4294901760
        %v1690 = vsub.f32 %v1468, %v1689
        %1691 = vmatpush.msra.mxu0 %v1690
        %v1692 = vand.u32 %v1467, 4294901760
        %v1693 = vsub.f32 %v1467, %v1692
        %1694 = vmatpush.msra.mxu0 %v1693
        %v1695 = vand.u32 %v1466, 4294901760
        %v1696 = vsub.f32 %v1466, %v1695
        %1697 = vmatpush.msra.mxu0 %v1696
        %v1698 = vand.u32 %v1520, 4294901760
        %v1699 = vsub.f32 %v1520, %v1698
        %1700 = vmatmul.f32.gmra.mxu0 %v1699
        %v1701 = vpop.f32.mrf.mxu0
        %v1702 = vadd.f32 %v1650, %v1701
        %v1703 = vand.u32 %v1523, 4294901760
        %v1704 = vsub.f32 %v1523, %v1703
        %1705 = vmatmul.f32.gmra.mxu0 %v1704
        %v1706 = vpop.f32.mrf.mxu0
        %v1707 = vadd.f32 %v1654, %v1706
        %v1708 = vand.u32 %v1526, 4294901760
        %v1709 = vsub.f32 %v1526, %v1708
        %1710 = vmatmul.f32.gmra.mxu0 %v1709
        %v1711 = vpop.f32.mrf.mxu0
        %v1712 = vadd.f32 %v1658, %v1711
        %v1713 = vand.u32 %v1529, 4294901760
        %v1714 = vsub.f32 %v1529, %v1713
        %1715 = vmatmul.f32.gmra.mxu0 %v1714
        %v1716 = vpop.f32.mrf.mxu0
        %v1717 = vadd.f32 %v1662, %v1716
        %v1718 = vand.u32 %v1532, 4294901760
        %v1719 = vsub.f32 %v1532, %v1718
        %1720 = vmatmul.f32.gmra.mxu0 %v1719
        %v1721 = vpop.f32.mrf.mxu0
        %v1722 = vadd.f32 %v1666, %v1721
        %v1723 = vand.u32 %v1535, 4294901760
        %v1724 = vsub.f32 %v1535, %v1723
        %1725 = vmatmul.f32.gmra.mxu0 %v1724
        %v1726 = vpop.f32.mrf.mxu0
        %v1727 = vadd.f32 %v1670, %v1726
        %v1728 = vand.u32 %v1538, 4294901760
        %v1729 = vsub.f32 %v1538, %v1728
        %1730 = vmatmul.f32.gmra.mxu0 %v1729
        %v1731 = vpop.f32.mrf.mxu0
        %v1732 = vadd.f32 %v1674, %v1731
        %1733 = vdwg.mxu0
        %1734 = vmatpush.msra.mxu0 0.0
        %1735 = vmatpush.msra.mxu0 0.0
        %1736 = vmatpush.msra.mxu0 0.0
        %1737 = vmatpush.msra.mxu0 0.0
        %1738 = vmatpush.msra.mxu0 0.0
        %1739 = vmatpush.msra.mxu0 0.0
        %1740 = vmatpush.msra.mxu0 0.0
        %1741 = vmatpush.msra.mxu0 0.0
        %1742 = vmatpush.msra.mxu0 0.0
        %1743 = vmatpush.msra.mxu0 0.0
        %1744 = vmatpush.msra.mxu0 0.0
        %1745 = vmatpush.msra.mxu0 0.0
        %1746 = vmatpush.msra.mxu0 0.0
        %v1747 = vand.u32 %v1468, 4294901760
        %1748 = vmatpush.msra.mxu0 %v1747
        %v1749 = vand.u32 %v1467, 4294901760
        %1750 = vmatpush.msra.mxu0 %v1749
        %v1751 = vand.u32 %v1466, 4294901760
        %1752 = vmatpush.msra.mxu0 %v1751
        %v1753 = vand.u32 %v1520, 4294901760
        %v1754 = vsub.f32 %v1520, %v1753
        %v1755 = vand.u32 %v1754, 4294901760
        %1756 = vmatmul.f32.gmra.mxu0 %v1755
        %v1757 = vpop.f32.mrf.mxu0
        %v1758 = vadd.f32 %v1702, %v1757
        %v1759 = vand.u32 %v1523, 4294901760
        %v1760 = vsub.f32 %v1523, %v1759
        %v1761 = vand.u32 %v1760, 4294901760
        %1762 = vmatmul.f32.gmra.mxu0 %v1761
        %v1763 = vpop.f32.mrf.mxu0
        %v1764 = vadd.f32 %v1707, %v1763
        %v1765 = vand.u32 %v1526, 4294901760
        %v1766 = vsub.f32 %v1526, %v1765
        %v1767 = vand.u32 %v1766, 4294901760
        %1768 = vmatmul.f32.gmra.mxu0 %v1767
        %v1769 = vpop.f32.mrf.mxu0
        %v1770 = vadd.f32 %v1712, %v1769
        %v1771 = vand.u32 %v1529, 4294901760
        %v1772 = vsub.f32 %v1529, %v1771
        %v1773 = vand.u32 %v1772, 4294901760
        %1774 = vmatmul.f32.gmra.mxu0 %v1773
        %v1775 = vpop.f32.mrf.mxu0
        %v1776 = vadd.f32 %v1717, %v1775
        %v1777 = vand.u32 %v1532, 4294901760
        %v1778 = vsub.f32 %v1532, %v1777
        %v1779 = vand.u32 %v1778, 4294901760
        %1780 = vmatmul.f32.gmra.mxu0 %v1779
        %v1781 = vpop.f32.mrf.mxu0
        %v1782 = vadd.f32 %v1722, %v1781
        %v1783 = vand.u32 %v1535, 4294901760
        %v1784 = vsub.f32 %v1535, %v1783
        %v1785 = vand.u32 %v1784, 4294901760
        %1786 = vmatmul.f32.gmra.mxu0 %v1785
        %v1787 = vpop.f32.mrf.mxu0
        %v1788 = vadd.f32 %v1727, %v1787
        %v1789 = vand.u32 %v1538, 4294901760
        %v1790 = vsub.f32 %v1538, %v1789
        %v1791 = vand.u32 %v1790, 4294901760
        %1792 = vmatmul.f32.gmra.mxu0 %v1791
        %v1793 = vpop.f32.mrf.mxu0
        %v1794 = vadd.f32 %v1732, %v1793
        %1795 = vdwg.mxu0
        %1796 = vmatpush.msra.mxu0 0.0
        %1797 = vmatpush.msra.mxu0 0.0
        %1798 = vmatpush.msra.mxu0 0.0
        %1799 = vmatpush.msra.mxu0 0.0
        %1800 = vmatpush.msra.mxu0 0.0
        %1801 = vmatpush.msra.mxu0 0.0
        %1802 = vmatpush.msra.mxu0 0.0
        %1803 = vmatpush.msra.mxu0 0.0
        %1804 = vmatpush.msra.mxu0 0.0
        %1805 = vmatpush.msra.mxu0 0.0
        %1806 = vmatpush.msra.mxu0 0.0
        %1807 = vmatpush.msra.mxu0 0.0
        %1808 = vmatpush.msra.mxu0 0.0
        %v1809 = vand.u32 %v1468, 4294901760
        %v1810 = vsub.f32 %v1468, %v1809
        %v1811 = vand.u32 %v1810, 4294901760
        %1812 = vmatpush.msra.mxu0 %v1811
        %v1813 = vand.u32 %v1467, 4294901760
        %v1814 = vsub.f32 %v1467, %v1813
        %v1815 = vand.u32 %v1814, 4294901760
        %1816 = vmatpush.msra.mxu0 %v1815
        %v1817 = vand.u32 %v1466, 4294901760
        %v1818 = vsub.f32 %v1466, %v1817
        %v1819 = vand.u32 %v1818, 4294901760
        %1820 = vmatpush.msra.mxu0 %v1819
        %v1821 = vand.u32 %v1520, 4294901760
        %1822 = vmatmul.f32.gmra.mxu0 %v1821
        %v1823 = vpop.f32.mrf.mxu0
        %v1824 = vadd.f32 %v1758, %v1823
        %v1825 = vand.u32 %v1523, 4294901760
        %1826 = vmatmul.f32.gmra.mxu0 %v1825
        %v1827 = vpop.f32.mrf.mxu0
        %v1828 = vadd.f32 %v1764, %v1827
        %v1829 = vand.u32 %v1526, 4294901760
        %1830 = vmatmul.f32.gmra.mxu0 %v1829
        %v1831 = vpop.f32.mrf.mxu0
        %v1832 = vadd.f32 %v1770, %v1831
        %v1833 = vand.u32 %v1529, 4294901760
        %1834 = vmatmul.f32.gmra.mxu0 %v1833
        %v1835 = vpop.f32.mrf.mxu0
        %v1836 = vadd.f32 %v1776, %v1835
        %v1837 = vand.u32 %v1532, 4294901760
        %1838 = vmatmul.f32.gmra.mxu0 %v1837
        %v1839 = vpop.f32.mrf.mxu0
        %v1840 = vadd.f32 %v1782, %v1839
        %v1841 = vand.u32 %v1535, 4294901760
        %1842 = vmatmul.f32.gmra.mxu0 %v1841
        %v1843 = vpop.f32.mrf.mxu0
        %v1844 = vadd.f32 %v1788, %v1843
        %v1845 = vand.u32 %v1538, 4294901760
        %1846 = vmatmul.f32.gmra.mxu0 %v1845
        %v1847 = vpop.f32.mrf.mxu0
        %v1848 = vadd.f32 %v1794, %v1847
        %1849 = vdwg.mxu0
        %1850 = vmatpush.msra.mxu0 0.0
        %1851 = vmatpush.msra.mxu0 0.0
        %1852 = vmatpush.msra.mxu0 0.0
        %1853 = vmatpush.msra.mxu0 0.0
        %1854 = vmatpush.msra.mxu0 0.0
        %1855 = vmatpush.msra.mxu0 0.0
        %1856 = vmatpush.msra.mxu0 0.0
        %1857 = vmatpush.msra.mxu0 0.0
        %1858 = vmatpush.msra.mxu0 0.0
        %1859 = vmatpush.msra.mxu0 0.0
        %1860 = vmatpush.msra.mxu0 0.0
        %1861 = vmatpush.msra.mxu0 0.0
        %1862 = vmatpush.msra.mxu0 0.0
        %v1863 = vand.u32 %v1468, 4294901760
        %1864 = vmatpush.msra.mxu0 %v1863
        %v1865 = vand.u32 %v1467, 4294901760
        %1866 = vmatpush.msra.mxu0 %v1865
        %v1867 = vand.u32 %v1466, 4294901760
        %1868 = vmatpush.msra.mxu0 %v1867
        %v1869 = vand.u32 %v1520, 4294901760
        %1870 = vmatmul.f32.gmra.mxu0 %v1869
        %v1871 = vpop.f32.mrf.mxu0
        %v1872 = vadd.f32 %v1824, %v1871
        %v1873 = vand.u32 %v1523, 4294901760
        %1874 = vmatmul.f32.gmra.mxu0 %v1873
        %v1875 = vpop.f32.mrf.mxu0
        %v1876 = vadd.f32 %v1828, %v1875
        %v1877 = vand.u32 %v1526, 4294901760
        %1878 = vmatmul.f32.gmra.mxu0 %v1877
        %v1879 = vpop.f32.mrf.mxu0
        %v1880 = vadd.f32 %v1832, %v1879
        %v1881 = vand.u32 %v1529, 4294901760
        %1882 = vmatmul.f32.gmra.mxu0 %v1881
        %v1883 = vpop.f32.mrf.mxu0
        %v1884 = vadd.f32 %v1836, %v1883
        %v1885 = vand.u32 %v1532, 4294901760
        %1886 = vmatmul.f32.gmra.mxu0 %v1885
        %v1887 = vpop.f32.mrf.mxu0
        %v1888 = vadd.f32 %v1840, %v1887
        %v1889 = vand.u32 %v1535, 4294901760
        %1890 = vmatmul.f32.gmra.mxu0 %v1889
        %v1891 = vpop.f32.mrf.mxu0
        %v1892 = vadd.f32 %v1844, %v1891
        %v1893 = vand.u32 %v1538, 4294901760
        %1894 = vmatmul.f32.gmra.mxu0 %v1893
        %v1895 = vpop.f32.mrf.mxu0
        %v1896 = vadd.f32 %v1848, %v1895
        %1897 = vdwg.mxu0
        %v1898 = vmax.f32 %v1872, 0.0
        %v1899 = vmax.f32 %v1876, 0.0
        %v1900 = vmax.f32 %v1880, 0.0
        %v1901 = vmax.f32 %v1884, 0.0
        %v1902 = vmax.f32 %v1888, 0.0
        %v1903 = vmax.f32 %v1892, 0.0
        %v1904 = vmax.f32 %v1896, 0.0
        %v1905 = vld [vmem:[%s9] sm:$0xff]
        %v1906 = vld [vmem:[%s9 + $0x8] sm:$0xff]
        %v1907 = vld [vmem:[%s9 + $0x10] sm:$0xff]
        %v1908 = vld [vmem:[%s9 + $0x18] sm:$0xff]
        %v1909 = vld [vmem:[%s9 + $0x20] sm:$0xff]
        %v1910 = vld [vmem:[%s9 + $0x28] sm:$0xff]
        %v1911 = vld [vmem:[%s9 + $0x30] sm:$0xff]
        %v1912 = vld [vmem:[%s9 + $0x38] sm:$0xff]
        %v1913 = vld [vmem:[%s9 + $0x40] sm:$0xff]
        %v1914 = vld [vmem:[%s9 + $0x48] sm:$0xff]
        %v1915 = vld [vmem:[%s9 + $0x50] sm:$0xff]
        %v1916 = vld [vmem:[%s10] sm:$0xff]
        %v1917 = vld [vmem:[%s10 + $0x8] sm:$0xff]
        %v1918 = vld [vmem:[%s10 + $0x10] sm:$0xff]
        %v1919 = vld [vmem:[%s10 + $0x18] sm:$0xff]
        %v1920 = vld [vmem:[%s10 + $0x20] sm:$0xff]
        %v1921 = vld [vmem:[%s10 + $0x28] sm:$0xff]
        %v1922 = vld [vmem:[%s10 + $0x30] sm:$0xff]
        %v1923 = vld [vmem:[%s10 + $0x38] sm:$0xff]
        %v1924 = vld [vmem:[%s10 + $0x40] sm:$0xff]
        %v1925 = vld [vmem:[%s10 + $0x48] sm:$0xff]
        %v1926 = vld [vmem:[%s10 + $0x50] sm:$0xff]
        %1928 = vset.pattern.permute.xlu0 0
        %1929 = vperm.xlu0 %1928, %v1916
        %v1930 = vpop.permute.xlu0 %1929
        %1933 = vset.pattern.permute.xlu0 0
        %1934 = vperm.xlu0 %1933, %v1917
        %v1935 = vpop.permute.xlu0 %1934
        %1938 = vset.pattern.permute.xlu0 0
        %1939 = vperm.xlu0 %1938, %v1918
        %v1940 = vpop.permute.xlu0 %1939
        %1943 = vset.pattern.permute.xlu0 0
        %1944 = vperm.xlu0 %1943, %v1919
        %v1945 = vpop.permute.xlu0 %1944
        %1948 = vset.pattern.permute.xlu0 0
        %1949 = vperm.xlu0 %1948, %v1920
        %v1950 = vpop.permute.xlu0 %1949
        %1953 = vset.pattern.permute.xlu0 0
        %1954 = vperm.xlu0 %1953, %v1921
        %v1955 = vpop.permute.xlu0 %1954
        %1958 = vset.pattern.permute.xlu0 0
        %1959 = vperm.xlu0 %1958, %v1922
        %v1960 = vpop.permute.xlu0 %1959
        %1963 = vset.pattern.permute.xlu0 0
        %1964 = vperm.xlu0 %1963, %v1923
        %v1965 = vpop.permute.xlu0 %1964
        %1968 = vset.pattern.permute.xlu0 0
        %1969 = vperm.xlu0 %1968, %v1924
        %v1970 = vpop.permute.xlu0 %1969
        %1973 = vset.pattern.permute.xlu0 0
        %1974 = vperm.xlu0 %1973, %v1925
        %v1975 = vpop.permute.xlu0 %1974
        %1978 = vset.pattern.permute.xlu0 0
        %1979 = vperm.xlu0 %1978, %v1926
        %v1980 = vpop.permute.xlu0 %1979
        %vm1982 = vcmask 457728
        %v1984 = vsel %vm1982, %v1905, 0
        %v1987 = vsel %vm1982, %v1906, 0
        %v1990 = vsel %vm1982, %v1907, 0
        %v1993 = vsel %vm1982, %v1908, 0
        %v1996 = vsel %vm1982, %v1909, 0
        %v1999 = vsel %vm1982, %v1910, 0
        %v2002 = vsel %vm1982, %v1911, 0
        %v2005 = vsel %vm1982, %v1912, 0
        %v2008 = vsel %vm1982, %v1913, 0
        %v2011 = vsel %vm1982, %v1914, 0
        %v2014 = vsel %vm1982, %v1915, 0
        %2016 = vmatpush.msra.mxu0 0.0
        %2017 = vmatpush.msra.mxu0 0.0
        %2018 = vmatpush.msra.mxu0 0.0
        %2019 = vmatpush.msra.mxu0 0.0
        %2020 = vmatpush.msra.mxu0 0.0
        %2021 = vmatpush.msra.mxu0 0.0
        %2022 = vmatpush.msra.mxu0 0.0
        %2023 = vmatpush.msra.mxu0 0.0
        %2024 = vmatpush.msra.mxu0 0.0
        %v2025 = vand.u32 %v1904, 4294901760
        %2026 = vmatpush.msra.mxu0 %v2025
        %v2027 = vand.u32 %v1903, 4294901760
        %2028 = vmatpush.msra.mxu0 %v2027
        %v2029 = vand.u32 %v1902, 4294901760
        %2030 = vmatpush.msra.mxu0 %v2029
        %v2031 = vand.u32 %v1901, 4294901760
        %2032 = vmatpush.msra.mxu0 %v2031
        %v2033 = vand.u32 %v1900, 4294901760
        %2034 = vmatpush.msra.mxu0 %v2033
        %v2035 = vand.u32 %v1899, 4294901760
        %2036 = vmatpush.msra.mxu0 %v2035
        %v2037 = vand.u32 %v1898, 4294901760
        %2038 = vmatpush.msra.mxu0 %v2037
        %v2039 = vand.u32 %v1984, 4294901760
        %v2040 = vsub.f32 %v1984, %v2039
        %v2041 = vand.u32 %v2040, 4294901760
        %v2042 = vsub.f32 %v2040, %v2041
        %v2043 = vand.u32 %v2042, 4294901760
        %2044 = vmatmul.f32.gmra.mxu0 %v2043
        %v2045 = vpop.f32.mrf.mxu0
        %v2046 = vadd.f32 %v1930, %v2045
        %v2047 = vand.u32 %v1987, 4294901760
        %v2048 = vsub.f32 %v1987, %v2047
        %v2049 = vand.u32 %v2048, 4294901760
        %v2050 = vsub.f32 %v2048, %v2049
        %v2051 = vand.u32 %v2050, 4294901760
        %2052 = vmatmul.f32.gmra.mxu0 %v2051
        %v2053 = vpop.f32.mrf.mxu0
        %v2054 = vadd.f32 %v1935, %v2053
        %v2055 = vand.u32 %v1990, 4294901760
        %v2056 = vsub.f32 %v1990, %v2055
        %v2057 = vand.u32 %v2056, 4294901760
        %v2058 = vsub.f32 %v2056, %v2057
        %v2059 = vand.u32 %v2058, 4294901760
        %2060 = vmatmul.f32.gmra.mxu0 %v2059
        %v2061 = vpop.f32.mrf.mxu0
        %v2062 = vadd.f32 %v1940, %v2061
        %v2063 = vand.u32 %v1993, 4294901760
        %v2064 = vsub.f32 %v1993, %v2063
        %v2065 = vand.u32 %v2064, 4294901760
        %v2066 = vsub.f32 %v2064, %v2065
        %v2067 = vand.u32 %v2066, 4294901760
        %2068 = vmatmul.f32.gmra.mxu0 %v2067
        %v2069 = vpop.f32.mrf.mxu0
        %v2070 = vadd.f32 %v1945, %v2069
        %v2071 = vand.u32 %v1996, 4294901760
        %v2072 = vsub.f32 %v1996, %v2071
        %v2073 = vand.u32 %v2072, 4294901760
        %v2074 = vsub.f32 %v2072, %v2073
        %v2075 = vand.u32 %v2074, 4294901760
        %2076 = vmatmul.f32.gmra.mxu0 %v2075
        %v2077 = vpop.f32.mrf.mxu0
        %v2078 = vadd.f32 %v1950, %v2077
        %v2079 = vand.u32 %v1999, 4294901760
        %v2080 = vsub.f32 %v1999, %v2079
        %v2081 = vand.u32 %v2080, 4294901760
        %v2082 = vsub.f32 %v2080, %v2081
        %v2083 = vand.u32 %v2082, 4294901760
        %2084 = vmatmul.f32.gmra.mxu0 %v2083
        %v2085 = vpop.f32.mrf.mxu0
        %v2086 = vadd.f32 %v1955, %v2085
        %v2087 = vand.u32 %v2002, 4294901760
        %v2088 = vsub.f32 %v2002, %v2087
        %v2089 = vand.u32 %v2088, 4294901760
        %v2090 = vsub.f32 %v2088, %v2089
        %v2091 = vand.u32 %v2090, 4294901760
        %2092 = vmatmul.f32.gmra.mxu0 %v2091
        %v2093 = vpop.f32.mrf.mxu0
        %v2094 = vadd.f32 %v1960, %v2093
        %v2095 = vand.u32 %v2005, 4294901760
        %v2096 = vsub.f32 %v2005, %v2095
        %v2097 = vand.u32 %v2096, 4294901760
        %v2098 = vsub.f32 %v2096, %v2097
        %v2099 = vand.u32 %v2098, 4294901760
        %2100 = vmatmul.f32.gmra.mxu0 %v2099
        %v2101 = vpop.f32.mrf.mxu0
        %v2102 = vadd.f32 %v1965, %v2101
        %v2103 = vand.u32 %v2008, 4294901760
        %v2104 = vsub.f32 %v2008, %v2103
        %v2105 = vand.u32 %v2104, 4294901760
        %v2106 = vsub.f32 %v2104, %v2105
        %v2107 = vand.u32 %v2106, 4294901760
        %2108 = vmatmul.f32.gmra.mxu0 %v2107
        %v2109 = vpop.f32.mrf.mxu0
        %v2110 = vadd.f32 %v1970, %v2109
        %v2111 = vand.u32 %v2011, 4294901760
        %v2112 = vsub.f32 %v2011, %v2111
        %v2113 = vand.u32 %v2112, 4294901760
        %v2114 = vsub.f32 %v2112, %v2113
        %v2115 = vand.u32 %v2114, 4294901760
        %2116 = vmatmul.f32.gmra.mxu0 %v2115
        %v2117 = vpop.f32.mrf.mxu0
        %v2118 = vadd.f32 %v1975, %v2117
        %v2119 = vand.u32 %v2014, 4294901760
        %v2120 = vsub.f32 %v2014, %v2119
        %v2121 = vand.u32 %v2120, 4294901760
        %v2122 = vsub.f32 %v2120, %v2121
        %v2123 = vand.u32 %v2122, 4294901760
        %2124 = vmatmul.f32.gmra.mxu0 %v2123
        %v2125 = vpop.f32.mrf.mxu0
        %v2126 = vadd.f32 %v1980, %v2125
        %2127 = vdwg.mxu0
        %2128 = vmatpush.msra.mxu0 0.0
        %2129 = vmatpush.msra.mxu0 0.0
        %2130 = vmatpush.msra.mxu0 0.0
        %2131 = vmatpush.msra.mxu0 0.0
        %2132 = vmatpush.msra.mxu0 0.0
        %2133 = vmatpush.msra.mxu0 0.0
        %2134 = vmatpush.msra.mxu0 0.0
        %2135 = vmatpush.msra.mxu0 0.0
        %2136 = vmatpush.msra.mxu0 0.0
        %v2137 = vand.u32 %v1904, 4294901760
        %v2138 = vsub.f32 %v1904, %v2137
        %v2139 = vand.u32 %v2138, 4294901760
        %v2140 = vsub.f32 %v2138, %v2139
        %v2141 = vand.u32 %v2140, 4294901760
        %2142 = vmatpush.msra.mxu0 %v2141
        %v2143 = vand.u32 %v1903, 4294901760
        %v2144 = vsub.f32 %v1903, %v2143
        %v2145 = vand.u32 %v2144, 4294901760
        %v2146 = vsub.f32 %v2144, %v2145
        %v2147 = vand.u32 %v2146, 4294901760
        %2148 = vmatpush.msra.mxu0 %v2147
        %v2149 = vand.u32 %v1902, 4294901760
        %v2150 = vsub.f32 %v1902, %v2149
        %v2151 = vand.u32 %v2150, 4294901760
        %v2152 = vsub.f32 %v2150, %v2151
        %v2153 = vand.u32 %v2152, 4294901760
        %2154 = vmatpush.msra.mxu0 %v2153
        %v2155 = vand.u32 %v1901, 4294901760
        %v2156 = vsub.f32 %v1901, %v2155
        %v2157 = vand.u32 %v2156, 4294901760
        %v2158 = vsub.f32 %v2156, %v2157
        %v2159 = vand.u32 %v2158, 4294901760
        %2160 = vmatpush.msra.mxu0 %v2159
        %v2161 = vand.u32 %v1900, 4294901760
        %v2162 = vsub.f32 %v1900, %v2161
        %v2163 = vand.u32 %v2162, 4294901760
        %v2164 = vsub.f32 %v2162, %v2163
        %v2165 = vand.u32 %v2164, 4294901760
        %2166 = vmatpush.msra.mxu0 %v2165
        %v2167 = vand.u32 %v1899, 4294901760
        %v2168 = vsub.f32 %v1899, %v2167
        %v2169 = vand.u32 %v2168, 4294901760
        %v2170 = vsub.f32 %v2168, %v2169
        %v2171 = vand.u32 %v2170, 4294901760
        %2172 = vmatpush.msra.mxu0 %v2171
        %v2173 = vand.u32 %v1898, 4294901760
        %v2174 = vsub.f32 %v1898, %v2173
        %v2175 = vand.u32 %v2174, 4294901760
        %v2176 = vsub.f32 %v2174, %v2175
        %v2177 = vand.u32 %v2176, 4294901760
        %2178 = vmatpush.msra.mxu0 %v2177
        %v2179 = vand.u32 %v1984, 4294901760
        %2180 = vmatmul.f32.gmra.mxu0 %v2179
        %v2181 = vpop.f32.mrf.mxu0
        %v2182 = vadd.f32 %v2046, %v2181
        %v2183 = vand.u32 %v1987, 4294901760
        %2184 = vmatmul.f32.gmra.mxu0 %v2183
        %v2185 = vpop.f32.mrf.mxu0
        %v2186 = vadd.f32 %v2054, %v2185
        %v2187 = vand.u32 %v1990, 4294901760
        %2188 = vmatmul.f32.gmra.mxu0 %v2187
        %v2189 = vpop.f32.mrf.mxu0
        %v2190 = vadd.f32 %v2062, %v2189
        %v2191 = vand.u32 %v1993, 4294901760
        %2192 = vmatmul.f32.gmra.mxu0 %v2191
        %v2193 = vpop.f32.mrf.mxu0
        %v2194 = vadd.f32 %v2070, %v2193
        %v2195 = vand.u32 %v1996, 4294901760
        %2196 = vmatmul.f32.gmra.mxu0 %v2195
        %v2197 = vpop.f32.mrf.mxu0
        %v2198 = vadd.f32 %v2078, %v2197
        %v2199 = vand.u32 %v1999, 4294901760
        %2200 = vmatmul.f32.gmra.mxu0 %v2199
        %v2201 = vpop.f32.mrf.mxu0
        %v2202 = vadd.f32 %v2086, %v2201
        %v2203 = vand.u32 %v2002, 4294901760
        %2204 = vmatmul.f32.gmra.mxu0 %v2203
        %v2205 = vpop.f32.mrf.mxu0
        %v2206 = vadd.f32 %v2094, %v2205
        %v2207 = vand.u32 %v2005, 4294901760
        %2208 = vmatmul.f32.gmra.mxu0 %v2207
        %v2209 = vpop.f32.mrf.mxu0
        %v2210 = vadd.f32 %v2102, %v2209
        %v2211 = vand.u32 %v2008, 4294901760
        %2212 = vmatmul.f32.gmra.mxu0 %v2211
        %v2213 = vpop.f32.mrf.mxu0
        %v2214 = vadd.f32 %v2110, %v2213
        %v2215 = vand.u32 %v2011, 4294901760
        %2216 = vmatmul.f32.gmra.mxu0 %v2215
        %v2217 = vpop.f32.mrf.mxu0
        %v2218 = vadd.f32 %v2118, %v2217
        %v2219 = vand.u32 %v2014, 4294901760
        %2220 = vmatmul.f32.gmra.mxu0 %v2219
        %v2221 = vpop.f32.mrf.mxu0
        %v2222 = vadd.f32 %v2126, %v2221
        %2223 = vdwg.mxu0
        %2224 = vmatpush.msra.mxu0 0.0
        %2225 = vmatpush.msra.mxu0 0.0
        %2226 = vmatpush.msra.mxu0 0.0
        %2227 = vmatpush.msra.mxu0 0.0
        %2228 = vmatpush.msra.mxu0 0.0
        %2229 = vmatpush.msra.mxu0 0.0
        %2230 = vmatpush.msra.mxu0 0.0
        %2231 = vmatpush.msra.mxu0 0.0
        %2232 = vmatpush.msra.mxu0 0.0
        %v2233 = vand.u32 %v1904, 4294901760
        %v2234 = vsub.f32 %v1904, %v2233
        %2235 = vmatpush.msra.mxu0 %v2234
        %v2236 = vand.u32 %v1903, 4294901760
        %v2237 = vsub.f32 %v1903, %v2236
        %2238 = vmatpush.msra.mxu0 %v2237
        %v2239 = vand.u32 %v1902, 4294901760
        %v2240 = vsub.f32 %v1902, %v2239
        %2241 = vmatpush.msra.mxu0 %v2240
        %v2242 = vand.u32 %v1901, 4294901760
        %v2243 = vsub.f32 %v1901, %v2242
        %2244 = vmatpush.msra.mxu0 %v2243
        %v2245 = vand.u32 %v1900, 4294901760
        %v2246 = vsub.f32 %v1900, %v2245
        %2247 = vmatpush.msra.mxu0 %v2246
        %v2248 = vand.u32 %v1899, 4294901760
        %v2249 = vsub.f32 %v1899, %v2248
        %2250 = vmatpush.msra.mxu0 %v2249
        %v2251 = vand.u32 %v1898, 4294901760
        %v2252 = vsub.f32 %v1898, %v2251
        %2253 = vmatpush.msra.mxu0 %v2252
        %v2254 = vand.u32 %v1984, 4294901760
        %v2255 = vsub.f32 %v1984, %v2254
        %2256 = vmatmul.f32.gmra.mxu0 %v2255
        %v2257 = vpop.f32.mrf.mxu0
        %v2258 = vadd.f32 %v2182, %v2257
        %v2259 = vand.u32 %v1987, 4294901760
        %v2260 = vsub.f32 %v1987, %v2259
        %2261 = vmatmul.f32.gmra.mxu0 %v2260
        %v2262 = vpop.f32.mrf.mxu0
        %v2263 = vadd.f32 %v2186, %v2262
        %v2264 = vand.u32 %v1990, 4294901760
        %v2265 = vsub.f32 %v1990, %v2264
        %2266 = vmatmul.f32.gmra.mxu0 %v2265
        %v2267 = vpop.f32.mrf.mxu0
        %v2268 = vadd.f32 %v2190, %v2267
        %v2269 = vand.u32 %v1993, 4294901760
        %v2270 = vsub.f32 %v1993, %v2269
        %2271 = vmatmul.f32.gmra.mxu0 %v2270
        %v2272 = vpop.f32.mrf.mxu0
        %v2273 = vadd.f32 %v2194, %v2272
        %v2274 = vand.u32 %v1996, 4294901760
        %v2275 = vsub.f32 %v1996, %v2274
        %2276 = vmatmul.f32.gmra.mxu0 %v2275
        %v2277 = vpop.f32.mrf.mxu0
        %v2278 = vadd.f32 %v2198, %v2277
        %v2279 = vand.u32 %v1999, 4294901760
        %v2280 = vsub.f32 %v1999, %v2279
        %2281 = vmatmul.f32.gmra.mxu0 %v2280
        %v2282 = vpop.f32.mrf.mxu0
        %v2283 = vadd.f32 %v2202, %v2282
        %v2284 = vand.u32 %v2002, 4294901760
        %v2285 = vsub.f32 %v2002, %v2284
        %2286 = vmatmul.f32.gmra.mxu0 %v2285
        %v2287 = vpop.f32.mrf.mxu0
        %v2288 = vadd.f32 %v2206, %v2287
        %v2289 = vand.u32 %v2005, 4294901760
        %v2290 = vsub.f32 %v2005, %v2289
        %2291 = vmatmul.f32.gmra.mxu0 %v2290
        %v2292 = vpop.f32.mrf.mxu0
        %v2293 = vadd.f32 %v2210, %v2292
        %v2294 = vand.u32 %v2008, 4294901760
        %v2295 = vsub.f32 %v2008, %v2294
        %2296 = vmatmul.f32.gmra.mxu0 %v2295
        %v2297 = vpop.f32.mrf.mxu0
        %v2298 = vadd.f32 %v2214, %v2297
        %v2299 = vand.u32 %v2011, 4294901760
        %v2300 = vsub.f32 %v2011, %v2299
        %2301 = vmatmul.f32.gmra.mxu0 %v2300
        %v2302 = vpop.f32.mrf.mxu0
        %v2303 = vadd.f32 %v2218, %v2302
        %v2304 = vand.u32 %v2014, 4294901760
        %v2305 = vsub.f32 %v2014, %v2304
        %2306 = vmatmul.f32.gmra.mxu0 %v2305
        %v2307 = vpop.f32.mrf.mxu0
        %v2308 = vadd.f32 %v2222, %v2307
        %2309 = vdwg.mxu0
        %2310 = vmatpush.msra.mxu0 0.0
        %2311 = vmatpush.msra.mxu0 0.0
        %2312 = vmatpush.msra.mxu0 0.0
        %2313 = vmatpush.msra.mxu0 0.0
        %2314 = vmatpush.msra.mxu0 0.0
        %2315 = vmatpush.msra.mxu0 0.0
        %2316 = vmatpush.msra.mxu0 0.0
        %2317 = vmatpush.msra.mxu0 0.0
        %2318 = vmatpush.msra.mxu0 0.0
        %v2319 = vand.u32 %v1904, 4294901760
        %2320 = vmatpush.msra.mxu0 %v2319
        %v2321 = vand.u32 %v1903, 4294901760
        %2322 = vmatpush.msra.mxu0 %v2321
        %v2323 = vand.u32 %v1902, 4294901760
        %2324 = vmatpush.msra.mxu0 %v2323
        %v2325 = vand.u32 %v1901, 4294901760
        %2326 = vmatpush.msra.mxu0 %v2325
        %v2327 = vand.u32 %v1900, 4294901760
        %2328 = vmatpush.msra.mxu0 %v2327
        %v2329 = vand.u32 %v1899, 4294901760
        %2330 = vmatpush.msra.mxu0 %v2329
        %v2331 = vand.u32 %v1898, 4294901760
        %2332 = vmatpush.msra.mxu0 %v2331
        %v2333 = vand.u32 %v1984, 4294901760
        %v2334 = vsub.f32 %v1984, %v2333
        %v2335 = vand.u32 %v2334, 4294901760
        %2336 = vmatmul.f32.gmra.mxu0 %v2335
        %v2337 = vpop.f32.mrf.mxu0
        %v2338 = vadd.f32 %v2258, %v2337
        %v2339 = vand.u32 %v1987, 4294901760
        %v2340 = vsub.f32 %v1987, %v2339
        %v2341 = vand.u32 %v2340, 4294901760
        %2342 = vmatmul.f32.gmra.mxu0 %v2341
        %v2343 = vpop.f32.mrf.mxu0
        %v2344 = vadd.f32 %v2263, %v2343
        %v2345 = vand.u32 %v1990, 4294901760
        %v2346 = vsub.f32 %v1990, %v2345
        %v2347 = vand.u32 %v2346, 4294901760
        %2348 = vmatmul.f32.gmra.mxu0 %v2347
        %v2349 = vpop.f32.mrf.mxu0
        %v2350 = vadd.f32 %v2268, %v2349
        %v2351 = vand.u32 %v1993, 4294901760
        %v2352 = vsub.f32 %v1993, %v2351
        %v2353 = vand.u32 %v2352, 4294901760
        %2354 = vmatmul.f32.gmra.mxu0 %v2353
        %v2355 = vpop.f32.mrf.mxu0
        %v2356 = vadd.f32 %v2273, %v2355
        %v2357 = vand.u32 %v1996, 4294901760
        %v2358 = vsub.f32 %v1996, %v2357
        %v2359 = vand.u32 %v2358, 4294901760
        %2360 = vmatmul.f32.gmra.mxu0 %v2359
        %v2361 = vpop.f32.mrf.mxu0
        %v2362 = vadd.f32 %v2278, %v2361
        %v2363 = vand.u32 %v1999, 4294901760
        %v2364 = vsub.f32 %v1999, %v2363
        %v2365 = vand.u32 %v2364, 4294901760
        %2366 = vmatmul.f32.gmra.mxu0 %v2365
        %v2367 = vpop.f32.mrf.mxu0
        %v2368 = vadd.f32 %v2283, %v2367
        %v2369 = vand.u32 %v2002, 4294901760
        %v2370 = vsub.f32 %v2002, %v2369
        %v2371 = vand.u32 %v2370, 4294901760
        %2372 = vmatmul.f32.gmra.mxu0 %v2371
        %v2373 = vpop.f32.mrf.mxu0
        %v2374 = vadd.f32 %v2288, %v2373
        %v2375 = vand.u32 %v2005, 4294901760
        %v2376 = vsub.f32 %v2005, %v2375
        %v2377 = vand.u32 %v2376, 4294901760
        %2378 = vmatmul.f32.gmra.mxu0 %v2377
        %v2379 = vpop.f32.mrf.mxu0
        %v2380 = vadd.f32 %v2293, %v2379
        %v2381 = vand.u32 %v2008, 4294901760
        %v2382 = vsub.f32 %v2008, %v2381
        %v2383 = vand.u32 %v2382, 4294901760
        %2384 = vmatmul.f32.gmra.mxu0 %v2383
        %v2385 = vpop.f32.mrf.mxu0
        %v2386 = vadd.f32 %v2298, %v2385
        %v2387 = vand.u32 %v2011, 4294901760
        %v2388 = vsub.f32 %v2011, %v2387
        %v2389 = vand.u32 %v2388, 4294901760
        %2390 = vmatmul.f32.gmra.mxu0 %v2389
        %v2391 = vpop.f32.mrf.mxu0
        %v2392 = vadd.f32 %v2303, %v2391
        %v2393 = vand.u32 %v2014, 4294901760
        %v2394 = vsub.f32 %v2014, %v2393
        %v2395 = vand.u32 %v2394, 4294901760
        %2396 = vmatmul.f32.gmra.mxu0 %v2395
        %v2397 = vpop.f32.mrf.mxu0
        %v2398 = vadd.f32 %v2308, %v2397
        %2399 = vdwg.mxu0
        %2400 = vmatpush.msra.mxu0 0.0
        %2401 = vmatpush.msra.mxu0 0.0
        %2402 = vmatpush.msra.mxu0 0.0
        %2403 = vmatpush.msra.mxu0 0.0
        %2404 = vmatpush.msra.mxu0 0.0
        %2405 = vmatpush.msra.mxu0 0.0
        %2406 = vmatpush.msra.mxu0 0.0
        %2407 = vmatpush.msra.mxu0 0.0
        %2408 = vmatpush.msra.mxu0 0.0
        %v2409 = vand.u32 %v1904, 4294901760
        %v2410 = vsub.f32 %v1904, %v2409
        %v2411 = vand.u32 %v2410, 4294901760
        %2412 = vmatpush.msra.mxu0 %v2411
        %v2413 = vand.u32 %v1903, 4294901760
        %v2414 = vsub.f32 %v1903, %v2413
        %v2415 = vand.u32 %v2414, 4294901760
        %2416 = vmatpush.msra.mxu0 %v2415
        %v2417 = vand.u32 %v1902, 4294901760
        %v2418 = vsub.f32 %v1902, %v2417
        %v2419 = vand.u32 %v2418, 4294901760
        %2420 = vmatpush.msra.mxu0 %v2419
        %v2421 = vand.u32 %v1901, 4294901760
        %v2422 = vsub.f32 %v1901, %v2421
        %v2423 = vand.u32 %v2422, 4294901760
        %2424 = vmatpush.msra.mxu0 %v2423
        %v2425 = vand.u32 %v1900, 4294901760
        %v2426 = vsub.f32 %v1900, %v2425
        %v2427 = vand.u32 %v2426, 4294901760
        %2428 = vmatpush.msra.mxu0 %v2427
        %v2429 = vand.u32 %v1899, 4294901760
        %v2430 = vsub.f32 %v1899, %v2429
        %v2431 = vand.u32 %v2430, 4294901760
        %2432 = vmatpush.msra.mxu0 %v2431
        %v2433 = vand.u32 %v1898, 4294901760
        %v2434 = vsub.f32 %v1898, %v2433
        %v2435 = vand.u32 %v2434, 4294901760
        %2436 = vmatpush.msra.mxu0 %v2435
        %v2437 = vand.u32 %v1984, 4294901760
        %2438 = vmatmul.f32.gmra.mxu0 %v2437
        %v2439 = vpop.f32.mrf.mxu0
        %v2440 = vadd.f32 %v2338, %v2439
        %v2441 = vand.u32 %v1987, 4294901760
        %2442 = vmatmul.f32.gmra.mxu0 %v2441
        %v2443 = vpop.f32.mrf.mxu0
        %v2444 = vadd.f32 %v2344, %v2443
        %v2445 = vand.u32 %v1990, 4294901760
        %2446 = vmatmul.f32.gmra.mxu0 %v2445
        %v2447 = vpop.f32.mrf.mxu0
        %v2448 = vadd.f32 %v2350, %v2447
        %v2449 = vand.u32 %v1993, 4294901760
        %2450 = vmatmul.f32.gmra.mxu0 %v2449
        %v2451 = vpop.f32.mrf.mxu0
        %v2452 = vadd.f32 %v2356, %v2451
        %v2453 = vand.u32 %v1996, 4294901760
        %2454 = vmatmul.f32.gmra.mxu0 %v2453
        %v2455 = vpop.f32.mrf.mxu0
        %v2456 = vadd.f32 %v2362, %v2455
        %v2457 = vand.u32 %v1999, 4294901760
        %2458 = vmatmul.f32.gmra.mxu0 %v2457
        %v2459 = vpop.f32.mrf.mxu0
        %v2460 = vadd.f32 %v2368, %v2459
        %v2461 = vand.u32 %v2002, 4294901760
        %2462 = vmatmul.f32.gmra.mxu0 %v2461
        %v2463 = vpop.f32.mrf.mxu0
        %v2464 = vadd.f32 %v2374, %v2463
        %v2465 = vand.u32 %v2005, 4294901760
        %2466 = vmatmul.f32.gmra.mxu0 %v2465
        %v2467 = vpop.f32.mrf.mxu0
        %v2468 = vadd.f32 %v2380, %v2467
        %v2469 = vand.u32 %v2008, 4294901760
        %2470 = vmatmul.f32.gmra.mxu0 %v2469
        %v2471 = vpop.f32.mrf.mxu0
        %v2472 = vadd.f32 %v2386, %v2471
        %v2473 = vand.u32 %v2011, 4294901760
        %2474 = vmatmul.f32.gmra.mxu0 %v2473
        %v2475 = vpop.f32.mrf.mxu0
        %v2476 = vadd.f32 %v2392, %v2475
        %v2477 = vand.u32 %v2014, 4294901760
        %2478 = vmatmul.f32.gmra.mxu0 %v2477
        %v2479 = vpop.f32.mrf.mxu0
        %v2480 = vadd.f32 %v2398, %v2479
        %2481 = vdwg.mxu0
        %2482 = vmatpush.msra.mxu0 0.0
        %2483 = vmatpush.msra.mxu0 0.0
        %2484 = vmatpush.msra.mxu0 0.0
        %2485 = vmatpush.msra.mxu0 0.0
        %2486 = vmatpush.msra.mxu0 0.0
        %2487 = vmatpush.msra.mxu0 0.0
        %2488 = vmatpush.msra.mxu0 0.0
        %2489 = vmatpush.msra.mxu0 0.0
        %2490 = vmatpush.msra.mxu0 0.0
        %v2491 = vand.u32 %v1904, 4294901760
        %2492 = vmatpush.msra.mxu0 %v2491
        %v2493 = vand.u32 %v1903, 4294901760
        %2494 = vmatpush.msra.mxu0 %v2493
        %v2495 = vand.u32 %v1902, 4294901760
        %2496 = vmatpush.msra.mxu0 %v2495
        %v2497 = vand.u32 %v1901, 4294901760
        %2498 = vmatpush.msra.mxu0 %v2497
        %v2499 = vand.u32 %v1900, 4294901760
        %2500 = vmatpush.msra.mxu0 %v2499
        %v2501 = vand.u32 %v1899, 4294901760
        %2502 = vmatpush.msra.mxu0 %v2501
        %v2503 = vand.u32 %v1898, 4294901760
        %2504 = vmatpush.msra.mxu0 %v2503
        %v2505 = vand.u32 %v1984, 4294901760
        %2506 = vmatmul.f32.gmra.mxu0 %v2505
        %v2507 = vpop.f32.mrf.mxu0
        %v2508 = vadd.f32 %v2440, %v2507
        %v2509 = vand.u32 %v1987, 4294901760
        %2510 = vmatmul.f32.gmra.mxu0 %v2509
        %v2511 = vpop.f32.mrf.mxu0
        %v2512 = vadd.f32 %v2444, %v2511
        %v2513 = vand.u32 %v1990, 4294901760
        %2514 = vmatmul.f32.gmra.mxu0 %v2513
        %v2515 = vpop.f32.mrf.mxu0
        %v2516 = vadd.f32 %v2448, %v2515
        %v2517 = vand.u32 %v1993, 4294901760
        %2518 = vmatmul.f32.gmra.mxu0 %v2517
        %v2519 = vpop.f32.mrf.mxu0
        %v2520 = vadd.f32 %v2452, %v2519
        %v2521 = vand.u32 %v1996, 4294901760
        %2522 = vmatmul.f32.gmra.mxu0 %v2521
        %v2523 = vpop.f32.mrf.mxu0
        %v2524 = vadd.f32 %v2456, %v2523
        %v2525 = vand.u32 %v1999, 4294901760
        %2526 = vmatmul.f32.gmra.mxu0 %v2525
        %v2527 = vpop.f32.mrf.mxu0
        %v2528 = vadd.f32 %v2460, %v2527
        %v2529 = vand.u32 %v2002, 4294901760
        %2530 = vmatmul.f32.gmra.mxu0 %v2529
        %v2531 = vpop.f32.mrf.mxu0
        %v2532 = vadd.f32 %v2464, %v2531
        %v2533 = vand.u32 %v2005, 4294901760
        %2534 = vmatmul.f32.gmra.mxu0 %v2533
        %v2535 = vpop.f32.mrf.mxu0
        %v2536 = vadd.f32 %v2468, %v2535
        %v2537 = vand.u32 %v2008, 4294901760
        %2538 = vmatmul.f32.gmra.mxu0 %v2537
        %v2539 = vpop.f32.mrf.mxu0
        %v2540 = vadd.f32 %v2472, %v2539
        %v2541 = vand.u32 %v2011, 4294901760
        %2542 = vmatmul.f32.gmra.mxu0 %v2541
        %v2543 = vpop.f32.mrf.mxu0
        %v2544 = vadd.f32 %v2476, %v2543
        %v2545 = vand.u32 %v2014, 4294901760
        %2546 = vmatmul.f32.gmra.mxu0 %v2545
        %v2547 = vpop.f32.mrf.mxu0
        %v2548 = vadd.f32 %v2480, %v2547
        %2549 = vdwg.mxu0
        %v2550 = vmax.f32 %v2508, 0.0
        %v2551 = vmax.f32 %v2512, 0.0
        %v2552 = vmax.f32 %v2516, 0.0
        %v2553 = vmax.f32 %v2520, 0.0
        %v2554 = vmax.f32 %v2524, 0.0
        %v2555 = vmax.f32 %v2528, 0.0
        %v2556 = vmax.f32 %v2532, 0.0
        %v2557 = vmax.f32 %v2536, 0.0
        %v2558 = vmax.f32 %v2540, 0.0
        %v2559 = vmax.f32 %v2544, 0.0
        %v2560 = vmax.f32 %v2548, 0.0
        %v2561 = vmul.f32 %v2550, %v847
        %v2562 = vmul.f32 %v2551, %v847
        %v2563 = vmul.f32 %v2552, %v847
        %v2564 = vmul.f32 %v2553, %v847
        %v2565 = vmul.f32 %v2554, %v847
        %v2566 = vmul.f32 %v2555, %v847
        %v2567 = vmul.f32 %v2556, %v847
        %v2568 = vmul.f32 %v2557, %v847
        %v2569 = vmul.f32 %v2558, %v847
        %v2570 = vmul.f32 %v2559, %v847
        %v2571 = vmul.f32 %v2560, %v847
        %2572 = vadd.xlane.f32.xlu0 %v2561
        %v2573 = vpop.xlane.xlu0 %2572
        %2574 = vadd.xlane.f32.xlu0 %v2562
        %v2575 = vpop.xlane.xlu0 %2574
        %2576 = vadd.xlane.f32.xlu0 %v2563
        %v2577 = vpop.xlane.xlu0 %2576
        %2578 = vadd.xlane.f32.xlu0 %v2564
        %v2579 = vpop.xlane.xlu0 %2578
        %2580 = vadd.xlane.f32.xlu0 %v2565
        %v2581 = vpop.xlane.xlu0 %2580
        %2582 = vadd.xlane.f32.xlu0 %v2566
        %v2583 = vpop.xlane.xlu0 %2582
        %2584 = vadd.xlane.f32.xlu0 %v2567
        %v2585 = vpop.xlane.xlu0 %2584
        %2586 = vadd.xlane.f32.xlu0 %v2568
        %v2587 = vpop.xlane.xlu0 %2586
        %2588 = vadd.xlane.f32.xlu0 %v2569
        %v2589 = vpop.xlane.xlu0 %2588
        %2590 = vadd.xlane.f32.xlu0 %v2570
        %v2591 = vpop.xlane.xlu0 %2590
        %2592 = vadd.xlane.f32.xlu0 %v2571
        %v2593 = vpop.xlane.xlu0 %2592
        %v2594 = vld [vmem:[%s11] sm:$0xff]
        %v2595 = vld [vmem:[%s11 + $0x8] sm:$0xff]
        %v2596 = vld [vmem:[%s11 + $0x10] sm:$0xff]
        %v2597 = vld [vmem:[%s11 + $0x18] sm:$0xff]
        %v2598 = vld [vmem:[%s11 + $0x20] sm:$0xff]
        %v2599 = vld [vmem:[%s11 + $0x28] sm:$0xff]
        %v2600 = vld [vmem:[%s11 + $0x30] sm:$0xff]
        %v2601 = vld [vmem:[%s11 + $0x38] sm:$0xff]
        %v2602 = vld [vmem:[%s11 + $0x40] sm:$0xff]
        %v2603 = vld [vmem:[%s11 + $0x48] sm:$0xff]
        %v2604 = vld [vmem:[%s11 + $0x50] sm:$0xff]
        %2606 = vset.pattern.permute.xlu0 0
        %2607 = vperm.xlu0 %2606, %v2594
        %v2608 = vpop.permute.xlu0 %2607
        %2611 = vset.pattern.permute.xlu0 0
        %2612 = vperm.xlu0 %2611, %v2595
        %v2613 = vpop.permute.xlu0 %2612
        %2616 = vset.pattern.permute.xlu0 0
        %2617 = vperm.xlu0 %2616, %v2596
        %v2618 = vpop.permute.xlu0 %2617
        %2621 = vset.pattern.permute.xlu0 0
        %2622 = vperm.xlu0 %2621, %v2597
        %v2623 = vpop.permute.xlu0 %2622
        %2626 = vset.pattern.permute.xlu0 0
        %2627 = vperm.xlu0 %2626, %v2598
        %v2628 = vpop.permute.xlu0 %2627
        %2631 = vset.pattern.permute.xlu0 0
        %2632 = vperm.xlu0 %2631, %v2599
        %v2633 = vpop.permute.xlu0 %2632
        %2636 = vset.pattern.permute.xlu0 0
        %2637 = vperm.xlu0 %2636, %v2600
        %v2638 = vpop.permute.xlu0 %2637
        %2641 = vset.pattern.permute.xlu0 0
        %2642 = vperm.xlu0 %2641, %v2601
        %v2643 = vpop.permute.xlu0 %2642
        %2646 = vset.pattern.permute.xlu0 0
        %2647 = vperm.xlu0 %2646, %v2602
        %v2648 = vpop.permute.xlu0 %2647
        %2651 = vset.pattern.permute.xlu0 0
        %2652 = vperm.xlu0 %2651, %v2603
        %v2653 = vpop.permute.xlu0 %2652
        %2656 = vset.pattern.permute.xlu0 0
        %2657 = vperm.xlu0 %2656, %v2604
        %v2658 = vpop.permute.xlu0 %2657
        %v2660 = vsub.f32 %v2550, %v2608
        %v2661 = vsub.f32 %v2551, %v2613
        %v2662 = vsub.f32 %v2552, %v2618
        %v2663 = vsub.f32 %v2553, %v2623
        %v2664 = vsub.f32 %v2554, %v2628
        %v2665 = vsub.f32 %v2555, %v2633
        %v2666 = vsub.f32 %v2556, %v2638
        %v2667 = vsub.f32 %v2557, %v2643
        %v2668 = vsub.f32 %v2558, %v2648
        %v2669 = vsub.f32 %v2559, %v2653
        %v2670 = vsub.f32 %v2560, %v2658
        %2672 = vset.pattern.permute.xlu0 0
        %2673 = vperm.xlu0 %2672, %v884
        %v2674 = vpop.permute.xlu0 %2673
        %2677 = vset.pattern.permute.xlu0 0
        %2678 = vperm.xlu0 %2677, %v899
        %v2679 = vpop.permute.xlu0 %2678
        %2682 = vset.pattern.permute.xlu0 0
        %2683 = vperm.xlu0 %2682, %v914
        %v2684 = vpop.permute.xlu0 %2683
        %2687 = vset.pattern.permute.xlu0 0
        %2688 = vperm.xlu0 %2687, %v929
        %v2689 = vpop.permute.xlu0 %2688
        %2692 = vset.pattern.permute.xlu0 0
        %2693 = vperm.xlu0 %2692, %v944
        %v2694 = vpop.permute.xlu0 %2693
        %2697 = vset.pattern.permute.xlu0 0
        %2698 = vperm.xlu0 %2697, %v959
        %v2699 = vpop.permute.xlu0 %2698
        %2702 = vset.pattern.permute.xlu0 0
        %2703 = vperm.xlu0 %2702, %v974
        %v2704 = vpop.permute.xlu0 %2703
        %2707 = vset.pattern.permute.xlu0 0
        %2708 = vperm.xlu0 %2707, %v989
        %v2709 = vpop.permute.xlu0 %2708
        %2712 = vset.pattern.permute.xlu0 0
        %2713 = vperm.xlu0 %2712, %v1004
        %v2714 = vpop.permute.xlu0 %2713
        %2717 = vset.pattern.permute.xlu0 0
        %2718 = vperm.xlu0 %2717, %v1019
        %v2719 = vpop.permute.xlu0 %2718
        %2722 = vset.pattern.permute.xlu0 0
        %2723 = vperm.xlu0 %2722, %v1034
        %v2724 = vpop.permute.xlu0 %2723
        %v2726 = vmul.f32 %v2660, %v2674
        %v2727 = vmul.f32 %v2661, %v2679
        %v2728 = vmul.f32 %v2662, %v2684
        %v2729 = vmul.f32 %v2663, %v2689
        %v2730 = vmul.f32 %v2664, %v2694
        %v2731 = vmul.f32 %v2665, %v2699
        %v2732 = vmul.f32 %v2666, %v2704
        %v2733 = vmul.f32 %v2667, %v2709
        %v2734 = vmul.f32 %v2668, %v2714
        %v2735 = vmul.f32 %v2669, %v2719
        %v2736 = vmul.f32 %v2670, %v2724
        %v2737 = vld [vmem:[%s16] sm:$0xff]
        %v2738 = vld [vmem:[%s16 + $0x8] sm:$0xff]
        %v2739 = vld [vmem:[%s16 + $0x10] sm:$0xff]
        %v2740 = vld [vmem:[%s16 + $0x18] sm:$0xff]
        %v2741 = vld [vmem:[%s16 + $0x20] sm:$0xff]
        %v2742 = vld [vmem:[%s16 + $0x28] sm:$0xff]
        %v2743 = vld [vmem:[%s16 + $0x30] sm:$0xff]
        %v2744 = vld [vmem:[%s17] sm:$0xff]
        %v2745 = vld [vmem:[%s17 + $0x8] sm:$0xff]
        %v2746 = vld [vmem:[%s17 + $0x10] sm:$0xff]
        %v2747 = vld [vmem:[%s17 + $0x18] sm:$0xff]
        %v2748 = vld [vmem:[%s17 + $0x20] sm:$0xff]
        %v2749 = vld [vmem:[%s17 + $0x28] sm:$0xff]
        %v2750 = vld [vmem:[%s17 + $0x30] sm:$0xff]
        %2752 = vset.pattern.permute.xlu0 0
        %2753 = vperm.xlu0 %2752, %v2744
        %v2754 = vpop.permute.xlu0 %2753
        %2757 = vset.pattern.permute.xlu0 0
        %2758 = vperm.xlu0 %2757, %v2745
        %v2759 = vpop.permute.xlu0 %2758
        %2762 = vset.pattern.permute.xlu0 0
        %2763 = vperm.xlu0 %2762, %v2746
        %v2764 = vpop.permute.xlu0 %2763
        %2767 = vset.pattern.permute.xlu0 0
        %2768 = vperm.xlu0 %2767, %v2747
        %v2769 = vpop.permute.xlu0 %2768
        %2772 = vset.pattern.permute.xlu0 0
        %2773 = vperm.xlu0 %2772, %v2748
        %v2774 = vpop.permute.xlu0 %2773
        %2777 = vset.pattern.permute.xlu0 0
        %2778 = vperm.xlu0 %2777, %v2749
        %v2779 = vpop.permute.xlu0 %2778
        %2782 = vset.pattern.permute.xlu0 0
        %2783 = vperm.xlu0 %2782, %v2750
        %v2784 = vpop.permute.xlu0 %2783
        %vm2786 = vcmask 719872
        %v2788 = vsel %vm2786, %v2737, 0
        %v2791 = vsel %vm2786, %v2738, 0
        %v2794 = vsel %vm2786, %v2739, 0
        %v2797 = vsel %vm2786, %v2740, 0
        %v2800 = vsel %vm2786, %v2741, 0
        %v2803 = vsel %vm2786, %v2742, 0
        %v2806 = vsel %vm2786, %v2743, 0
        %2808 = vmatpush.msra.mxu0 0.0
        %2809 = vmatpush.msra.mxu0 0.0
        %2810 = vmatpush.msra.mxu0 0.0
        %2811 = vmatpush.msra.mxu0 0.0
        %2812 = vmatpush.msra.mxu0 0.0
        %v2813 = vand.u32 %v2736, 4294901760
        %2814 = vmatpush.msra.mxu0 %v2813
        %v2815 = vand.u32 %v2735, 4294901760
        %2816 = vmatpush.msra.mxu0 %v2815
        %v2817 = vand.u32 %v2734, 4294901760
        %2818 = vmatpush.msra.mxu0 %v2817
        %v2819 = vand.u32 %v2733, 4294901760
        %2820 = vmatpush.msra.mxu0 %v2819
        %v2821 = vand.u32 %v2732, 4294901760
        %2822 = vmatpush.msra.mxu0 %v2821
        %v2823 = vand.u32 %v2731, 4294901760
        %2824 = vmatpush.msra.mxu0 %v2823
        %v2825 = vand.u32 %v2730, 4294901760
        %2826 = vmatpush.msra.mxu0 %v2825
        %v2827 = vand.u32 %v2729, 4294901760
        %2828 = vmatpush.msra.mxu0 %v2827
        %v2829 = vand.u32 %v2728, 4294901760
        %2830 = vmatpush.msra.mxu0 %v2829
        %v2831 = vand.u32 %v2727, 4294901760
        %2832 = vmatpush.msra.mxu0 %v2831
        %v2833 = vand.u32 %v2726, 4294901760
        %2834 = vmatpush.msra.mxu0 %v2833
        %v2835 = vand.u32 %v2788, 4294901760
        %v2836 = vsub.f32 %v2788, %v2835
        %v2837 = vand.u32 %v2836, 4294901760
        %v2838 = vsub.f32 %v2836, %v2837
        %v2839 = vand.u32 %v2838, 4294901760
        %2840 = vmatmul.f32.gmra.mxu0 %v2839
        %v2841 = vpop.f32.mrf.mxu0
        %v2842 = vadd.f32 %v2754, %v2841
        %v2843 = vand.u32 %v2791, 4294901760
        %v2844 = vsub.f32 %v2791, %v2843
        %v2845 = vand.u32 %v2844, 4294901760
        %v2846 = vsub.f32 %v2844, %v2845
        %v2847 = vand.u32 %v2846, 4294901760
        %2848 = vmatmul.f32.gmra.mxu0 %v2847
        %v2849 = vpop.f32.mrf.mxu0
        %v2850 = vadd.f32 %v2759, %v2849
        %v2851 = vand.u32 %v2794, 4294901760
        %v2852 = vsub.f32 %v2794, %v2851
        %v2853 = vand.u32 %v2852, 4294901760
        %v2854 = vsub.f32 %v2852, %v2853
        %v2855 = vand.u32 %v2854, 4294901760
        %2856 = vmatmul.f32.gmra.mxu0 %v2855
        %v2857 = vpop.f32.mrf.mxu0
        %v2858 = vadd.f32 %v2764, %v2857
        %v2859 = vand.u32 %v2797, 4294901760
        %v2860 = vsub.f32 %v2797, %v2859
        %v2861 = vand.u32 %v2860, 4294901760
        %v2862 = vsub.f32 %v2860, %v2861
        %v2863 = vand.u32 %v2862, 4294901760
        %2864 = vmatmul.f32.gmra.mxu0 %v2863
        %v2865 = vpop.f32.mrf.mxu0
        %v2866 = vadd.f32 %v2769, %v2865
        %v2867 = vand.u32 %v2800, 4294901760
        %v2868 = vsub.f32 %v2800, %v2867
        %v2869 = vand.u32 %v2868, 4294901760
        %v2870 = vsub.f32 %v2868, %v2869
        %v2871 = vand.u32 %v2870, 4294901760
        %2872 = vmatmul.f32.gmra.mxu0 %v2871
        %v2873 = vpop.f32.mrf.mxu0
        %v2874 = vadd.f32 %v2774, %v2873
        %v2875 = vand.u32 %v2803, 4294901760
        %v2876 = vsub.f32 %v2803, %v2875
        %v2877 = vand.u32 %v2876, 4294901760
        %v2878 = vsub.f32 %v2876, %v2877
        %v2879 = vand.u32 %v2878, 4294901760
        %2880 = vmatmul.f32.gmra.mxu0 %v2879
        %v2881 = vpop.f32.mrf.mxu0
        %v2882 = vadd.f32 %v2779, %v2881
        %v2883 = vand.u32 %v2806, 4294901760
        %v2884 = vsub.f32 %v2806, %v2883
        %v2885 = vand.u32 %v2884, 4294901760
        %v2886 = vsub.f32 %v2884, %v2885
        %v2887 = vand.u32 %v2886, 4294901760
        %2888 = vmatmul.f32.gmra.mxu0 %v2887
        %v2889 = vpop.f32.mrf.mxu0
        %v2890 = vadd.f32 %v2784, %v2889
        %2891 = vdwg.mxu0
        %2892 = vmatpush.msra.mxu0 0.0
        %2893 = vmatpush.msra.mxu0 0.0
        %2894 = vmatpush.msra.mxu0 0.0
        %2895 = vmatpush.msra.mxu0 0.0
        %2896 = vmatpush.msra.mxu0 0.0
        %v2897 = vand.u32 %v2736, 4294901760
        %v2898 = vsub.f32 %v2736, %v2897
        %v2899 = vand.u32 %v2898, 4294901760
        %v2900 = vsub.f32 %v2898, %v2899
        %v2901 = vand.u32 %v2900, 4294901760
        %2902 = vmatpush.msra.mxu0 %v2901
        %v2903 = vand.u32 %v2735, 4294901760
        %v2904 = vsub.f32 %v2735, %v2903
        %v2905 = vand.u32 %v2904, 4294901760
        %v2906 = vsub.f32 %v2904, %v2905
        %v2907 = vand.u32 %v2906, 4294901760
        %2908 = vmatpush.msra.mxu0 %v2907
        %v2909 = vand.u32 %v2734, 4294901760
        %v2910 = vsub.f32 %v2734, %v2909
        %v2911 = vand.u32 %v2910, 4294901760
        %v2912 = vsub.f32 %v2910, %v2911
        %v2913 = vand.u32 %v2912, 4294901760
        %2914 = vmatpush.msra.mxu0 %v2913
        %v2915 = vand.u32 %v2733, 4294901760
        %v2916 = vsub.f32 %v2733, %v2915
        %v2917 = vand.u32 %v2916, 4294901760
        %v2918 = vsub.f32 %v2916, %v2917
        %v2919 = vand.u32 %v2918, 4294901760
        %2920 = vmatpush.msra.mxu0 %v2919
        %v2921 = vand.u32 %v2732, 4294901760
        %v2922 = vsub.f32 %v2732, %v2921
        %v2923 = vand.u32 %v2922, 4294901760
        %v2924 = vsub.f32 %v2922, %v2923
        %v2925 = vand.u32 %v2924, 4294901760
        %2926 = vmatpush.msra.mxu0 %v2925
        %v2927 = vand.u32 %v2731, 4294901760
        %v2928 = vsub.f32 %v2731, %v2927
        %v2929 = vand.u32 %v2928, 4294901760
        %v2930 = vsub.f32 %v2928, %v2929
        %v2931 = vand.u32 %v2930, 4294901760
        %2932 = vmatpush.msra.mxu0 %v2931
        %v2933 = vand.u32 %v2730, 4294901760
        %v2934 = vsub.f32 %v2730, %v2933
        %v2935 = vand.u32 %v2934, 4294901760
        %v2936 = vsub.f32 %v2934, %v2935
        %v2937 = vand.u32 %v2936, 4294901760
        %2938 = vmatpush.msra.mxu0 %v2937
        %v2939 = vand.u32 %v2729, 4294901760
        %v2940 = vsub.f32 %v2729, %v2939
        %v2941 = vand.u32 %v2940, 4294901760
        %v2942 = vsub.f32 %v2940, %v2941
        %v2943 = vand.u32 %v2942, 4294901760
        %2944 = vmatpush.msra.mxu0 %v2943
        %v2945 = vand.u32 %v2728, 4294901760
        %v2946 = vsub.f32 %v2728, %v2945
        %v2947 = vand.u32 %v2946, 4294901760
        %v2948 = vsub.f32 %v2946, %v2947
        %v2949 = vand.u32 %v2948, 4294901760
        %2950 = vmatpush.msra.mxu0 %v2949
        %v2951 = vand.u32 %v2727, 4294901760
        %v2952 = vsub.f32 %v2727, %v2951
        %v2953 = vand.u32 %v2952, 4294901760
        %v2954 = vsub.f32 %v2952, %v2953
        %v2955 = vand.u32 %v2954, 4294901760
        %2956 = vmatpush.msra.mxu0 %v2955
        %v2957 = vand.u32 %v2726, 4294901760
        %v2958 = vsub.f32 %v2726, %v2957
        %v2959 = vand.u32 %v2958, 4294901760
        %v2960 = vsub.f32 %v2958, %v2959
        %v2961 = vand.u32 %v2960, 4294901760
        %2962 = vmatpush.msra.mxu0 %v2961
        %v2963 = vand.u32 %v2788, 4294901760
        %2964 = vmatmul.f32.gmra.mxu0 %v2963
        %v2965 = vpop.f32.mrf.mxu0
        %v2966 = vadd.f32 %v2842, %v2965
        %v2967 = vand.u32 %v2791, 4294901760
        %2968 = vmatmul.f32.gmra.mxu0 %v2967
        %v2969 = vpop.f32.mrf.mxu0
        %v2970 = vadd.f32 %v2850, %v2969
        %v2971 = vand.u32 %v2794, 4294901760
        %2972 = vmatmul.f32.gmra.mxu0 %v2971
        %v2973 = vpop.f32.mrf.mxu0
        %v2974 = vadd.f32 %v2858, %v2973
        %v2975 = vand.u32 %v2797, 4294901760
        %2976 = vmatmul.f32.gmra.mxu0 %v2975
        %v2977 = vpop.f32.mrf.mxu0
        %v2978 = vadd.f32 %v2866, %v2977
        %v2979 = vand.u32 %v2800, 4294901760
        %2980 = vmatmul.f32.gmra.mxu0 %v2979
        %v2981 = vpop.f32.mrf.mxu0
        %v2982 = vadd.f32 %v2874, %v2981
        %v2983 = vand.u32 %v2803, 4294901760
        %2984 = vmatmul.f32.gmra.mxu0 %v2983
        %v2985 = vpop.f32.mrf.mxu0
        %v2986 = vadd.f32 %v2882, %v2985
        %v2987 = vand.u32 %v2806, 4294901760
        %2988 = vmatmul.f32.gmra.mxu0 %v2987
        %v2989 = vpop.f32.mrf.mxu0
        %v2990 = vadd.f32 %v2890, %v2989
        %2991 = vdwg.mxu0
        %2992 = vmatpush.msra.mxu0 0.0
        %2993 = vmatpush.msra.mxu0 0.0
        %2994 = vmatpush.msra.mxu0 0.0
        %2995 = vmatpush.msra.mxu0 0.0
        %2996 = vmatpush.msra.mxu0 0.0
        %v2997 = vand.u32 %v2736, 4294901760
        %v2998 = vsub.f32 %v2736, %v2997
        %2999 = vmatpush.msra.mxu0 %v2998
        %v3000 = vand.u32 %v2735, 4294901760
        %v3001 = vsub.f32 %v2735, %v3000
        %3002 = vmatpush.msra.mxu0 %v3001
        %v3003 = vand.u32 %v2734, 4294901760
        %v3004 = vsub.f32 %v2734, %v3003
        %3005 = vmatpush.msra.mxu0 %v3004
        %v3006 = vand.u32 %v2733, 4294901760
        %v3007 = vsub.f32 %v2733, %v3006
        %3008 = vmatpush.msra.mxu0 %v3007
        %v3009 = vand.u32 %v2732, 4294901760
        %v3010 = vsub.f32 %v2732, %v3009
        %3011 = vmatpush.msra.mxu0 %v3010
        %v3012 = vand.u32 %v2731, 4294901760
        %v3013 = vsub.f32 %v2731, %v3012
        %3014 = vmatpush.msra.mxu0 %v3013
        %v3015 = vand.u32 %v2730, 4294901760
        %v3016 = vsub.f32 %v2730, %v3015
        %3017 = vmatpush.msra.mxu0 %v3016
        %v3018 = vand.u32 %v2729, 4294901760
        %v3019 = vsub.f32 %v2729, %v3018
        %3020 = vmatpush.msra.mxu0 %v3019
        %v3021 = vand.u32 %v2728, 4294901760
        %v3022 = vsub.f32 %v2728, %v3021
        %3023 = vmatpush.msra.mxu0 %v3022
        %v3024 = vand.u32 %v2727, 4294901760
        %v3025 = vsub.f32 %v2727, %v3024
        %3026 = vmatpush.msra.mxu0 %v3025
        %v3027 = vand.u32 %v2726, 4294901760
        %v3028 = vsub.f32 %v2726, %v3027
        %3029 = vmatpush.msra.mxu0 %v3028
        %v3030 = vand.u32 %v2788, 4294901760
        %v3031 = vsub.f32 %v2788, %v3030
        %3032 = vmatmul.f32.gmra.mxu0 %v3031
        %v3033 = vpop.f32.mrf.mxu0
        %v3034 = vadd.f32 %v2966, %v3033
        %v3035 = vand.u32 %v2791, 4294901760
        %v3036 = vsub.f32 %v2791, %v3035
        %3037 = vmatmul.f32.gmra.mxu0 %v3036
        %v3038 = vpop.f32.mrf.mxu0
        %v3039 = vadd.f32 %v2970, %v3038
        %v3040 = vand.u32 %v2794, 4294901760
        %v3041 = vsub.f32 %v2794, %v3040
        %3042 = vmatmul.f32.gmra.mxu0 %v3041
        %v3043 = vpop.f32.mrf.mxu0
        %v3044 = vadd.f32 %v2974, %v3043
        %v3045 = vand.u32 %v2797, 4294901760
        %v3046 = vsub.f32 %v2797, %v3045
        %3047 = vmatmul.f32.gmra.mxu0 %v3046
        %v3048 = vpop.f32.mrf.mxu0
        %v3049 = vadd.f32 %v2978, %v3048
        %v3050 = vand.u32 %v2800, 4294901760
        %v3051 = vsub.f32 %v2800, %v3050
        %3052 = vmatmul.f32.gmra.mxu0 %v3051
        %v3053 = vpop.f32.mrf.mxu0
        %v3054 = vadd.f32 %v2982, %v3053
        %v3055 = vand.u32 %v2803, 4294901760
        %v3056 = vsub.f32 %v2803, %v3055
        %3057 = vmatmul.f32.gmra.mxu0 %v3056
        %v3058 = vpop.f32.mrf.mxu0
        %v3059 = vadd.f32 %v2986, %v3058
        %v3060 = vand.u32 %v2806, 4294901760
        %v3061 = vsub.f32 %v2806, %v3060
        %3062 = vmatmul.f32.gmra.mxu0 %v3061
        %v3063 = vpop.f32.mrf.mxu0
        %v3064 = vadd.f32 %v2990, %v3063
        %3065 = vdwg.mxu0
        %3066 = vmatpush.msra.mxu0 0.0
        %3067 = vmatpush.msra.mxu0 0.0
        %3068 = vmatpush.msra.mxu0 0.0
        %3069 = vmatpush.msra.mxu0 0.0
        %3070 = vmatpush.msra.mxu0 0.0
        %v3071 = vand.u32 %v2736, 4294901760
        %3072 = vmatpush.msra.mxu0 %v3071
        %v3073 = vand.u32 %v2735, 4294901760
        %3074 = vmatpush.msra.mxu0 %v3073
        %v3075 = vand.u32 %v2734, 4294901760
        %3076 = vmatpush.msra.mxu0 %v3075
        %v3077 = vand.u32 %v2733, 4294901760
        %3078 = vmatpush.msra.mxu0 %v3077
        %v3079 = vand.u32 %v2732, 4294901760
        %3080 = vmatpush.msra.mxu0 %v3079
        %v3081 = vand.u32 %v2731, 4294901760
        %3082 = vmatpush.msra.mxu0 %v3081
        %v3083 = vand.u32 %v2730, 4294901760
        %3084 = vmatpush.msra.mxu0 %v3083
        %v3085 = vand.u32 %v2729, 4294901760
        %3086 = vmatpush.msra.mxu0 %v3085
        %v3087 = vand.u32 %v2728, 4294901760
        %3088 = vmatpush.msra.mxu0 %v3087
        %v3089 = vand.u32 %v2727, 4294901760
        %3090 = vmatpush.msra.mxu0 %v3089
        %v3091 = vand.u32 %v2726, 4294901760
        %3092 = vmatpush.msra.mxu0 %v3091
        %v3093 = vand.u32 %v2788, 4294901760
        %v3094 = vsub.f32 %v2788, %v3093
        %v3095 = vand.u32 %v3094, 4294901760
        %3096 = vmatmul.f32.gmra.mxu0 %v3095
        %v3097 = vpop.f32.mrf.mxu0
        %v3098 = vadd.f32 %v3034, %v3097
        %v3099 = vand.u32 %v2791, 4294901760
        %v3100 = vsub.f32 %v2791, %v3099
        %v3101 = vand.u32 %v3100, 4294901760
        %3102 = vmatmul.f32.gmra.mxu0 %v3101
        %v3103 = vpop.f32.mrf.mxu0
        %v3104 = vadd.f32 %v3039, %v3103
        %v3105 = vand.u32 %v2794, 4294901760
        %v3106 = vsub.f32 %v2794, %v3105
        %v3107 = vand.u32 %v3106, 4294901760
        %3108 = vmatmul.f32.gmra.mxu0 %v3107
        %v3109 = vpop.f32.mrf.mxu0
        %v3110 = vadd.f32 %v3044, %v3109
        %v3111 = vand.u32 %v2797, 4294901760
        %v3112 = vsub.f32 %v2797, %v3111
        %v3113 = vand.u32 %v3112, 4294901760
        %3114 = vmatmul.f32.gmra.mxu0 %v3113
        %v3115 = vpop.f32.mrf.mxu0
        %v3116 = vadd.f32 %v3049, %v3115
        %v3117 = vand.u32 %v2800, 4294901760
        %v3118 = vsub.f32 %v2800, %v3117
        %v3119 = vand.u32 %v3118, 4294901760
        %3120 = vmatmul.f32.gmra.mxu0 %v3119
        %v3121 = vpop.f32.mrf.mxu0
        %v3122 = vadd.f32 %v3054, %v3121
        %v3123 = vand.u32 %v2803, 4294901760
        %v3124 = vsub.f32 %v2803, %v3123
        %v3125 = vand.u32 %v3124, 4294901760
        %3126 = vmatmul.f32.gmra.mxu0 %v3125
        %v3127 = vpop.f32.mrf.mxu0
        %v3128 = vadd.f32 %v3059, %v3127
        %v3129 = vand.u32 %v2806, 4294901760
        %v3130 = vsub.f32 %v2806, %v3129
        %v3131 = vand.u32 %v3130, 4294901760
        %3132 = vmatmul.f32.gmra.mxu0 %v3131
        %v3133 = vpop.f32.mrf.mxu0
        %v3134 = vadd.f32 %v3064, %v3133
        %3135 = vdwg.mxu0
        %3136 = vmatpush.msra.mxu0 0.0
        %3137 = vmatpush.msra.mxu0 0.0
        %3138 = vmatpush.msra.mxu0 0.0
        %3139 = vmatpush.msra.mxu0 0.0
        %3140 = vmatpush.msra.mxu0 0.0
        %v3141 = vand.u32 %v2736, 4294901760
        %v3142 = vsub.f32 %v2736, %v3141
        %v3143 = vand.u32 %v3142, 4294901760
        %3144 = vmatpush.msra.mxu0 %v3143
        %v3145 = vand.u32 %v2735, 4294901760
        %v3146 = vsub.f32 %v2735, %v3145
        %v3147 = vand.u32 %v3146, 4294901760
        %3148 = vmatpush.msra.mxu0 %v3147
        %v3149 = vand.u32 %v2734, 4294901760
        %v3150 = vsub.f32 %v2734, %v3149
        %v3151 = vand.u32 %v3150, 4294901760
        %3152 = vmatpush.msra.mxu0 %v3151
        %v3153 = vand.u32 %v2733, 4294901760
        %v3154 = vsub.f32 %v2733, %v3153
        %v3155 = vand.u32 %v3154, 4294901760
        %3156 = vmatpush.msra.mxu0 %v3155
        %v3157 = vand.u32 %v2732, 4294901760
        %v3158 = vsub.f32 %v2732, %v3157
        %v3159 = vand.u32 %v3158, 4294901760
        %3160 = vmatpush.msra.mxu0 %v3159
        %v3161 = vand.u32 %v2731, 4294901760
        %v3162 = vsub.f32 %v2731, %v3161
        %v3163 = vand.u32 %v3162, 4294901760
        %3164 = vmatpush.msra.mxu0 %v3163
        %v3165 = vand.u32 %v2730, 4294901760
        %v3166 = vsub.f32 %v2730, %v3165
        %v3167 = vand.u32 %v3166, 4294901760
        %3168 = vmatpush.msra.mxu0 %v3167
        %v3169 = vand.u32 %v2729, 4294901760
        %v3170 = vsub.f32 %v2729, %v3169
        %v3171 = vand.u32 %v3170, 4294901760
        %3172 = vmatpush.msra.mxu0 %v3171
        %v3173 = vand.u32 %v2728, 4294901760
        %v3174 = vsub.f32 %v2728, %v3173
        %v3175 = vand.u32 %v3174, 4294901760
        %3176 = vmatpush.msra.mxu0 %v3175
        %v3177 = vand.u32 %v2727, 4294901760
        %v3178 = vsub.f32 %v2727, %v3177
        %v3179 = vand.u32 %v3178, 4294901760
        %3180 = vmatpush.msra.mxu0 %v3179
        %v3181 = vand.u32 %v2726, 4294901760
        %v3182 = vsub.f32 %v2726, %v3181
        %v3183 = vand.u32 %v3182, 4294901760
        %3184 = vmatpush.msra.mxu0 %v3183
        %v3185 = vand.u32 %v2788, 4294901760
        %3186 = vmatmul.f32.gmra.mxu0 %v3185
        %v3187 = vpop.f32.mrf.mxu0
        %v3188 = vadd.f32 %v3098, %v3187
        %v3189 = vand.u32 %v2791, 4294901760
        %3190 = vmatmul.f32.gmra.mxu0 %v3189
        %v3191 = vpop.f32.mrf.mxu0
        %v3192 = vadd.f32 %v3104, %v3191
        %v3193 = vand.u32 %v2794, 4294901760
        %3194 = vmatmul.f32.gmra.mxu0 %v3193
        %v3195 = vpop.f32.mrf.mxu0
        %v3196 = vadd.f32 %v3110, %v3195
        %v3197 = vand.u32 %v2797, 4294901760
        %3198 = vmatmul.f32.gmra.mxu0 %v3197
        %v3199 = vpop.f32.mrf.mxu0
        %v3200 = vadd.f32 %v3116, %v3199
        %v3201 = vand.u32 %v2800, 4294901760
        %3202 = vmatmul.f32.gmra.mxu0 %v3201
        %v3203 = vpop.f32.mrf.mxu0
        %v3204 = vadd.f32 %v3122, %v3203
        %v3205 = vand.u32 %v2803, 4294901760
        %3206 = vmatmul.f32.gmra.mxu0 %v3205
        %v3207 = vpop.f32.mrf.mxu0
        %v3208 = vadd.f32 %v3128, %v3207
        %v3209 = vand.u32 %v2806, 4294901760
        %3210 = vmatmul.f32.gmra.mxu0 %v3209
        %v3211 = vpop.f32.mrf.mxu0
        %v3212 = vadd.f32 %v3134, %v3211
        %3213 = vdwg.mxu0
        %3214 = vmatpush.msra.mxu0 0.0
        %3215 = vmatpush.msra.mxu0 0.0
        %3216 = vmatpush.msra.mxu0 0.0
        %3217 = vmatpush.msra.mxu0 0.0
        %3218 = vmatpush.msra.mxu0 0.0
        %v3219 = vand.u32 %v2736, 4294901760
        %3220 = vmatpush.msra.mxu0 %v3219
        %v3221 = vand.u32 %v2735, 4294901760
        %3222 = vmatpush.msra.mxu0 %v3221
        %v3223 = vand.u32 %v2734, 4294901760
        %3224 = vmatpush.msra.mxu0 %v3223
        %v3225 = vand.u32 %v2733, 4294901760
        %3226 = vmatpush.msra.mxu0 %v3225
        %v3227 = vand.u32 %v2732, 4294901760
        %3228 = vmatpush.msra.mxu0 %v3227
        %v3229 = vand.u32 %v2731, 4294901760
        %3230 = vmatpush.msra.mxu0 %v3229
        %v3231 = vand.u32 %v2730, 4294901760
        %3232 = vmatpush.msra.mxu0 %v3231
        %v3233 = vand.u32 %v2729, 4294901760
        %3234 = vmatpush.msra.mxu0 %v3233
        %v3235 = vand.u32 %v2728, 4294901760
        %3236 = vmatpush.msra.mxu0 %v3235
        %v3237 = vand.u32 %v2727, 4294901760
        %3238 = vmatpush.msra.mxu0 %v3237
        %v3239 = vand.u32 %v2726, 4294901760
        %3240 = vmatpush.msra.mxu0 %v3239
        %v3241 = vand.u32 %v2788, 4294901760
        %3242 = vmatmul.f32.gmra.mxu0 %v3241
        %v3243 = vpop.f32.mrf.mxu0
        %v3244 = vadd.f32 %v3188, %v3243
        %v3245 = vand.u32 %v2791, 4294901760
        %3246 = vmatmul.f32.gmra.mxu0 %v3245
        %v3247 = vpop.f32.mrf.mxu0
        %v3248 = vadd.f32 %v3192, %v3247
        %v3249 = vand.u32 %v2794, 4294901760
        %3250 = vmatmul.f32.gmra.mxu0 %v3249
        %v3251 = vpop.f32.mrf.mxu0
        %v3252 = vadd.f32 %v3196, %v3251
        %v3253 = vand.u32 %v2797, 4294901760
        %3254 = vmatmul.f32.gmra.mxu0 %v3253
        %v3255 = vpop.f32.mrf.mxu0
        %v3256 = vadd.f32 %v3200, %v3255
        %v3257 = vand.u32 %v2800, 4294901760
        %3258 = vmatmul.f32.gmra.mxu0 %v3257
        %v3259 = vpop.f32.mrf.mxu0
        %v3260 = vadd.f32 %v3204, %v3259
        %v3261 = vand.u32 %v2803, 4294901760
        %3262 = vmatmul.f32.gmra.mxu0 %v3261
        %v3263 = vpop.f32.mrf.mxu0
        %v3264 = vadd.f32 %v3208, %v3263
        %v3265 = vand.u32 %v2806, 4294901760
        %3266 = vmatmul.f32.gmra.mxu0 %v3265
        %v3267 = vpop.f32.mrf.mxu0
        %v3268 = vadd.f32 %v3212, %v3267
        %3269 = vdwg.mxu0
        %v3270 = vxor.u32 %v3244, 2147483648
        %v3271 = vxor.u32 %v3248, 2147483648
        %v3272 = vxor.u32 %v3252, 2147483648
        %v3273 = vxor.u32 %v3256, 2147483648
        %v3274 = vxor.u32 %v3260, 2147483648
        %v3275 = vxor.u32 %v3264, 2147483648
        %v3276 = vxor.u32 %v3268, 2147483648
        %v3277 = vmul.f32 %v3270, 1.442695
        %v3278 = vpow.pop %v3277
        %v3279 = vmul.f32 %v3271, 1.442695
        %v3280 = vpow.pop %v3279
        %v3281 = vmul.f32 %v3272, 1.442695
        %v3282 = vpow.pop %v3281
        %v3283 = vmul.f32 %v3273, 1.442695
        %v3284 = vpow.pop %v3283
        %v3285 = vmul.f32 %v3274, 1.442695
        %v3286 = vpow.pop %v3285
        %v3287 = vmul.f32 %v3275, 1.442695
        %v3288 = vpow.pop %v3287
        %v3289 = vmul.f32 %v3276, 1.442695
        %v3290 = vpow.pop %v3289
        %v3291 = vadd.f32 %v3278, 1.0
        %v3292 = vadd.f32 %v3280, 1.0
        %v3293 = vadd.f32 %v3282, 1.0
        %v3294 = vadd.f32 %v3284, 1.0
        %v3295 = vadd.f32 %v3286, 1.0
        %v3296 = vadd.f32 %v3288, 1.0
        %v3297 = vadd.f32 %v3290, 1.0
        %v3298 = vrcp.pop %v3291
        %v3299 = vmul.f32 %v3291, %v3298
        %v3300 = vsub.f32 1.0, %v3299
        %v3301 = vmul.f32 %v3298, %v3300
        %v3302 = vadd.f32 %v3298, %v3301
        %vm3303 = vweird.f32 %v3291
        %vm3304 = vweird.f32 %v3298
        %vm3305 = vmor %vm3303, %vm3304
        %v3306 = vsel %vm3305, %v3298, %v3302
        %v3307 = vand.u32 2147483647, %v3291
        %vm3308 = vcmp.eq.f32.partialorder %v3307, 8.507059e+37
        %v3309 = vand.u32 %v3291, 2147483648
        %v3310 = vor.u32 1.1754944e-38, %v3309
        %v3311 = vsel %vm3308, %v3310, %v3306
        %v3312 = vmul.f32 1.0, %v3311
        %v3313 = vrcp.pop %v3292
        %v3314 = vmul.f32 %v3292, %v3313
        %v3315 = vsub.f32 1.0, %v3314
        %v3316 = vmul.f32 %v3313, %v3315
        %v3317 = vadd.f32 %v3313, %v3316
        %vm3318 = vweird.f32 %v3292
        %vm3319 = vweird.f32 %v3313
        %vm3320 = vmor %vm3318, %vm3319
        %v3321 = vsel %vm3320, %v3313, %v3317
        %v3322 = vand.u32 2147483647, %v3292
        %vm3323 = vcmp.eq.f32.partialorder %v3322, 8.507059e+37
        %v3324 = vand.u32 %v3292, 2147483648
        %v3325 = vor.u32 1.1754944e-38, %v3324
        %v3326 = vsel %vm3323, %v3325, %v3321
        %v3327 = vmul.f32 1.0, %v3326
        %v3328 = vrcp.pop %v3293
        %v3329 = vmul.f32 %v3293, %v3328
        %v3330 = vsub.f32 1.0, %v3329
        %v3331 = vmul.f32 %v3328, %v3330
        %v3332 = vadd.f32 %v3328, %v3331
        %vm3333 = vweird.f32 %v3293
        %vm3334 = vweird.f32 %v3328
        %vm3335 = vmor %vm3333, %vm3334
        %v3336 = vsel %vm3335, %v3328, %v3332
        %v3337 = vand.u32 2147483647, %v3293
        %vm3338 = vcmp.eq.f32.partialorder %v3337, 8.507059e+37
        %v3339 = vand.u32 %v3293, 2147483648
        %v3340 = vor.u32 1.1754944e-38, %v3339
        %v3341 = vsel %vm3338, %v3340, %v3336
        %v3342 = vmul.f32 1.0, %v3341
        %v3343 = vrcp.pop %v3294
        %v3344 = vmul.f32 %v3294, %v3343
        %v3345 = vsub.f32 1.0, %v3344
        %v3346 = vmul.f32 %v3343, %v3345
        %v3347 = vadd.f32 %v3343, %v3346
        %vm3348 = vweird.f32 %v3294
        %vm3349 = vweird.f32 %v3343
        %vm3350 = vmor %vm3348, %vm3349
        %v3351 = vsel %vm3350, %v3343, %v3347
        %v3352 = vand.u32 2147483647, %v3294
        %vm3353 = vcmp.eq.f32.partialorder %v3352, 8.507059e+37
        %v3354 = vand.u32 %v3294, 2147483648
        %v3355 = vor.u32 1.1754944e-38, %v3354
        %v3356 = vsel %vm3353, %v3355, %v3351
        %v3357 = vmul.f32 1.0, %v3356
        %v3358 = vrcp.pop %v3295
        %v3359 = vmul.f32 %v3295, %v3358
        %v3360 = vsub.f32 1.0, %v3359
        %v3361 = vmul.f32 %v3358, %v3360
        %v3362 = vadd.f32 %v3358, %v3361
        %vm3363 = vweird.f32 %v3295
        %vm3364 = vweird.f32 %v3358
        %vm3365 = vmor %vm3363, %vm3364
        %v3366 = vsel %vm3365, %v3358, %v3362
        %v3367 = vand.u32 2147483647, %v3295
        %vm3368 = vcmp.eq.f32.partialorder %v3367, 8.507059e+37
        %v3369 = vand.u32 %v3295, 2147483648
        %v3370 = vor.u32 1.1754944e-38, %v3369
        %v3371 = vsel %vm3368, %v3370, %v3366
        %v3372 = vmul.f32 1.0, %v3371
        %v3373 = vrcp.pop %v3296
        %v3374 = vmul.f32 %v3296, %v3373
        %v3375 = vsub.f32 1.0, %v3374
        %v3376 = vmul.f32 %v3373, %v3375
        %v3377 = vadd.f32 %v3373, %v3376
        %vm3378 = vweird.f32 %v3296
        %vm3379 = vweird.f32 %v3373
        %vm3380 = vmor %vm3378, %vm3379
        %v3381 = vsel %vm3380, %v3373, %v3377
        %v3382 = vand.u32 2147483647, %v3296
        %vm3383 = vcmp.eq.f32.partialorder %v3382, 8.507059e+37
        %v3384 = vand.u32 %v3296, 2147483648
        %v3385 = vor.u32 1.1754944e-38, %v3384
        %v3386 = vsel %vm3383, %v3385, %v3381
        %v3387 = vmul.f32 1.0, %v3386
        %v3388 = vrcp.pop %v3297
        %v3389 = vmul.f32 %v3297, %v3388
        %v3390 = vsub.f32 1.0, %v3389
        %v3391 = vmul.f32 %v3388, %v3390
        %v3392 = vadd.f32 %v3388, %v3391
        %vm3393 = vweird.f32 %v3297
        %vm3394 = vweird.f32 %v3388
        %vm3395 = vmor %vm3393, %vm3394
        %v3396 = vsel %vm3395, %v3388, %v3392
        %v3397 = vand.u32 2147483647, %v3297
        %vm3398 = vcmp.eq.f32.partialorder %v3397, 8.507059e+37
        %v3399 = vand.u32 %v3297, 2147483648
        %v3400 = vor.u32 1.1754944e-38, %v3399
        %v3401 = vsel %vm3398, %v3400, %v3396
        %v3402 = vmul.f32 1.0, %v3401
        %3404 = vset.pattern.permute.xlu0 0
        %3405 = vperm.xlu0 %3404, %v1049
        %v3406 = vpop.permute.xlu0 %3405
        %3409 = vset.pattern.permute.xlu0 0
        %3410 = vperm.xlu0 %3409, %v1050
        %v3411 = vpop.permute.xlu0 %3410
        %3414 = vset.pattern.permute.xlu0 0
        %3415 = vperm.xlu0 %3414, %v1051
        %v3416 = vpop.permute.xlu0 %3415
        %3419 = vset.pattern.permute.xlu0 0
        %3420 = vperm.xlu0 %3419, %v1052
        %v3421 = vpop.permute.xlu0 %3420
        %3424 = vset.pattern.permute.xlu0 0
        %3425 = vperm.xlu0 %3424, %v1053
        %v3426 = vpop.permute.xlu0 %3425
        %3429 = vset.pattern.permute.xlu0 0
        %3430 = vperm.xlu0 %3429, %v1054
        %v3431 = vpop.permute.xlu0 %3430
        %3434 = vset.pattern.permute.xlu0 0
        %3435 = vperm.xlu0 %3434, %v1055
        %v3436 = vpop.permute.xlu0 %3435
        %v3438 = vmul.f32 %v1058, %v3406
        %v3439 = vmul.f32 %v1059, %v3411
        %v3440 = vmul.f32 %v1060, %v3416
        %v3441 = vmul.f32 %v1061, %v3421
        %v3442 = vmul.f32 %v1062, %v3426
        %v3443 = vmul.f32 %v1063, %v3431
        %v3444 = vmul.f32 %v1064, %v3436
        %3446 = vset.pattern.permute.xlu0 0
        %3447 = vperm.xlu0 %3446, %v1042
        %v3448 = vpop.permute.xlu0 %3447
        %3451 = vset.pattern.permute.xlu0 0
        %3452 = vperm.xlu0 %3451, %v1043
        %v3453 = vpop.permute.xlu0 %3452
        %3456 = vset.pattern.permute.xlu0 0
        %3457 = vperm.xlu0 %3456, %v1044
        %v3458 = vpop.permute.xlu0 %3457
        %3461 = vset.pattern.permute.xlu0 0
        %3462 = vperm.xlu0 %3461, %v1045
        %v3463 = vpop.permute.xlu0 %3462
        %3466 = vset.pattern.permute.xlu0 0
        %3467 = vperm.xlu0 %3466, %v1046
        %v3468 = vpop.permute.xlu0 %3467
        %3471 = vset.pattern.permute.xlu0 0
        %3472 = vperm.xlu0 %3471, %v1047
        %v3473 = vpop.permute.xlu0 %3472
        %3476 = vset.pattern.permute.xlu0 0
        %3477 = vperm.xlu0 %3476, %v1048
        %v3478 = vpop.permute.xlu0 %3477
        %v3480 = vadd.f32 %v3438, %v3448
        %v3481 = vadd.f32 %v3439, %v3453
        %v3482 = vadd.f32 %v3440, %v3458
        %v3483 = vadd.f32 %v3441, %v3463
        %v3484 = vadd.f32 %v3442, %v3468
        %v3485 = vadd.f32 %v3443, %v3473
        %v3486 = vadd.f32 %v3444, %v3478
        %v3487 = vmul.f32 %v3312, %v1898
        %v3488 = vmul.f32 %v3327, %v1899
        %v3489 = vmul.f32 %v3342, %v1900
        %v3490 = vmul.f32 %v3357, %v1901
        %v3491 = vmul.f32 %v3372, %v1902
        %v3492 = vmul.f32 %v3387, %v1903
        %v3493 = vmul.f32 %v3402, %v1904
        %v3494 = vsub.f32 1.0, %v3312
        %v3495 = vsub.f32 1.0, %v3327
        %v3496 = vsub.f32 1.0, %v3342
        %v3497 = vsub.f32 1.0, %v3357
        %v3498 = vsub.f32 1.0, %v3372
        %v3499 = vsub.f32 1.0, %v3387
        %v3500 = vsub.f32 1.0, %v3402
        %v3501 = vmul.f32 %v3494, %v3480
        %v3502 = vmul.f32 %v3495, %v3481
        %v3503 = vmul.f32 %v3496, %v3482
        %v3504 = vmul.f32 %v3497, %v3483
        %v3505 = vmul.f32 %v3498, %v3484
        %v3506 = vmul.f32 %v3499, %v3485
        %v3507 = vmul.f32 %v3500, %v3486
        %v3508 = vadd.f32 %v3487, %v3501
        %v3509 = vadd.f32 %v3488, %v3502
        %v3510 = vadd.f32 %v3489, %v3503
        %v3511 = vadd.f32 %v3490, %v3504
        %v3512 = vadd.f32 %v3491, %v3505
        %v3513 = vadd.f32 %v3492, %v3506
        %v3514 = vadd.f32 %v3493, %v3507
        %3516 = vset.pattern.permute.xlu0 0
        %3517 = vperm.xlu0 %3516, %v1035
        %v3518 = vpop.permute.xlu0 %3517
        %3521 = vset.pattern.permute.xlu0 0
        %3522 = vperm.xlu0 %3521, %v1036
        %v3523 = vpop.permute.xlu0 %3522
        %3526 = vset.pattern.permute.xlu0 0
        %3527 = vperm.xlu0 %3526, %v1037
        %v3528 = vpop.permute.xlu0 %3527
        %3531 = vset.pattern.permute.xlu0 0
        %3532 = vperm.xlu0 %3531, %v1038
        %v3533 = vpop.permute.xlu0 %3532
        %3536 = vset.pattern.permute.xlu0 0
        %3537 = vperm.xlu0 %3536, %v1039
        %v3538 = vpop.permute.xlu0 %3537
        %3541 = vset.pattern.permute.xlu0 0
        %3542 = vperm.xlu0 %3541, %v1040
        %v3543 = vpop.permute.xlu0 %3542
        %3546 = vset.pattern.permute.xlu0 0
        %3547 = vperm.xlu0 %3546, %v1041
        %v3548 = vpop.permute.xlu0 %3547
        %v3550 = vmul.f32 %v3518, %v3508
        %v3551 = vmul.f32 %v3523, %v3509
        %v3552 = vmul.f32 %v3528, %v3510
        %v3553 = vmul.f32 %v3533, %v3511
        %v3554 = vmul.f32 %v3538, %v3512
        %v3555 = vmul.f32 %v3543, %v3513
        %v3556 = vmul.f32 %v3548, %v3514
        %v3557 = vsub.f32 1.0, %v1035
        %v3558 = vsub.f32 1.0, %v1036
        %v3559 = vsub.f32 1.0, %v1037
        %v3560 = vsub.f32 1.0, %v1038
        %v3561 = vsub.f32 1.0, %v1039
        %v3562 = vsub.f32 1.0, %v1040
        %v3563 = vsub.f32 1.0, %v1041
        %3565 = vset.pattern.permute.xlu0 0
        %3566 = vperm.xlu0 %3565, %v3557
        %v3567 = vpop.permute.xlu0 %3566
        %3570 = vset.pattern.permute.xlu0 0
        %3571 = vperm.xlu0 %3570, %v3558
        %v3572 = vpop.permute.xlu0 %3571
        %3575 = vset.pattern.permute.xlu0 0
        %3576 = vperm.xlu0 %3575, %v3559
        %v3577 = vpop.permute.xlu0 %3576
        %3580 = vset.pattern.permute.xlu0 0
        %3581 = vperm.xlu0 %3580, %v3560
        %v3582 = vpop.permute.xlu0 %3581
        %3585 = vset.pattern.permute.xlu0 0
        %3586 = vperm.xlu0 %3585, %v3561
        %v3587 = vpop.permute.xlu0 %3586
        %3590 = vset.pattern.permute.xlu0 0
        %3591 = vperm.xlu0 %3590, %v3562
        %v3592 = vpop.permute.xlu0 %3591
        %3595 = vset.pattern.permute.xlu0 0
        %3596 = vperm.xlu0 %3595, %v3563
        %v3597 = vpop.permute.xlu0 %3596
        %v3599 = vmul.f32 %v3567, %v1898
        %v3600 = vmul.f32 %v3572, %v1899
        %v3601 = vmul.f32 %v3577, %v1900
        %v3602 = vmul.f32 %v3582, %v1901
        %v3603 = vmul.f32 %v3587, %v1902
        %v3604 = vmul.f32 %v3592, %v1903
        %v3605 = vmul.f32 %v3597, %v1904
        %v3606 = vadd.f32 %v3550, %v3599
        %v3607 = vadd.f32 %v3551, %v3600
        %v3608 = vadd.f32 %v3552, %v3601
        %v3609 = vadd.f32 %v3553, %v3602
        %v3610 = vadd.f32 %v3554, %v3603
        %v3611 = vadd.f32 %v3555, %v3604
        %v3612 = vadd.f32 %v3556, %v3605
        %v3613 = vmul.f32 %v3606, %v847
        %v3614 = vmul.f32 %v3607, %v847
        %v3615 = vmul.f32 %v3608, %v847
        %v3616 = vmul.f32 %v3609, %v847
        %v3617 = vmul.f32 %v3610, %v847
        %v3618 = vmul.f32 %v3611, %v847
        %v3619 = vmul.f32 %v3612, %v847
        %3620 = vadd.xlane.f32.xlu0 %v3613
        %v3621 = vpop.xlane.xlu0 %3620
        %3622 = vadd.xlane.f32.xlu0 %v3614
        %v3623 = vpop.xlane.xlu0 %3622
        %3624 = vadd.xlane.f32.xlu0 %v3615
        %v3625 = vpop.xlane.xlu0 %3624
        %3626 = vadd.xlane.f32.xlu0 %v3616
        %v3627 = vpop.xlane.xlu0 %3626
        %3628 = vadd.xlane.f32.xlu0 %v3617
        %v3629 = vpop.xlane.xlu0 %3628
        %3630 = vadd.xlane.f32.xlu0 %v3618
        %v3631 = vpop.xlane.xlu0 %3630
        %3632 = vadd.xlane.f32.xlu0 %v3619
        %v3633 = vpop.xlane.xlu0 %3632
        %v3634 = vld [vmem:[%s742 + $0x38] sm:$0xff]
        %v3635 = vld [vmem:[%s742 + $0x40] sm:$0xff]
        %v3636 = vld [vmem:[%s742 + $0x48] sm:$0xff]
        %v3637 = vld [vmem:[%s742 + $0x50] sm:$0xff]
        %v3638 = vld [vmem:[%s742 + $0x58] sm:$0xff]
        %v3639 = vld [vmem:[%s742 + $0x60] sm:$0xff]
        %v3640 = vld [vmem:[%s742 + $0x68] sm:$0xff]
        %v3642 = vsel %vm1076, %v1057, 0
        %3644 = vmatpush.msra.mxu0 0.0
        %3645 = vmatpush.msra.mxu0 0.0
        %3646 = vmatpush.msra.mxu0 0.0
        %3647 = vmatpush.msra.mxu0 0.0
        %3648 = vmatpush.msra.mxu0 0.0
        %3649 = vmatpush.msra.mxu0 0.0
        %3650 = vmatpush.msra.mxu0 0.0
        %3651 = vmatpush.msra.mxu0 0.0
        %3652 = vmatpush.msra.mxu0 0.0
        %3653 = vmatpush.msra.mxu0 0.0
        %3654 = vmatpush.msra.mxu0 0.0
        %3655 = vmatpush.msra.mxu0 0.0
        %3656 = vmatpush.msra.mxu0 0.0
        %3657 = vmatpush.msra.mxu0 0.0
        %3658 = vmatpush.msra.mxu0 0.0
        %v3659 = vand.u32 %v3642, 4294901760
        %3660 = vmatpush.msra.mxu0 %v3659
        %v3661 = vand.u32 %v1074, 4294901760
        %v3662 = vsub.f32 %v1074, %v3661
        %v3663 = vand.u32 %v3662, 4294901760
        %v3664 = vsub.f32 %v3662, %v3663
        %v3665 = vand.u32 %v3664, 4294901760
        %3666 = vmatmul.f32.gmra.mxu0 %v3665
        %v3667 = vpop.f32.mrf.mxu0
        %v3668 = vadd.f32 %v1070, %v3667
        %3669 = vdwg.mxu0
        %3670 = vmatpush.msra.mxu0 0.0
        %3671 = vmatpush.msra.mxu0 0.0
        %3672 = vmatpush.msra.mxu0 0.0
        %3673 = vmatpush.msra.mxu0 0.0
        %3674 = vmatpush.msra.mxu0 0.0
        %3675 = vmatpush.msra.mxu0 0.0
        %3676 = vmatpush.msra.mxu0 0.0
        %3677 = vmatpush.msra.mxu0 0.0
        %3678 = vmatpush.msra.mxu0 0.0
        %3679 = vmatpush.msra.mxu0 0.0
        %3680 = vmatpush.msra.mxu0 0.0
        %3681 = vmatpush.msra.mxu0 0.0
        %3682 = vmatpush.msra.mxu0 0.0
        %3683 = vmatpush.msra.mxu0 0.0
        %3684 = vmatpush.msra.mxu0 0.0
        %v3685 = vand.u32 %v3642, 4294901760
        %v3686 = vsub.f32 %v3642, %v3685
        %v3687 = vand.u32 %v3686, 4294901760
        %v3688 = vsub.f32 %v3686, %v3687
        %v3689 = vand.u32 %v3688, 4294901760
        %3690 = vmatpush.msra.mxu0 %v3689
        %v3691 = vand.u32 %v1074, 4294901760
        %3692 = vmatmul.f32.gmra.mxu0 %v3691
        %v3693 = vpop.f32.mrf.mxu0
        %v3694 = vadd.f32 %v3668, %v3693
        %3695 = vdwg.mxu0
        %3696 = vmatpush.msra.mxu0 0.0
        %3697 = vmatpush.msra.mxu0 0.0
        %3698 = vmatpush.msra.mxu0 0.0
        %3699 = vmatpush.msra.mxu0 0.0
        %3700 = vmatpush.msra.mxu0 0.0
        %3701 = vmatpush.msra.mxu0 0.0
        %3702 = vmatpush.msra.mxu0 0.0
        %3703 = vmatpush.msra.mxu0 0.0
        %3704 = vmatpush.msra.mxu0 0.0
        %3705 = vmatpush.msra.mxu0 0.0
        %3706 = vmatpush.msra.mxu0 0.0
        %3707 = vmatpush.msra.mxu0 0.0
        %3708 = vmatpush.msra.mxu0 0.0
        %3709 = vmatpush.msra.mxu0 0.0
        %3710 = vmatpush.msra.mxu0 0.0
        %v3711 = vand.u32 %v3642, 4294901760
        %v3712 = vsub.f32 %v3642, %v3711
        %3713 = vmatpush.msra.mxu0 %v3712
        %v3714 = vand.u32 %v1074, 4294901760
        %v3715 = vsub.f32 %v1074, %v3714
        %3716 = vmatmul.f32.gmra.mxu0 %v3715
        %v3717 = vpop.f32.mrf.mxu0
        %v3718 = vadd.f32 %v3694, %v3717
        %3719 = vdwg.mxu0
        %3720 = vmatpush.msra.mxu0 0.0
        %3721 = vmatpush.msra.mxu0 0.0
        %3722 = vmatpush.msra.mxu0 0.0
        %3723 = vmatpush.msra.mxu0 0.0
        %3724 = vmatpush.msra.mxu0 0.0
        %3725 = vmatpush.msra.mxu0 0.0
        %3726 = vmatpush.msra.mxu0 0.0
        %3727 = vmatpush.msra.mxu0 0.0
        %3728 = vmatpush.msra.mxu0 0.0
        %3729 = vmatpush.msra.mxu0 0.0
        %3730 = vmatpush.msra.mxu0 0.0
        %3731 = vmatpush.msra.mxu0 0.0
        %3732 = vmatpush.msra.mxu0 0.0
        %3733 = vmatpush.msra.mxu0 0.0
        %3734 = vmatpush.msra.mxu0 0.0
        %v3735 = vand.u32 %v3642, 4294901760
        %3736 = vmatpush.msra.mxu0 %v3735
        %v3737 = vand.u32 %v1074, 4294901760
        %v3738 = vsub.f32 %v1074, %v3737
        %v3739 = vand.u32 %v3738, 4294901760
        %3740 = vmatmul.f32.gmra.mxu0 %v3739
        %v3741 = vpop.f32.mrf.mxu0
        %v3742 = vadd.f32 %v3718, %v3741
        %3743 = vdwg.mxu0
        %3744 = vmatpush.msra.mxu0 0.0
        %3745 = vmatpush.msra.mxu0 0.0
        %3746 = vmatpush.msra.mxu0 0.0
        %3747 = vmatpush.msra.mxu0 0.0
        %3748 = vmatpush.msra.mxu0 0.0
        %3749 = vmatpush.msra.mxu0 0.0
        %3750 = vmatpush.msra.mxu0 0.0
        %3751 = vmatpush.msra.mxu0 0.0
        %3752 = vmatpush.msra.mxu0 0.0
        %3753 = vmatpush.msra.mxu0 0.0
        %3754 = vmatpush.msra.mxu0 0.0
        %3755 = vmatpush.msra.mxu0 0.0
        %3756 = vmatpush.msra.mxu0 0.0
        %3757 = vmatpush.msra.mxu0 0.0
        %3758 = vmatpush.msra.mxu0 0.0
        %v3759 = vand.u32 %v3642, 4294901760
        %v3760 = vsub.f32 %v3642, %v3759
        %v3761 = vand.u32 %v3760, 4294901760
        %3762 = vmatpush.msra.mxu0 %v3761
        %v3763 = vand.u32 %v1074, 4294901760
        %3764 = vmatmul.f32.gmra.mxu0 %v3763
        %v3765 = vpop.f32.mrf.mxu0
        %v3766 = vadd.f32 %v3742, %v3765
        %3767 = vdwg.mxu0
        %3768 = vmatpush.msra.mxu0 0.0
        %3769 = vmatpush.msra.mxu0 0.0
        %3770 = vmatpush.msra.mxu0 0.0
        %3771 = vmatpush.msra.mxu0 0.0
        %3772 = vmatpush.msra.mxu0 0.0
        %3773 = vmatpush.msra.mxu0 0.0
        %3774 = vmatpush.msra.mxu0 0.0
        %3775 = vmatpush.msra.mxu0 0.0
        %3776 = vmatpush.msra.mxu0 0.0
        %3777 = vmatpush.msra.mxu0 0.0
        %3778 = vmatpush.msra.mxu0 0.0
        %3779 = vmatpush.msra.mxu0 0.0
        %3780 = vmatpush.msra.mxu0 0.0
        %3781 = vmatpush.msra.mxu0 0.0
        %3782 = vmatpush.msra.mxu0 0.0
        %v3783 = vand.u32 %v3642, 4294901760
        %3784 = vmatpush.msra.mxu0 %v3783
        %v3785 = vand.u32 %v1074, 4294901760
        %3786 = vmatmul.f32.gmra.mxu0 %v3785
        %v3787 = vpop.f32.mrf.mxu0
        %v3788 = vadd.f32 %v3766, %v3787
        %3789 = vdwg.mxu0
        %v3790 = vmax.f32 %v3788, 0.0
        %3791 = vmatpush.msra.mxu0 0.0
        %3792 = vmatpush.msra.mxu0 0.0
        %3793 = vmatpush.msra.mxu0 0.0
        %3794 = vmatpush.msra.mxu0 0.0
        %3795 = vmatpush.msra.mxu0 0.0
        %3796 = vmatpush.msra.mxu0 0.0
        %3797 = vmatpush.msra.mxu0 0.0
        %3798 = vmatpush.msra.mxu0 0.0
        %3799 = vmatpush.msra.mxu0 0.0
        %3800 = vmatpush.msra.mxu0 0.0
        %3801 = vmatpush.msra.mxu0 0.0
        %3802 = vmatpush.msra.mxu0 0.0
        %3803 = vmatpush.msra.mxu0 0.0
        %3804 = vmatpush.msra.mxu0 0.0
        %3805 = vmatpush.msra.mxu0 0.0
        %v3806 = vand.u32 %v3790, 4294901760
        %3807 = vmatpush.msra.mxu0 %v3806
        %v3808 = vand.u32 %v1250, 4294901760
        %v3809 = vsub.f32 %v1250, %v3808
        %v3810 = vand.u32 %v3809, 4294901760
        %v3811 = vsub.f32 %v3809, %v3810
        %v3812 = vand.u32 %v3811, 4294901760
        %3813 = vmatmul.f32.gmra.mxu0 %v3812
        %v3814 = vpop.f32.mrf.mxu0
        %v3815 = vadd.f32 %v1236, %v3814
        %v3816 = vand.u32 %v1253, 4294901760
        %v3817 = vsub.f32 %v1253, %v3816
        %v3818 = vand.u32 %v3817, 4294901760
        %v3819 = vsub.f32 %v3817, %v3818
        %v3820 = vand.u32 %v3819, 4294901760
        %3821 = vmatmul.f32.gmra.mxu0 %v3820
        %v3822 = vpop.f32.mrf.mxu0
        %v3823 = vadd.f32 %v1241, %v3822
        %v3824 = vand.u32 %v1256, 4294901760
        %v3825 = vsub.f32 %v1256, %v3824
        %v3826 = vand.u32 %v3825, 4294901760
        %v3827 = vsub.f32 %v3825, %v3826
        %v3828 = vand.u32 %v3827, 4294901760
        %3829 = vmatmul.f32.gmra.mxu0 %v3828
        %v3830 = vpop.f32.mrf.mxu0
        %v3831 = vadd.f32 %v1246, %v3830
        %3832 = vdwg.mxu0
        %3833 = vmatpush.msra.mxu0 0.0
        %3834 = vmatpush.msra.mxu0 0.0
        %3835 = vmatpush.msra.mxu0 0.0
        %3836 = vmatpush.msra.mxu0 0.0
        %3837 = vmatpush.msra.mxu0 0.0
        %3838 = vmatpush.msra.mxu0 0.0
        %3839 = vmatpush.msra.mxu0 0.0
        %3840 = vmatpush.msra.mxu0 0.0
        %3841 = vmatpush.msra.mxu0 0.0
        %3842 = vmatpush.msra.mxu0 0.0
        %3843 = vmatpush.msra.mxu0 0.0
        %3844 = vmatpush.msra.mxu0 0.0
        %3845 = vmatpush.msra.mxu0 0.0
        %3846 = vmatpush.msra.mxu0 0.0
        %3847 = vmatpush.msra.mxu0 0.0
        %v3848 = vand.u32 %v3790, 4294901760
        %v3849 = vsub.f32 %v3790, %v3848
        %v3850 = vand.u32 %v3849, 4294901760
        %v3851 = vsub.f32 %v3849, %v3850
        %v3852 = vand.u32 %v3851, 4294901760
        %3853 = vmatpush.msra.mxu0 %v3852
        %v3854 = vand.u32 %v1250, 4294901760
        %3855 = vmatmul.f32.gmra.mxu0 %v3854
        %v3856 = vpop.f32.mrf.mxu0
        %v3857 = vadd.f32 %v3815, %v3856
        %v3858 = vand.u32 %v1253, 4294901760
        %3859 = vmatmul.f32.gmra.mxu0 %v3858
        %v3860 = vpop.f32.mrf.mxu0
        %v3861 = vadd.f32 %v3823, %v3860
        %v3862 = vand.u32 %v1256, 4294901760
        %3863 = vmatmul.f32.gmra.mxu0 %v3862
        %v3864 = vpop.f32.mrf.mxu0
        %v3865 = vadd.f32 %v3831, %v3864
        %3866 = vdwg.mxu0
        %3867 = vmatpush.msra.mxu0 0.0
        %3868 = vmatpush.msra.mxu0 0.0
        %3869 = vmatpush.msra.mxu0 0.0
        %3870 = vmatpush.msra.mxu0 0.0
        %3871 = vmatpush.msra.mxu0 0.0
        %3872 = vmatpush.msra.mxu0 0.0
        %3873 = vmatpush.msra.mxu0 0.0
        %3874 = vmatpush.msra.mxu0 0.0
        %3875 = vmatpush.msra.mxu0 0.0
        %3876 = vmatpush.msra.mxu0 0.0
        %3877 = vmatpush.msra.mxu0 0.0
        %3878 = vmatpush.msra.mxu0 0.0
        %3879 = vmatpush.msra.mxu0 0.0
        %3880 = vmatpush.msra.mxu0 0.0
        %3881 = vmatpush.msra.mxu0 0.0
        %v3882 = vand.u32 %v3790, 4294901760
        %v3883 = vsub.f32 %v3790, %v3882
        %3884 = vmatpush.msra.mxu0 %v3883
        %v3885 = vand.u32 %v1250, 4294901760
        %v3886 = vsub.f32 %v1250, %v3885
        %3887 = vmatmul.f32.gmra.mxu0 %v3886
        %v3888 = vpop.f32.mrf.mxu0
        %v3889 = vadd.f32 %v3857, %v3888
        %v3890 = vand.u32 %v1253, 4294901760
        %v3891 = vsub.f32 %v1253, %v3890
        %3892 = vmatmul.f32.gmra.mxu0 %v3891
        %v3893 = vpop.f32.mrf.mxu0
        %v3894 = vadd.f32 %v3861, %v3893
        %v3895 = vand.u32 %v1256, 4294901760
        %v3896 = vsub.f32 %v1256, %v3895
        %3897 = vmatmul.f32.gmra.mxu0 %v3896
        %v3898 = vpop.f32.mrf.mxu0
        %v3899 = vadd.f32 %v3865, %v3898
        %3900 = vdwg.mxu0
        %3901 = vmatpush.msra.mxu0 0.0
        %3902 = vmatpush.msra.mxu0 0.0
        %3903 = vmatpush.msra.mxu0 0.0
        %3904 = vmatpush.msra.mxu0 0.0
        %3905 = vmatpush.msra.mxu0 0.0
        %3906 = vmatpush.msra.mxu0 0.0
        %3907 = vmatpush.msra.mxu0 0.0
        %3908 = vmatpush.msra.mxu0 0.0
        %3909 = vmatpush.msra.mxu0 0.0
        %3910 = vmatpush.msra.mxu0 0.0
        %3911 = vmatpush.msra.mxu0 0.0
        %3912 = vmatpush.msra.mxu0 0.0
        %3913 = vmatpush.msra.mxu0 0.0
        %3914 = vmatpush.msra.mxu0 0.0
        %3915 = vmatpush.msra.mxu0 0.0
        %v3916 = vand.u32 %v3790, 4294901760
        %3917 = vmatpush.msra.mxu0 %v3916
        %v3918 = vand.u32 %v1250, 4294901760
        %v3919 = vsub.f32 %v1250, %v3918
        %v3920 = vand.u32 %v3919, 4294901760
        %3921 = vmatmul.f32.gmra.mxu0 %v3920
        %v3922 = vpop.f32.mrf.mxu0
        %v3923 = vadd.f32 %v3889, %v3922
        %v3924 = vand.u32 %v1253, 4294901760
        %v3925 = vsub.f32 %v1253, %v3924
        %v3926 = vand.u32 %v3925, 4294901760
        %3927 = vmatmul.f32.gmra.mxu0 %v3926
        %v3928 = vpop.f32.mrf.mxu0
        %v3929 = vadd.f32 %v3894, %v3928
        %v3930 = vand.u32 %v1256, 4294901760
        %v3931 = vsub.f32 %v1256, %v3930
        %v3932 = vand.u32 %v3931, 4294901760
        %3933 = vmatmul.f32.gmra.mxu0 %v3932
        %v3934 = vpop.f32.mrf.mxu0
        %v3935 = vadd.f32 %v3899, %v3934
        %3936 = vdwg.mxu0
        %3937 = vmatpush.msra.mxu0 0.0
        %3938 = vmatpush.msra.mxu0 0.0
        %3939 = vmatpush.msra.mxu0 0.0
        %3940 = vmatpush.msra.mxu0 0.0
        %3941 = vmatpush.msra.mxu0 0.0
        %3942 = vmatpush.msra.mxu0 0.0
        %3943 = vmatpush.msra.mxu0 0.0
        %3944 = vmatpush.msra.mxu0 0.0
        %3945 = vmatpush.msra.mxu0 0.0
        %3946 = vmatpush.msra.mxu0 0.0
        %3947 = vmatpush.msra.mxu0 0.0
        %3948 = vmatpush.msra.mxu0 0.0
        %3949 = vmatpush.msra.mxu0 0.0
        %3950 = vmatpush.msra.mxu0 0.0
        %3951 = vmatpush.msra.mxu0 0.0
        %v3952 = vand.u32 %v3790, 4294901760
        %v3953 = vsub.f32 %v3790, %v3952
        %v3954 = vand.u32 %v3953, 4294901760
        %3955 = vmatpush.msra.mxu0 %v3954
        %v3956 = vand.u32 %v1250, 4294901760
        %3957 = vmatmul.f32.gmra.mxu0 %v3956
        %v3958 = vpop.f32.mrf.mxu0
        %v3959 = vadd.f32 %v3923, %v3958
        %v3960 = vand.u32 %v1253, 4294901760
        %3961 = vmatmul.f32.gmra.mxu0 %v3960
        %v3962 = vpop.f32.mrf.mxu0
        %v3963 = vadd.f32 %v3929, %v3962
        %v3964 = vand.u32 %v1256, 4294901760
        %3965 = vmatmul.f32.gmra.mxu0 %v3964
        %v3966 = vpop.f32.mrf.mxu0
        %v3967 = vadd.f32 %v3935, %v3966
        %3968 = vdwg.mxu0
        %3969 = vmatpush.msra.mxu0 0.0
        %3970 = vmatpush.msra.mxu0 0.0
        %3971 = vmatpush.msra.mxu0 0.0
        %3972 = vmatpush.msra.mxu0 0.0
        %3973 = vmatpush.msra.mxu0 0.0
        %3974 = vmatpush.msra.mxu0 0.0
        %3975 = vmatpush.msra.mxu0 0.0
        %3976 = vmatpush.msra.mxu0 0.0
        %3977 = vmatpush.msra.mxu0 0.0
        %3978 = vmatpush.msra.mxu0 0.0
        %3979 = vmatpush.msra.mxu0 0.0
        %3980 = vmatpush.msra.mxu0 0.0
        %3981 = vmatpush.msra.mxu0 0.0
        %3982 = vmatpush.msra.mxu0 0.0
        %3983 = vmatpush.msra.mxu0 0.0
        %v3984 = vand.u32 %v3790, 4294901760
        %3985 = vmatpush.msra.mxu0 %v3984
        %v3986 = vand.u32 %v1250, 4294901760
        %3987 = vmatmul.f32.gmra.mxu0 %v3986
        %v3988 = vpop.f32.mrf.mxu0
        %v3989 = vadd.f32 %v3959, %v3988
        %v3990 = vand.u32 %v1253, 4294901760
        %3991 = vmatmul.f32.gmra.mxu0 %v3990
        %v3992 = vpop.f32.mrf.mxu0
        %v3993 = vadd.f32 %v3963, %v3992
        %v3994 = vand.u32 %v1256, 4294901760
        %3995 = vmatmul.f32.gmra.mxu0 %v3994
        %v3996 = vpop.f32.mrf.mxu0
        %v3997 = vadd.f32 %v3967, %v3996
        %3998 = vdwg.mxu0
        %v3999 = vmax.f32 %v3989, 0.0
        %v4000 = vmax.f32 %v3993, 0.0
        %v4001 = vmax.f32 %v3997, 0.0
        %4002 = vmatpush.msra.mxu0 0.0
        %4003 = vmatpush.msra.mxu0 0.0
        %4004 = vmatpush.msra.mxu0 0.0
        %4005 = vmatpush.msra.mxu0 0.0
        %4006 = vmatpush.msra.mxu0 0.0
        %4007 = vmatpush.msra.mxu0 0.0
        %4008 = vmatpush.msra.mxu0 0.0
        %4009 = vmatpush.msra.mxu0 0.0
        %4010 = vmatpush.msra.mxu0 0.0
        %4011 = vmatpush.msra.mxu0 0.0
        %4012 = vmatpush.msra.mxu0 0.0
        %4013 = vmatpush.msra.mxu0 0.0
        %4014 = vmatpush.msra.mxu0 0.0
        %v4015 = vand.u32 %v4001, 4294901760
        %4016 = vmatpush.msra.mxu0 %v4015
        %v4017 = vand.u32 %v4000, 4294901760
        %4018 = vmatpush.msra.mxu0 %v4017
        %v4019 = vand.u32 %v3999, 4294901760
        %4020 = vmatpush.msra.mxu0 %v4019
        %v4021 = vand.u32 %v1520, 4294901760
        %v4022 = vsub.f32 %v1520, %v4021
        %v4023 = vand.u32 %v4022, 4294901760
        %v4024 = vsub.f32 %v4022, %v4023
        %v4025 = vand.u32 %v4024, 4294901760
        %4026 = vmatmul.f32.gmra.mxu0 %v4025
        %v4027 = vpop.f32.mrf.mxu0
        %v4028 = vadd.f32 %v1486, %v4027
        %v4029 = vand.u32 %v1523, 4294901760
        %v4030 = vsub.f32 %v1523, %v4029
        %v4031 = vand.u32 %v4030, 4294901760
        %v4032 = vsub.f32 %v4030, %v4031
        %v4033 = vand.u32 %v4032, 4294901760
        %4034 = vmatmul.f32.gmra.mxu0 %v4033
        %v4035 = vpop.f32.mrf.mxu0
        %v4036 = vadd.f32 %v1491, %v4035
        %v4037 = vand.u32 %v1526, 4294901760
        %v4038 = vsub.f32 %v1526, %v4037
        %v4039 = vand.u32 %v4038, 4294901760
        %v4040 = vsub.f32 %v4038, %v4039
        %v4041 = vand.u32 %v4040, 4294901760
        %4042 = vmatmul.f32.gmra.mxu0 %v4041
        %v4043 = vpop.f32.mrf.mxu0
        %v4044 = vadd.f32 %v1496, %v4043
        %v4045 = vand.u32 %v1529, 4294901760
        %v4046 = vsub.f32 %v1529, %v4045
        %v4047 = vand.u32 %v4046, 4294901760
        %v4048 = vsub.f32 %v4046, %v4047
        %v4049 = vand.u32 %v4048, 4294901760
        %4050 = vmatmul.f32.gmra.mxu0 %v4049
        %v4051 = vpop.f32.mrf.mxu0
        %v4052 = vadd.f32 %v1501, %v4051
        %v4053 = vand.u32 %v1532, 4294901760
        %v4054 = vsub.f32 %v1532, %v4053
        %v4055 = vand.u32 %v4054, 4294901760
        %v4056 = vsub.f32 %v4054, %v4055
        %v4057 = vand.u32 %v4056, 4294901760
        %4058 = vmatmul.f32.gmra.mxu0 %v4057
        %v4059 = vpop.f32.mrf.mxu0
        %v4060 = vadd.f32 %v1506, %v4059
        %v4061 = vand.u32 %v1535, 4294901760
        %v4062 = vsub.f32 %v1535, %v4061
        %v4063 = vand.u32 %v4062, 4294901760
        %v4064 = vsub.f32 %v4062, %v4063
        %v4065 = vand.u32 %v4064, 4294901760
        %4066 = vmatmul.f32.gmra.mxu0 %v4065
        %v4067 = vpop.f32.mrf.mxu0
        %v4068 = vadd.f32 %v1511, %v4067
        %v4069 = vand.u32 %v1538, 4294901760
        %v4070 = vsub.f32 %v1538, %v4069
        %v4071 = vand.u32 %v4070, 4294901760
        %v4072 = vsub.f32 %v4070, %v4071
        %v4073 = vand.u32 %v4072, 4294901760
        %4074 = vmatmul.f32.gmra.mxu0 %v4073
        %v4075 = vpop.f32.mrf.mxu0
        %v4076 = vadd.f32 %v1516, %v4075
        %4077 = vdwg.mxu0
        %4078 = vmatpush.msra.mxu0 0.0
        %4079 = vmatpush.msra.mxu0 0.0
        %4080 = vmatpush.msra.mxu0 0.0
        %4081 = vmatpush.msra.mxu0 0.0
        %4082 = vmatpush.msra.mxu0 0.0
        %4083 = vmatpush.msra.mxu0 0.0
        %4084 = vmatpush.msra.mxu0 0.0
        %4085 = vmatpush.msra.mxu0 0.0
        %4086 = vmatpush.msra.mxu0 0.0
        %4087 = vmatpush.msra.mxu0 0.0
        %4088 = vmatpush.msra.mxu0 0.0
        %4089 = vmatpush.msra.mxu0 0.0
        %4090 = vmatpush.msra.mxu0 0.0
        %v4091 = vand.u32 %v4001, 4294901760
        %v4092 = vsub.f32 %v4001, %v4091
        %v4093 = vand.u32 %v4092, 4294901760
        %v4094 = vsub.f32 %v4092, %v4093
        %v4095 = vand.u32 %v4094, 4294901760
        %4096 = vmatpush.msra.mxu0 %v4095
        %v4097 = vand.u32 %v4000, 4294901760
        %v4098 = vsub.f32 %v4000, %v4097
        %v4099 = vand.u32 %v4098, 4294901760
        %v4100 = vsub.f32 %v4098, %v4099
        %v4101 = vand.u32 %v4100, 4294901760
        %4102 = vmatpush.msra.mxu0 %v4101
        %v4103 = vand.u32 %v3999, 4294901760
        %v4104 = vsub.f32 %v3999, %v4103
        %v4105 = vand.u32 %v4104, 4294901760
        %v4106 = vsub.f32 %v4104, %v4105
        %v4107 = vand.u32 %v4106, 4294901760
        %4108 = vmatpush.msra.mxu0 %v4107
        %v4109 = vand.u32 %v1520, 4294901760
        %4110 = vmatmul.f32.gmra.mxu0 %v4109
        %v4111 = vpop.f32.mrf.mxu0
        %v4112 = vadd.f32 %v4028, %v4111
        %v4113 = vand.u32 %v1523, 4294901760
        %4114 = vmatmul.f32.gmra.mxu0 %v4113
        %v4115 = vpop.f32.mrf.mxu0
        %v4116 = vadd.f32 %v4036, %v4115
        %v4117 = vand.u32 %v1526, 4294901760
        %4118 = vmatmul.f32.gmra.mxu0 %v4117
        %v4119 = vpop.f32.mrf.mxu0
        %v4120 = vadd.f32 %v4044, %v4119
        %v4121 = vand.u32 %v1529, 4294901760
        %4122 = vmatmul.f32.gmra.mxu0 %v4121
        %v4123 = vpop.f32.mrf.mxu0
        %v4124 = vadd.f32 %v4052, %v4123
        %v4125 = vand.u32 %v1532, 4294901760
        %4126 = vmatmul.f32.gmra.mxu0 %v4125
        %v4127 = vpop.f32.mrf.mxu0
        %v4128 = vadd.f32 %v4060, %v4127
        %v4129 = vand.u32 %v1535, 4294901760
        %4130 = vmatmul.f32.gmra.mxu0 %v4129
        %v4131 = vpop.f32.mrf.mxu0
        %v4132 = vadd.f32 %v4068, %v4131
        %v4133 = vand.u32 %v1538, 4294901760
        %4134 = vmatmul.f32.gmra.mxu0 %v4133
        %v4135 = vpop.f32.mrf.mxu0
        %v4136 = vadd.f32 %v4076, %v4135
        %4137 = vdwg.mxu0
        %4138 = vmatpush.msra.mxu0 0.0
        %4139 = vmatpush.msra.mxu0 0.0
        %4140 = vmatpush.msra.mxu0 0.0
        %4141 = vmatpush.msra.mxu0 0.0
        %4142 = vmatpush.msra.mxu0 0.0
        %4143 = vmatpush.msra.mxu0 0.0
        %4144 = vmatpush.msra.mxu0 0.0
        %4145 = vmatpush.msra.mxu0 0.0
        %4146 = vmatpush.msra.mxu0 0.0
        %4147 = vmatpush.msra.mxu0 0.0
        %4148 = vmatpush.msra.mxu0 0.0
        %4149 = vmatpush.msra.mxu0 0.0
        %4150 = vmatpush.msra.mxu0 0.0
        %v4151 = vand.u32 %v4001, 4294901760
        %v4152 = vsub.f32 %v4001, %v4151
        %4153 = vmatpush.msra.mxu0 %v4152
        %v4154 = vand.u32 %v4000, 4294901760
        %v4155 = vsub.f32 %v4000, %v4154
        %4156 = vmatpush.msra.mxu0 %v4155
        %v4157 = vand.u32 %v3999, 4294901760
        %v4158 = vsub.f32 %v3999, %v4157
        %4159 = vmatpush.msra.mxu0 %v4158
        %v4160 = vand.u32 %v1520, 4294901760
        %v4161 = vsub.f32 %v1520, %v4160
        %4162 = vmatmul.f32.gmra.mxu0 %v4161
        %v4163 = vpop.f32.mrf.mxu0
        %v4164 = vadd.f32 %v4112, %v4163
        %v4165 = vand.u32 %v1523, 4294901760
        %v4166 = vsub.f32 %v1523, %v4165
        %4167 = vmatmul.f32.gmra.mxu0 %v4166
        %v4168 = vpop.f32.mrf.mxu0
        %v4169 = vadd.f32 %v4116, %v4168
        %v4170 = vand.u32 %v1526, 4294901760
        %v4171 = vsub.f32 %v1526, %v4170
        %4172 = vmatmul.f32.gmra.mxu0 %v4171
        %v4173 = vpop.f32.mrf.mxu0
        %v4174 = vadd.f32 %v4120, %v4173
        %v4175 = vand.u32 %v1529, 4294901760
        %v4176 = vsub.f32 %v1529, %v4175
        %4177 = vmatmul.f32.gmra.mxu0 %v4176
        %v4178 = vpop.f32.mrf.mxu0
        %v4179 = vadd.f32 %v4124, %v4178
        %v4180 = vand.u32 %v1532, 4294901760
        %v4181 = vsub.f32 %v1532, %v4180
        %4182 = vmatmul.f32.gmra.mxu0 %v4181
        %v4183 = vpop.f32.mrf.mxu0
        %v4184 = vadd.f32 %v4128, %v4183
        %v4185 = vand.u32 %v1535, 4294901760
        %v4186 = vsub.f32 %v1535, %v4185
        %4187 = vmatmul.f32.gmra.mxu0 %v4186
        %v4188 = vpop.f32.mrf.mxu0
        %v4189 = vadd.f32 %v4132, %v4188
        %v4190 = vand.u32 %v1538, 4294901760
        %v4191 = vsub.f32 %v1538, %v4190
        %4192 = vmatmul.f32.gmra.mxu0 %v4191
        %v4193 = vpop.f32.mrf.mxu0
        %v4194 = vadd.f32 %v4136, %v4193
        %4195 = vdwg.mxu0
        %4196 = vmatpush.msra.mxu0 0.0
        %4197 = vmatpush.msra.mxu0 0.0
        %4198 = vmatpush.msra.mxu0 0.0
        %4199 = vmatpush.msra.mxu0 0.0
        %4200 = vmatpush.msra.mxu0 0.0
        %4201 = vmatpush.msra.mxu0 0.0
        %4202 = vmatpush.msra.mxu0 0.0
        %4203 = vmatpush.msra.mxu0 0.0
        %4204 = vmatpush.msra.mxu0 0.0
        %4205 = vmatpush.msra.mxu0 0.0
        %4206 = vmatpush.msra.mxu0 0.0
        %4207 = vmatpush.msra.mxu0 0.0
        %4208 = vmatpush.msra.mxu0 0.0
        %v4209 = vand.u32 %v4001, 4294901760
        %4210 = vmatpush.msra.mxu0 %v4209
        %v4211 = vand.u32 %v4000, 4294901760
        %4212 = vmatpush.msra.mxu0 %v4211
        %v4213 = vand.u32 %v3999, 4294901760
        %4214 = vmatpush.msra.mxu0 %v4213
        %v4215 = vand.u32 %v1520, 4294901760
        %v4216 = vsub.f32 %v1520, %v4215
        %v4217 = vand.u32 %v4216, 4294901760
        %4218 = vmatmul.f32.gmra.mxu0 %v4217
        %v4219 = vpop.f32.mrf.mxu0
        %v4220 = vadd.f32 %v4164, %v4219
        %v4221 = vand.u32 %v1523, 4294901760
        %v4222 = vsub.f32 %v1523, %v4221
        %v4223 = vand.u32 %v4222, 4294901760
        %4224 = vmatmul.f32.gmra.mxu0 %v4223
        %v4225 = vpop.f32.mrf.mxu0
        %v4226 = vadd.f32 %v4169, %v4225
        %v4227 = vand.u32 %v1526, 4294901760
        %v4228 = vsub.f32 %v1526, %v4227
        %v4229 = vand.u32 %v4228, 4294901760
        %4230 = vmatmul.f32.gmra.mxu0 %v4229
        %v4231 = vpop.f32.mrf.mxu0
        %v4232 = vadd.f32 %v4174, %v4231
        %v4233 = vand.u32 %v1529, 4294901760
        %v4234 = vsub.f32 %v1529, %v4233
        %v4235 = vand.u32 %v4234, 4294901760
        %4236 = vmatmul.f32.gmra.mxu0 %v4235
        %v4237 = vpop.f32.mrf.mxu0
        %v4238 = vadd.f32 %v4179, %v4237
        %v4239 = vand.u32 %v1532, 4294901760
        %v4240 = vsub.f32 %v1532, %v4239
        %v4241 = vand.u32 %v4240, 4294901760
        %4242 = vmatmul.f32.gmra.mxu0 %v4241
        %v4243 = vpop.f32.mrf.mxu0
        %v4244 = vadd.f32 %v4184, %v4243
        %v4245 = vand.u32 %v1535, 4294901760
        %v4246 = vsub.f32 %v1535, %v4245
        %v4247 = vand.u32 %v4246, 4294901760
        %4248 = vmatmul.f32.gmra.mxu0 %v4247
        %v4249 = vpop.f32.mrf.mxu0
        %v4250 = vadd.f32 %v4189, %v4249
        %v4251 = vand.u32 %v1538, 4294901760
        %v4252 = vsub.f32 %v1538, %v4251
        %v4253 = vand.u32 %v4252, 4294901760
        %4254 = vmatmul.f32.gmra.mxu0 %v4253
        %v4255 = vpop.f32.mrf.mxu0
        %v4256 = vadd.f32 %v4194, %v4255
        %4257 = vdwg.mxu0
        %4258 = vmatpush.msra.mxu0 0.0
        %4259 = vmatpush.msra.mxu0 0.0
        %4260 = vmatpush.msra.mxu0 0.0
        %4261 = vmatpush.msra.mxu0 0.0
        %4262 = vmatpush.msra.mxu0 0.0
        %4263 = vmatpush.msra.mxu0 0.0
        %4264 = vmatpush.msra.mxu0 0.0
        %4265 = vmatpush.msra.mxu0 0.0
        %4266 = vmatpush.msra.mxu0 0.0
        %4267 = vmatpush.msra.mxu0 0.0
        %4268 = vmatpush.msra.mxu0 0.0
        %4269 = vmatpush.msra.mxu0 0.0
        %4270 = vmatpush.msra.mxu0 0.0
        %v4271 = vand.u32 %v4001, 4294901760
        %v4272 = vsub.f32 %v4001, %v4271
        %v4273 = vand.u32 %v4272, 4294901760
        %4274 = vmatpush.msra.mxu0 %v4273
        %v4275 = vand.u32 %v4000, 4294901760
        %v4276 = vsub.f32 %v4000, %v4275
        %v4277 = vand.u32 %v4276, 4294901760
        %4278 = vmatpush.msra.mxu0 %v4277
        %v4279 = vand.u32 %v3999, 4294901760
        %v4280 = vsub.f32 %v3999, %v4279
        %v4281 = vand.u32 %v4280, 4294901760
        %4282 = vmatpush.msra.mxu0 %v4281
        %v4283 = vand.u32 %v1520, 4294901760
        %4284 = vmatmul.f32.gmra.mxu0 %v4283
        %v4285 = vpop.f32.mrf.mxu0
        %v4286 = vadd.f32 %v4220, %v4285
        %v4287 = vand.u32 %v1523, 4294901760
        %4288 = vmatmul.f32.gmra.mxu0 %v4287
        %v4289 = vpop.f32.mrf.mxu0
        %v4290 = vadd.f32 %v4226, %v4289
        %v4291 = vand.u32 %v1526, 4294901760
        %4292 = vmatmul.f32.gmra.mxu0 %v4291
        %v4293 = vpop.f32.mrf.mxu0
        %v4294 = vadd.f32 %v4232, %v4293
        %v4295 = vand.u32 %v1529, 4294901760
        %4296 = vmatmul.f32.gmra.mxu0 %v4295
        %v4297 = vpop.f32.mrf.mxu0
        %v4298 = vadd.f32 %v4238, %v4297
        %v4299 = vand.u32 %v1532, 4294901760
        %4300 = vmatmul.f32.gmra.mxu0 %v4299
        %v4301 = vpop.f32.mrf.mxu0
        %v4302 = vadd.f32 %v4244, %v4301
        %v4303 = vand.u32 %v1535, 4294901760
        %4304 = vmatmul.f32.gmra.mxu0 %v4303
        %v4305 = vpop.f32.mrf.mxu0
        %v4306 = vadd.f32 %v4250, %v4305
        %v4307 = vand.u32 %v1538, 4294901760
        %4308 = vmatmul.f32.gmra.mxu0 %v4307
        %v4309 = vpop.f32.mrf.mxu0
        %v4310 = vadd.f32 %v4256, %v4309
        %4311 = vdwg.mxu0
        %4312 = vmatpush.msra.mxu0 0.0
        %4313 = vmatpush.msra.mxu0 0.0
        %4314 = vmatpush.msra.mxu0 0.0
        %4315 = vmatpush.msra.mxu0 0.0
        %4316 = vmatpush.msra.mxu0 0.0
        %4317 = vmatpush.msra.mxu0 0.0
        %4318 = vmatpush.msra.mxu0 0.0
        %4319 = vmatpush.msra.mxu0 0.0
        %4320 = vmatpush.msra.mxu0 0.0
        %4321 = vmatpush.msra.mxu0 0.0
        %4322 = vmatpush.msra.mxu0 0.0
        %4323 = vmatpush.msra.mxu0 0.0
        %4324 = vmatpush.msra.mxu0 0.0
        %v4325 = vand.u32 %v4001, 4294901760
        %4326 = vmatpush.msra.mxu0 %v4325
        %v4327 = vand.u32 %v4000, 4294901760
        %4328 = vmatpush.msra.mxu0 %v4327
        %v4329 = vand.u32 %v3999, 4294901760
        %4330 = vmatpush.msra.mxu0 %v4329
        %v4331 = vand.u32 %v1520, 4294901760
        %4332 = vmatmul.f32.gmra.mxu0 %v4331
        %v4333 = vpop.f32.mrf.mxu0
        %v4334 = vadd.f32 %v4286, %v4333
        %v4335 = vand.u32 %v1523, 4294901760
        %4336 = vmatmul.f32.gmra.mxu0 %v4335
        %v4337 = vpop.f32.mrf.mxu0
        %v4338 = vadd.f32 %v4290, %v4337
        %v4339 = vand.u32 %v1526, 4294901760
        %4340 = vmatmul.f32.gmra.mxu0 %v4339
        %v4341 = vpop.f32.mrf.mxu0
        %v4342 = vadd.f32 %v4294, %v4341
        %v4343 = vand.u32 %v1529, 4294901760
        %4344 = vmatmul.f32.gmra.mxu0 %v4343
        %v4345 = vpop.f32.mrf.mxu0
        %v4346 = vadd.f32 %v4298, %v4345
        %v4347 = vand.u32 %v1532, 4294901760
        %4348 = vmatmul.f32.gmra.mxu0 %v4347
        %v4349 = vpop.f32.mrf.mxu0
        %v4350 = vadd.f32 %v4302, %v4349
        %v4351 = vand.u32 %v1535, 4294901760
        %4352 = vmatmul.f32.gmra.mxu0 %v4351
        %v4353 = vpop.f32.mrf.mxu0
        %v4354 = vadd.f32 %v4306, %v4353
        %v4355 = vand.u32 %v1538, 4294901760
        %4356 = vmatmul.f32.gmra.mxu0 %v4355
        %v4357 = vpop.f32.mrf.mxu0
        %v4358 = vadd.f32 %v4310, %v4357
        %4359 = vdwg.mxu0
        %v4360 = vmax.f32 %v4334, 0.0
        %v4361 = vmax.f32 %v4338, 0.0
        %v4362 = vmax.f32 %v4342, 0.0
        %v4363 = vmax.f32 %v4346, 0.0
        %v4364 = vmax.f32 %v4350, 0.0
        %v4365 = vmax.f32 %v4354, 0.0
        %v4366 = vmax.f32 %v4358, 0.0
        %4367 = vmatpush.msra.mxu0 0.0
        %4368 = vmatpush.msra.mxu0 0.0
        %4369 = vmatpush.msra.mxu0 0.0
        %4370 = vmatpush.msra.mxu0 0.0
        %4371 = vmatpush.msra.mxu0 0.0
        %4372 = vmatpush.msra.mxu0 0.0
        %4373 = vmatpush.msra.mxu0 0.0
        %4374 = vmatpush.msra.mxu0 0.0
        %4375 = vmatpush.msra.mxu0 0.0
        %v4376 = vand.u32 %v4366, 4294901760
        %4377 = vmatpush.msra.mxu0 %v4376
        %v4378 = vand.u32 %v4365, 4294901760
        %4379 = vmatpush.msra.mxu0 %v4378
        %v4380 = vand.u32 %v4364, 4294901760
        %4381 = vmatpush.msra.mxu0 %v4380
        %v4382 = vand.u32 %v4363, 4294901760
        %4383 = vmatpush.msra.mxu0 %v4382
        %v4384 = vand.u32 %v4362, 4294901760
        %4385 = vmatpush.msra.mxu0 %v4384
        %v4386 = vand.u32 %v4361, 4294901760
        %4387 = vmatpush.msra.mxu0 %v4386
        %v4388 = vand.u32 %v4360, 4294901760
        %4389 = vmatpush.msra.mxu0 %v4388
        %v4390 = vand.u32 %v1984, 4294901760
        %v4391 = vsub.f32 %v1984, %v4390
        %v4392 = vand.u32 %v4391, 4294901760
        %v4393 = vsub.f32 %v4391, %v4392
        %v4394 = vand.u32 %v4393, 4294901760
        %4395 = vmatmul.f32.gmra.mxu0 %v4394
        %v4396 = vpop.f32.mrf.mxu0
        %v4397 = vadd.f32 %v1930, %v4396
        %v4398 = vand.u32 %v1987, 4294901760
        %v4399 = vsub.f32 %v1987, %v4398
        %v4400 = vand.u32 %v4399, 4294901760
        %v4401 = vsub.f32 %v4399, %v4400
        %v4402 = vand.u32 %v4401, 4294901760
        %4403 = vmatmul.f32.gmra.mxu0 %v4402
        %v4404 = vpop.f32.mrf.mxu0
        %v4405 = vadd.f32 %v1935, %v4404
        %v4406 = vand.u32 %v1990, 4294901760
        %v4407 = vsub.f32 %v1990, %v4406
        %v4408 = vand.u32 %v4407, 4294901760
        %v4409 = vsub.f32 %v4407, %v4408
        %v4410 = vand.u32 %v4409, 4294901760
        %4411 = vmatmul.f32.gmra.mxu0 %v4410
        %v4412 = vpop.f32.mrf.mxu0
        %v4413 = vadd.f32 %v1940, %v4412
        %v4414 = vand.u32 %v1993, 4294901760
        %v4415 = vsub.f32 %v1993, %v4414
        %v4416 = vand.u32 %v4415, 4294901760
        %v4417 = vsub.f32 %v4415, %v4416
        %v4418 = vand.u32 %v4417, 4294901760
        %4419 = vmatmul.f32.gmra.mxu0 %v4418
        %v4420 = vpop.f32.mrf.mxu0
        %v4421 = vadd.f32 %v1945, %v4420
        %v4422 = vand.u32 %v1996, 4294901760
        %v4423 = vsub.f32 %v1996, %v4422
        %v4424 = vand.u32 %v4423, 4294901760
        %v4425 = vsub.f32 %v4423, %v4424
        %v4426 = vand.u32 %v4425, 4294901760
        %4427 = vmatmul.f32.gmra.mxu0 %v4426
        %v4428 = vpop.f32.mrf.mxu0
        %v4429 = vadd.f32 %v1950, %v4428
        %v4430 = vand.u32 %v1999, 4294901760
        %v4431 = vsub.f32 %v1999, %v4430
        %v4432 = vand.u32 %v4431, 4294901760
        %v4433 = vsub.f32 %v4431, %v4432
        %v4434 = vand.u32 %v4433, 4294901760
        %4435 = vmatmul.f32.gmra.mxu0 %v4434
        %v4436 = vpop.f32.mrf.mxu0
        %v4437 = vadd.f32 %v1955, %v4436
        %v4438 = vand.u32 %v2002, 4294901760
        %v4439 = vsub.f32 %v2002, %v4438
        %v4440 = vand.u32 %v4439, 4294901760
        %v4441 = vsub.f32 %v4439, %v4440
        %v4442 = vand.u32 %v4441, 4294901760
        %4443 = vmatmul.f32.gmra.mxu0 %v4442
        %v4444 = vpop.f32.mrf.mxu0
        %v4445 = vadd.f32 %v1960, %v4444
        %v4446 = vand.u32 %v2005, 4294901760
        %v4447 = vsub.f32 %v2005, %v4446
        %v4448 = vand.u32 %v4447, 4294901760
        %v4449 = vsub.f32 %v4447, %v4448
        %v4450 = vand.u32 %v4449, 4294901760
        %4451 = vmatmul.f32.gmra.mxu0 %v4450
        %v4452 = vpop.f32.mrf.mxu0
        %v4453 = vadd.f32 %v1965, %v4452
        %v4454 = vand.u32 %v2008, 4294901760
        %v4455 = vsub.f32 %v2008, %v4454
        %v4456 = vand.u32 %v4455, 4294901760
        %v4457 = vsub.f32 %v4455, %v4456
        %v4458 = vand.u32 %v4457, 4294901760
        %4459 = vmatmul.f32.gmra.mxu0 %v4458
        %v4460 = vpop.f32.mrf.mxu0
        %v4461 = vadd.f32 %v1970, %v4460
        %v4462 = vand.u32 %v2011, 4294901760
        %v4463 = vsub.f32 %v2011, %v4462
        %v4464 = vand.u32 %v4463, 4294901760
        %v4465 = vsub.f32 %v4463, %v4464
        %v4466 = vand.u32 %v4465, 4294901760
        %4467 = vmatmul.f32.gmra.mxu0 %v4466
        %v4468 = vpop.f32.mrf.mxu0
        %v4469 = vadd.f32 %v1975, %v4468
        %v4470 = vand.u32 %v2014, 4294901760
        %v4471 = vsub.f32 %v2014, %v4470
        %v4472 = vand.u32 %v4471, 4294901760
        %v4473 = vsub.f32 %v4471, %v4472
        %v4474 = vand.u32 %v4473, 4294901760
        %4475 = vmatmul.f32.gmra.mxu0 %v4474
        %v4476 = vpop.f32.mrf.mxu0
        %v4477 = vadd.f32 %v1980, %v4476
        %4478 = vdwg.mxu0
        %4479 = vmatpush.msra.mxu0 0.0
        %4480 = vmatpush.msra.mxu0 0.0
        %4481 = vmatpush.msra.mxu0 0.0
        %4482 = vmatpush.msra.mxu0 0.0
        %4483 = vmatpush.msra.mxu0 0.0
        %4484 = vmatpush.msra.mxu0 0.0
        %4485 = vmatpush.msra.mxu0 0.0
        %4486 = vmatpush.msra.mxu0 0.0
        %4487 = vmatpush.msra.mxu0 0.0
        %v4488 = vand.u32 %v4366, 4294901760
        %v4489 = vsub.f32 %v4366, %v4488
        %v4490 = vand.u32 %v4489, 4294901760
        %v4491 = vsub.f32 %v4489, %v4490
        %v4492 = vand.u32 %v4491, 4294901760
        %4493 = vmatpush.msra.mxu0 %v4492
        %v4494 = vand.u32 %v4365, 4294901760
        %v4495 = vsub.f32 %v4365, %v4494
        %v4496 = vand.u32 %v4495, 4294901760
        %v4497 = vsub.f32 %v4495, %v4496
        %v4498 = vand.u32 %v4497, 4294901760
        %4499 = vmatpush.msra.mxu0 %v4498
        %v4500 = vand.u32 %v4364, 4294901760
        %v4501 = vsub.f32 %v4364, %v4500
        %v4502 = vand.u32 %v4501, 4294901760
        %v4503 = vsub.f32 %v4501, %v4502
        %v4504 = vand.u32 %v4503, 4294901760
        %4505 = vmatpush.msra.mxu0 %v4504
        %v4506 = vand.u32 %v4363, 4294901760
        %v4507 = vsub.f32 %v4363, %v4506
        %v4508 = vand.u32 %v4507, 4294901760
        %v4509 = vsub.f32 %v4507, %v4508
        %v4510 = vand.u32 %v4509, 4294901760
        %4511 = vmatpush.msra.mxu0 %v4510
        %v4512 = vand.u32 %v4362, 4294901760
        %v4513 = vsub.f32 %v4362, %v4512
        %v4514 = vand.u32 %v4513, 4294901760
        %v4515 = vsub.f32 %v4513, %v4514
        %v4516 = vand.u32 %v4515, 4294901760
        %4517 = vmatpush.msra.mxu0 %v4516
        %v4518 = vand.u32 %v4361, 4294901760
        %v4519 = vsub.f32 %v4361, %v4518
        %v4520 = vand.u32 %v4519, 4294901760
        %v4521 = vsub.f32 %v4519, %v4520
        %v4522 = vand.u32 %v4521, 4294901760
        %4523 = vmatpush.msra.mxu0 %v4522
        %v4524 = vand.u32 %v4360, 4294901760
        %v4525 = vsub.f32 %v4360, %v4524
        %v4526 = vand.u32 %v4525, 4294901760
        %v4527 = vsub.f32 %v4525, %v4526
        %v4528 = vand.u32 %v4527, 4294901760
        %4529 = vmatpush.msra.mxu0 %v4528
        %v4530 = vand.u32 %v1984, 4294901760
        %4531 = vmatmul.f32.gmra.mxu0 %v4530
        %v4532 = vpop.f32.mrf.mxu0
        %v4533 = vadd.f32 %v4397, %v4532
        %v4534 = vand.u32 %v1987, 4294901760
        %4535 = vmatmul.f32.gmra.mxu0 %v4534
        %v4536 = vpop.f32.mrf.mxu0
        %v4537 = vadd.f32 %v4405, %v4536
        %v4538 = vand.u32 %v1990, 4294901760
        %4539 = vmatmul.f32.gmra.mxu0 %v4538
        %v4540 = vpop.f32.mrf.mxu0
        %v4541 = vadd.f32 %v4413, %v4540
        %v4542 = vand.u32 %v1993, 4294901760
        %4543 = vmatmul.f32.gmra.mxu0 %v4542
        %v4544 = vpop.f32.mrf.mxu0
        %v4545 = vadd.f32 %v4421, %v4544
        %v4546 = vand.u32 %v1996, 4294901760
        %4547 = vmatmul.f32.gmra.mxu0 %v4546
        %v4548 = vpop.f32.mrf.mxu0
        %v4549 = vadd.f32 %v4429, %v4548
        %v4550 = vand.u32 %v1999, 4294901760
        %4551 = vmatmul.f32.gmra.mxu0 %v4550
        %v4552 = vpop.f32.mrf.mxu0
        %v4553 = vadd.f32 %v4437, %v4552
        %v4554 = vand.u32 %v2002, 4294901760
        %4555 = vmatmul.f32.gmra.mxu0 %v4554
        %v4556 = vpop.f32.mrf.mxu0
        %v4557 = vadd.f32 %v4445, %v4556
        %v4558 = vand.u32 %v2005, 4294901760
        %4559 = vmatmul.f32.gmra.mxu0 %v4558
        %v4560 = vpop.f32.mrf.mxu0
        %v4561 = vadd.f32 %v4453, %v4560
        %v4562 = vand.u32 %v2008, 4294901760
        %4563 = vmatmul.f32.gmra.mxu0 %v4562
        %v4564 = vpop.f32.mrf.mxu0
        %v4565 = vadd.f32 %v4461, %v4564
        %v4566 = vand.u32 %v2011, 4294901760
        %4567 = vmatmul.f32.gmra.mxu0 %v4566
        %v4568 = vpop.f32.mrf.mxu0
        %v4569 = vadd.f32 %v4469, %v4568
        %v4570 = vand.u32 %v2014, 4294901760
        %4571 = vmatmul.f32.gmra.mxu0 %v4570
        %v4572 = vpop.f32.mrf.mxu0
        %v4573 = vadd.f32 %v4477, %v4572
        %4574 = vdwg.mxu0
        %4575 = vmatpush.msra.mxu0 0.0
        %4576 = vmatpush.msra.mxu0 0.0
        %4577 = vmatpush.msra.mxu0 0.0
        %4578 = vmatpush.msra.mxu0 0.0
        %4579 = vmatpush.msra.mxu0 0.0
        %4580 = vmatpush.msra.mxu0 0.0
        %4581 = vmatpush.msra.mxu0 0.0
        %4582 = vmatpush.msra.mxu0 0.0
        %4583 = vmatpush.msra.mxu0 0.0
        %v4584 = vand.u32 %v4366, 4294901760
        %v4585 = vsub.f32 %v4366, %v4584
        %4586 = vmatpush.msra.mxu0 %v4585
        %v4587 = vand.u32 %v4365, 4294901760
        %v4588 = vsub.f32 %v4365, %v4587
        %4589 = vmatpush.msra.mxu0 %v4588
        %v4590 = vand.u32 %v4364, 4294901760
        %v4591 = vsub.f32 %v4364, %v4590
        %4592 = vmatpush.msra.mxu0 %v4591
        %v4593 = vand.u32 %v4363, 4294901760
        %v4594 = vsub.f32 %v4363, %v4593
        %4595 = vmatpush.msra.mxu0 %v4594
        %v4596 = vand.u32 %v4362, 4294901760
        %v4597 = vsub.f32 %v4362, %v4596
        %4598 = vmatpush.msra.mxu0 %v4597
        %v4599 = vand.u32 %v4361, 4294901760
        %v4600 = vsub.f32 %v4361, %v4599
        %4601 = vmatpush.msra.mxu0 %v4600
        %v4602 = vand.u32 %v4360, 4294901760
        %v4603 = vsub.f32 %v4360, %v4602
        %4604 = vmatpush.msra.mxu0 %v4603
        %v4605 = vand.u32 %v1984, 4294901760
        %v4606 = vsub.f32 %v1984, %v4605
        %4607 = vmatmul.f32.gmra.mxu0 %v4606
        %v4608 = vpop.f32.mrf.mxu0
        %v4609 = vadd.f32 %v4533, %v4608
        %v4610 = vand.u32 %v1987, 4294901760
        %v4611 = vsub.f32 %v1987, %v4610
        %4612 = vmatmul.f32.gmra.mxu0 %v4611
        %v4613 = vpop.f32.mrf.mxu0
        %v4614 = vadd.f32 %v4537, %v4613
        %v4615 = vand.u32 %v1990, 4294901760
        %v4616 = vsub.f32 %v1990, %v4615
        %4617 = vmatmul.f32.gmra.mxu0 %v4616
        %v4618 = vpop.f32.mrf.mxu0
        %v4619 = vadd.f32 %v4541, %v4618
        %v4620 = vand.u32 %v1993, 4294901760
        %v4621 = vsub.f32 %v1993, %v4620
        %4622 = vmatmul.f32.gmra.mxu0 %v4621
        %v4623 = vpop.f32.mrf.mxu0
        %v4624 = vadd.f32 %v4545, %v4623
        %v4625 = vand.u32 %v1996, 4294901760
        %v4626 = vsub.f32 %v1996, %v4625
        %4627 = vmatmul.f32.gmra.mxu0 %v4626
        %v4628 = vpop.f32.mrf.mxu0
        %v4629 = vadd.f32 %v4549, %v4628
        %v4630 = vand.u32 %v1999, 4294901760
        %v4631 = vsub.f32 %v1999, %v4630
        %4632 = vmatmul.f32.gmra.mxu0 %v4631
        %v4633 = vpop.f32.mrf.mxu0
        %v4634 = vadd.f32 %v4553, %v4633
        %v4635 = vand.u32 %v2002, 4294901760
        %v4636 = vsub.f32 %v2002, %v4635
        %4637 = vmatmul.f32.gmra.mxu0 %v4636
        %v4638 = vpop.f32.mrf.mxu0
        %v4639 = vadd.f32 %v4557, %v4638
        %v4640 = vand.u32 %v2005, 4294901760
        %v4641 = vsub.f32 %v2005, %v4640
        %4642 = vmatmul.f32.gmra.mxu0 %v4641
        %v4643 = vpop.f32.mrf.mxu0
        %v4644 = vadd.f32 %v4561, %v4643
        %v4645 = vand.u32 %v2008, 4294901760
        %v4646 = vsub.f32 %v2008, %v4645
        %4647 = vmatmul.f32.gmra.mxu0 %v4646
        %v4648 = vpop.f32.mrf.mxu0
        %v4649 = vadd.f32 %v4565, %v4648
        %v4650 = vand.u32 %v2011, 4294901760
        %v4651 = vsub.f32 %v2011, %v4650
        %4652 = vmatmul.f32.gmra.mxu0 %v4651
        %v4653 = vpop.f32.mrf.mxu0
        %v4654 = vadd.f32 %v4569, %v4653
        %v4655 = vand.u32 %v2014, 4294901760
        %v4656 = vsub.f32 %v2014, %v4655
        %4657 = vmatmul.f32.gmra.mxu0 %v4656
        %v4658 = vpop.f32.mrf.mxu0
        %v4659 = vadd.f32 %v4573, %v4658
        %4660 = vdwg.mxu0
        %4661 = vmatpush.msra.mxu0 0.0
        %4662 = vmatpush.msra.mxu0 0.0
        %4663 = vmatpush.msra.mxu0 0.0
        %4664 = vmatpush.msra.mxu0 0.0
        %4665 = vmatpush.msra.mxu0 0.0
        %4666 = vmatpush.msra.mxu0 0.0
        %4667 = vmatpush.msra.mxu0 0.0
        %4668 = vmatpush.msra.mxu0 0.0
        %4669 = vmatpush.msra.mxu0 0.0
        %v4670 = vand.u32 %v4366, 4294901760
        %4671 = vmatpush.msra.mxu0 %v4670
        %v4672 = vand.u32 %v4365, 4294901760
        %4673 = vmatpush.msra.mxu0 %v4672
        %v4674 = vand.u32 %v4364, 4294901760
        %4675 = vmatpush.msra.mxu0 %v4674
        %v4676 = vand.u32 %v4363, 4294901760
        %4677 = vmatpush.msra.mxu0 %v4676
        %v4678 = vand.u32 %v4362, 4294901760
        %4679 = vmatpush.msra.mxu0 %v4678
        %v4680 = vand.u32 %v4361, 4294901760
        %4681 = vmatpush.msra.mxu0 %v4680
        %v4682 = vand.u32 %v4360, 4294901760
        %4683 = vmatpush.msra.mxu0 %v4682
        %v4684 = vand.u32 %v1984, 4294901760
        %v4685 = vsub.f32 %v1984, %v4684
        %v4686 = vand.u32 %v4685, 4294901760
        %4687 = vmatmul.f32.gmra.mxu0 %v4686
        %v4688 = vpop.f32.mrf.mxu0
        %v4689 = vadd.f32 %v4609, %v4688
        %v4690 = vand.u32 %v1987, 4294901760
        %v4691 = vsub.f32 %v1987, %v4690
        %v4692 = vand.u32 %v4691, 4294901760
        %4693 = vmatmul.f32.gmra.mxu0 %v4692
        %v4694 = vpop.f32.mrf.mxu0
        %v4695 = vadd.f32 %v4614, %v4694
        %v4696 = vand.u32 %v1990, 4294901760
        %v4697 = vsub.f32 %v1990, %v4696
        %v4698 = vand.u32 %v4697, 4294901760
        %4699 = vmatmul.f32.gmra.mxu0 %v4698
        %v4700 = vpop.f32.mrf.mxu0
        %v4701 = vadd.f32 %v4619, %v4700
        %v4702 = vand.u32 %v1993, 4294901760
        %v4703 = vsub.f32 %v1993, %v4702
        %v4704 = vand.u32 %v4703, 4294901760
        %4705 = vmatmul.f32.gmra.mxu0 %v4704
        %v4706 = vpop.f32.mrf.mxu0
        %v4707 = vadd.f32 %v4624, %v4706
        %v4708 = vand.u32 %v1996, 4294901760
        %v4709 = vsub.f32 %v1996, %v4708
        %v4710 = vand.u32 %v4709, 4294901760
        %4711 = vmatmul.f32.gmra.mxu0 %v4710
        %v4712 = vpop.f32.mrf.mxu0
        %v4713 = vadd.f32 %v4629, %v4712
        %v4714 = vand.u32 %v1999, 4294901760
        %v4715 = vsub.f32 %v1999, %v4714
        %v4716 = vand.u32 %v4715, 4294901760
        %4717 = vmatmul.f32.gmra.mxu0 %v4716
        %v4718 = vpop.f32.mrf.mxu0
        %v4719 = vadd.f32 %v4634, %v4718
        %v4720 = vand.u32 %v2002, 4294901760
        %v4721 = vsub.f32 %v2002, %v4720
        %v4722 = vand.u32 %v4721, 4294901760
        %4723 = vmatmul.f32.gmra.mxu0 %v4722
        %v4724 = vpop.f32.mrf.mxu0
        %v4725 = vadd.f32 %v4639, %v4724
        %v4726 = vand.u32 %v2005, 4294901760
        %v4727 = vsub.f32 %v2005, %v4726
        %v4728 = vand.u32 %v4727, 4294901760
        %4729 = vmatmul.f32.gmra.mxu0 %v4728
        %v4730 = vpop.f32.mrf.mxu0
        %v4731 = vadd.f32 %v4644, %v4730
        %v4732 = vand.u32 %v2008, 4294901760
        %v4733 = vsub.f32 %v2008, %v4732
        %v4734 = vand.u32 %v4733, 4294901760
        %4735 = vmatmul.f32.gmra.mxu0 %v4734
        %v4736 = vpop.f32.mrf.mxu0
        %v4737 = vadd.f32 %v4649, %v4736
        %v4738 = vand.u32 %v2011, 4294901760
        %v4739 = vsub.f32 %v2011, %v4738
        %v4740 = vand.u32 %v4739, 4294901760
        %4741 = vmatmul.f32.gmra.mxu0 %v4740
        %v4742 = vpop.f32.mrf.mxu0
        %v4743 = vadd.f32 %v4654, %v4742
        %v4744 = vand.u32 %v2014, 4294901760
        %v4745 = vsub.f32 %v2014, %v4744
        %v4746 = vand.u32 %v4745, 4294901760
        %4747 = vmatmul.f32.gmra.mxu0 %v4746
        %v4748 = vpop.f32.mrf.mxu0
        %v4749 = vadd.f32 %v4659, %v4748
        %4750 = vdwg.mxu0
        %4751 = vmatpush.msra.mxu0 0.0
        %4752 = vmatpush.msra.mxu0 0.0
        %4753 = vmatpush.msra.mxu0 0.0
        %4754 = vmatpush.msra.mxu0 0.0
        %4755 = vmatpush.msra.mxu0 0.0
        %4756 = vmatpush.msra.mxu0 0.0
        %4757 = vmatpush.msra.mxu0 0.0
        %4758 = vmatpush.msra.mxu0 0.0
        %4759 = vmatpush.msra.mxu0 0.0
        %v4760 = vand.u32 %v4366, 4294901760
        %v4761 = vsub.f32 %v4366, %v4760
        %v4762 = vand.u32 %v4761, 4294901760
        %4763 = vmatpush.msra.mxu0 %v4762
        %v4764 = vand.u32 %v4365, 4294901760
        %v4765 = vsub.f32 %v4365, %v4764
        %v4766 = vand.u32 %v4765, 4294901760
        %4767 = vmatpush.msra.mxu0 %v4766
        %v4768 = vand.u32 %v4364, 4294901760
        %v4769 = vsub.f32 %v4364, %v4768
        %v4770 = vand.u32 %v4769, 4294901760
        %4771 = vmatpush.msra.mxu0 %v4770
        %v4772 = vand.u32 %v4363, 4294901760
        %v4773 = vsub.f32 %v4363, %v4772
        %v4774 = vand.u32 %v4773, 4294901760
        %4775 = vmatpush.msra.mxu0 %v4774
        %v4776 = vand.u32 %v4362, 4294901760
        %v4777 = vsub.f32 %v4362, %v4776
        %v4778 = vand.u32 %v4777, 4294901760
        %4779 = vmatpush.msra.mxu0 %v4778
        %v4780 = vand.u32 %v4361, 4294901760
        %v4781 = vsub.f32 %v4361, %v4780
        %v4782 = vand.u32 %v4781, 4294901760
        %4783 = vmatpush.msra.mxu0 %v4782
        %v4784 = vand.u32 %v4360, 4294901760
        %v4785 = vsub.f32 %v4360, %v4784
        %v4786 = vand.u32 %v4785, 4294901760
        %4787 = vmatpush.msra.mxu0 %v4786
        %v4788 = vand.u32 %v1984, 4294901760
        %4789 = vmatmul.f32.gmra.mxu0 %v4788
        %v4790 = vpop.f32.mrf.mxu0
        %v4791 = vadd.f32 %v4689, %v4790
        %v4792 = vand.u32 %v1987, 4294901760
        %4793 = vmatmul.f32.gmra.mxu0 %v4792
        %v4794 = vpop.f32.mrf.mxu0
        %v4795 = vadd.f32 %v4695, %v4794
        %v4796 = vand.u32 %v1990, 4294901760
        %4797 = vmatmul.f32.gmra.mxu0 %v4796
        %v4798 = vpop.f32.mrf.mxu0
        %v4799 = vadd.f32 %v4701, %v4798
        %v4800 = vand.u32 %v1993, 4294901760
        %4801 = vmatmul.f32.gmra.mxu0 %v4800
        %v4802 = vpop.f32.mrf.mxu0
        %v4803 = vadd.f32 %v4707, %v4802
        %v4804 = vand.u32 %v1996, 4294901760
        %4805 = vmatmul.f32.gmra.mxu0 %v4804
        %v4806 = vpop.f32.mrf.mxu0
        %v4807 = vadd.f32 %v4713, %v4806
        %v4808 = vand.u32 %v1999, 4294901760
        %4809 = vmatmul.f32.gmra.mxu0 %v4808
        %v4810 = vpop.f32.mrf.mxu0
        %v4811 = vadd.f32 %v4719, %v4810
        %v4812 = vand.u32 %v2002, 4294901760
        %4813 = vmatmul.f32.gmra.mxu0 %v4812
        %v4814 = vpop.f32.mrf.mxu0
        %v4815 = vadd.f32 %v4725, %v4814
        %v4816 = vand.u32 %v2005, 4294901760
        %4817 = vmatmul.f32.gmra.mxu0 %v4816
        %v4818 = vpop.f32.mrf.mxu0
        %v4819 = vadd.f32 %v4731, %v4818
        %v4820 = vand.u32 %v2008, 4294901760
        %4821 = vmatmul.f32.gmra.mxu0 %v4820
        %v4822 = vpop.f32.mrf.mxu0
        %v4823 = vadd.f32 %v4737, %v4822
        %v4824 = vand.u32 %v2011, 4294901760
        %4825 = vmatmul.f32.gmra.mxu0 %v4824
        %v4826 = vpop.f32.mrf.mxu0
        %v4827 = vadd.f32 %v4743, %v4826
        %v4828 = vand.u32 %v2014, 4294901760
        %4829 = vmatmul.f32.gmra.mxu0 %v4828
        %v4830 = vpop.f32.mrf.mxu0
        %v4831 = vadd.f32 %v4749, %v4830
        %4832 = vdwg.mxu0
        %4833 = vmatpush.msra.mxu0 0.0
        %4834 = vmatpush.msra.mxu0 0.0
        %4835 = vmatpush.msra.mxu0 0.0
        %4836 = vmatpush.msra.mxu0 0.0
        %4837 = vmatpush.msra.mxu0 0.0
        %4838 = vmatpush.msra.mxu0 0.0
        %4839 = vmatpush.msra.mxu0 0.0
        %4840 = vmatpush.msra.mxu0 0.0
        %4841 = vmatpush.msra.mxu0 0.0
        %v4842 = vand.u32 %v4366, 4294901760
        %4843 = vmatpush.msra.mxu0 %v4842
        %v4844 = vand.u32 %v4365, 4294901760
        %4845 = vmatpush.msra.mxu0 %v4844
        %v4846 = vand.u32 %v4364, 4294901760
        %4847 = vmatpush.msra.mxu0 %v4846
        %v4848 = vand.u32 %v4363, 4294901760
        %4849 = vmatpush.msra.mxu0 %v4848
        %v4850 = vand.u32 %v4362, 4294901760
        %4851 = vmatpush.msra.mxu0 %v4850
        %v4852 = vand.u32 %v4361, 4294901760
        %4853 = vmatpush.msra.mxu0 %v4852
        %v4854 = vand.u32 %v4360, 4294901760
        %4855 = vmatpush.msra.mxu0 %v4854
        %v4856 = vand.u32 %v1984, 4294901760
        %4857 = vmatmul.f32.gmra.mxu0 %v4856
        %v4858 = vpop.f32.mrf.mxu0
        %v4859 = vadd.f32 %v4791, %v4858
        %v4860 = vand.u32 %v1987, 4294901760
        %4861 = vmatmul.f32.gmra.mxu0 %v4860
        %v4862 = vpop.f32.mrf.mxu0
        %v4863 = vadd.f32 %v4795, %v4862
        %v4864 = vand.u32 %v1990, 4294901760
        %4865 = vmatmul.f32.gmra.mxu0 %v4864
        %v4866 = vpop.f32.mrf.mxu0
        %v4867 = vadd.f32 %v4799, %v4866
        %v4868 = vand.u32 %v1993, 4294901760
        %4869 = vmatmul.f32.gmra.mxu0 %v4868
        %v4870 = vpop.f32.mrf.mxu0
        %v4871 = vadd.f32 %v4803, %v4870
        %v4872 = vand.u32 %v1996, 4294901760
        %4873 = vmatmul.f32.gmra.mxu0 %v4872
        %v4874 = vpop.f32.mrf.mxu0
        %v4875 = vadd.f32 %v4807, %v4874
        %v4876 = vand.u32 %v1999, 4294901760
        %4877 = vmatmul.f32.gmra.mxu0 %v4876
        %v4878 = vpop.f32.mrf.mxu0
        %v4879 = vadd.f32 %v4811, %v4878
        %v4880 = vand.u32 %v2002, 4294901760
        %4881 = vmatmul.f32.gmra.mxu0 %v4880
        %v4882 = vpop.f32.mrf.mxu0
        %v4883 = vadd.f32 %v4815, %v4882
        %v4884 = vand.u32 %v2005, 4294901760
        %4885 = vmatmul.f32.gmra.mxu0 %v4884
        %v4886 = vpop.f32.mrf.mxu0
        %v4887 = vadd.f32 %v4819, %v4886
        %v4888 = vand.u32 %v2008, 4294901760
        %4889 = vmatmul.f32.gmra.mxu0 %v4888
        %v4890 = vpop.f32.mrf.mxu0
        %v4891 = vadd.f32 %v4823, %v4890
        %v4892 = vand.u32 %v2011, 4294901760
        %4893 = vmatmul.f32.gmra.mxu0 %v4892
        %v4894 = vpop.f32.mrf.mxu0
        %v4895 = vadd.f32 %v4827, %v4894
        %v4896 = vand.u32 %v2014, 4294901760
        %4897 = vmatmul.f32.gmra.mxu0 %v4896
        %v4898 = vpop.f32.mrf.mxu0
        %v4899 = vadd.f32 %v4831, %v4898
        %4900 = vdwg.mxu0
        %v4901 = vmax.f32 %v4859, 0.0
        %v4902 = vmax.f32 %v4863, 0.0
        %v4903 = vmax.f32 %v4867, 0.0
        %v4904 = vmax.f32 %v4871, 0.0
        %v4905 = vmax.f32 %v4875, 0.0
        %v4906 = vmax.f32 %v4879, 0.0
        %v4907 = vmax.f32 %v4883, 0.0
        %v4908 = vmax.f32 %v4887, 0.0
        %v4909 = vmax.f32 %v4891, 0.0
        %v4910 = vmax.f32 %v4895, 0.0
        %v4911 = vmax.f32 %v4899, 0.0
        %v4912 = vmul.f32 %v4901, %v847
        %v4913 = vmul.f32 %v4902, %v847
        %v4914 = vmul.f32 %v4903, %v847
        %v4915 = vmul.f32 %v4904, %v847
        %v4916 = vmul.f32 %v4905, %v847
        %v4917 = vmul.f32 %v4906, %v847
        %v4918 = vmul.f32 %v4907, %v847
        %v4919 = vmul.f32 %v4908, %v847
        %v4920 = vmul.f32 %v4909, %v847
        %v4921 = vmul.f32 %v4910, %v847
        %v4922 = vmul.f32 %v4911, %v847
        %4923 = vadd.xlane.f32.xlu0 %v4912
        %v4924 = vpop.xlane.xlu0 %4923
        %4925 = vadd.xlane.f32.xlu0 %v4913
        %v4926 = vpop.xlane.xlu0 %4925
        %4927 = vadd.xlane.f32.xlu0 %v4914
        %v4928 = vpop.xlane.xlu0 %4927
        %4929 = vadd.xlane.f32.xlu0 %v4915
        %v4930 = vpop.xlane.xlu0 %4929
        %4931 = vadd.xlane.f32.xlu0 %v4916
        %v4932 = vpop.xlane.xlu0 %4931
        %4933 = vadd.xlane.f32.xlu0 %v4917
        %v4934 = vpop.xlane.xlu0 %4933
        %4935 = vadd.xlane.f32.xlu0 %v4918
        %v4936 = vpop.xlane.xlu0 %4935
        %4937 = vadd.xlane.f32.xlu0 %v4919
        %v4938 = vpop.xlane.xlu0 %4937
        %4939 = vadd.xlane.f32.xlu0 %v4920
        %v4940 = vpop.xlane.xlu0 %4939
        %4941 = vadd.xlane.f32.xlu0 %v4921
        %v4942 = vpop.xlane.xlu0 %4941
        %4943 = vadd.xlane.f32.xlu0 %v4922
        %v4944 = vpop.xlane.xlu0 %4943
        %v4945 = vsub.f32 %v4901, %v2608
        %v4946 = vsub.f32 %v4902, %v2613
        %v4947 = vsub.f32 %v4903, %v2618
        %v4948 = vsub.f32 %v4904, %v2623
        %v4949 = vsub.f32 %v4905, %v2628
        %v4950 = vsub.f32 %v4906, %v2633
        %v4951 = vsub.f32 %v4907, %v2638
        %v4952 = vsub.f32 %v4908, %v2643
        %v4953 = vsub.f32 %v4909, %v2648
        %v4954 = vsub.f32 %v4910, %v2653
        %v4955 = vsub.f32 %v4911, %v2658
        %v4956 = vmul.f32 %v4945, %v2674
        %v4957 = vmul.f32 %v4946, %v2679
        %v4958 = vmul.f32 %v4947, %v2684
        %v4959 = vmul.f32 %v4948, %v2689
        %v4960 = vmul.f32 %v4949, %v2694
        %v4961 = vmul.f32 %v4950, %v2699
        %v4962 = vmul.f32 %v4951, %v2704
        %v4963 = vmul.f32 %v4952, %v2709
        %v4964 = vmul.f32 %v4953, %v2714
        %v4965 = vmul.f32 %v4954, %v2719
        %v4966 = vmul.f32 %v4955, %v2724
        %4967 = vmatpush.msra.mxu0 0.0
        %4968 = vmatpush.msra.mxu0 0.0
        %4969 = vmatpush.msra.mxu0 0.0
        %4970 = vmatpush.msra.mxu0 0.0
        %4971 = vmatpush.msra.mxu0 0.0
        %v4972 = vand.u32 %v4966, 4294901760
        %4973 = vmatpush.msra.mxu0 %v4972
        %v4974 = vand.u32 %v4965, 4294901760
        %4975 = vmatpush.msra.mxu0 %v4974
        %v4976 = vand.u32 %v4964, 4294901760
        %4977 = vmatpush.msra.mxu0 %v4976
        %v4978 = vand.u32 %v4963, 4294901760
        %4979 = vmatpush.msra.mxu0 %v4978
        %v4980 = vand.u32 %v4962, 4294901760
        %4981 = vmatpush.msra.mxu0 %v4980
        %v4982 = vand.u32 %v4961, 4294901760
        %4983 = vmatpush.msra.mxu0 %v4982
        %v4984 = vand.u32 %v4960, 4294901760
        %4985 = vmatpush.msra.mxu0 %v4984
        %v4986 = vand.u32 %v4959, 4294901760
        %4987 = vmatpush.msra.mxu0 %v4986
        %v4988 = vand.u32 %v4958, 4294901760
        %4989 = vmatpush.msra.mxu0 %v4988
        %v4990 = vand.u32 %v4957, 4294901760
        %4991 = vmatpush.msra.mxu0 %v4990
        %v4992 = vand.u32 %v4956, 4294901760
        %4993 = vmatpush.msra.mxu0 %v4992
        %v4994 = vand.u32 %v2788, 4294901760
        %v4995 = vsub.f32 %v2788, %v4994
        %v4996 = vand.u32 %v4995, 4294901760
        %v4997 = vsub.f32 %v4995, %v4996
        %v4998 = vand.u32 %v4997, 4294901760
        %4999 = vmatmul.f32.gmra.mxu0 %v4998
        %v5000 = vpop.f32.mrf.mxu0
        %v5001 = vadd.f32 %v2754, %v5000
        %v5002 = vand.u32 %v2791, 4294901760
        %v5003 = vsub.f32 %v2791, %v5002
        %v5004 = vand.u32 %v5003, 4294901760
        %v5005 = vsub.f32 %v5003, %v5004
        %v5006 = vand.u32 %v5005, 4294901760
        %5007 = vmatmul.f32.gmra.mxu0 %v5006
        %v5008 = vpop.f32.mrf.mxu0
        %v5009 = vadd.f32 %v2759, %v5008
        %v5010 = vand.u32 %v2794, 4294901760
        %v5011 = vsub.f32 %v2794, %v5010
        %v5012 = vand.u32 %v5011, 4294901760
        %v5013 = vsub.f32 %v5011, %v5012
        %v5014 = vand.u32 %v5013, 4294901760
        %5015 = vmatmul.f32.gmra.mxu0 %v5014
        %v5016 = vpop.f32.mrf.mxu0
        %v5017 = vadd.f32 %v2764, %v5016
        %v5018 = vand.u32 %v2797, 4294901760
        %v5019 = vsub.f32 %v2797, %v5018
        %v5020 = vand.u32 %v5019, 4294901760
        %v5021 = vsub.f32 %v5019, %v5020
        %v5022 = vand.u32 %v5021, 4294901760
        %5023 = vmatmul.f32.gmra.mxu0 %v5022
        %v5024 = vpop.f32.mrf.mxu0
        %v5025 = vadd.f32 %v2769, %v5024
        %v5026 = vand.u32 %v2800, 4294901760
        %v5027 = vsub.f32 %v2800, %v5026
        %v5028 = vand.u32 %v5027, 4294901760
        %v5029 = vsub.f32 %v5027, %v5028
        %v5030 = vand.u32 %v5029, 4294901760
        %5031 = vmatmul.f32.gmra.mxu0 %v5030
        %v5032 = vpop.f32.mrf.mxu0
        %v5033 = vadd.f32 %v2774, %v5032
        %v5034 = vand.u32 %v2803, 4294901760
        %v5035 = vsub.f32 %v2803, %v5034
        %v5036 = vand.u32 %v5035, 4294901760
        %v5037 = vsub.f32 %v5035, %v5036
        %v5038 = vand.u32 %v5037, 4294901760
        %5039 = vmatmul.f32.gmra.mxu0 %v5038
        %v5040 = vpop.f32.mrf.mxu0
        %v5041 = vadd.f32 %v2779, %v5040
        %v5042 = vand.u32 %v2806, 4294901760
        %v5043 = vsub.f32 %v2806, %v5042
        %v5044 = vand.u32 %v5043, 4294901760
        %v5045 = vsub.f32 %v5043, %v5044
        %v5046 = vand.u32 %v5045, 4294901760
        %5047 = vmatmul.f32.gmra.mxu0 %v5046
        %v5048 = vpop.f32.mrf.mxu0
        %v5049 = vadd.f32 %v2784, %v5048
        %5050 = vdwg.mxu0
        %5051 = vmatpush.msra.mxu0 0.0
        %5052 = vmatpush.msra.mxu0 0.0
        %5053 = vmatpush.msra.mxu0 0.0
        %5054 = vmatpush.msra.mxu0 0.0
        %5055 = vmatpush.msra.mxu0 0.0
        %v5056 = vand.u32 %v4966, 4294901760
        %v5057 = vsub.f32 %v4966, %v5056
        %v5058 = vand.u32 %v5057, 4294901760
        %v5059 = vsub.f32 %v5057, %v5058
        %v5060 = vand.u32 %v5059, 4294901760
        %5061 = vmatpush.msra.mxu0 %v5060
        %v5062 = vand.u32 %v4965, 4294901760
        %v5063 = vsub.f32 %v4965, %v5062
        %v5064 = vand.u32 %v5063, 4294901760
        %v5065 = vsub.f32 %v5063, %v5064
        %v5066 = vand.u32 %v5065, 4294901760
        %5067 = vmatpush.msra.mxu0 %v5066
        %v5068 = vand.u32 %v4964, 4294901760
        %v5069 = vsub.f32 %v4964, %v5068
        %v5070 = vand.u32 %v5069, 4294901760
        %v5071 = vsub.f32 %v5069, %v5070
        %v5072 = vand.u32 %v5071, 4294901760
        %5073 = vmatpush.msra.mxu0 %v5072
        %v5074 = vand.u32 %v4963, 4294901760
        %v5075 = vsub.f32 %v4963, %v5074
        %v5076 = vand.u32 %v5075, 4294901760
        %v5077 = vsub.f32 %v5075, %v5076
        %v5078 = vand.u32 %v5077, 4294901760
        %5079 = vmatpush.msra.mxu0 %v5078
        %v5080 = vand.u32 %v4962, 4294901760
        %v5081 = vsub.f32 %v4962, %v5080
        %v5082 = vand.u32 %v5081, 4294901760
        %v5083 = vsub.f32 %v5081, %v5082
        %v5084 = vand.u32 %v5083, 4294901760
        %5085 = vmatpush.msra.mxu0 %v5084
        %v5086 = vand.u32 %v4961, 4294901760
        %v5087 = vsub.f32 %v4961, %v5086
        %v5088 = vand.u32 %v5087, 4294901760
        %v5089 = vsub.f32 %v5087, %v5088
        %v5090 = vand.u32 %v5089, 4294901760
        %5091 = vmatpush.msra.mxu0 %v5090
        %v5092 = vand.u32 %v4960, 4294901760
        %v5093 = vsub.f32 %v4960, %v5092
        %v5094 = vand.u32 %v5093, 4294901760
        %v5095 = vsub.f32 %v5093, %v5094
        %v5096 = vand.u32 %v5095, 4294901760
        %5097 = vmatpush.msra.mxu0 %v5096
        %v5098 = vand.u32 %v4959, 4294901760
        %v5099 = vsub.f32 %v4959, %v5098
        %v5100 = vand.u32 %v5099, 4294901760
        %v5101 = vsub.f32 %v5099, %v5100
        %v5102 = vand.u32 %v5101, 4294901760
        %5103 = vmatpush.msra.mxu0 %v5102
        %v5104 = vand.u32 %v4958, 4294901760
        %v5105 = vsub.f32 %v4958, %v5104
        %v5106 = vand.u32 %v5105, 4294901760
        %v5107 = vsub.f32 %v5105, %v5106
        %v5108 = vand.u32 %v5107, 4294901760
        %5109 = vmatpush.msra.mxu0 %v5108
        %v5110 = vand.u32 %v4957, 4294901760
        %v5111 = vsub.f32 %v4957, %v5110
        %v5112 = vand.u32 %v5111, 4294901760
        %v5113 = vsub.f32 %v5111, %v5112
        %v5114 = vand.u32 %v5113, 4294901760
        %5115 = vmatpush.msra.mxu0 %v5114
        %v5116 = vand.u32 %v4956, 4294901760
        %v5117 = vsub.f32 %v4956, %v5116
        %v5118 = vand.u32 %v5117, 4294901760
        %v5119 = vsub.f32 %v5117, %v5118
        %v5120 = vand.u32 %v5119, 4294901760
        %5121 = vmatpush.msra.mxu0 %v5120
        %v5122 = vand.u32 %v2788, 4294901760
        %5123 = vmatmul.f32.gmra.mxu0 %v5122
        %v5124 = vpop.f32.mrf.mxu0
        %v5125 = vadd.f32 %v5001, %v5124
        %v5126 = vand.u32 %v2791, 4294901760
        %5127 = vmatmul.f32.gmra.mxu0 %v5126
        %v5128 = vpop.f32.mrf.mxu0
        %v5129 = vadd.f32 %v5009, %v5128
        %v5130 = vand.u32 %v2794, 4294901760
        %5131 = vmatmul.f32.gmra.mxu0 %v5130
        %v5132 = vpop.f32.mrf.mxu0
        %v5133 = vadd.f32 %v5017, %v5132
        %v5134 = vand.u32 %v2797, 4294901760
        %5135 = vmatmul.f32.gmra.mxu0 %v5134
        %v5136 = vpop.f32.mrf.mxu0
        %v5137 = vadd.f32 %v5025, %v5136
        %v5138 = vand.u32 %v2800, 4294901760
        %5139 = vmatmul.f32.gmra.mxu0 %v5138
        %v5140 = vpop.f32.mrf.mxu0
        %v5141 = vadd.f32 %v5033, %v5140
        %v5142 = vand.u32 %v2803, 4294901760
        %5143 = vmatmul.f32.gmra.mxu0 %v5142
        %v5144 = vpop.f32.mrf.mxu0
        %v5145 = vadd.f32 %v5041, %v5144
        %v5146 = vand.u32 %v2806, 4294901760
        %5147 = vmatmul.f32.gmra.mxu0 %v5146
        %v5148 = vpop.f32.mrf.mxu0
        %v5149 = vadd.f32 %v5049, %v5148
        %5150 = vdwg.mxu0
        %5151 = vmatpush.msra.mxu0 0.0
        %5152 = vmatpush.msra.mxu0 0.0
        %5153 = vmatpush.msra.mxu0 0.0
        %5154 = vmatpush.msra.mxu0 0.0
        %5155 = vmatpush.msra.mxu0 0.0
        %v5156 = vand.u32 %v4966, 4294901760
        %v5157 = vsub.f32 %v4966, %v5156
        %5158 = vmatpush.msra.mxu0 %v5157
        %v5159 = vand.u32 %v4965, 4294901760
        %v5160 = vsub.f32 %v4965, %v5159
        %5161 = vmatpush.msra.mxu0 %v5160
        %v5162 = vand.u32 %v4964, 4294901760
        %v5163 = vsub.f32 %v4964, %v5162
        %5164 = vmatpush.msra.mxu0 %v5163
        %v5165 = vand.u32 %v4963, 4294901760
        %v5166 = vsub.f32 %v4963, %v5165
        %5167 = vmatpush.msra.mxu0 %v5166
        %v5168 = vand.u32 %v4962, 4294901760
        %v5169 = vsub.f32 %v4962, %v5168
        %5170 = vmatpush.msra.mxu0 %v5169
        %v5171 = vand.u32 %v4961, 4294901760
        %v5172 = vsub.f32 %v4961, %v5171
        %5173 = vmatpush.msra.mxu0 %v5172
        %v5174 = vand.u32 %v4960, 4294901760
        %v5175 = vsub.f32 %v4960, %v5174
        %5176 = vmatpush.msra.mxu0 %v5175
        %v5177 = vand.u32 %v4959, 4294901760
        %v5178 = vsub.f32 %v4959, %v5177
        %5179 = vmatpush.msra.mxu0 %v5178
        %v5180 = vand.u32 %v4958, 4294901760
        %v5181 = vsub.f32 %v4958, %v5180
        %5182 = vmatpush.msra.mxu0 %v5181
        %v5183 = vand.u32 %v4957, 4294901760
        %v5184 = vsub.f32 %v4957, %v5183
        %5185 = vmatpush.msra.mxu0 %v5184
        %v5186 = vand.u32 %v4956, 4294901760
        %v5187 = vsub.f32 %v4956, %v5186
        %5188 = vmatpush.msra.mxu0 %v5187
        %v5189 = vand.u32 %v2788, 4294901760
        %v5190 = vsub.f32 %v2788, %v5189
        %5191 = vmatmul.f32.gmra.mxu0 %v5190
        %v5192 = vpop.f32.mrf.mxu0
        %v5193 = vadd.f32 %v5125, %v5192
        %v5194 = vand.u32 %v2791, 4294901760
        %v5195 = vsub.f32 %v2791, %v5194
        %5196 = vmatmul.f32.gmra.mxu0 %v5195
        %v5197 = vpop.f32.mrf.mxu0
        %v5198 = vadd.f32 %v5129, %v5197
        %v5199 = vand.u32 %v2794, 4294901760
        %v5200 = vsub.f32 %v2794, %v5199
        %5201 = vmatmul.f32.gmra.mxu0 %v5200
        %v5202 = vpop.f32.mrf.mxu0
        %v5203 = vadd.f32 %v5133, %v5202
        %v5204 = vand.u32 %v2797, 4294901760
        %v5205 = vsub.f32 %v2797, %v5204
        %5206 = vmatmul.f32.gmra.mxu0 %v5205
        %v5207 = vpop.f32.mrf.mxu0
        %v5208 = vadd.f32 %v5137, %v5207
        %v5209 = vand.u32 %v2800, 4294901760
        %v5210 = vsub.f32 %v2800, %v5209
        %5211 = vmatmul.f32.gmra.mxu0 %v5210
        %v5212 = vpop.f32.mrf.mxu0
        %v5213 = vadd.f32 %v5141, %v5212
        %v5214 = vand.u32 %v2803, 4294901760
        %v5215 = vsub.f32 %v2803, %v5214
        %5216 = vmatmul.f32.gmra.mxu0 %v5215
        %v5217 = vpop.f32.mrf.mxu0
        %v5218 = vadd.f32 %v5145, %v5217
        %v5219 = vand.u32 %v2806, 4294901760
        %v5220 = vsub.f32 %v2806, %v5219
        %5221 = vmatmul.f32.gmra.mxu0 %v5220
        %v5222 = vpop.f32.mrf.mxu0
        %v5223 = vadd.f32 %v5149, %v5222
        %5224 = vdwg.mxu0
        %5225 = vmatpush.msra.mxu0 0.0
        %5226 = vmatpush.msra.mxu0 0.0
        %5227 = vmatpush.msra.mxu0 0.0
        %5228 = vmatpush.msra.mxu0 0.0
        %5229 = vmatpush.msra.mxu0 0.0
        %v5230 = vand.u32 %v4966, 4294901760
        %5231 = vmatpush.msra.mxu0 %v5230
        %v5232 = vand.u32 %v4965, 4294901760
        %5233 = vmatpush.msra.mxu0 %v5232
        %v5234 = vand.u32 %v4964, 4294901760
        %5235 = vmatpush.msra.mxu0 %v5234
        %v5236 = vand.u32 %v4963, 4294901760
        %5237 = vmatpush.msra.mxu0 %v5236
        %v5238 = vand.u32 %v4962, 4294901760
        %5239 = vmatpush.msra.mxu0 %v5238
        %v5240 = vand.u32 %v4961, 4294901760
        %5241 = vmatpush.msra.mxu0 %v5240
        %v5242 = vand.u32 %v4960, 4294901760
        %5243 = vmatpush.msra.mxu0 %v5242
        %v5244 = vand.u32 %v4959, 4294901760
        %5245 = vmatpush.msra.mxu0 %v5244
        %v5246 = vand.u32 %v4958, 4294901760
        %5247 = vmatpush.msra.mxu0 %v5246
        %v5248 = vand.u32 %v4957, 4294901760
        %5249 = vmatpush.msra.mxu0 %v5248
        %v5250 = vand.u32 %v4956, 4294901760
        %5251 = vmatpush.msra.mxu0 %v5250
        %v5252 = vand.u32 %v2788, 4294901760
        %v5253 = vsub.f32 %v2788, %v5252
        %v5254 = vand.u32 %v5253, 4294901760
        %5255 = vmatmul.f32.gmra.mxu0 %v5254
        %v5256 = vpop.f32.mrf.mxu0
        %v5257 = vadd.f32 %v5193, %v5256
        %v5258 = vand.u32 %v2791, 4294901760
        %v5259 = vsub.f32 %v2791, %v5258
        %v5260 = vand.u32 %v5259, 4294901760
        %5261 = vmatmul.f32.gmra.mxu0 %v5260
        %v5262 = vpop.f32.mrf.mxu0
        %v5263 = vadd.f32 %v5198, %v5262
        %v5264 = vand.u32 %v2794, 4294901760
        %v5265 = vsub.f32 %v2794, %v5264
        %v5266 = vand.u32 %v5265, 4294901760
        %5267 = vmatmul.f32.gmra.mxu0 %v5266
        %v5268 = vpop.f32.mrf.mxu0
        %v5269 = vadd.f32 %v5203, %v5268
        %v5270 = vand.u32 %v2797, 4294901760
        %v5271 = vsub.f32 %v2797, %v5270
        %v5272 = vand.u32 %v5271, 4294901760
        %5273 = vmatmul.f32.gmra.mxu0 %v5272
        %v5274 = vpop.f32.mrf.mxu0
        %v5275 = vadd.f32 %v5208, %v5274
        %v5276 = vand.u32 %v2800, 4294901760
        %v5277 = vsub.f32 %v2800, %v5276
        %v5278 = vand.u32 %v5277, 4294901760
        %5279 = vmatmul.f32.gmra.mxu0 %v5278
        %v5280 = vpop.f32.mrf.mxu0
        %v5281 = vadd.f32 %v5213, %v5280
        %v5282 = vand.u32 %v2803, 4294901760
        %v5283 = vsub.f32 %v2803, %v5282
        %v5284 = vand.u32 %v5283, 4294901760
        %5285 = vmatmul.f32.gmra.mxu0 %v5284
        %v5286 = vpop.f32.mrf.mxu0
        %v5287 = vadd.f32 %v5218, %v5286
        %v5288 = vand.u32 %v2806, 4294901760
        %v5289 = vsub.f32 %v2806, %v5288
        %v5290 = vand.u32 %v5289, 4294901760
        %5291 = vmatmul.f32.gmra.mxu0 %v5290
        %v5292 = vpop.f32.mrf.mxu0
        %v5293 = vadd.f32 %v5223, %v5292
        %5294 = vdwg.mxu0
        %5295 = vmatpush.msra.mxu0 0.0
        %5296 = vmatpush.msra.mxu0 0.0
        %5297 = vmatpush.msra.mxu0 0.0
        %5298 = vmatpush.msra.mxu0 0.0
        %5299 = vmatpush.msra.mxu0 0.0
        %v5300 = vand.u32 %v4966, 4294901760
        %v5301 = vsub.f32 %v4966, %v5300
        %v5302 = vand.u32 %v5301, 4294901760
        %5303 = vmatpush.msra.mxu0 %v5302
        %v5304 = vand.u32 %v4965, 4294901760
        %v5305 = vsub.f32 %v4965, %v5304
        %v5306 = vand.u32 %v5305, 4294901760
        %5307 = vmatpush.msra.mxu0 %v5306
        %v5308 = vand.u32 %v4964, 4294901760
        %v5309 = vsub.f32 %v4964, %v5308
        %v5310 = vand.u32 %v5309, 4294901760
        %5311 = vmatpush.msra.mxu0 %v5310
        %v5312 = vand.u32 %v4963, 4294901760
        %v5313 = vsub.f32 %v4963, %v5312
        %v5314 = vand.u32 %v5313, 4294901760
        %5315 = vmatpush.msra.mxu0 %v5314
        %v5316 = vand.u32 %v4962, 4294901760
        %v5317 = vsub.f32 %v4962, %v5316
        %v5318 = vand.u32 %v5317, 4294901760
        %5319 = vmatpush.msra.mxu0 %v5318
        %v5320 = vand.u32 %v4961, 4294901760
        %v5321 = vsub.f32 %v4961, %v5320
        %v5322 = vand.u32 %v5321, 4294901760
        %5323 = vmatpush.msra.mxu0 %v5322
        %v5324 = vand.u32 %v4960, 4294901760
        %v5325 = vsub.f32 %v4960, %v5324
        %v5326 = vand.u32 %v5325, 4294901760
        %5327 = vmatpush.msra.mxu0 %v5326
        %v5328 = vand.u32 %v4959, 4294901760
        %v5329 = vsub.f32 %v4959, %v5328
        %v5330 = vand.u32 %v5329, 4294901760
        %5331 = vmatpush.msra.mxu0 %v5330
        %v5332 = vand.u32 %v4958, 4294901760
        %v5333 = vsub.f32 %v4958, %v5332
        %v5334 = vand.u32 %v5333, 4294901760
        %5335 = vmatpush.msra.mxu0 %v5334
        %v5336 = vand.u32 %v4957, 4294901760
        %v5337 = vsub.f32 %v4957, %v5336
        %v5338 = vand.u32 %v5337, 4294901760
        %5339 = vmatpush.msra.mxu0 %v5338
        %v5340 = vand.u32 %v4956, 4294901760
        %v5341 = vsub.f32 %v4956, %v5340
        %v5342 = vand.u32 %v5341, 4294901760
        %5343 = vmatpush.msra.mxu0 %v5342
        %v5344 = vand.u32 %v2788, 4294901760
        %5345 = vmatmul.f32.gmra.mxu0 %v5344
        %v5346 = vpop.f32.mrf.mxu0
        %v5347 = vadd.f32 %v5257, %v5346
        %v5348 = vand.u32 %v2791, 4294901760
        %5349 = vmatmul.f32.gmra.mxu0 %v5348
        %v5350 = vpop.f32.mrf.mxu0
        %v5351 = vadd.f32 %v5263, %v5350
        %v5352 = vand.u32 %v2794, 4294901760
        %5353 = vmatmul.f32.gmra.mxu0 %v5352
        %v5354 = vpop.f32.mrf.mxu0
        %v5355 = vadd.f32 %v5269, %v5354
        %v5356 = vand.u32 %v2797, 4294901760
        %5357 = vmatmul.f32.gmra.mxu0 %v5356
        %v5358 = vpop.f32.mrf.mxu0
        %v5359 = vadd.f32 %v5275, %v5358
        %v5360 = vand.u32 %v2800, 4294901760
        %5361 = vmatmul.f32.gmra.mxu0 %v5360
        %v5362 = vpop.f32.mrf.mxu0
        %v5363 = vadd.f32 %v5281, %v5362
        %v5364 = vand.u32 %v2803, 4294901760
        %5365 = vmatmul.f32.gmra.mxu0 %v5364
        %v5366 = vpop.f32.mrf.mxu0
        %v5367 = vadd.f32 %v5287, %v5366
        %v5368 = vand.u32 %v2806, 4294901760
        %5369 = vmatmul.f32.gmra.mxu0 %v5368
        %v5370 = vpop.f32.mrf.mxu0
        %v5371 = vadd.f32 %v5293, %v5370
        %5372 = vdwg.mxu0
        %5373 = vmatpush.msra.mxu0 0.0
        %5374 = vmatpush.msra.mxu0 0.0
        %5375 = vmatpush.msra.mxu0 0.0
        %5376 = vmatpush.msra.mxu0 0.0
        %5377 = vmatpush.msra.mxu0 0.0
        %v5378 = vand.u32 %v4966, 4294901760
        %5379 = vmatpush.msra.mxu0 %v5378
        %v5380 = vand.u32 %v4965, 4294901760
        %5381 = vmatpush.msra.mxu0 %v5380
        %v5382 = vand.u32 %v4964, 4294901760
        %5383 = vmatpush.msra.mxu0 %v5382
        %v5384 = vand.u32 %v4963, 4294901760
        %5385 = vmatpush.msra.mxu0 %v5384
        %v5386 = vand.u32 %v4962, 4294901760
        %5387 = vmatpush.msra.mxu0 %v5386
        %v5388 = vand.u32 %v4961, 4294901760
        %5389 = vmatpush.msra.mxu0 %v5388
        %v5390 = vand.u32 %v4960, 4294901760
        %5391 = vmatpush.msra.mxu0 %v5390
        %v5392 = vand.u32 %v4959, 4294901760
        %5393 = vmatpush.msra.mxu0 %v5392
        %v5394 = vand.u32 %v4958, 4294901760
        %5395 = vmatpush.msra.mxu0 %v5394
        %v5396 = vand.u32 %v4957, 4294901760
        %5397 = vmatpush.msra.mxu0 %v5396
        %v5398 = vand.u32 %v4956, 4294901760
        %5399 = vmatpush.msra.mxu0 %v5398
        %v5400 = vand.u32 %v2788, 4294901760
        %5401 = vmatmul.f32.gmra.mxu0 %v5400
        %v5402 = vpop.f32.mrf.mxu0
        %v5403 = vadd.f32 %v5347, %v5402
        %v5404 = vand.u32 %v2791, 4294901760
        %5405 = vmatmul.f32.gmra.mxu0 %v5404
        %v5406 = vpop.f32.mrf.mxu0
        %v5407 = vadd.f32 %v5351, %v5406
        %v5408 = vand.u32 %v2794, 4294901760
        %5409 = vmatmul.f32.gmra.mxu0 %v5408
        %v5410 = vpop.f32.mrf.mxu0
        %v5411 = vadd.f32 %v5355, %v5410
        %v5412 = vand.u32 %v2797, 4294901760
        %5413 = vmatmul.f32.gmra.mxu0 %v5412
        %v5414 = vpop.f32.mrf.mxu0
        %v5415 = vadd.f32 %v5359, %v5414
        %v5416 = vand.u32 %v2800, 4294901760
        %5417 = vmatmul.f32.gmra.mxu0 %v5416
        %v5418 = vpop.f32.mrf.mxu0
        %v5419 = vadd.f32 %v5363, %v5418
        %v5420 = vand.u32 %v2803, 4294901760
        %5421 = vmatmul.f32.gmra.mxu0 %v5420
        %v5422 = vpop.f32.mrf.mxu0
        %v5423 = vadd.f32 %v5367, %v5422
        %v5424 = vand.u32 %v2806, 4294901760
        %5425 = vmatmul.f32.gmra.mxu0 %v5424
        %v5426 = vpop.f32.mrf.mxu0
        %v5427 = vadd.f32 %v5371, %v5426
        %5428 = vdwg.mxu0
        %v5429 = vxor.u32 %v5403, 2147483648
        %v5430 = vxor.u32 %v5407, 2147483648
        %v5431 = vxor.u32 %v5411, 2147483648
        %v5432 = vxor.u32 %v5415, 2147483648
        %v5433 = vxor.u32 %v5419, 2147483648
        %v5434 = vxor.u32 %v5423, 2147483648
        %v5435 = vxor.u32 %v5427, 2147483648
        %v5436 = vmul.f32 %v5429, 1.442695
        %v5437 = vpow.pop %v5436
        %v5438 = vmul.f32 %v5430, 1.442695
        %v5439 = vpow.pop %v5438
        %v5440 = vmul.f32 %v5431, 1.442695
        %v5441 = vpow.pop %v5440
        %v5442 = vmul.f32 %v5432, 1.442695
        %v5443 = vpow.pop %v5442
        %v5444 = vmul.f32 %v5433, 1.442695
        %v5445 = vpow.pop %v5444
        %v5446 = vmul.f32 %v5434, 1.442695
        %v5447 = vpow.pop %v5446
        %v5448 = vmul.f32 %v5435, 1.442695
        %v5449 = vpow.pop %v5448
        %v5450 = vadd.f32 %v5437, 1.0
        %v5451 = vadd.f32 %v5439, 1.0
        %v5452 = vadd.f32 %v5441, 1.0
        %v5453 = vadd.f32 %v5443, 1.0
        %v5454 = vadd.f32 %v5445, 1.0
        %v5455 = vadd.f32 %v5447, 1.0
        %v5456 = vadd.f32 %v5449, 1.0
        %v5457 = vrcp.pop %v5450
        %v5458 = vmul.f32 %v5450, %v5457
        %v5459 = vsub.f32 1.0, %v5458
        %v5460 = vmul.f32 %v5457, %v5459
        %v5461 = vadd.f32 %v5457, %v5460
        %vm5462 = vweird.f32 %v5450
        %vm5463 = vweird.f32 %v5457
        %vm5464 = vmor %vm5462, %vm5463
        %v5465 = vsel %vm5464, %v5457, %v5461
        %v5466 = vand.u32 2147483647, %v5450
        %vm5467 = vcmp.eq.f32.partialorder %v5466, 8.507059e+37
        %v5468 = vand.u32 %v5450, 2147483648
        %v5469 = vor.u32 1.1754944e-38, %v5468
        %v5470 = vsel %vm5467, %v5469, %v5465
        %v5471 = vmul.f32 1.0, %v5470
        %v5472 = vrcp.pop %v5451
        %v5473 = vmul.f32 %v5451, %v5472
        %v5474 = vsub.f32 1.0, %v5473
        %v5475 = vmul.f32 %v5472, %v5474
        %v5476 = vadd.f32 %v5472, %v5475
        %vm5477 = vweird.f32 %v5451
        %vm5478 = vweird.f32 %v5472
        %vm5479 = vmor %vm5477, %vm5478
        %v5480 = vsel %vm5479, %v5472, %v5476
        %v5481 = vand.u32 2147483647, %v5451
        %vm5482 = vcmp.eq.f32.partialorder %v5481, 8.507059e+37
        %v5483 = vand.u32 %v5451, 2147483648
        %v5484 = vor.u32 1.1754944e-38, %v5483
        %v5485 = vsel %vm5482, %v5484, %v5480
        %v5486 = vmul.f32 1.0, %v5485
        %v5487 = vrcp.pop %v5452
        %v5488 = vmul.f32 %v5452, %v5487
        %v5489 = vsub.f32 1.0, %v5488
        %v5490 = vmul.f32 %v5487, %v5489
        %v5491 = vadd.f32 %v5487, %v5490
        %vm5492 = vweird.f32 %v5452
        %vm5493 = vweird.f32 %v5487
        %vm5494 = vmor %vm5492, %vm5493
        %v5495 = vsel %vm5494, %v5487, %v5491
        %v5496 = vand.u32 2147483647, %v5452
        %vm5497 = vcmp.eq.f32.partialorder %v5496, 8.507059e+37
        %v5498 = vand.u32 %v5452, 2147483648
        %v5499 = vor.u32 1.1754944e-38, %v5498
        %v5500 = vsel %vm5497, %v5499, %v5495
        %v5501 = vmul.f32 1.0, %v5500
        %v5502 = vrcp.pop %v5453
        %v5503 = vmul.f32 %v5453, %v5502
        %v5504 = vsub.f32 1.0, %v5503
        %v5505 = vmul.f32 %v5502, %v5504
        %v5506 = vadd.f32 %v5502, %v5505
        %vm5507 = vweird.f32 %v5453
        %vm5508 = vweird.f32 %v5502
        %vm5509 = vmor %vm5507, %vm5508
        %v5510 = vsel %vm5509, %v5502, %v5506
        %v5511 = vand.u32 2147483647, %v5453
        %vm5512 = vcmp.eq.f32.partialorder %v5511, 8.507059e+37
        %v5513 = vand.u32 %v5453, 2147483648
        %v5514 = vor.u32 1.1754944e-38, %v5513
        %v5515 = vsel %vm5512, %v5514, %v5510
        %v5516 = vmul.f32 1.0, %v5515
        %v5517 = vrcp.pop %v5454
        %v5518 = vmul.f32 %v5454, %v5517
        %v5519 = vsub.f32 1.0, %v5518
        %v5520 = vmul.f32 %v5517, %v5519
        %v5521 = vadd.f32 %v5517, %v5520
        %vm5522 = vweird.f32 %v5454
        %vm5523 = vweird.f32 %v5517
        %vm5524 = vmor %vm5522, %vm5523
        %v5525 = vsel %vm5524, %v5517, %v5521
        %v5526 = vand.u32 2147483647, %v5454
        %vm5527 = vcmp.eq.f32.partialorder %v5526, 8.507059e+37
        %v5528 = vand.u32 %v5454, 2147483648
        %v5529 = vor.u32 1.1754944e-38, %v5528
        %v5530 = vsel %vm5527, %v5529, %v5525
        %v5531 = vmul.f32 1.0, %v5530
        %v5532 = vrcp.pop %v5455
        %v5533 = vmul.f32 %v5455, %v5532
        %v5534 = vsub.f32 1.0, %v5533
        %v5535 = vmul.f32 %v5532, %v5534
        %v5536 = vadd.f32 %v5532, %v5535
        %vm5537 = vweird.f32 %v5455
        %vm5538 = vweird.f32 %v5532
        %vm5539 = vmor %vm5537, %vm5538
        %v5540 = vsel %vm5539, %v5532, %v5536
        %v5541 = vand.u32 2147483647, %v5455
        %vm5542 = vcmp.eq.f32.partialorder %v5541, 8.507059e+37
        %v5543 = vand.u32 %v5455, 2147483648
        %v5544 = vor.u32 1.1754944e-38, %v5543
        %v5545 = vsel %vm5542, %v5544, %v5540
        %v5546 = vmul.f32 1.0, %v5545
        %v5547 = vrcp.pop %v5456
        %v5548 = vmul.f32 %v5456, %v5547
        %v5549 = vsub.f32 1.0, %v5548
        %v5550 = vmul.f32 %v5547, %v5549
        %v5551 = vadd.f32 %v5547, %v5550
        %vm5552 = vweird.f32 %v5456
        %vm5553 = vweird.f32 %v5547
        %vm5554 = vmor %vm5552, %vm5553
        %v5555 = vsel %vm5554, %v5547, %v5551
        %v5556 = vand.u32 2147483647, %v5456
        %vm5557 = vcmp.eq.f32.partialorder %v5556, 8.507059e+37
        %v5558 = vand.u32 %v5456, 2147483648
        %v5559 = vor.u32 1.1754944e-38, %v5558
        %v5560 = vsel %vm5557, %v5559, %v5555
        %v5561 = vmul.f32 1.0, %v5560
        %v5562 = vmul.f32 %v3634, %v3406
        %v5563 = vmul.f32 %v3635, %v3411
        %v5564 = vmul.f32 %v3636, %v3416
        %v5565 = vmul.f32 %v3637, %v3421
        %v5566 = vmul.f32 %v3638, %v3426
        %v5567 = vmul.f32 %v3639, %v3431
        %v5568 = vmul.f32 %v3640, %v3436
        %v5569 = vadd.f32 %v5562, %v3448
        %v5570 = vadd.f32 %v5563, %v3453
        %v5571 = vadd.f32 %v5564, %v3458
        %v5572 = vadd.f32 %v5565, %v3463
        %v5573 = vadd.f32 %v5566, %v3468
        %v5574 = vadd.f32 %v5567, %v3473
        %v5575 = vadd.f32 %v5568, %v3478
        %v5576 = vmul.f32 %v5471, %v4360
        %v5577 = vmul.f32 %v5486, %v4361
        %v5578 = vmul.f32 %v5501, %v4362
        %v5579 = vmul.f32 %v5516, %v4363
        %v5580 = vmul.f32 %v5531, %v4364
        %v5581 = vmul.f32 %v5546, %v4365
        %v5582 = vmul.f32 %v5561, %v4366
        %v5583 = vsub.f32 1.0, %v5471
        %v5584 = vsub.f32 1.0, %v5486
        %v5585 = vsub.f32 1.0, %v5501
        %v5586 = vsub.f32 1.0, %v5516
        %v5587 = vsub.f32 1.0, %v5531
        %v5588 = vsub.f32 1.0, %v5546
        %v5589 = vsub.f32 1.0, %v5561
        %v5590 = vmul.f32 %v5583, %v5569
        %v5591 = vmul.f32 %v5584, %v5570
        %v5592 = vmul.f32 %v5585, %v5571
        %v5593 = vmul.f32 %v5586, %v5572
        %v5594 = vmul.f32 %v5587, %v5573
        %v5595 = vmul.f32 %v5588, %v5574
        %v5596 = vmul.f32 %v5589, %v5575
        %v5597 = vadd.f32 %v5576, %v5590
        %v5598 = vadd.f32 %v5577, %v5591
        %v5599 = vadd.f32 %v5578, %v5592
        %v5600 = vadd.f32 %v5579, %v5593
        %v5601 = vadd.f32 %v5580, %v5594
        %v5602 = vadd.f32 %v5581, %v5595
        %v5603 = vadd.f32 %v5582, %v5596
        %v5604 = vmul.f32 %v3518, %v5597
        %v5605 = vmul.f32 %v3523, %v5598
        %v5606 = vmul.f32 %v3528, %v5599
        %v5607 = vmul.f32 %v3533, %v5600
        %v5608 = vmul.f32 %v3538, %v5601
        %v5609 = vmul.f32 %v3543, %v5602
        %v5610 = vmul.f32 %v3548, %v5603
        %v5611 = vmul.f32 %v3567, %v4360
        %v5612 = vmul.f32 %v3572, %v4361
        %v5613 = vmul.f32 %v3577, %v4362
        %v5614 = vmul.f32 %v3582, %v4363
        %v5615 = vmul.f32 %v3587, %v4364
        %v5616 = vmul.f32 %v3592, %v4365
        %v5617 = vmul.f32 %v3597, %v4366
        %v5618 = vadd.f32 %v5604, %v5611
        %v5619 = vadd.f32 %v5605, %v5612
        %v5620 = vadd.f32 %v5606, %v5613
        %v5621 = vadd.f32 %v5607, %v5614
        %v5622 = vadd.f32 %v5608, %v5615
        %v5623 = vadd.f32 %v5609, %v5616
        %v5624 = vadd.f32 %v5610, %v5617
        %v5625 = vmul.f32 %v5618, %v847
        %v5626 = vmul.f32 %v5619, %v847
        %v5627 = vmul.f32 %v5620, %v847
        %v5628 = vmul.f32 %v5621, %v847
        %v5629 = vmul.f32 %v5622, %v847
        %v5630 = vmul.f32 %v5623, %v847
        %v5631 = vmul.f32 %v5624, %v847
        %5632 = vadd.xlane.f32.xlu0 %v5625
        %v5633 = vpop.xlane.xlu0 %5632
        %5634 = vadd.xlane.f32.xlu0 %v5626
        %v5635 = vpop.xlane.xlu0 %5634
        %5636 = vadd.xlane.f32.xlu0 %v5627
        %v5637 = vpop.xlane.xlu0 %5636
        %5638 = vadd.xlane.f32.xlu0 %v5628
        %v5639 = vpop.xlane.xlu0 %5638
        %5640 = vadd.xlane.f32.xlu0 %v5629
        %v5641 = vpop.xlane.xlu0 %5640
        %5642 = vadd.xlane.f32.xlu0 %v5630
        %v5643 = vpop.xlane.xlu0 %5642
        %5644 = vadd.xlane.f32.xlu0 %v5631
        %v5645 = vpop.xlane.xlu0 %5644
        %v5646 = vld [vmem:[%s742 + $0x70] sm:$0xff]
        %v5647 = vld [vmem:[%s742 + $0x78] sm:$0xff]
        %v5648 = vld [vmem:[%s742 + $0x80] sm:$0xff]
        %v5649 = vld [vmem:[%s742 + $0x88] sm:$0xff]
        %v5650 = vld [vmem:[%s742 + $0x90] sm:$0xff]
        %v5651 = vld [vmem:[%s742 + $0x98] sm:$0xff]
        %v5652 = vld [vmem:[%s742 + $0xa0] sm:$0xff]
        %v5653 = vmul.f32 %v4360, %v5583
        %v5654 = vmul.f32 %v4361, %v5584
        %v5655 = vmul.f32 %v4362, %v5585
        %v5656 = vmul.f32 %v4363, %v5586
        %v5657 = vmul.f32 %v4364, %v5587
        %v5658 = vmul.f32 %v4365, %v5588
        %v5659 = vmul.f32 %v4366, %v5589
        %v5660 = vmul.f32 %v5646, %v1898
        %v5661 = vmul.f32 %v5647, %v1899
        %v5662 = vmul.f32 %v5648, %v1900
        %v5663 = vmul.f32 %v5649, %v1901
        %v5664 = vmul.f32 %v5650, %v1902
        %v5665 = vmul.f32 %v5651, %v1903
        %v5666 = vmul.f32 %v5652, %v1904
        %v5667 = vadd.f32 %v5660, %v1898
        %v5668 = vadd.f32 %v5661, %v1899
        %v5669 = vadd.f32 %v5662, %v1900
        %v5670 = vadd.f32 %v5663, %v1901
        %v5671 = vadd.f32 %v5664, %v1902
        %v5672 = vadd.f32 %v5665, %v1903
        %v5673 = vadd.f32 %v5666, %v1904
        %v5674 = vmul.f32 %v5471, %v5667
        %v5675 = vmul.f32 %v5486, %v5668
        %v5676 = vmul.f32 %v5501, %v5669
        %v5677 = vmul.f32 %v5516, %v5670
        %v5678 = vmul.f32 %v5531, %v5671
        %v5679 = vmul.f32 %v5546, %v5672
        %v5680 = vmul.f32 %v5561, %v5673
        %v5681 = vadd.f32 %v5653, %v5674
        %v5682 = vadd.f32 %v5654, %v5675
        %v5683 = vadd.f32 %v5655, %v5676
        %v5684 = vadd.f32 %v5656, %v5677
        %v5685 = vadd.f32 %v5657, %v5678
        %v5686 = vadd.f32 %v5658, %v5679
        %v5687 = vadd.f32 %v5659, %v5680
        %v5688 = vld [vmem:[%s18] sm:$0x7]
        %v5689 = vld [vmem:[%s19] sm:$0x7]
        %v5691 = vsel %vm1982, %v5689, 0
        %5693 = vmatpush.msra.mxu0 0.0
        %5694 = vmatpush.msra.mxu0 0.0
        %5695 = vmatpush.msra.mxu0 0.0
        %5696 = vmatpush.msra.mxu0 0.0
        %5697 = vmatpush.msra.mxu0 0.0
        %5698 = vmatpush.msra.mxu0 0.0
        %5699 = vmatpush.msra.mxu0 0.0
        %5700 = vmatpush.msra.mxu0 0.0
        %5701 = vmatpush.msra.mxu0 0.0
        %v5702 = vand.u32 %v5687, 4294901760
        %5703 = vmatpush.msra.mxu0 %v5702
        %v5704 = vand.u32 %v5686, 4294901760
        %5705 = vmatpush.msra.mxu0 %v5704
        %v5706 = vand.u32 %v5685, 4294901760
        %5707 = vmatpush.msra.mxu0 %v5706
        %v5708 = vand.u32 %v5684, 4294901760
        %5709 = vmatpush.msra.mxu0 %v5708
        %v5710 = vand.u32 %v5683, 4294901760
        %5711 = vmatpush.msra.mxu0 %v5710
        %v5712 = vand.u32 %v5682, 4294901760
        %5713 = vmatpush.msra.mxu0 %v5712
        %v5714 = vand.u32 %v5681, 4294901760
        %5715 = vmatpush.msra.mxu0 %v5714
        %v5716 = vand.u32 %v5691, 4294901760
        %v5717 = vsub.f32 %v5691, %v5716
        %v5718 = vand.u32 %v5717, 4294901760
        %v5719 = vsub.f32 %v5717, %v5718
        %v5720 = vand.u32 %v5719, 4294901760
        %5721 = vmatmul.f32.gmra.mxu0 %v5720
        %v5722 = vpop.f32.mrf.mxu0
        %v5723 = vadd.f32 0.0, %v5722
        %5724 = vdwg.mxu0
        %5725 = vmatpush.msra.mxu0 0.0
        %5726 = vmatpush.msra.mxu0 0.0
        %5727 = vmatpush.msra.mxu0 0.0
        %5728 = vmatpush.msra.mxu0 0.0
        %5729 = vmatpush.msra.mxu0 0.0
        %5730 = vmatpush.msra.mxu0 0.0
        %5731 = vmatpush.msra.mxu0 0.0
        %5732 = vmatpush.msra.mxu0 0.0
        %5733 = vmatpush.msra.mxu0 0.0
        %v5734 = vand.u32 %v5687, 4294901760
        %v5735 = vsub.f32 %v5687, %v5734
        %v5736 = vand.u32 %v5735, 4294901760
        %v5737 = vsub.f32 %v5735, %v5736
        %v5738 = vand.u32 %v5737, 4294901760
        %5739 = vmatpush.msra.mxu0 %v5738
        %v5740 = vand.u32 %v5686, 4294901760
        %v5741 = vsub.f32 %v5686, %v5740
        %v5742 = vand.u32 %v5741, 4294901760
        %v5743 = vsub.f32 %v5741, %v5742
        %v5744 = vand.u32 %v5743, 4294901760
        %5745 = vmatpush.msra.mxu0 %v5744
        %v5746 = vand.u32 %v5685, 4294901760
        %v5747 = vsub.f32 %v5685, %v5746
        %v5748 = vand.u32 %v5747, 4294901760
        %v5749 = vsub.f32 %v5747, %v5748
        %v5750 = vand.u32 %v5749, 4294901760
        %5751 = vmatpush.msra.mxu0 %v5750
        %v5752 = vand.u32 %v5684, 4294901760
        %v5753 = vsub.f32 %v5684, %v5752
        %v5754 = vand.u32 %v5753, 4294901760
        %v5755 = vsub.f32 %v5753, %v5754
        %v5756 = vand.u32 %v5755, 4294901760
        %5757 = vmatpush.msra.mxu0 %v5756
        %v5758 = vand.u32 %v5683, 4294901760
        %v5759 = vsub.f32 %v5683, %v5758
        %v5760 = vand.u32 %v5759, 4294901760
        %v5761 = vsub.f32 %v5759, %v5760
        %v5762 = vand.u32 %v5761, 4294901760
        %5763 = vmatpush.msra.mxu0 %v5762
        %v5764 = vand.u32 %v5682, 4294901760
        %v5765 = vsub.f32 %v5682, %v5764
        %v5766 = vand.u32 %v5765, 4294901760
        %v5767 = vsub.f32 %v5765, %v5766
        %v5768 = vand.u32 %v5767, 4294901760
        %5769 = vmatpush.msra.mxu0 %v5768
        %v5770 = vand.u32 %v5681, 4294901760
        %v5771 = vsub.f32 %v5681, %v5770
        %v5772 = vand.u32 %v5771, 4294901760
        %v5773 = vsub.f32 %v5771, %v5772
        %v5774 = vand.u32 %v5773, 4294901760
        %5775 = vmatpush.msra.mxu0 %v5774
        %v5776 = vand.u32 %v5691, 4294901760
        %5777 = vmatmul.f32.gmra.mxu0 %v5776
        %v5778 = vpop.f32.mrf.mxu0
        %v5779 = vadd.f32 %v5723, %v5778
        %5780 = vdwg.mxu0
        %5781 = vmatpush.msra.mxu0 0.0
        %5782 = vmatpush.msra.mxu0 0.0
        %5783 = vmatpush.msra.mxu0 0.0
        %5784 = vmatpush.msra.mxu0 0.0
        %5785 = vmatpush.msra.mxu0 0.0
        %5786 = vmatpush.msra.mxu0 0.0
        %5787 = vmatpush.msra.mxu0 0.0
        %5788 = vmatpush.msra.mxu0 0.0
        %5789 = vmatpush.msra.mxu0 0.0
        %v5790 = vand.u32 %v5687, 4294901760
        %v5791 = vsub.f32 %v5687, %v5790
        %5792 = vmatpush.msra.mxu0 %v5791
        %v5793 = vand.u32 %v5686, 4294901760
        %v5794 = vsub.f32 %v5686, %v5793
        %5795 = vmatpush.msra.mxu0 %v5794
        %v5796 = vand.u32 %v5685, 4294901760
        %v5797 = vsub.f32 %v5685, %v5796
        %5798 = vmatpush.msra.mxu0 %v5797
        %v5799 = vand.u32 %v5684, 4294901760
        %v5800 = vsub.f32 %v5684, %v5799
        %5801 = vmatpush.msra.mxu0 %v5800
        %v5802 = vand.u32 %v5683, 4294901760
        %v5803 = vsub.f32 %v5683, %v5802
        %5804 = vmatpush.msra.mxu0 %v5803
        %v5805 = vand.u32 %v5682, 4294901760
        %v5806 = vsub.f32 %v5682, %v5805
        %5807 = vmatpush.msra.mxu0 %v5806
        %v5808 = vand.u32 %v5681, 4294901760
        %v5809 = vsub.f32 %v5681, %v5808
        %5810 = vmatpush.msra.mxu0 %v5809
        %v5811 = vand.u32 %v5691, 4294901760
        %v5812 = vsub.f32 %v5691, %v5811
        %5813 = vmatmul.f32.gmra.mxu0 %v5812
        %v5814 = vpop.f32.mrf.mxu0
        %v5815 = vadd.f32 %v5779, %v5814
        %5816 = vdwg.mxu0
        %5817 = vmatpush.msra.mxu0 0.0
        %5818 = vmatpush.msra.mxu0 0.0
        %5819 = vmatpush.msra.mxu0 0.0
        %5820 = vmatpush.msra.mxu0 0.0
        %5821 = vmatpush.msra.mxu0 0.0
        %5822 = vmatpush.msra.mxu0 0.0
        %5823 = vmatpush.msra.mxu0 0.0
        %5824 = vmatpush.msra.mxu0 0.0
        %5825 = vmatpush.msra.mxu0 0.0
        %v5826 = vand.u32 %v5687, 4294901760
        %5827 = vmatpush.msra.mxu0 %v5826
        %v5828 = vand.u32 %v5686, 4294901760
        %5829 = vmatpush.msra.mxu0 %v5828
        %v5830 = vand.u32 %v5685, 4294901760
        %5831 = vmatpush.msra.mxu0 %v5830
        %v5832 = vand.u32 %v5684, 4294901760
        %5833 = vmatpush.msra.mxu0 %v5832
        %v5834 = vand.u32 %v5683, 4294901760
        %5835 = vmatpush.msra.mxu0 %v5834
        %v5836 = vand.u32 %v5682, 4294901760
        %5837 = vmatpush.msra.mxu0 %v5836
        %v5838 = vand.u32 %v5681, 4294901760
        %5839 = vmatpush.msra.mxu0 %v5838
        %v5840 = vand.u32 %v5691, 4294901760
        %v5841 = vsub.f32 %v5691, %v5840
        %v5842 = vand.u32 %v5841, 4294901760
        %5843 = vmatmul.f32.gmra.mxu0 %v5842
        %v5844 = vpop.f32.mrf.mxu0
        %v5845 = vadd.f32 %v5815, %v5844
        %5846 = vdwg.mxu0
        %5847 = vmatpush.msra.mxu0 0.0
        %5848 = vmatpush.msra.mxu0 0.0
        %5849 = vmatpush.msra.mxu0 0.0
        %5850 = vmatpush.msra.mxu0 0.0
        %5851 = vmatpush.msra.mxu0 0.0
        %5852 = vmatpush.msra.mxu0 0.0
        %5853 = vmatpush.msra.mxu0 0.0
        %5854 = vmatpush.msra.mxu0 0.0
        %5855 = vmatpush.msra.mxu0 0.0
        %v5856 = vand.u32 %v5687, 4294901760
        %v5857 = vsub.f32 %v5687, %v5856
        %v5858 = vand.u32 %v5857, 4294901760
        %5859 = vmatpush.msra.mxu0 %v5858
        %v5860 = vand.u32 %v5686, 4294901760
        %v5861 = vsub.f32 %v5686, %v5860
        %v5862 = vand.u32 %v5861, 4294901760
        %5863 = vmatpush.msra.mxu0 %v5862
        %v5864 = vand.u32 %v5685, 4294901760
        %v5865 = vsub.f32 %v5685, %v5864
        %v5866 = vand.u32 %v5865, 4294901760
        %5867 = vmatpush.msra.mxu0 %v5866
        %v5868 = vand.u32 %v5684, 4294901760
        %v5869 = vsub.f32 %v5684, %v5868
        %v5870 = vand.u32 %v5869, 4294901760
        %5871 = vmatpush.msra.mxu0 %v5870
        %v5872 = vand.u32 %v5683, 4294901760
        %v5873 = vsub.f32 %v5683, %v5872
        %v5874 = vand.u32 %v5873, 4294901760
        %5875 = vmatpush.msra.mxu0 %v5874
        %v5876 = vand.u32 %v5682, 4294901760
        %v5877 = vsub.f32 %v5682, %v5876
        %v5878 = vand.u32 %v5877, 4294901760
        %5879 = vmatpush.msra.mxu0 %v5878
        %v5880 = vand.u32 %v5681, 4294901760
        %v5881 = vsub.f32 %v5681, %v5880
        %v5882 = vand.u32 %v5881, 4294901760
        %5883 = vmatpush.msra.mxu0 %v5882
        %v5884 = vand.u32 %v5691, 4294901760
        %5885 = vmatmul.f32.gmra.mxu0 %v5884
        %v5886 = vpop.f32.mrf.mxu0
        %v5887 = vadd.f32 %v5845, %v5886
        %5888 = vdwg.mxu0
        %5889 = vmatpush.msra.mxu0 0.0
        %5890 = vmatpush.msra.mxu0 0.0
        %5891 = vmatpush.msra.mxu0 0.0
        %5892 = vmatpush.msra.mxu0 0.0
        %5893 = vmatpush.msra.mxu0 0.0
        %5894 = vmatpush.msra.mxu0 0.0
        %5895 = vmatpush.msra.mxu0 0.0
        %5896 = vmatpush.msra.mxu0 0.0
        %5897 = vmatpush.msra.mxu0 0.0
        %v5898 = vand.u32 %v5687, 4294901760
        %5899 = vmatpush.msra.mxu0 %v5898
        %v5900 = vand.u32 %v5686, 4294901760
        %5901 = vmatpush.msra.mxu0 %v5900
        %v5902 = vand.u32 %v5685, 4294901760
        %5903 = vmatpush.msra.mxu0 %v5902
        %v5904 = vand.u32 %v5684, 4294901760
        %5905 = vmatpush.msra.mxu0 %v5904
        %v5906 = vand.u32 %v5683, 4294901760
        %5907 = vmatpush.msra.mxu0 %v5906
        %v5908 = vand.u32 %v5682, 4294901760
        %5909 = vmatpush.msra.mxu0 %v5908
        %v5910 = vand.u32 %v5681, 4294901760
        %5911 = vmatpush.msra.mxu0 %v5910
        %v5912 = vand.u32 %v5691, 4294901760
        %5913 = vmatmul.f32.gmra.mxu0 %v5912
        %v5914 = vpop.f32.mrf.mxu0
        %v5915 = vadd.f32 %v5887, %v5914
        %5916 = vdwg.mxu0
        %v5918 = vsel %vm1072, %v5688, 0
        %5920 = vmatpush.msra.mxu0 0.0
        %5921 = vmatpush.msra.mxu0 0.0
        %5922 = vmatpush.msra.mxu0 0.0
        %5923 = vmatpush.msra.mxu0 0.0
        %5924 = vmatpush.msra.mxu0 0.0
        %5925 = vmatpush.msra.mxu0 0.0
        %5926 = vmatpush.msra.mxu0 0.0
        %5927 = vmatpush.msra.mxu0 0.0
        %5928 = vmatpush.msra.mxu0 0.0
        %5929 = vmatpush.msra.mxu0 0.0
        %5930 = vmatpush.msra.mxu0 0.0
        %5931 = vmatpush.msra.mxu0 0.0
        %5932 = vmatpush.msra.mxu0 0.0
        %5933 = vmatpush.msra.mxu0 0.0
        %5934 = vmatpush.msra.mxu0 0.0
        %v5935 = vand.u32 %v3642, 4294901760
        %5936 = vmatpush.msra.mxu0 %v5935
        %v5937 = vand.u32 %v5918, 4294901760
        %v5938 = vsub.f32 %v5918, %v5937
        %v5939 = vand.u32 %v5938, 4294901760
        %v5940 = vsub.f32 %v5938, %v5939
        %v5941 = vand.u32 %v5940, 4294901760
        %5942 = vmatmul.f32.gmra.mxu0 %v5941
        %v5943 = vpop.f32.mrf.mxu0
        %v5944 = vadd.f32 %v5915, %v5943
        %5945 = vdwg.mxu0
        %5946 = vmatpush.msra.mxu0 0.0
        %5947 = vmatpush.msra.mxu0 0.0
        %5948 = vmatpush.msra.mxu0 0.0
        %5949 = vmatpush.msra.mxu0 0.0
        %5950 = vmatpush.msra.mxu0 0.0
        %5951 = vmatpush.msra.mxu0 0.0
        %5952 = vmatpush.msra.mxu0 0.0
        %5953 = vmatpush.msra.mxu0 0.0
        %5954 = vmatpush.msra.mxu0 0.0
        %5955 = vmatpush.msra.mxu0 0.0
        %5956 = vmatpush.msra.mxu0 0.0
        %5957 = vmatpush.msra.mxu0 0.0
        %5958 = vmatpush.msra.mxu0 0.0
        %5959 = vmatpush.msra.mxu0 0.0
        %5960 = vmatpush.msra.mxu0 0.0
        %v5961 = vand.u32 %v3642, 4294901760
        %v5962 = vsub.f32 %v3642, %v5961
        %v5963 = vand.u32 %v5962, 4294901760
        %v5964 = vsub.f32 %v5962, %v5963
        %v5965 = vand.u32 %v5964, 4294901760
        %5966 = vmatpush.msra.mxu0 %v5965
        %v5967 = vand.u32 %v5918, 4294901760
        %5968 = vmatmul.f32.gmra.mxu0 %v5967
        %v5969 = vpop.f32.mrf.mxu0
        %v5970 = vadd.f32 %v5944, %v5969
        %5971 = vdwg.mxu0
        %5972 = vmatpush.msra.mxu0 0.0
        %5973 = vmatpush.msra.mxu0 0.0
        %5974 = vmatpush.msra.mxu0 0.0
        %5975 = vmatpush.msra.mxu0 0.0
        %5976 = vmatpush.msra.mxu0 0.0
        %5977 = vmatpush.msra.mxu0 0.0
        %5978 = vmatpush.msra.mxu0 0.0
        %5979 = vmatpush.msra.mxu0 0.0
        %5980 = vmatpush.msra.mxu0 0.0
        %5981 = vmatpush.msra.mxu0 0.0
        %5982 = vmatpush.msra.mxu0 0.0
        %5983 = vmatpush.msra.mxu0 0.0
        %5984 = vmatpush.msra.mxu0 0.0
        %5985 = vmatpush.msra.mxu0 0.0
        %5986 = vmatpush.msra.mxu0 0.0
        %v5987 = vand.u32 %v3642, 4294901760
        %v5988 = vsub.f32 %v3642, %v5987
        %5989 = vmatpush.msra.mxu0 %v5988
        %v5990 = vand.u32 %v5918, 4294901760
        %v5991 = vsub.f32 %v5918, %v5990
        %5992 = vmatmul.f32.gmra.mxu0 %v5991
        %v5993 = vpop.f32.mrf.mxu0
        %v5994 = vadd.f32 %v5970, %v5993
        %5995 = vdwg.mxu0
        %5996 = vmatpush.msra.mxu0 0.0
        %5997 = vmatpush.msra.mxu0 0.0
        %5998 = vmatpush.msra.mxu0 0.0
        %5999 = vmatpush.msra.mxu0 0.0
        %6000 = vmatpush.msra.mxu0 0.0
        %6001 = vmatpush.msra.mxu0 0.0
        %6002 = vmatpush.msra.mxu0 0.0
        %6003 = vmatpush.msra.mxu0 0.0
        %6004 = vmatpush.msra.mxu0 0.0
        %6005 = vmatpush.msra.mxu0 0.0
        %6006 = vmatpush.msra.mxu0 0.0
        %6007 = vmatpush.msra.mxu0 0.0
        %6008 = vmatpush.msra.mxu0 0.0
        %6009 = vmatpush.msra.mxu0 0.0
        %6010 = vmatpush.msra.mxu0 0.0
        %v6011 = vand.u32 %v3642, 4294901760
        %6012 = vmatpush.msra.mxu0 %v6011
        %v6013 = vand.u32 %v5918, 4294901760
        %v6014 = vsub.f32 %v5918, %v6013
        %v6015 = vand.u32 %v6014, 4294901760
        %6016 = vmatmul.f32.gmra.mxu0 %v6015
        %v6017 = vpop.f32.mrf.mxu0
        %v6018 = vadd.f32 %v5994, %v6017
        %6019 = vdwg.mxu0
        %6020 = vmatpush.msra.mxu0 0.0
        %6021 = vmatpush.msra.mxu0 0.0
        %6022 = vmatpush.msra.mxu0 0.0
        %6023 = vmatpush.msra.mxu0 0.0
        %6024 = vmatpush.msra.mxu0 0.0
        %6025 = vmatpush.msra.mxu0 0.0
        %6026 = vmatpush.msra.mxu0 0.0
        %6027 = vmatpush.msra.mxu0 0.0
        %6028 = vmatpush.msra.mxu0 0.0
        %6029 = vmatpush.msra.mxu0 0.0
        %6030 = vmatpush.msra.mxu0 0.0
        %6031 = vmatpush.msra.mxu0 0.0
        %6032 = vmatpush.msra.mxu0 0.0
        %6033 = vmatpush.msra.mxu0 0.0
        %6034 = vmatpush.msra.mxu0 0.0
        %v6035 = vand.u32 %v3642, 4294901760
        %v6036 = vsub.f32 %v3642, %v6035
        %v6037 = vand.u32 %v6036, 4294901760
        %6038 = vmatpush.msra.mxu0 %v6037
        %v6039 = vand.u32 %v5918, 4294901760
        %6040 = vmatmul.f32.gmra.mxu0 %v6039
        %v6041 = vpop.f32.mrf.mxu0
        %v6042 = vadd.f32 %v6018, %v6041
        %6043 = vdwg.mxu0
        %6044 = vmatpush.msra.mxu0 0.0
        %6045 = vmatpush.msra.mxu0 0.0
        %6046 = vmatpush.msra.mxu0 0.0
        %6047 = vmatpush.msra.mxu0 0.0
        %6048 = vmatpush.msra.mxu0 0.0
        %6049 = vmatpush.msra.mxu0 0.0
        %6050 = vmatpush.msra.mxu0 0.0
        %6051 = vmatpush.msra.mxu0 0.0
        %6052 = vmatpush.msra.mxu0 0.0
        %6053 = vmatpush.msra.mxu0 0.0
        %6054 = vmatpush.msra.mxu0 0.0
        %6055 = vmatpush.msra.mxu0 0.0
        %6056 = vmatpush.msra.mxu0 0.0
        %6057 = vmatpush.msra.mxu0 0.0
        %6058 = vmatpush.msra.mxu0 0.0
        %v6059 = vand.u32 %v3642, 4294901760
        %6060 = vmatpush.msra.mxu0 %v6059
        %v6061 = vand.u32 %v5918, 4294901760
        %6062 = vmatmul.f32.gmra.mxu0 %v6061
        %v6063 = vpop.f32.mrf.mxu0
        %v6064 = vadd.f32 %v6042, %v6063
        %6065 = vdwg.mxu0
        %v6066 = vld [vmem:[%s20] sm:$0x7]
        %6068 = vset.pattern.permute.xlu0 0
        %6069 = vperm.xlu0 %6068, %v6066
        %v6070 = vpop.permute.xlu0 %6069
        %v6072 = vadd.f32 %v6064, %v6070
        %6073 = vst [vmem:[%s813] sm:$0x7] %v6072
        %v6074 = vld [vmem:[%s21] sm:$0x7]
        %v6075 = vld [vmem:[%s22] sm:$0x7]
        %6077 = vset.pattern.permute.xlu0 0
        %6078 = vperm.xlu0 %6077, %v6075
        %v6079 = vpop.permute.xlu0 %6078
        %v6082 = vsel %vm1982, %v6074, 0
        %6084 = vmatpush.msra.mxu0 0.0
        %6085 = vmatpush.msra.mxu0 0.0
        %6086 = vmatpush.msra.mxu0 0.0
        %6087 = vmatpush.msra.mxu0 0.0
        %6088 = vmatpush.msra.mxu0 0.0
        %6089 = vmatpush.msra.mxu0 0.0
        %6090 = vmatpush.msra.mxu0 0.0
        %6091 = vmatpush.msra.mxu0 0.0
        %6092 = vmatpush.msra.mxu0 0.0
        %v6093 = vand.u32 %v5561, 4294901760
        %6094 = vmatpush.msra.mxu0 %v6093
        %v6095 = vand.u32 %v5546, 4294901760
        %6096 = vmatpush.msra.mxu0 %v6095
        %v6097 = vand.u32 %v5531, 4294901760
        %6098 = vmatpush.msra.mxu0 %v6097
        %v6099 = vand.u32 %v5516, 4294901760
        %6100 = vmatpush.msra.mxu0 %v6099
        %v6101 = vand.u32 %v5501, 4294901760
        %6102 = vmatpush.msra.mxu0 %v6101
        %v6103 = vand.u32 %v5486, 4294901760
        %6104 = vmatpush.msra.mxu0 %v6103
        %v6105 = vand.u32 %v5471, 4294901760
        %6106 = vmatpush.msra.mxu0 %v6105
        %v6107 = vand.u32 %v6082, 4294901760
        %v6108 = vsub.f32 %v6082, %v6107
        %v6109 = vand.u32 %v6108, 4294901760
        %v6110 = vsub.f32 %v6108, %v6109
        %v6111 = vand.u32 %v6110, 4294901760
        %6112 = vmatmul.f32.gmra.mxu0 %v6111
        %v6113 = vpop.f32.mrf.mxu0
        %v6114 = vadd.f32 %v6079, %v6113
        %6115 = vdwg.mxu0
        %6116 = vmatpush.msra.mxu0 0.0
        %6117 = vmatpush.msra.mxu0 0.0
        %6118 = vmatpush.msra.mxu0 0.0
        %6119 = vmatpush.msra.mxu0 0.0
        %6120 = vmatpush.msra.mxu0 0.0
        %6121 = vmatpush.msra.mxu0 0.0
        %6122 = vmatpush.msra.mxu0 0.0
        %6123 = vmatpush.msra.mxu0 0.0
        %6124 = vmatpush.msra.mxu0 0.0
        %v6125 = vand.u32 %v5561, 4294901760
        %v6126 = vsub.f32 %v5561, %v6125
        %v6127 = vand.u32 %v6126, 4294901760
        %v6128 = vsub.f32 %v6126, %v6127
        %v6129 = vand.u32 %v6128, 4294901760
        %6130 = vmatpush.msra.mxu0 %v6129
        %v6131 = vand.u32 %v5546, 4294901760
        %v6132 = vsub.f32 %v5546, %v6131
        %v6133 = vand.u32 %v6132, 4294901760
        %v6134 = vsub.f32 %v6132, %v6133
        %v6135 = vand.u32 %v6134, 4294901760
        %6136 = vmatpush.msra.mxu0 %v6135
        %v6137 = vand.u32 %v5531, 4294901760
        %v6138 = vsub.f32 %v5531, %v6137
        %v6139 = vand.u32 %v6138, 4294901760
        %v6140 = vsub.f32 %v6138, %v6139
        %v6141 = vand.u32 %v6140, 4294901760
        %6142 = vmatpush.msra.mxu0 %v6141
        %v6143 = vand.u32 %v5516, 4294901760
        %v6144 = vsub.f32 %v5516, %v6143
        %v6145 = vand.u32 %v6144, 4294901760
        %v6146 = vsub.f32 %v6144, %v6145
        %v6147 = vand.u32 %v6146, 4294901760
        %6148 = vmatpush.msra.mxu0 %v6147
        %v6149 = vand.u32 %v5501, 4294901760
        %v6150 = vsub.f32 %v5501, %v6149
        %v6151 = vand.u32 %v6150, 4294901760
        %v6152 = vsub.f32 %v6150, %v6151
        %v6153 = vand.u32 %v6152, 4294901760
        %6154 = vmatpush.msra.mxu0 %v6153
        %v6155 = vand.u32 %v5486, 4294901760
        %v6156 = vsub.f32 %v5486, %v6155
        %v6157 = vand.u32 %v6156, 4294901760
        %v6158 = vsub.f32 %v6156, %v6157
        %v6159 = vand.u32 %v6158, 4294901760
        %6160 = vmatpush.msra.mxu0 %v6159
        %v6161 = vand.u32 %v5471, 4294901760
        %v6162 = vsub.f32 %v5471, %v6161
        %v6163 = vand.u32 %v6162, 4294901760
        %v6164 = vsub.f32 %v6162, %v6163
        %v6165 = vand.u32 %v6164, 4294901760
        %6166 = vmatpush.msra.mxu0 %v6165
        %v6167 = vand.u32 %v6082, 4294901760
        %6168 = vmatmul.f32.gmra.mxu0 %v6167
        %v6169 = vpop.f32.mrf.mxu0
        %v6170 = vadd.f32 %v6114, %v6169
        %6171 = vdwg.mxu0
        %6172 = vmatpush.msra.mxu0 0.0
        %6173 = vmatpush.msra.mxu0 0.0
        %6174 = vmatpush.msra.mxu0 0.0
        %6175 = vmatpush.msra.mxu0 0.0
        %6176 = vmatpush.msra.mxu0 0.0
        %6177 = vmatpush.msra.mxu0 0.0
        %6178 = vmatpush.msra.mxu0 0.0
        %6179 = vmatpush.msra.mxu0 0.0
        %6180 = vmatpush.msra.mxu0 0.0
        %v6181 = vand.u32 %v5561, 4294901760
        %v6182 = vsub.f32 %v5561, %v6181
        %6183 = vmatpush.msra.mxu0 %v6182
        %v6184 = vand.u32 %v5546, 4294901760
        %v6185 = vsub.f32 %v5546, %v6184
        %6186 = vmatpush.msra.mxu0 %v6185
        %v6187 = vand.u32 %v5531, 4294901760
        %v6188 = vsub.f32 %v5531, %v6187
        %6189 = vmatpush.msra.mxu0 %v6188
        %v6190 = vand.u32 %v5516, 4294901760
        %v6191 = vsub.f32 %v5516, %v6190
        %6192 = vmatpush.msra.mxu0 %v6191
        %v6193 = vand.u32 %v5501, 4294901760
        %v6194 = vsub.f32 %v5501, %v6193
        %6195 = vmatpush.msra.mxu0 %v6194
        %v6196 = vand.u32 %v5486, 4294901760
        %v6197 = vsub.f32 %v5486, %v6196
        %6198 = vmatpush.msra.mxu0 %v6197
        %v6199 = vand.u32 %v5471, 4294901760
        %v6200 = vsub.f32 %v5471, %v6199
        %6201 = vmatpush.msra.mxu0 %v6200
        %v6202 = vand.u32 %v6082, 4294901760
        %v6203 = vsub.f32 %v6082, %v6202
        %6204 = vmatmul.f32.gmra.mxu0 %v6203
        %v6205 = vpop.f32.mrf.mxu0
        %v6206 = vadd.f32 %v6170, %v6205
        %6207 = vdwg.mxu0
        %6208 = vmatpush.msra.mxu0 0.0
        %6209 = vmatpush.msra.mxu0 0.0
        %6210 = vmatpush.msra.mxu0 0.0
        %6211 = vmatpush.msra.mxu0 0.0
        %6212 = vmatpush.msra.mxu0 0.0
        %6213 = vmatpush.msra.mxu0 0.0
        %6214 = vmatpush.msra.mxu0 0.0
        %6215 = vmatpush.msra.mxu0 0.0
        %6216 = vmatpush.msra.mxu0 0.0
        %v6217 = vand.u32 %v5561, 4294901760
        %6218 = vmatpush.msra.mxu0 %v6217
        %v6219 = vand.u32 %v5546, 4294901760
        %6220 = vmatpush.msra.mxu0 %v6219
        %v6221 = vand.u32 %v5531, 4294901760
        %6222 = vmatpush.msra.mxu0 %v6221
        %v6223 = vand.u32 %v5516, 4294901760
        %6224 = vmatpush.msra.mxu0 %v6223
        %v6225 = vand.u32 %v5501, 4294901760
        %6226 = vmatpush.msra.mxu0 %v6225
        %v6227 = vand.u32 %v5486, 4294901760
        %6228 = vmatpush.msra.mxu0 %v6227
        %v6229 = vand.u32 %v5471, 4294901760
        %6230 = vmatpush.msra.mxu0 %v6229
        %v6231 = vand.u32 %v6082, 4294901760
        %v6232 = vsub.f32 %v6082, %v6231
        %v6233 = vand.u32 %v6232, 4294901760
        %6234 = vmatmul.f32.gmra.mxu0 %v6233
        %v6235 = vpop.f32.mrf.mxu0
        %v6236 = vadd.f32 %v6206, %v6235
        %6237 = vdwg.mxu0
        %6238 = vmatpush.msra.mxu0 0.0
        %6239 = vmatpush.msra.mxu0 0.0
        %6240 = vmatpush.msra.mxu0 0.0
        %6241 = vmatpush.msra.mxu0 0.0
        %6242 = vmatpush.msra.mxu0 0.0
        %6243 = vmatpush.msra.mxu0 0.0
        %6244 = vmatpush.msra.mxu0 0.0
        %6245 = vmatpush.msra.mxu0 0.0
        %6246 = vmatpush.msra.mxu0 0.0
        %v6247 = vand.u32 %v5561, 4294901760
        %v6248 = vsub.f32 %v5561, %v6247
        %v6249 = vand.u32 %v6248, 4294901760
        %6250 = vmatpush.msra.mxu0 %v6249
        %v6251 = vand.u32 %v5546, 4294901760
        %v6252 = vsub.f32 %v5546, %v6251
        %v6253 = vand.u32 %v6252, 4294901760
        %6254 = vmatpush.msra.mxu0 %v6253
        %v6255 = vand.u32 %v5531, 4294901760
        %v6256 = vsub.f32 %v5531, %v6255
        %v6257 = vand.u32 %v6256, 4294901760
        %6258 = vmatpush.msra.mxu0 %v6257
        %v6259 = vand.u32 %v5516, 4294901760
        %v6260 = vsub.f32 %v5516, %v6259
        %v6261 = vand.u32 %v6260, 4294901760
        %6262 = vmatpush.msra.mxu0 %v6261
        %v6263 = vand.u32 %v5501, 4294901760
        %v6264 = vsub.f32 %v5501, %v6263
        %v6265 = vand.u32 %v6264, 4294901760
        %6266 = vmatpush.msra.mxu0 %v6265
        %v6267 = vand.u32 %v5486, 4294901760
        %v6268 = vsub.f32 %v5486, %v6267
        %v6269 = vand.u32 %v6268, 4294901760
        %6270 = vmatpush.msra.mxu0 %v6269
        %v6271 = vand.u32 %v5471, 4294901760
        %v6272 = vsub.f32 %v5471, %v6271
        %v6273 = vand.u32 %v6272, 4294901760
        %6274 = vmatpush.msra.mxu0 %v6273
        %v6275 = vand.u32 %v6082, 4294901760
        %6276 = vmatmul.f32.gmra.mxu0 %v6275
        %v6277 = vpop.f32.mrf.mxu0
        %v6278 = vadd.f32 %v6236, %v6277
        %6279 = vdwg.mxu0
        %6280 = vmatpush.msra.mxu0 0.0
        %6281 = vmatpush.msra.mxu0 0.0
        %6282 = vmatpush.msra.mxu0 0.0
        %6283 = vmatpush.msra.mxu0 0.0
        %6284 = vmatpush.msra.mxu0 0.0
        %6285 = vmatpush.msra.mxu0 0.0
        %6286 = vmatpush.msra.mxu0 0.0
        %6287 = vmatpush.msra.mxu0 0.0
        %6288 = vmatpush.msra.mxu0 0.0
        %v6289 = vand.u32 %v5561, 4294901760
        %6290 = vmatpush.msra.mxu0 %v6289
        %v6291 = vand.u32 %v5546, 4294901760
        %6292 = vmatpush.msra.mxu0 %v6291
        %v6293 = vand.u32 %v5531, 4294901760
        %6294 = vmatpush.msra.mxu0 %v6293
        %v6295 = vand.u32 %v5516, 4294901760
        %6296 = vmatpush.msra.mxu0 %v6295
        %v6297 = vand.u32 %v5501, 4294901760
        %6298 = vmatpush.msra.mxu0 %v6297
        %v6299 = vand.u32 %v5486, 4294901760
        %6300 = vmatpush.msra.mxu0 %v6299
        %v6301 = vand.u32 %v5471, 4294901760
        %6302 = vmatpush.msra.mxu0 %v6301
        %v6303 = vand.u32 %v6082, 4294901760
        %6304 = vmatmul.f32.gmra.mxu0 %v6303
        %v6305 = vpop.f32.mrf.mxu0
        %v6306 = vadd.f32 %v6278, %v6305
        %6307 = vdwg.mxu0
        %v6308 = vxor.u32 %v6306, 2147483648
        %v6309 = vmul.f32 %v6308, 1.442695
        %v6310 = vpow.pop %v6309
        %v6311 = vadd.f32 %v6310, 1.0
        %v6312 = vrcp.pop %v6311
        %v6313 = vmul.f32 %v6311, %v6312
        %v6314 = vsub.f32 1.0, %v6313
        %v6315 = vmul.f32 %v6312, %v6314
        %v6316 = vadd.f32 %v6312, %v6315
        %vm6317 = vweird.f32 %v6311
        %vm6318 = vweird.f32 %v6312
        %vm6319 = vmor %vm6317, %vm6318
        %v6320 = vsel %vm6319, %v6312, %v6316
        %v6321 = vand.u32 2147483647, %v6311
        %vm6322 = vcmp.eq.f32.partialorder %v6321, 8.507059e+37
        %v6323 = vand.u32 %v6311, 2147483648
        %v6324 = vor.u32 1.1754944e-38, %v6323
        %v6325 = vsel %vm6322, %v6324, %v6320
        %v6326 = vmul.f32 1.0, %v6325
        %6327 = vst [vmem:[%s820] sm:$0x7] %v6326
        %vm6328 = vcmask 7168
        %6329 = vst.msk [vmem:[%s840] sm:$0xff] %vm6328, %v3621
        %6330 = vst.msk [vmem:[%s840 + $0x8] sm:$0xff] %vm6328, %v3623
        %6331 = vst.msk [vmem:[%s840 + $0x10] sm:$0xff] %vm6328, %v3625
        %6332 = vst.msk [vmem:[%s840 + $0x18] sm:$0xff] %vm6328, %v3627
        %6333 = vst.msk [vmem:[%s840 + $0x20] sm:$0xff] %vm6328, %v3629
        %6334 = vst.msk [vmem:[%s840 + $0x28] sm:$0xff] %vm6328, %v3631
        %6335 = vst.msk [vmem:[%s840 + $0x30] sm:$0xff] %vm6328, %v3633
        %6336 = vst.msk [vmem:[%s840 + $0x38] sm:$0xff] %vm6328, %v5633
        %6337 = vst.msk [vmem:[%s840 + $0x40] sm:$0xff] %vm6328, %v5635
        %6338 = vst.msk [vmem:[%s840 + $0x48] sm:$0xff] %vm6328, %v5637
        %6339 = vst.msk [vmem:[%s840 + $0x50] sm:$0xff] %vm6328, %v5639
        %6340 = vst.msk [vmem:[%s840 + $0x58] sm:$0xff] %vm6328, %v5641
        %6341 = vst.msk [vmem:[%s840 + $0x60] sm:$0xff] %vm6328, %v5643
        %6342 = vst.msk [vmem:[%s840 + $0x68] sm:$0xff] %vm6328, %v5645
        %6343 = vst.msk [vmem:[%s840 + $0x70] sm:$0xff] %vm6328, %v2573
        %6344 = vst.msk [vmem:[%s840 + $0x78] sm:$0xff] %vm6328, %v2575
        %6345 = vst.msk [vmem:[%s840 + $0x80] sm:$0xff] %vm6328, %v2577
        %6346 = vst.msk [vmem:[%s840 + $0x88] sm:$0xff] %vm6328, %v2579
        %6347 = vst.msk [vmem:[%s840 + $0x90] sm:$0xff] %vm6328, %v2581
        %6348 = vst.msk [vmem:[%s840 + $0x98] sm:$0xff] %vm6328, %v2583
        %6349 = vst.msk [vmem:[%s840 + $0xa0] sm:$0xff] %vm6328, %v2585
        %6350 = vst.msk [vmem:[%s840 + $0xa8] sm:$0xff] %vm6328, %v2587
        %6351 = vst.msk [vmem:[%s840 + $0xb0] sm:$0xff] %vm6328, %v2589
        %6352 = vst.msk [vmem:[%s840 + $0xb8] sm:$0xff] %vm6328, %v2591
        %6353 = vst.msk [vmem:[%s840 + $0xc0] sm:$0xff] %vm6328, %v2593
        %6354 = vst.msk [vmem:[%s840 + $0xc8] sm:$0xff] %vm6328, %v4924
        %6355 = vst.msk [vmem:[%s840 + $0xd0] sm:$0xff] %vm6328, %v4926
        %6356 = vst.msk [vmem:[%s840 + $0xd8] sm:$0xff] %vm6328, %v4928
        %6357 = vst.msk [vmem:[%s840 + $0xe0] sm:$0xff] %vm6328, %v4930
        %6358 = vst.msk [vmem:[%s840 + $0xe8] sm:$0xff] %vm6328, %v4932
        %6359 = vst.msk [vmem:[%s840 + $0xf0] sm:$0xff] %vm6328, %v4934
        %6360 = vst.msk [vmem:[%s840 + $0xf8] sm:$0xff] %vm6328, %v4936
        %6361 = vst.msk [vmem:[%s840 + $0x100] sm:$0xff] %vm6328, %v4938
        %6362 = vst.msk [vmem:[%s840 + $0x108] sm:$0xff] %vm6328, %v4940
        %6363 = vst.msk [vmem:[%s840 + $0x110] sm:$0xff] %vm6328, %v4942
        %6364 = vst.msk [vmem:[%s840 + $0x118] sm:$0xff] %vm6328, %v4944
        %s6365 = sand.u32 %s552, 1
        %s6366 = scalar_lea.sflag [#allocation4], %s6365
        %s6367 = sand.u32 %s552, 1
        %s6368 = smul.addr %s6367, 4
        %s6369 = scalar_lea.vmem [#allocation5], %s6368
        %s6370 = sand.u32 %s578, 1
        %s6371 = scalar_lea.sflag [#allocation7], %s6370
        %s6372 = sand.u32 %s578, 1
        %s6373 = smul.addr %s6372, 4
        %s6374 = scalar_lea.vmem [#allocation6], %s6373
        %p6375 = scmp.lt.s32.totalorder %s46, 1
        %s6376 = scalar_select %p6375, %s46, 1
        %s6377 = smul.addr %s6376, 36
        %s6378 = smul.addr %s6377, 8
        %s6379 = scalar_lea.vmem %s25, %s6378
        // Predicated region
        $region117: #{tpu_custom_call.1} parent=111 // pred_check
          %p6380 = pneg %p562
        $region118: #{tpu_custom_call.1} parent=111 // pred_check_branch
          %6382 = sbr.rel (%p6380) target = $region120
        $region119: #{tpu_custom_call.1} parent=111 // pred_region
          %6384 = vsyncadd %s6366, 0
          %s6385 = smul.addr %s46, 4
          %s6386 = scalar_lea.hbm %s23, %s6385
          %s6388 = sshll.u32 %s6369, 4
          %s6389 = int_to_ptr.vmem [resolvable:$true] %s6388
          %s6390 = sshll.u32 %s6386, 4
          %s6391 = int_to_ptr.hbm [resolvable:$true] %s6390
          %6393 = dma.vmem_to_hbm [thread:$0]  %s6389, 64, %s6391, %s6366
        $region120: #{tpu_custom_call.1} parent=111 // pred_fallthru
          _
        // Predicated region
        $region121: #{tpu_custom_call.1} parent=111 // pred_check
          %p6394 = pneg %p588
        $region122: #{tpu_custom_call.1} parent=111 // pred_check_branch
          %6396 = sbr.rel (%p6394) target = $region124
        $region123: #{tpu_custom_call.1} parent=111 // pred_region
          %6398 = vsyncadd %s6371, 0
          %s6399 = smul.addr %s46, 4
          %s6400 = scalar_lea.hbm %s24, %s6399
          %s6402 = sshll.u32 %s6374, 4
          %s6403 = int_to_ptr.vmem [resolvable:$true] %s6402
          %s6404 = sshll.u32 %s6400, 4
          %s6405 = int_to_ptr.hbm [resolvable:$true] %s6404
          %6407 = dma.vmem_to_hbm [thread:$0]  %s6403, 64, %s6405, %s6371
        $region124: #{tpu_custom_call.1} parent=111 // pred_fallthru
          _
        // Predicated region
        $region125: #{tpu_custom_call.1} parent=111 // pred_check
          %p6408 = pneg %p614
        $region126: #{tpu_custom_call.1} parent=111 // pred_check_branch
          %6410 = sbr.rel (%p6408) target = $region128
        $region127: #{tpu_custom_call.1} parent=111 // pred_region
          _
        $region128: #{tpu_custom_call.1} parent=111 // pred_fallthru
          _
      $region112: #{tpu_custom_call.1} parent=5 // pred_fallthru
        _
      %p6411 = scmp.le.s32.totalorder 2, %s41
      // Predicated region
      $region129: #{tpu_custom_call.1} parent=5 // pred_check
        %p6412 = pneg %p6411
      $region130: #{tpu_custom_call.1} parent=5 // pred_check_branch
        %6414 = sbr.rel (%p6412) target = $region132
      $region131: #{tpu_custom_call.1} parent=5 // pred_region
        %s6415 = ssub.s32 %s41, 2
        // Predicated region
        $region133: #{tpu_custom_call.1} parent=131 // pred_check
          %p6416 = pneg %p568
        $region134: #{tpu_custom_call.1} parent=131 // pred_check_branch
          %6418 = sbr.rel (%p6416) target = $region136
        $region135: #{tpu_custom_call.1} parent=131 // pred_region
          %s6419 = sand.u32 %s553, 1
          %s6420 = scalar_lea.sflag [#allocation4], %s6419
          %s6421 = sand.u32 %s553, 1
          %s6422 = smul.addr %s6421, 4
          %s6423 = scalar_lea.vmem [#allocation5], %s6422
          %6425 = dma.done %s6420, 64
        $region136: #{tpu_custom_call.1} parent=131 // pred_fallthru
          _
        // Predicated region
        $region137: #{tpu_custom_call.1} parent=131 // pred_check
          %p6426 = pneg %p594
        $region138: #{tpu_custom_call.1} parent=131 // pred_check_branch
          %6428 = sbr.rel (%p6426) target = $region140
        $region139: #{tpu_custom_call.1} parent=131 // pred_region
          %s6429 = sand.u32 %s579, 1
          %s6430 = scalar_lea.sflag [#allocation7], %s6429
          %s6431 = sand.u32 %s579, 1
          %s6432 = smul.addr %s6431, 4
          %s6433 = scalar_lea.vmem [#allocation6], %s6432
          %6435 = dma.done %s6430, 64
        $region140: #{tpu_custom_call.1} parent=131 // pred_fallthru
          _
        // Predicated region
        $region141: #{tpu_custom_call.1} parent=131 // pred_check
          %p6436 = pneg %p620
        $region142: #{tpu_custom_call.1} parent=131 // pred_check_branch
          %6438 = sbr.rel (%p6436) target = $region144
        $region143: #{tpu_custom_call.1} parent=131 // pred_region
          %p6439 = scmp.lt.s32.totalorder %s47, 1
          %s6440 = scalar_select %p6439, %s47, 1
          %s6441 = smul.addr %s6440, 36
          %s6442 = smul.addr %s6441, 8
          %s6443 = scalar_lea.vmem %s25, %s6442
        $region144: #{tpu_custom_call.1} parent=131 // pred_fallthru
          _
      $region132: #{tpu_custom_call.1} parent=5 // pred_fallthru
        _
    $region6: #{tpu_custom_call.1} parent=1 // loop_footer
      %s45 = sadd.s32 1, %s41
    $region7: #{tpu_custom_call.1} parent=1 // loop_footer_branch
      %40 = sbr.rel target = $region3
    $region8: #{tpu_custom_call.1} parent=1 // loop_exit
      _
    %6444 = vsyncpa [#allocation3], 1
    %s6445 = scalar_lea.sflag [#allocation3], 1
    %6446 = vsyncpa %s6445, 1
    %6447 = vsyncpa [#allocation4], 1
    %s6448 = scalar_lea.sflag [#allocation4], 1
    %6449 = vsyncpa %s6448, 1
    %6450 = vsyncpa [#allocation7], 1
    %s6451 = scalar_lea.sflag [#allocation7], 1
    %6452 = vsyncpa %s6451, 1

</llo_original>
